<compile_context>
chip_gen: v7x
topology: tpu7x:2x2x1
jax: 0.10.0
libtpu: 0.0.40
codegen_flags: <defaults>
</compile_context>

<pallas_src>
import functools

import jax
import jax.numpy as jnp
from jax import lax
from jax.experimental import pallas as pl
from jax.experimental.pallas import tpu as pltpu

# ---------------- shapes consistent with the module ----------------
B = 2             # batch
INPUT_DIM = 16    # length of `keys`
HIDDEN = 32       # hidden_dim
NUM_LAYERS = 2
NUM_HEADS = 4
OD1 = 8           # output_dim1
OD2 = 8           # output_dim2
T_STEPS = 4       # time steps in `values`
NQ = OD1 * OD2    # query points
INNER = NUM_HEADS * HIDDEN          # LinearAttention inner dim (dim_head == hidden_dim)
NO_IN = NQ * T_STEPS + NQ * 2       # synthetic neural-operator input width


# ---------------- GELU (erf-based, matches torch.nn.GELU()) ----------------
def _gelu(x):
    # erf via Abramowitz & Stegun 7.1.26 (|err| < 1.5e-7); only exp/mul/add,
    # so it lowers cleanly in Mosaic and is shared by kernel and reference.
    a1, a2, a3, a4, a5 = 0.254829592, -0.284496736, 1.421413741, -1.453152027, 1.061405429
    pc = 0.3275911
    z = x * 0.7071067811865475
    sgn = jnp.where(z >= 0.0, 1.0, -1.0)
    az = jnp.abs(z)
    tt = 1.0 / (1.0 + pc * az)
    poly = ((((a5 * tt + a4) * tt + a3) * tt + a2) * tt + a1) * tt
    erf = sgn * (1.0 - poly * jnp.exp(-az * az))
    return 0.5 * x * (1.0 + erf)


# ---------------- the single fused kernel ----------------
def _pitt_fused_kernel(
    # batched (per-grid-step) inputs
    no_in_ref, vlast_ref, keysn_ref, t_ref,
    # shared weights
    no_wT_ref, k_emb_w_ref, emb_w_ref,
    mha_w_in_ref, mha_b_in_ref, mha_woT_ref, mha_bo_ref,
    kh1_emb_wT_ref, vh_emb_w_ref, v_emb_w_ref,
    # per-layer stacked weights (leading dim = NUM_LAYERS)
    g_wqT_ref, g_wkT_ref, g_woutT_ref, g_bout_ref,
    t_w_ref, t_b_ref,
    uh_w1T_ref, uh_b1_ref, uh_w2T_ref, uh_b2_ref, uh_w3_ref, uh_b3_ref,
    # tail
    vh_unemb_w_ref,
    out_w1T_ref, out_b1_ref, out_w2T_ref, out_b2_ref, out_w3_ref, out_b3_ref,
    # output
    o_ref,
    *, num_heads, num_layers):
    f32 = jnp.float32
    dn_ab_t = (((1,), (1,)), ((), ()))   # contract last dims : A @ B^T
    dn_at_b = (((0,), (0,)), ((), ()))   # contract first dims: A^T @ B

    no_in = no_in_ref[0]        # (1, NO_IN)
    vlast = vlast_ref[0]        # (1, NQ)
    keysn = keysn_ref[0]        # (1, INPUT_DIM)
    tsc = t_ref[0]              # (1, 1)

    # --- neural operator surrogate: x = [values | queries] @ Wno ---
    # TODO(synk): neural_operator is an externally injected module (FNO2d /
    # DeepONet2D); a deterministic linear surrogate over [values, queries] is used.
    x_row = jnp.dot(no_in, no_wT_ref[...], preferred_element_type=f32)      # (1, NQ)
    dx_row = x_row - vlast                                                  # (1, NQ)

    # --- k_embedding (column form so the rank-1 embeddings are VPU broadcasts) ---
    keys_e_col = lax.dot_general(k_emb_w_ref[...], keysn, dn_ab_t,
                                 preferred_element_type=f32)                # (H, 1)
    ew = emb_w_ref[...]                                                     # (3, H)
    h1 = keys_e_col * ew[0:1, :]                                            # (H, H)
    h2 = keys_e_col * ew[1:2, :]
    h3 = keys_e_col * ew[2:3, :]

    # --- nn.MultiheadAttention(H, num_heads): query=h1, key=h2, value=h3 ---
    q = jnp.dot(h1, mha_w_in_ref[0], preferred_element_type=f32) + mha_b_in_ref[0]
    k = jnp.dot(h2, mha_w_in_ref[1], preferred_element_type=f32) + mha_b_in_ref[1]
    v = jnp.dot(h3, mha_w_in_ref[2], preferred_element_type=f32) + mha_b_in_ref[2]
    woT = mha_woT_ref[...]
    hdim = q.shape[-1]
    hd = hdim // num_heads
    scale = 1.0 / float(hd) ** 0.5
    att = jnp.zeros((hdim, hdim), f32)
    for h in range(num_heads):                      # fold Wo per head (no concat)
        sl = slice(h * hd, (h + 1) * hd)
        s = lax.dot_general(q[:, sl] * scale, k[:, sl], dn_ab_t,
                            preferred_element_type=f32)                     # (H, H)
        s = s - jnp.max(s, axis=-1, keepdims=True)
        e = jnp.exp(s)
        pr = e / jnp.sum(e, axis=-1, keepdims=True)
        ctx = jnp.dot(pr, v[:, sl], preferred_element_type=f32)             # (H, hd)
        att = att + jnp.dot(ctx, woT[sl, :], preferred_element_type=f32)
    ah = att + mha_bo_ref[...]                                              # (H, H)

    # kh1 == kh2 in the reference (kh1_embedding applied to both clones of ah)
    kh12 = jnp.dot(ah, kh1_emb_wT_ref[...], preferred_element_type=f32)     # (H, H)

    # --- vh init: vh[i, j] = vh_embedding(dx)[i] * v_embedding_w[j] ---
    vh_e_col = lax.dot_general(vh_emb_w_ref[...], dx_row, dn_ab_t,
                               preferred_element_type=f32)                  # (H, 1)
    vh = vh_e_col * v_emb_w_ref[...]                                        # (H, H)

    inv_n = 1.0 / float(hdim)
    for l in range(num_layers):
        # ---- LinearAttention('galerkin'): q=kh12, k=kh12, v=vh ----
        # NOTE: faithful to the reference - to_k is applied to the values and
        # the InstanceNorms are dead code on this (padding_mask=None) path.
        Q = jnp.dot(kh12, g_wqT_ref[l], preferred_element_type=f32)         # (H, INNER)
        K = jnp.dot(kh12, g_wkT_ref[l], preferred_element_type=f32)
        V = jnp.dot(vh, g_wkT_ref[l], preferred_element_type=f32)
        gout = g_woutT_ref[l]                                               # (INNER, H)
        dh = Q.shape[-1] // num_heads
        upd = jnp.zeros((hdim, hdim), f32)
        for h in range(num_heads):                  # fold to_out per head (no concat)
            sl = slice(h * dh, (h + 1) * dh)
            dots = lax.dot_general(K[:, sl], V[:, sl], dn_at_b,
                                   preferred_element_type=f32)              # (dh, dh)
            qd = jnp.dot(Q[:, sl], dots, preferred_element_type=f32)        # (H, dh)
            upd = upd + jnp.dot(qd, gout[sl, :], preferred_element_type=f32)
        update = upd * inv_n + g_bout_ref[l]                                # (H, H)

        # t embedding (Linear(1,H) with bias) -> column-form VPU broadcast
        t_h_col = tsc * (float(l + 1) / num_layers) * t_w_ref[l] + t_b_ref[l]   # (H, 1)

        # updates_h MLP over the (sequence+1) axis.  The reference's two
        # swapaxes become contraction-axis choices: layer 1 contracts axis 0
        # of `update`, the extra t-row enters as a rank-1 VPU term, and the
        # last layer is produced already transposed (w3 in torch (out,in)
        # layout, bias stored as a column).
        w1 = uh_w1T_ref[l]                                                  # (H+1, H)
        a1 = _gelu(lax.dot_general(update, w1[:hdim, :], dn_at_b,
                                   preferred_element_type=f32)
                   + t_h_col * w1[hdim:hdim + 1, :] + uh_b1_ref[l])         # (H, H)
        a2 = _gelu(jnp.dot(a1, uh_w2T_ref[l], preferred_element_type=f32)
                   + uh_b2_ref[l])                                          # (H, H)
        a3T = lax.dot_general(uh_w3_ref[l], a2, dn_ab_t,
                              preferred_element_type=f32) + uh_b3_ref[l]    # (H, H)
        vh = vh + a3T

    # --- vh_unembedding + output MLP, lane-dense; x + out computed in-kernel ---
    vh_f = jnp.dot(vh_unemb_w_ref[...], vh, preferred_element_type=f32)     # (NQ, H)
    o1 = _gelu(jnp.dot(vh_f, out_w1T_ref[...], preferred_element_type=f32)
               + out_b1_ref[...])
    o2 = _gelu(jnp.dot(o1, out_w2T_ref[...], preferred_element_type=f32)
               + out_b2_ref[...])
    o3 = lax.dot_general(out_w3_ref[...], o2, dn_ab_t,
                         preferred_element_type=f32) + out_b3_ref[...]      # (1, NQ)
    o_ref[0] = x_row + o3


# ---------------- parameters (deterministic, synthetic) ----------------
def init_params(key):
    kit = iter(jax.random.split(key, 64))

    def w(shape, scale=0.1):
        return scale * jax.random.normal(next(kit), shape, jnp.float32)

    p = {}
    p["no_wT"] = w((NO_IN, NQ), 0.05)               # synthetic neural_operator surrogate
    p["k_emb_w"] = w((HIDDEN, INPUT_DIM))           # k_embedding_layer (torch (out,in), no bias)
    p["emb_w"] = w((3, HIDDEN))                     # embedding_layer1..3 weights (each (H,1) flattened)
    p["mha_w_in"] = w((3, HIDDEN, HIDDEN))          # MHA [WqT, WkT, WvT], each (in,out)
    p["mha_b_in"] = w((3, 1, HIDDEN), 0.01)
    p["mha_woT"] = w((HIDDEN, HIDDEN))
    p["mha_bo"] = w((1, HIDDEN), 0.01)
    p["kh1_emb_wT"] = w((HIDDEN, HIDDEN))           # kh1_embedding (no bias)
    p["vh_emb_w"] = w((HIDDEN, NQ))                 # vh_embedding_layer (torch (out,in), no bias)
    p["v_emb_w"] = w((1, HIDDEN))                   # v_embedding_layer weight ((H,1) flattened)
    # per-layer stacks (leading dim = NUM_LAYERS)
    p["g_wqT"] = w((NUM_LAYERS, HIDDEN, INNER))     # LinearAttention to_q (in,out)
    p["g_wkT"] = w((NUM_LAYERS, HIDDEN, INNER))     # LinearAttention to_k (in,out)
    p["g_woutT"] = w((NUM_LAYERS, INNER, HIDDEN))   # LinearAttention to_out (in,out)
    p["g_bout"] = w((NUM_LAYERS, 1, HIDDEN), 0.01)
    p["t_w"] = w((NUM_LAYERS, HIDDEN, 1))           # t_embeddings weight, stored as column
    p["t_b"] = w((NUM_LAYERS, HIDDEN, 1), 0.01)     # t_embeddings bias,   stored as column
    p["uh_w1T"] = w((NUM_LAYERS, HIDDEN + 1, HIDDEN))
    p["uh_b1"] = w((NUM_LAYERS, 1, HIDDEN), 0.01)
    p["uh_w2T"] = w((NUM_LAYERS, HIDDEN, HIDDEN))
    p["uh_b2"] = w((NUM_LAYERS, 1, HIDDEN), 0.01)
    p["uh_w3"] = w((NUM_LAYERS, HIDDEN, HIDDEN))    # torch (out,in) layout
    p["uh_b3"] = w((NUM_LAYERS, HIDDEN, 1), 0.01)   # bias stored as column
    p["vh_unemb_w"] = w((NQ, HIDDEN))               # vh_unembedding (torch (out,in), no bias)
    p["out_w1T"] = w((HIDDEN, HIDDEN)); p["out_b1"] = w((1, HIDDEN), 0.01)
    p["out_w2T"] = w((HIDDEN, HIDDEN)); p["out_b2"] = w((1, HIDDEN), 0.01)
    p["out_w3"] = w((1, HIDDEN));       p["out_b3"] = w((1, 1), 0.01)
    return p


# ---------------- forward pass: one fused pallas_call ----------------
def pitt2d_forward(params, queries, keys, values, t):
    B_ = values.shape[0]
    f32 = jnp.float32

    # One-time input formatting on the kernel INPUTS only (all intermediates of
    # the forward pass itself live in VMEM inside the single fused kernel).
    no_in = jnp.concatenate(
        [values.reshape(B_, 1, -1), queries.reshape(B_, 1, -1)], axis=-1).astype(f32)
    vlast = values[..., -1].reshape(B_, 1, NQ).astype(f32)
    kmax = jnp.max(keys)
    keysn = ((keys - kmax) / kmax).reshape(B_, 1, INPUT_DIM).astype(f32)
    t3 = t.reshape(B_, 1, 1).astype(f32)

    operands = (
        no_in, vlast, keysn, t3,
        params["no_wT"], params["k_emb_w"], params["emb_w"],
        params["mha_w_in"], params["mha_b_in"], params["mha_woT"], params["mha_bo"],
        params["kh1_emb_wT"], params["vh_emb_w"], params["v_emb_w"],
        params["g_wqT"], params["g_wkT"], params["g_woutT"], params["g_bout"],
        params["t_w"], params["t_b"],
        params["uh_w1T"], params["uh_b1"], params["uh_w2T"], params["uh_b2"],
        params["uh_w3"], params["uh_b3"],
        params["vh_unemb_w"],
        params["out_w1T"], params["out_b1"], params["out_w2T"], params["out_b2"],
        params["out_w3"], params["out_b3"],
    )

    in_specs = []
    for i, arr in enumerate(operands):
        if i < 4:                       # per-batch inputs: block the leading batch dim only
            in_specs.append(pl.BlockSpec((1,) + arr.shape[1:], lambda b: (b, 0, 0)))
        elif arr.ndim == 3:             # stacked weights: full-extent, shared across grid
            in_specs.append(pl.BlockSpec(arr.shape, lambda b: (0, 0, 0)))
        else:                           # 2-D weights: full-extent, shared across grid
            in_specs.append(pl.BlockSpec(arr.shape, lambda b: (0, 0)))

    out = pl.pallas_call(
        functools.partial(_pitt_fused_kernel,
                          num_heads=NUM_HEADS, num_layers=NUM_LAYERS),
        out_shape=jax.ShapeDtypeStruct((B_, 1, NQ), f32),
        grid=(B_,),
        in_specs=in_specs,
        out_specs=pl.BlockSpec((1, 1, NQ), lambda b: (b, 0, 0)),
        compiler_params=pltpu.CompilerParams(dimension_semantics=("parallel",)),
    )(*operands)
    return out.reshape(B_, OD1, OD2)


# ---------------- pure-JAX reference (mirrors the PyTorch forward) ----------------
def pitt2d_reference(params, queries, keys, values, t):
    B_ = values.shape[0]
    hp = lambda a, b: jnp.matmul(a, b, precision=lax.Precision.HIGHEST)

    no_in = jnp.concatenate([values.reshape(B_, -1), queries.reshape(B_, -1)], axis=-1)
    x = hp(no_in, params["no_wT"]).reshape(B_, OD1, OD2)
    dx = (x - values[..., -1]).reshape(B_, NQ)

    kmax = jnp.max(keys)
    keys_n = (keys - kmax) / kmax
    keys_e = hp(keys_n, params["k_emb_w"].T)                               # (B, H)
    h1 = keys_e[:, :, None] * params["emb_w"][0][None, None, :]
    h2 = keys_e[:, :, None] * params["emb_w"][1][None, None, :]
    h3 = keys_e[:, :, None] * params["emb_w"][2][None, None, :]

    wq, wk, wv = params["mha_w_in"]
    bq, bk, bv = params["mha_b_in"]
    q = hp(h1, wq) + bq
    k = hp(h2, wk) + bk
    v = hp(h3, wv) + bv
    hd = HIDDEN // NUM_HEADS
    qh = q.reshape(B_, HIDDEN, NUM_HEADS, hd).transpose(0, 2, 1, 3)
    kh = k.reshape(B_, HIDDEN, NUM_HEADS, hd).transpose(0, 2, 1, 3)
    vv = v.reshape(B_, HIDDEN, NUM_HEADS, hd).transpose(0, 2, 1, 3)
    s = jnp.einsum('bhid,bhjd->bhij', qh, kh,
                   precision=lax.Precision.HIGHEST) * (1.0 / float(hd) ** 0.5)
    pr = jax.nn.softmax(s, axis=-1)
    ctx = jnp.einsum('bhij,bhjd->bhid', pr, vv, precision=lax.Precision.HIGHEST)
    ctx = ctx.transpose(0, 2, 1, 3).reshape(B_, HIDDEN, HIDDEN)
    ah = hp(ctx, params["mha_woT"]) + params["mha_bo"]
    kh1 = hp(ah, params["kh1_emb_wT"])                                     # == kh2

    vh_e = hp(dx, params["vh_emb_w"].T)                                    # (B, H)
    vh = vh_e[:, :, None] * params["v_emb_w"][0][None, None, :]            # (B, H, H)

    t3 = t.reshape(B_, 1, 1)
    for l in range(NUM_LAYERS):
        Q = hp(kh1, params["g_wqT"][l])
        K = hp(kh1, params["g_wkT"][l])
        V = hp(vh, params["g_wkT"][l])
        dh2 = INNER // NUM_HEADS
        Qh = Q.reshape(B_, HIDDEN, NUM_HEADS, dh2).transpose(0, 2, 1, 3)
        Kh = K.reshape(B_, HIDDEN, NUM_HEADS, dh2).transpose(0, 2, 1, 3)
        Vh = V.reshape(B_, HIDDEN, NUM_HEADS, dh2).transpose(0, 2, 1, 3)
        dots = jnp.einsum('bhnd,bhne->bhde', Kh, Vh, precision=lax.Precision.HIGHEST)
        outg = jnp.einsum('bhnd,bhde->bhne', Qh, dots,
                          precision=lax.Precision.HIGHEST) * (1.0 / HIDDEN)
        outg = outg.transpose(0, 2, 1, 3).reshape(B_, HIDDEN, INNER)
        update = hp(outg, params["g_woutT"][l]) + params["g_bout"][l]

        t_frac = t3 * (l + 1) / NUM_LAYERS
        t_h = t_frac * params["t_w"][l][:, 0][None, None, :] \
            + params["t_b"][l][:, 0][None, None, :]                        # (B, 1, H)
        up_t = jnp.swapaxes(jnp.concatenate([update, t_h], axis=1), 1, 2)  # (B, H, H+1)
        a1 = _gelu(hp(up_t, params["uh_w1T"][l]) + params["uh_b1"][l])
        a2 = _gelu(hp(a1, params["uh_w2T"][l]) + params["uh_b2"][l])
        a3 = hp(a2, params["uh_w3"][l].T) + params["uh_b3"][l][:, 0][None, None, :]
        vh = vh + jnp.swapaxes(a3, 1, 2)

    vh_s = jnp.swapaxes(vh, 1, 2)
    vh_f = jnp.swapaxes(hp(vh_s, params["vh_unemb_w"].T), 1, 2)            # (B, NQ, H)
    o1 = _gelu(hp(vh_f, params["out_w1T"]) + params["out_b1"])
    o2 = _gelu(hp(o1, params["out_w2T"]) + params["out_b2"])
    o3 = hp(o2, params["out_w3"].T) + params["out_b3"][0, 0]               # (B, NQ, 1)
    return x + o3[..., 0].reshape(B_, OD1, OD2)


if __name__ == "__main__":
    key = jax.random.PRNGKey(0)
    kp, kq, kk, kv, kt = jax.random.split(key, 5)
    params = init_params(kp)
    queries = jax.random.normal(kq, (B, NQ, 2), jnp.float32)
    keys_in = jax.random.uniform(kk, (B, INPUT_DIM), jnp.float32, minval=0.5, maxval=2.0)
    values = jax.random.normal(kv, (B, OD1, OD2, T_STEPS), jnp.float32)
    t_in = jax.random.uniform(kt, (B,), jnp.float32, minval=0.1, maxval=1.0)

    fwd = jax.jit(pitt2d_forward)
    out = fwd(params, queries, keys_in, values, t_in)
    jax.block_until_ready(out)

    assert out.shape == (B, OD1, OD2) and out.dtype == jnp.float32
    assert bool(jnp.all(jnp.isfinite(out)))
    ref = pitt2d_reference(params, queries, keys_in, values, t_in)
    max_diff = float(jnp.max(jnp.abs(out - ref)))
    assert max_diff < 2e-2, f"fused kernel vs reference mismatch: {max_diff}"
    print("KERNEL_OK")
</pallas_src>

<mosaic_0001>
module attributes {stable_mosaic.version = 11 : i64} {
  func.func @_pitt_fused_kernel(%arg0: i32, %arg1: memref<1x1x384xf32, #tpu.memory_space<vmem>>, %arg2: memref<1x1x64xf32, #tpu.memory_space<vmem>>, %arg3: memref<1x1x16xf32, #tpu.memory_space<vmem>>, %arg4: memref<1x1x1xf32, #tpu.memory_space<vmem>>, %arg5: memref<384x64xf32, #tpu.memory_space<vmem>>, %arg6: memref<32x16xf32, #tpu.memory_space<vmem>>, %arg7: memref<3x32xf32, #tpu.memory_space<vmem>>, %arg8: memref<3x32x32xf32, #tpu.memory_space<vmem>>, %arg9: memref<3x1x32xf32, #tpu.memory_space<vmem>>, %arg10: memref<32x32xf32, #tpu.memory_space<vmem>>, %arg11: memref<1x32xf32, #tpu.memory_space<vmem>>, %arg12: memref<32x32xf32, #tpu.memory_space<vmem>>, %arg13: memref<32x64xf32, #tpu.memory_space<vmem>>, %arg14: memref<1x32xf32, #tpu.memory_space<vmem>>, %arg15: memref<2x32x128xf32, #tpu.memory_space<vmem>>, %arg16: memref<2x32x128xf32, #tpu.memory_space<vmem>>, %arg17: memref<2x128x32xf32, #tpu.memory_space<vmem>>, %arg18: memref<2x1x32xf32, #tpu.memory_space<vmem>>, %arg19: memref<2x32x1xf32, #tpu.memory_space<vmem>>, %arg20: memref<2x32x1xf32, #tpu.memory_space<vmem>>, %arg21: memref<2x33x32xf32, #tpu.memory_space<vmem>>, %arg22: memref<2x1x32xf32, #tpu.memory_space<vmem>>, %arg23: memref<2x32x32xf32, #tpu.memory_space<vmem>>, %arg24: memref<2x1x32xf32, #tpu.memory_space<vmem>>, %arg25: memref<2x32x32xf32, #tpu.memory_space<vmem>>, %arg26: memref<2x32x1xf32, #tpu.memory_space<vmem>>, %arg27: memref<64x32xf32, #tpu.memory_space<vmem>>, %arg28: memref<32x32xf32, #tpu.memory_space<vmem>>, %arg29: memref<1x32xf32, #tpu.memory_space<vmem>>, %arg30: memref<32x32xf32, #tpu.memory_space<vmem>>, %arg31: memref<1x32xf32, #tpu.memory_space<vmem>>, %arg32: memref<1x32xf32, #tpu.memory_space<vmem>>, %arg33: memref<1x1xf32, #tpu.memory_space<vmem>>, %arg34: memref<1x1x64xf32, #tpu.memory_space<vmem>>) attributes {dimension_semantics = [#tpu.dimension_semantics<parallel>], iteration_bounds = array<i64: 2>, scalar_prefetch = 0 : i64, scratch_operands = 0 : i64, tpu.core_type = #tpu.core_type<tc>, window_params = [{transform_indices = @transform_0, window_bounds = array<i64: 1, 1, 384>}, {transform_indices = @transform_1, window_bounds = array<i64: 1, 1, 64>}, {transform_indices = @transform_2, window_bounds = array<i64: 1, 1, 16>}, {transform_indices = @transform_3, window_bounds = array<i64: 1, 1, 1>}, {pipeline_mode = #tpu.pipeline_mode<synchronous>, transform_indices = @transform_4, window_bounds = array<i64: 384, 64>}, {pipeline_mode = #tpu.pipeline_mode<synchronous>, transform_indices = @transform_5, window_bounds = array<i64: 32, 16>}, {pipeline_mode = #tpu.pipeline_mode<synchronous>, transform_indices = @transform_6, window_bounds = array<i64: 3, 32>}, {pipeline_mode = #tpu.pipeline_mode<synchronous>, transform_indices = @transform_7, window_bounds = array<i64: 3, 32, 32>}, {pipeline_mode = #tpu.pipeline_mode<synchronous>, transform_indices = @transform_8, window_bounds = array<i64: 3, 1, 32>}, {pipeline_mode = #tpu.pipeline_mode<synchronous>, transform_indices = @transform_9, window_bounds = array<i64: 32, 32>}, {pipeline_mode = #tpu.pipeline_mode<synchronous>, transform_indices = @transform_10, window_bounds = array<i64: 1, 32>}, {pipeline_mode = #tpu.pipeline_mode<synchronous>, transform_indices = @transform_11, window_bounds = array<i64: 32, 32>}, {pipeline_mode = #tpu.pipeline_mode<synchronous>, transform_indices = @transform_12, window_bounds = array<i64: 32, 64>}, {pipeline_mode = #tpu.pipeline_mode<synchronous>, transform_indices = @transform_13, window_bounds = array<i64: 1, 32>}, {pipeline_mode = #tpu.pipeline_mode<synchronous>, transform_indices = @transform_14, window_bounds = array<i64: 2, 32, 128>}, {pipeline_mode = #tpu.pipeline_mode<synchronous>, transform_indices = @transform_15, window_bounds = array<i64: 2, 32, 128>}, {pipeline_mode = #tpu.pipeline_mode<synchronous>, transform_indices = @transform_16, window_bounds = array<i64: 2, 128, 32>}, {pipeline_mode = #tpu.pipeline_mode<synchronous>, transform_indices = @transform_17, window_bounds = array<i64: 2, 1, 32>}, {pipeline_mode = #tpu.pipeline_mode<synchronous>, transform_indices = @transform_18, window_bounds = array<i64: 2, 32, 1>}, {pipeline_mode = #tpu.pipeline_mode<synchronous>, transform_indices = @transform_19, window_bounds = array<i64: 2, 32, 1>}, {pipeline_mode = #tpu.pipeline_mode<synchronous>, transform_indices = @transform_20, window_bounds = array<i64: 2, 33, 32>}, {pipeline_mode = #tpu.pipeline_mode<synchronous>, transform_indices = @transform_21, window_bounds = array<i64: 2, 1, 32>}, {pipeline_mode = #tpu.pipeline_mode<synchronous>, transform_indices = @transform_22, window_bounds = array<i64: 2, 32, 32>}, {pipeline_mode = #tpu.pipeline_mode<synchronous>, transform_indices = @transform_23, window_bounds = array<i64: 2, 1, 32>}, {pipeline_mode = #tpu.pipeline_mode<synchronous>, transform_indices = @transform_24, window_bounds = array<i64: 2, 32, 32>}, {pipeline_mode = #tpu.pipeline_mode<synchronous>, transform_indices = @transform_25, window_bounds = array<i64: 2, 32, 1>}, {pipeline_mode = #tpu.pipeline_mode<synchronous>, transform_indices = @transform_26, window_bounds = array<i64: 64, 32>}, {pipeline_mode = #tpu.pipeline_mode<synchronous>, transform_indices = @transform_27, window_bounds = array<i64: 32, 32>}, {pipeline_mode = #tpu.pipeline_mode<synchronous>, transform_indices = @transform_28, window_bounds = array<i64: 1, 32>}, {pipeline_mode = #tpu.pipeline_mode<synchronous>, transform_indices = @transform_29, window_bounds = array<i64: 32, 32>}, {pipeline_mode = #tpu.pipeline_mode<synchronous>, transform_indices = @transform_30, window_bounds = array<i64: 1, 32>}, {pipeline_mode = #tpu.pipeline_mode<synchronous>, transform_indices = @transform_31, window_bounds = array<i64: 1, 32>}, {pipeline_mode = #tpu.pipeline_mode<synchronous>, transform_indices = @transform_32, window_bounds = array<i64: 1, 1>}, {transform_indices = @transform_33, window_bounds = array<i64: 1, 1, 64>}]} {
    %c0 = arith.constant 0 : index
    %c0_0 = arith.constant 0 : index
    %c0_1 = arith.constant 0 : index
    %0 = vector.load %arg1[%c0, %c0_0, %c0_1] : memref<1x1x384xf32, #tpu.memory_space<vmem>>, vector<1x1x384xf32>
    %1 = vector.shape_cast %0 : vector<1x1x384xf32> to vector<1x384xf32>
    %c0_2 = arith.constant 0 : index
    %c0_3 = arith.constant 0 : index
    %c0_4 = arith.constant 0 : index
    %2 = vector.load %arg2[%c0_2, %c0_3, %c0_4] : memref<1x1x64xf32, #tpu.memory_space<vmem>>, vector<1x1x64xf32>
    %3 = vector.shape_cast %2 : vector<1x1x64xf32> to vector<1x64xf32>
    %c0_5 = arith.constant 0 : index
    %c0_6 = arith.constant 0 : index
    %c0_7 = arith.constant 0 : index
    %4 = vector.load %arg3[%c0_5, %c0_6, %c0_7] : memref<1x1x16xf32, #tpu.memory_space<vmem>>, vector<1x1x16xf32>
    %5 = vector.shape_cast %4 : vector<1x1x16xf32> to vector<1x16xf32>
    %c0_8 = arith.constant 0 : index
    %c0_9 = arith.constant 0 : index
    %c0_10 = arith.constant 0 : index
    %6 = vector.load %arg4[%c0_8, %c0_9, %c0_10] : memref<1x1x1xf32, #tpu.memory_space<vmem>>, vector<1x1x1xf32>
    %7 = vector.shape_cast %6 : vector<1x1x1xf32> to vector<1x1xf32>
    %c0_11 = arith.constant 0 : index
    %c0_12 = arith.constant 0 : index
    %8 = vector.load %arg5[%c0_11, %c0_12] : memref<384x64xf32, #tpu.memory_space<vmem>>, vector<384x64xf32>
    %cst = arith.constant dense<0.000000e+00> : vector<1x64xf32>
    %9 = tpu.matmul %1, %8, %cst {dimension_numbers = #tpu.dot_dimension_numbers<[1], [0], [0], [1], [0, 0, 1, 1], [], []>} : vector<1x384xf32>, vector<384x64xf32>, vector<1x64xf32> -> vector<1x64xf32>
    %10 = arith.subf %9, %3 : vector<1x64xf32>
    %c0_13 = arith.constant 0 : index
    %c0_14 = arith.constant 0 : index
    %11 = vector.load %arg6[%c0_13, %c0_14] : memref<32x16xf32, #tpu.memory_space<vmem>>, vector<32x16xf32>
    %cst_15 = arith.constant dense<0.000000e+00> : vector<32x1xf32>
    %12 = tpu.matmul %11, %5, %cst_15 {dimension_numbers = #tpu.dot_dimension_numbers<[1], [1], [0], [0], [0, 0, 1, 0], [], []>} : vector<32x16xf32>, vector<1x16xf32>, vector<32x1xf32> -> vector<32x1xf32>
    %c0_16 = arith.constant 0 : index
    %c0_17 = arith.constant 0 : index
    %13 = vector.load %arg7[%c0_16, %c0_17] : memref<3x32xf32, #tpu.memory_space<vmem>>, vector<3x32xf32>
    %14 = vector.extract_strided_slice %13 {offsets = [0, 0], sizes = [1, 32], strides = [1, 1]} : vector<3x32xf32> to vector<1x32xf32>
    %15 = vector.broadcast %12 : vector<32x1xf32> to vector<32x32xf32>
    %16 = vector.broadcast %14 : vector<1x32xf32> to vector<32x32xf32>
    %17 = arith.mulf %15, %16 : vector<32x32xf32>
    %18 = vector.extract_strided_slice %13 {offsets = [1, 0], sizes = [1, 32], strides = [1, 1]} : vector<3x32xf32> to vector<1x32xf32>
    %19 = vector.broadcast %12 : vector<32x1xf32> to vector<32x32xf32>
    %20 = vector.broadcast %18 : vector<1x32xf32> to vector<32x32xf32>
    %21 = arith.mulf %19, %20 : vector<32x32xf32>
    %22 = vector.extract_strided_slice %13 {offsets = [2, 0], sizes = [1, 32], strides = [1, 1]} : vector<3x32xf32> to vector<1x32xf32>
    %23 = vector.broadcast %12 : vector<32x1xf32> to vector<32x32xf32>
    %24 = vector.broadcast %22 : vector<1x32xf32> to vector<32x32xf32>
    %25 = arith.mulf %23, %24 : vector<32x32xf32>
    %c0_18 = arith.constant 0 : index
    %c0_19 = arith.constant 0 : index
    %c0_20 = arith.constant 0 : index
    %26 = vector.load %arg8[%c0_18, %c0_19, %c0_20] : memref<3x32x32xf32, #tpu.memory_space<vmem>>, vector<1x32x32xf32>
    %27 = vector.shape_cast %26 : vector<1x32x32xf32> to vector<32x32xf32>
    %cst_21 = arith.constant dense<0.000000e+00> : vector<32x32xf32>
    %28 = tpu.matmul %17, %27, %cst_21 {dimension_numbers = #tpu.dot_dimension_numbers<[1], [0], [0], [1], [0, 0, 1, 1], [], []>} : vector<32x32xf32>, vector<32x32xf32>, vector<32x32xf32> -> vector<32x32xf32>
    %c0_22 = arith.constant 0 : index
    %c0_23 = arith.constant 0 : index
    %c0_24 = arith.constant 0 : index
    %29 = vector.load %arg9[%c0_22, %c0_23, %c0_24] : memref<3x1x32xf32, #tpu.memory_space<vmem>>, vector<1x1x32xf32>
    %30 = vector.shape_cast %29 : vector<1x1x32xf32> to vector<1x32xf32>
    %31 = vector.broadcast %30 : vector<1x32xf32> to vector<32x32xf32>
    %32 = arith.addf %28, %31 : vector<32x32xf32>
    %c1 = arith.constant 1 : index
    %c0_25 = arith.constant 0 : index
    %c0_26 = arith.constant 0 : index
    %33 = vector.load %arg8[%c1, %c0_25, %c0_26] : memref<3x32x32xf32, #tpu.memory_space<vmem>>, vector<1x32x32xf32>
    %34 = vector.shape_cast %33 : vector<1x32x32xf32> to vector<32x32xf32>
    %cst_27 = arith.constant dense<0.000000e+00> : vector<32x32xf32>
    %35 = tpu.matmul %21, %34, %cst_27 {dimension_numbers = #tpu.dot_dimension_numbers<[1], [0], [0], [1], [0, 0, 1, 1], [], []>} : vector<32x32xf32>, vector<32x32xf32>, vector<32x32xf32> -> vector<32x32xf32>
    %c1_28 = arith.constant 1 : index
    %c0_29 = arith.constant 0 : index
    %c0_30 = arith.constant 0 : index
    %36 = vector.load %arg9[%c1_28, %c0_29, %c0_30] : memref<3x1x32xf32, #tpu.memory_space<vmem>>, vector<1x1x32xf32>
    %37 = vector.shape_cast %36 : vector<1x1x32xf32> to vector<1x32xf32>
    %38 = vector.broadcast %37 : vector<1x32xf32> to vector<32x32xf32>
    %39 = arith.addf %35, %38 : vector<32x32xf32>
    %c2 = arith.constant 2 : index
    %c0_31 = arith.constant 0 : index
    %c0_32 = arith.constant 0 : index
    %40 = vector.load %arg8[%c2, %c0_31, %c0_32] : memref<3x32x32xf32, #tpu.memory_space<vmem>>, vector<1x32x32xf32>
    %41 = vector.shape_cast %40 : vector<1x32x32xf32> to vector<32x32xf32>
    %cst_33 = arith.constant dense<0.000000e+00> : vector<32x32xf32>
    %42 = tpu.matmul %25, %41, %cst_33 {dimension_numbers = #tpu.dot_dimension_numbers<[1], [0], [0], [1], [0, 0, 1, 1], [], []>} : vector<32x32xf32>, vector<32x32xf32>, vector<32x32xf32> -> vector<32x32xf32>
    %c2_34 = arith.constant 2 : index
    %c0_35 = arith.constant 0 : index
    %c0_36 = arith.constant 0 : index
    %43 = vector.load %arg9[%c2_34, %c0_35, %c0_36] : memref<3x1x32xf32, #tpu.memory_space<vmem>>, vector<1x1x32xf32>
    %44 = vector.shape_cast %43 : vector<1x1x32xf32> to vector<1x32xf32>
    %45 = vector.broadcast %44 : vector<1x32xf32> to vector<32x32xf32>
    %46 = arith.addf %42, %45 : vector<32x32xf32>
    %c0_37 = arith.constant 0 : index
    %c0_38 = arith.constant 0 : index
    %47 = vector.load %arg10[%c0_37, %c0_38] : memref<32x32xf32, #tpu.memory_space<vmem>>, vector<32x32xf32>
    %cst_39 = arith.constant 0.000000e+00 : f32
    %48 = vector.broadcast %cst_39 : f32 to vector<32x32xf32>
    %49 = vector.extract_strided_slice %32 {offsets = [0, 0], sizes = [32, 8], strides = [1, 1]} : vector<32x32xf32> to vector<32x8xf32>
    %cst_40 = arith.constant 0.353553385 : f32
    %50 = vector.broadcast %cst_40 : f32 to vector<32x8xf32>
    %51 = arith.mulf %49, %50 : vector<32x8xf32>
    %52 = vector.extract_strided_slice %39 {offsets = [0, 0], sizes = [32, 8], strides = [1, 1]} : vector<32x32xf32> to vector<32x8xf32>
    %cst_41 = arith.constant dense<0.000000e+00> : vector<32x32xf32>
    %53 = tpu.matmul %51, %52, %cst_41 {dimension_numbers = #tpu.dot_dimension_numbers<[1], [1], [0], [0], [0, 0, 1, 0], [], []>} : vector<32x8xf32>, vector<32x8xf32>, vector<32x32xf32> -> vector<32x32xf32>
    %cst_42 = arith.constant dense<0xFF800000> : vector<32xf32>
    %54 = vector.multi_reduction <maximumf>, %53, %cst_42 [1] : vector<32x32xf32> to vector<32xf32>
    %55 = vector.shape_cast %54 : vector<32xf32> to vector<32x1xf32>
    %56 = vector.broadcast %55 : vector<32x1xf32> to vector<32x32xf32>
    %57 = arith.subf %53, %56 : vector<32x32xf32>
    %58 = math.exp %57 : vector<32x32xf32>
    %cst_43 = arith.constant dense<0.000000e+00> : vector<32xf32>
    %59 = vector.multi_reduction <add>, %58, %cst_43 [1] : vector<32x32xf32> to vector<32xf32>
    %60 = vector.shape_cast %59 : vector<32xf32> to vector<32x1xf32>
    %61 = vector.broadcast %60 : vector<32x1xf32> to vector<32x32xf32>
    %62 = arith.divf %58, %61 : vector<32x32xf32>
    %63 = vector.extract_strided_slice %46 {offsets = [0, 0], sizes = [32, 8], strides = [1, 1]} : vector<32x32xf32> to vector<32x8xf32>
    %cst_44 = arith.constant dense<0.000000e+00> : vector<32x8xf32>
    %64 = tpu.matmul %62, %63, %cst_44 {dimension_numbers = #tpu.dot_dimension_numbers<[1], [0], [0], [1], [0, 0, 1, 1], [], []>} : vector<32x32xf32>, vector<32x8xf32>, vector<32x8xf32> -> vector<32x8xf32>
    %65 = vector.extract_strided_slice %47 {offsets = [0, 0], sizes = [8, 32], strides = [1, 1]} : vector<32x32xf32> to vector<8x32xf32>
    %cst_45 = arith.constant dense<0.000000e+00> : vector<32x32xf32>
    %66 = tpu.matmul %64, %65, %cst_45 {dimension_numbers = #tpu.dot_dimension_numbers<[1], [0], [0], [1], [0, 0, 1, 1], [], []>} : vector<32x8xf32>, vector<8x32xf32>, vector<32x32xf32> -> vector<32x32xf32>
    %67 = arith.addf %48, %66 : vector<32x32xf32>
    %68 = vector.extract_strided_slice %32 {offsets = [0, 8], sizes = [32, 8], strides = [1, 1]} : vector<32x32xf32> to vector<32x8xf32>
    %cst_46 = arith.constant 0.353553385 : f32
    %69 = vector.broadcast %cst_46 : f32 to vector<32x8xf32>
    %70 = arith.mulf %68, %69 : vector<32x8xf32>
    %71 = vector.extract_strided_slice %39 {offsets = [0, 8], sizes = [32, 8], strides = [1, 1]} : vector<32x32xf32> to vector<32x8xf32>
    %cst_47 = arith.constant dense<0.000000e+00> : vector<32x32xf32>
    %72 = tpu.matmul %70, %71, %cst_47 {dimension_numbers = #tpu.dot_dimension_numbers<[1], [1], [0], [0], [0, 0, 1, 0], [], []>} : vector<32x8xf32>, vector<32x8xf32>, vector<32x32xf32> -> vector<32x32xf32>
    %cst_48 = arith.constant dense<0xFF800000> : vector<32xf32>
    %73 = vector.multi_reduction <maximumf>, %72, %cst_48 [1] : vector<32x32xf32> to vector<32xf32>
    %74 = vector.shape_cast %73 : vector<32xf32> to vector<32x1xf32>
    %75 = vector.broadcast %74 : vector<32x1xf32> to vector<32x32xf32>
    %76 = arith.subf %72, %75 : vector<32x32xf32>
    %77 = math.exp %76 : vector<32x32xf32>
    %cst_49 = arith.constant dense<0.000000e+00> : vector<32xf32>
    %78 = vector.multi_reduction <add>, %77, %cst_49 [1] : vector<32x32xf32> to vector<32xf32>
    %79 = vector.shape_cast %78 : vector<32xf32> to vector<32x1xf32>
    %80 = vector.broadcast %79 : vector<32x1xf32> to vector<32x32xf32>
    %81 = arith.divf %77, %80 : vector<32x32xf32>
    %82 = vector.extract_strided_slice %46 {offsets = [0, 8], sizes = [32, 8], strides = [1, 1]} : vector<32x32xf32> to vector<32x8xf32>
    %cst_50 = arith.constant dense<0.000000e+00> : vector<32x8xf32>
    %83 = tpu.matmul %81, %82, %cst_50 {dimension_numbers = #tpu.dot_dimension_numbers<[1], [0], [0], [1], [0, 0, 1, 1], [], []>} : vector<32x32xf32>, vector<32x8xf32>, vector<32x8xf32> -> vector<32x8xf32>
    %84 = vector.extract_strided_slice %47 {offsets = [8, 0], sizes = [8, 32], strides = [1, 1]} : vector<32x32xf32> to vector<8x32xf32>
    %cst_51 = arith.constant dense<0.000000e+00> : vector<32x32xf32>
    %85 = tpu.matmul %83, %84, %cst_51 {dimension_numbers = #tpu.dot_dimension_numbers<[1], [0], [0], [1], [0, 0, 1, 1], [], []>} : vector<32x8xf32>, vector<8x32xf32>, vector<32x32xf32> -> vector<32x32xf32>
    %86 = arith.addf %67, %85 : vector<32x32xf32>
    %87 = vector.extract_strided_slice %32 {offsets = [0, 16], sizes = [32, 8], strides = [1, 1]} : vector<32x32xf32> to vector<32x8xf32>
    %cst_52 = arith.constant 0.353553385 : f32
    %88 = vector.broadcast %cst_52 : f32 to vector<32x8xf32>
    %89 = arith.mulf %87, %88 : vector<32x8xf32>
    %90 = vector.extract_strided_slice %39 {offsets = [0, 16], sizes = [32, 8], strides = [1, 1]} : vector<32x32xf32> to vector<32x8xf32>
    %cst_53 = arith.constant dense<0.000000e+00> : vector<32x32xf32>
    %91 = tpu.matmul %89, %90, %cst_53 {dimension_numbers = #tpu.dot_dimension_numbers<[1], [1], [0], [0], [0, 0, 1, 0], [], []>} : vector<32x8xf32>, vector<32x8xf32>, vector<32x32xf32> -> vector<32x32xf32>
    %cst_54 = arith.constant dense<0xFF800000> : vector<32xf32>
    %92 = vector.multi_reduction <maximumf>, %91, %cst_54 [1] : vector<32x32xf32> to vector<32xf32>
    %93 = vector.shape_cast %92 : vector<32xf32> to vector<32x1xf32>
    %94 = vector.broadcast %93 : vector<32x1xf32> to vector<32x32xf32>
    %95 = arith.subf %91, %94 : vector<32x32xf32>
    %96 = math.exp %95 : vector<32x32xf32>
    %cst_55 = arith.constant dense<0.000000e+00> : vector<32xf32>
    %97 = vector.multi_reduction <add>, %96, %cst_55 [1] : vector<32x32xf32> to vector<32xf32>
    %98 = vector.shape_cast %97 : vector<32xf32> to vector<32x1xf32>
    %99 = vector.broadcast %98 : vector<32x1xf32> to vector<32x32xf32>
    %100 = arith.divf %96, %99 : vector<32x32xf32>
    %101 = vector.extract_strided_slice %46 {offsets = [0, 16], sizes = [32, 8], strides = [1, 1]} : vector<32x32xf32> to vector<32x8xf32>
    %cst_56 = arith.constant dense<0.000000e+00> : vector<32x8xf32>
    %102 = tpu.matmul %100, %101, %cst_56 {dimension_numbers = #tpu.dot_dimension_numbers<[1], [0], [0], [1], [0, 0, 1, 1], [], []>} : vector<32x32xf32>, vector<32x8xf32>, vector<32x8xf32> -> vector<32x8xf32>
    %103 = vector.extract_strided_slice %47 {offsets = [16, 0], sizes = [8, 32], strides = [1, 1]} : vector<32x32xf32> to vector<8x32xf32>
    %cst_57 = arith.constant dense<0.000000e+00> : vector<32x32xf32>
    %104 = tpu.matmul %102, %103, %cst_57 {dimension_numbers = #tpu.dot_dimension_numbers<[1], [0], [0], [1], [0, 0, 1, 1], [], []>} : vector<32x8xf32>, vector<8x32xf32>, vector<32x32xf32> -> vector<32x32xf32>
    %105 = arith.addf %86, %104 : vector<32x32xf32>
    %106 = vector.extract_strided_slice %32 {offsets = [0, 24], sizes = [32, 8], strides = [1, 1]} : vector<32x32xf32> to vector<32x8xf32>
    %cst_58 = arith.constant 0.353553385 : f32
    %107 = vector.broadcast %cst_58 : f32 to vector<32x8xf32>
    %108 = arith.mulf %106, %107 : vector<32x8xf32>
    %109 = vector.extract_strided_slice %39 {offsets = [0, 24], sizes = [32, 8], strides = [1, 1]} : vector<32x32xf32> to vector<32x8xf32>
    %cst_59 = arith.constant dense<0.000000e+00> : vector<32x32xf32>
    %110 = tpu.matmul %108, %109, %cst_59 {dimension_numbers = #tpu.dot_dimension_numbers<[1], [1], [0], [0], [0, 0, 1, 0], [], []>} : vector<32x8xf32>, vector<32x8xf32>, vector<32x32xf32> -> vector<32x32xf32>
    %cst_60 = arith.constant dense<0xFF800000> : vector<32xf32>
    %111 = vector.multi_reduction <maximumf>, %110, %cst_60 [1] : vector<32x32xf32> to vector<32xf32>
    %112 = vector.shape_cast %111 : vector<32xf32> to vector<32x1xf32>
    %113 = vector.broadcast %112 : vector<32x1xf32> to vector<32x32xf32>
    %114 = arith.subf %110, %113 : vector<32x32xf32>
    %115 = math.exp %114 : vector<32x32xf32>
    %cst_61 = arith.constant dense<0.000000e+00> : vector<32xf32>
    %116 = vector.multi_reduction <add>, %115, %cst_61 [1] : vector<32x32xf32> to vector<32xf32>
    %117 = vector.shape_cast %116 : vector<32xf32> to vector<32x1xf32>
    %118 = vector.broadcast %117 : vector<32x1xf32> to vector<32x32xf32>
    %119 = arith.divf %115, %118 : vector<32x32xf32>
    %120 = vector.extract_strided_slice %46 {offsets = [0, 24], sizes = [32, 8], strides = [1, 1]} : vector<32x32xf32> to vector<32x8xf32>
    %cst_62 = arith.constant dense<0.000000e+00> : vector<32x8xf32>
    %121 = tpu.matmul %119, %120, %cst_62 {dimension_numbers = #tpu.dot_dimension_numbers<[1], [0], [0], [1], [0, 0, 1, 1], [], []>} : vector<32x32xf32>, vector<32x8xf32>, vector<32x8xf32> -> vector<32x8xf32>
    %122 = vector.extract_strided_slice %47 {offsets = [24, 0], sizes = [8, 32], strides = [1, 1]} : vector<32x32xf32> to vector<8x32xf32>
    %cst_63 = arith.constant dense<0.000000e+00> : vector<32x32xf32>
    %123 = tpu.matmul %121, %122, %cst_63 {dimension_numbers = #tpu.dot_dimension_numbers<[1], [0], [0], [1], [0, 0, 1, 1], [], []>} : vector<32x8xf32>, vector<8x32xf32>, vector<32x32xf32> -> vector<32x32xf32>
    %124 = arith.addf %105, %123 : vector<32x32xf32>
    %c0_64 = arith.constant 0 : index
    %c0_65 = arith.constant 0 : index
    %125 = vector.load %arg11[%c0_64, %c0_65] : memref<1x32xf32, #tpu.memory_space<vmem>>, vector<1x32xf32>
    %126 = vector.broadcast %125 : vector<1x32xf32> to vector<32x32xf32>
    %127 = arith.addf %124, %126 : vector<32x32xf32>
    %c0_66 = arith.constant 0 : index
    %c0_67 = arith.constant 0 : index
    %128 = vector.load %arg12[%c0_66, %c0_67] : memref<32x32xf32, #tpu.memory_space<vmem>>, vector<32x32xf32>
    %cst_68 = arith.constant dense<0.000000e+00> : vector<32x32xf32>
    %129 = tpu.matmul %127, %128, %cst_68 {dimension_numbers = #tpu.dot_dimension_numbers<[1], [0], [0], [1], [0, 0, 1, 1], [], []>} : vector<32x32xf32>, vector<32x32xf32>, vector<32x32xf32> -> vector<32x32xf32>
    %c0_69 = arith.constant 0 : index
    %c0_70 = arith.constant 0 : index
    %130 = vector.load %arg13[%c0_69, %c0_70] : memref<32x64xf32, #tpu.memory_space<vmem>>, vector<32x64xf32>
    %cst_71 = arith.constant dense<0.000000e+00> : vector<32x1xf32>
    %131 = tpu.matmul %130, %10, %cst_71 {dimension_numbers = #tpu.dot_dimension_numbers<[1], [1], [0], [0], [0, 0, 1, 0], [], []>} : vector<32x64xf32>, vector<1x64xf32>, vector<32x1xf32> -> vector<32x1xf32>
    %c0_72 = arith.constant 0 : index
    %c0_73 = arith.constant 0 : index
    %132 = vector.load %arg14[%c0_72, %c0_73] : memref<1x32xf32, #tpu.memory_space<vmem>>, vector<1x32xf32>
    %133 = vector.broadcast %131 : vector<32x1xf32> to vector<32x32xf32>
    %134 = vector.broadcast %132 : vector<1x32xf32> to vector<32x32xf32>
    %135 = arith.mulf %133, %134 : vector<32x32xf32>
    %c0_74 = arith.constant 0 : index
    %c0_75 = arith.constant 0 : index
    %c0_76 = arith.constant 0 : index
    %136 = vector.load %arg15[%c0_74, %c0_75, %c0_76] : memref<2x32x128xf32, #tpu.memory_space<vmem>>, vector<1x32x128xf32>
    %137 = vector.shape_cast %136 : vector<1x32x128xf32> to vector<32x128xf32>
    %cst_77 = arith.constant dense<0.000000e+00> : vector<32x128xf32>
    %138 = tpu.matmul %129, %137, %cst_77 {dimension_numbers = #tpu.dot_dimension_numbers<[1], [0], [0], [1], [0, 0, 1, 1], [], []>} : vector<32x32xf32>, vector<32x128xf32>, vector<32x128xf32> -> vector<32x128xf32>
    %c0_78 = arith.constant 0 : index
    %c0_79 = arith.constant 0 : index
    %c0_80 = arith.constant 0 : index
    %139 = vector.load %arg16[%c0_78, %c0_79, %c0_80] : memref<2x32x128xf32, #tpu.memory_space<vmem>>, vector<1x32x128xf32>
    %140 = vector.shape_cast %139 : vector<1x32x128xf32> to vector<32x128xf32>
    %cst_81 = arith.constant dense<0.000000e+00> : vector<32x128xf32>
    %141 = tpu.matmul %129, %140, %cst_81 {dimension_numbers = #tpu.dot_dimension_numbers<[1], [0], [0], [1], [0, 0, 1, 1], [], []>} : vector<32x32xf32>, vector<32x128xf32>, vector<32x128xf32> -> vector<32x128xf32>
    %c0_82 = arith.constant 0 : index
    %c0_83 = arith.constant 0 : index
    %c0_84 = arith.constant 0 : index
    %142 = vector.load %arg16[%c0_82, %c0_83, %c0_84] : memref<2x32x128xf32, #tpu.memory_space<vmem>>, vector<1x32x128xf32>
    %143 = vector.shape_cast %142 : vector<1x32x128xf32> to vector<32x128xf32>
    %cst_85 = arith.constant dense<0.000000e+00> : vector<32x128xf32>
    %144 = tpu.matmul %135, %143, %cst_85 {dimension_numbers = #tpu.dot_dimension_numbers<[1], [0], [0], [1], [0, 0, 1, 1], [], []>} : vector<32x32xf32>, vector<32x128xf32>, vector<32x128xf32> -> vector<32x128xf32>
    %c0_86 = arith.constant 0 : index
    %c0_87 = arith.constant 0 : index
    %c0_88 = arith.constant 0 : index
    %145 = vector.load %arg17[%c0_86, %c0_87, %c0_88] : memref<2x128x32xf32, #tpu.memory_space<vmem>>, vector<1x128x32xf32>
    %146 = vector.shape_cast %145 : vector<1x128x32xf32> to vector<128x32xf32>
    %cst_89 = arith.constant 0.000000e+00 : f32
    %147 = vector.broadcast %cst_89 : f32 to vector<32x32xf32>
    %148 = vector.extract_strided_slice %141 {offsets = [0, 0], sizes = [32, 32], strides = [1, 1]} : vector<32x128xf32> to vector<32x32xf32>
    %149 = vector.extract_strided_slice %144 {offsets = [0, 0], sizes = [32, 32], strides = [1, 1]} : vector<32x128xf32> to vector<32x32xf32>
    %cst_90 = arith.constant dense<0.000000e+00> : vector<32x32xf32>
    %150 = tpu.matmul %148, %149, %cst_90 {dimension_numbers = #tpu.dot_dimension_numbers<[0], [0], [1], [1], [0, 1, 1, 1], [], []>} : vector<32x32xf32>, vector<32x32xf32>, vector<32x32xf32> -> vector<32x32xf32>
    %151 = vector.extract_strided_slice %138 {offsets = [0, 0], sizes = [32, 32], strides = [1, 1]} : vector<32x128xf32> to vector<32x32xf32>
    %cst_91 = arith.constant dense<0.000000e+00> : vector<32x32xf32>
    %152 = tpu.matmul %151, %150, %cst_91 {dimension_numbers = #tpu.dot_dimension_numbers<[1], [0], [0], [1], [0, 0, 1, 1], [], []>} : vector<32x32xf32>, vector<32x32xf32>, vector<32x32xf32> -> vector<32x32xf32>
    %153 = vector.extract_strided_slice %146 {offsets = [0, 0], sizes = [32, 32], strides = [1, 1]} : vector<128x32xf32> to vector<32x32xf32>
    %cst_92 = arith.constant dense<0.000000e+00> : vector<32x32xf32>
    %154 = tpu.matmul %152, %153, %cst_92 {dimension_numbers = #tpu.dot_dimension_numbers<[1], [0], [0], [1], [0, 0, 1, 1], [], []>} : vector<32x32xf32>, vector<32x32xf32>, vector<32x32xf32> -> vector<32x32xf32>
    %155 = arith.addf %147, %154 : vector<32x32xf32>
    %156 = vector.extract_strided_slice %141 {offsets = [0, 32], sizes = [32, 32], strides = [1, 1]} : vector<32x128xf32> to vector<32x32xf32>
    %157 = vector.extract_strided_slice %144 {offsets = [0, 32], sizes = [32, 32], strides = [1, 1]} : vector<32x128xf32> to vector<32x32xf32>
    %cst_93 = arith.constant dense<0.000000e+00> : vector<32x32xf32>
    %158 = tpu.matmul %156, %157, %cst_93 {dimension_numbers = #tpu.dot_dimension_numbers<[0], [0], [1], [1], [0, 1, 1, 1], [], []>} : vector<32x32xf32>, vector<32x32xf32>, vector<32x32xf32> -> vector<32x32xf32>
    %159 = vector.extract_strided_slice %138 {offsets = [0, 32], sizes = [32, 32], strides = [1, 1]} : vector<32x128xf32> to vector<32x32xf32>
    %cst_94 = arith.constant dense<0.000000e+00> : vector<32x32xf32>
    %160 = tpu.matmul %159, %158, %cst_94 {dimension_numbers = #tpu.dot_dimension_numbers<[1], [0], [0], [1], [0, 0, 1, 1], [], []>} : vector<32x32xf32>, vector<32x32xf32>, vector<32x32xf32> -> vector<32x32xf32>
    %161 = vector.extract_strided_slice %146 {offsets = [32, 0], sizes = [32, 32], strides = [1, 1]} : vector<128x32xf32> to vector<32x32xf32>
    %cst_95 = arith.constant dense<0.000000e+00> : vector<32x32xf32>
    %162 = tpu.matmul %160, %161, %cst_95 {dimension_numbers = #tpu.dot_dimension_numbers<[1], [0], [0], [1], [0, 0, 1, 1], [], []>} : vector<32x32xf32>, vector<32x32xf32>, vector<32x32xf32> -> vector<32x32xf32>
    %163 = arith.addf %155, %162 : vector<32x32xf32>
    %164 = vector.extract_strided_slice %141 {offsets = [0, 64], sizes = [32, 32], strides = [1, 1]} : vector<32x128xf32> to vector<32x32xf32>
    %165 = vector.extract_strided_slice %144 {offsets = [0, 64], sizes = [32, 32], strides = [1, 1]} : vector<32x128xf32> to vector<32x32xf32>
    %cst_96 = arith.constant dense<0.000000e+00> : vector<32x32xf32>
    %166 = tpu.matmul %164, %165, %cst_96 {dimension_numbers = #tpu.dot_dimension_numbers<[0], [0], [1], [1], [0, 1, 1, 1], [], []>} : vector<32x32xf32>, vector<32x32xf32>, vector<32x32xf32> -> vector<32x32xf32>
    %167 = vector.extract_strided_slice %138 {offsets = [0, 64], sizes = [32, 32], strides = [1, 1]} : vector<32x128xf32> to vector<32x32xf32>
    %cst_97 = arith.constant dense<0.000000e+00> : vector<32x32xf32>
    %168 = tpu.matmul %167, %166, %cst_97 {dimension_numbers = #tpu.dot_dimension_numbers<[1], [0], [0], [1], [0, 0, 1, 1], [], []>} : vector<32x32xf32>, vector<32x32xf32>, vector<32x32xf32> -> vector<32x32xf32>
    %169 = vector.extract_strided_slice %146 {offsets = [64, 0], sizes = [32, 32], strides = [1, 1]} : vector<128x32xf32> to vector<32x32xf32>
    %cst_98 = arith.constant dense<0.000000e+00> : vector<32x32xf32>
    %170 = tpu.matmul %168, %169, %cst_98 {dimension_numbers = #tpu.dot_dimension_numbers<[1], [0], [0], [1], [0, 0, 1, 1], [], []>} : vector<32x32xf32>, vector<32x32xf32>, vector<32x32xf32> -> vector<32x32xf32>
    %171 = arith.addf %163, %170 : vector<32x32xf32>
    %172 = vector.extract_strided_slice %141 {offsets = [0, 96], sizes = [32, 32], strides = [1, 1]} : vector<32x128xf32> to vector<32x32xf32>
    %173 = vector.extract_strided_slice %144 {offsets = [0, 96], sizes = [32, 32], strides = [1, 1]} : vector<32x128xf32> to vector<32x32xf32>
    %cst_99 = arith.constant dense<0.000000e+00> : vector<32x32xf32>
    %174 = tpu.matmul %172, %173, %cst_99 {dimension_numbers = #tpu.dot_dimension_numbers<[0], [0], [1], [1], [0, 1, 1, 1], [], []>} : vector<32x32xf32>, vector<32x32xf32>, vector<32x32xf32> -> vector<32x32xf32>
    %175 = vector.extract_strided_slice %138 {offsets = [0, 96], sizes = [32, 32], strides = [1, 1]} : vector<32x128xf32> to vector<32x32xf32>
    %cst_100 = arith.constant dense<0.000000e+00> : vector<32x32xf32>
    %176 = tpu.matmul %175, %174, %cst_100 {dimension_numbers = #tpu.dot_dimension_numbers<[1], [0], [0], [1], [0, 0, 1, 1], [], []>} : vector<32x32xf32>, vector<32x32xf32>, vector<32x32xf32> -> vector<32x32xf32>
    %177 = vector.extract_strided_slice %146 {offsets = [96, 0], sizes = [32, 32], strides = [1, 1]} : vector<128x32xf32> to vector<32x32xf32>
    %cst_101 = arith.constant dense<0.000000e+00> : vector<32x32xf32>
    %178 = tpu.matmul %176, %177, %cst_101 {dimension_numbers = #tpu.dot_dimension_numbers<[1], [0], [0], [1], [0, 0, 1, 1], [], []>} : vector<32x32xf32>, vector<32x32xf32>, vector<32x32xf32> -> vector<32x32xf32>
    %179 = arith.addf %171, %178 : vector<32x32xf32>
    %cst_102 = arith.constant 3.125000e-02 : f32
    %180 = vector.broadcast %cst_102 : f32 to vector<32x32xf32>
    %181 = arith.mulf %179, %180 : vector<32x32xf32>
    %c0_103 = arith.constant 0 : index
    %c0_104 = arith.constant 0 : index
    %c0_105 = arith.constant 0 : index
    %182 = vector.load %arg18[%c0_103, %c0_104, %c0_105] : memref<2x1x32xf32, #tpu.memory_space<vmem>>, vector<1x1x32xf32>
    %183 = vector.shape_cast %182 : vector<1x1x32xf32> to vector<1x32xf32>
    %184 = vector.broadcast %183 : vector<1x32xf32> to vector<32x32xf32>
    %185 = arith.addf %181, %184 : vector<32x32xf32>
    %cst_106 = arith.constant 5.000000e-01 : f32
    %186 = vector.broadcast %cst_106 : f32 to vector<1x1xf32>
    %187 = arith.mulf %7, %186 : vector<1x1xf32>
    %c0_107 = arith.constant 0 : index
    %c0_108 = arith.constant 0 : index
    %c0_109 = arith.constant 0 : index
    %188 = vector.load %arg19[%c0_107, %c0_108, %c0_109] : memref<2x32x1xf32, #tpu.memory_space<vmem>>, vector<1x32x1xf32>
    %189 = vector.shape_cast %188 : vector<1x32x1xf32> to vector<32x1xf32>
    %190 = vector.broadcast %187 : vector<1x1xf32> to vector<32x1xf32>
    %191 = arith.mulf %190, %189 : vector<32x1xf32>
    %c0_110 = arith.constant 0 : index
    %c0_111 = arith.constant 0 : index
    %c0_112 = arith.constant 0 : index
    %192 = vector.load %arg20[%c0_110, %c0_111, %c0_112] : memref<2x32x1xf32, #tpu.memory_space<vmem>>, vector<1x32x1xf32>
    %193 = vector.shape_cast %192 : vector<1x32x1xf32> to vector<32x1xf32>
    %194 = arith.addf %191, %193 : vector<32x1xf32>
    %c0_113 = arith.constant 0 : index
    %c0_114 = arith.constant 0 : index
    %c0_115 = arith.constant 0 : index
    %195 = vector.load %arg21[%c0_113, %c0_114, %c0_115] : memref<2x33x32xf32, #tpu.memory_space<vmem>>, vector<1x33x32xf32>
    %196 = vector.shape_cast %195 : vector<1x33x32xf32> to vector<33x32xf32>
    %197 = vector.extract_strided_slice %196 {offsets = [0, 0], sizes = [32, 32], strides = [1, 1]} : vector<33x32xf32> to vector<32x32xf32>
    %cst_116 = arith.constant dense<0.000000e+00> : vector<32x32xf32>
    %198 = tpu.matmul %185, %197, %cst_116 {dimension_numbers = #tpu.dot_dimension_numbers<[0], [0], [1], [1], [0, 1, 1, 1], [], []>} : vector<32x32xf32>, vector<32x32xf32>, vector<32x32xf32> -> vector<32x32xf32>
    %199 = vector.extract_strided_slice %196 {offsets = [32, 0], sizes = [1, 32], strides = [1, 1]} : vector<33x32xf32> to vector<1x32xf32>
    %200 = vector.broadcast %194 : vector<32x1xf32> to vector<32x32xf32>
    %201 = vector.broadcast %199 : vector<1x32xf32> to vector<32x32xf32>
    %202 = arith.mulf %200, %201 : vector<32x32xf32>
    %203 = arith.addf %198, %202 : vector<32x32xf32>
    %c0_117 = arith.constant 0 : index
    %c0_118 = arith.constant 0 : index
    %c0_119 = arith.constant 0 : index
    %204 = vector.load %arg22[%c0_117, %c0_118, %c0_119] : memref<2x1x32xf32, #tpu.memory_space<vmem>>, vector<1x1x32xf32>
    %205 = vector.shape_cast %204 : vector<1x1x32xf32> to vector<1x32xf32>
    %206 = vector.broadcast %205 : vector<1x32xf32> to vector<32x32xf32>
    %207 = arith.addf %203, %206 : vector<32x32xf32>
    %cst_120 = arith.constant 0.707106769 : f32
    %208 = vector.broadcast %cst_120 : f32 to vector<32x32xf32>
    %209 = arith.mulf %207, %208 : vector<32x32xf32>
    %cst_121 = arith.constant 0.000000e+00 : f32
    %210 = vector.broadcast %cst_121 : f32 to vector<32x32xf32>
    %211 = arith.cmpf oge, %209, %210 : vector<32x32xf32>
    %cst_122 = arith.constant 1.000000e+00 : f32
    %cst_123 = arith.constant -1.000000e+00 : f32
    %212 = vector.broadcast %cst_122 : f32 to vector<32x32xf32>
    %213 = vector.broadcast %cst_123 : f32 to vector<32x32xf32>
    %214 = arith.select %211, %212, %213 : vector<32x32xi1>, vector<32x32xf32>
    %215 = math.absf %209 : vector<32x32xf32>
    %cst_124 = arith.constant 0.327591091 : f32
    %216 = vector.broadcast %cst_124 : f32 to vector<32x32xf32>
    %217 = arith.mulf %216, %215 : vector<32x32xf32>
    %cst_125 = arith.constant 1.000000e+00 : f32
    %218 = vector.broadcast %cst_125 : f32 to vector<32x32xf32>
    %219 = arith.addf %218, %217 : vector<32x32xf32>
    %cst_126 = arith.constant 1.000000e+00 : f32
    %220 = vector.broadcast %cst_126 : f32 to vector<32x32xf32>
    %221 = arith.divf %220, %219 : vector<32x32xf32>
    %cst_127 = arith.constant 1.06140542 : f32
    %222 = vector.broadcast %cst_127 : f32 to vector<32x32xf32>
    %223 = arith.mulf %222, %221 : vector<32x32xf32>
    %cst_128 = arith.constant -1.45315206 : f32
    %224 = vector.broadcast %cst_128 : f32 to vector<32x32xf32>
    %225 = arith.addf %223, %224 : vector<32x32xf32>
    %226 = arith.mulf %225, %221 : vector<32x32xf32>
    %cst_129 = arith.constant 1.42141378 : f32
    %227 = vector.broadcast %cst_129 : f32 to vector<32x32xf32>
    %228 = arith.addf %226, %227 : vector<32x32xf32>
    %229 = arith.mulf %228, %221 : vector<32x32xf32>
    %cst_130 = arith.constant -0.284496725 : f32
    %230 = vector.broadcast %cst_130 : f32 to vector<32x32xf32>
    %231 = arith.addf %229, %230 : vector<32x32xf32>
    %232 = arith.mulf %231, %221 : vector<32x32xf32>
    %cst_131 = arith.constant 0.254829586 : f32
    %233 = vector.broadcast %cst_131 : f32 to vector<32x32xf32>
    %234 = arith.addf %232, %233 : vector<32x32xf32>
    %235 = arith.mulf %234, %221 : vector<32x32xf32>
    %cst_132 = arith.constant 0.000000e+00 : f32
    %236 = vector.broadcast %cst_132 : f32 to vector<32x32xf32>
    %237 = arith.subf %236, %215 : vector<32x32xf32>
    %238 = arith.mulf %237, %215 : vector<32x32xf32>
    %239 = math.exp %238 : vector<32x32xf32>
    %240 = arith.mulf %235, %239 : vector<32x32xf32>
    %cst_133 = arith.constant 1.000000e+00 : f32
    %241 = vector.broadcast %cst_133 : f32 to vector<32x32xf32>
    %242 = arith.subf %241, %240 : vector<32x32xf32>
    %243 = arith.mulf %214, %242 : vector<32x32xf32>
    %cst_134 = arith.constant 5.000000e-01 : f32
    %244 = vector.broadcast %cst_134 : f32 to vector<32x32xf32>
    %245 = arith.mulf %244, %207 : vector<32x32xf32>
    %cst_135 = arith.constant 1.000000e+00 : f32
    %246 = vector.broadcast %cst_135 : f32 to vector<32x32xf32>
    %247 = arith.addf %246, %243 : vector<32x32xf32>
    %248 = arith.mulf %245, %247 : vector<32x32xf32>
    %c0_136 = arith.constant 0 : index
    %c0_137 = arith.constant 0 : index
    %c0_138 = arith.constant 0 : index
    %249 = vector.load %arg23[%c0_136, %c0_137, %c0_138] : memref<2x32x32xf32, #tpu.memory_space<vmem>>, vector<1x32x32xf32>
    %250 = vector.shape_cast %249 : vector<1x32x32xf32> to vector<32x32xf32>
    %cst_139 = arith.constant dense<0.000000e+00> : vector<32x32xf32>
    %251 = tpu.matmul %248, %250, %cst_139 {dimension_numbers = #tpu.dot_dimension_numbers<[1], [0], [0], [1], [0, 0, 1, 1], [], []>} : vector<32x32xf32>, vector<32x32xf32>, vector<32x32xf32> -> vector<32x32xf32>
    %c0_140 = arith.constant 0 : index
    %c0_141 = arith.constant 0 : index
    %c0_142 = arith.constant 0 : index
    %252 = vector.load %arg24[%c0_140, %c0_141, %c0_142] : memref<2x1x32xf32, #tpu.memory_space<vmem>>, vector<1x1x32xf32>
    %253 = vector.shape_cast %252 : vector<1x1x32xf32> to vector<1x32xf32>
    %254 = vector.broadcast %253 : vector<1x32xf32> to vector<32x32xf32>
    %255 = arith.addf %251, %254 : vector<32x32xf32>
    %cst_143 = arith.constant 0.707106769 : f32
    %256 = vector.broadcast %cst_143 : f32 to vector<32x32xf32>
    %257 = arith.mulf %255, %256 : vector<32x32xf32>
    %cst_144 = arith.constant 0.000000e+00 : f32
    %258 = vector.broadcast %cst_144 : f32 to vector<32x32xf32>
    %259 = arith.cmpf oge, %257, %258 : vector<32x32xf32>
    %cst_145 = arith.constant 1.000000e+00 : f32
    %cst_146 = arith.constant -1.000000e+00 : f32
    %260 = vector.broadcast %cst_145 : f32 to vector<32x32xf32>
    %261 = vector.broadcast %cst_146 : f32 to vector<32x32xf32>
    %262 = arith.select %259, %260, %261 : vector<32x32xi1>, vector<32x32xf32>
    %263 = math.absf %257 : vector<32x32xf32>
    %cst_147 = arith.constant 0.327591091 : f32
    %264 = vector.broadcast %cst_147 : f32 to vector<32x32xf32>
    %265 = arith.mulf %264, %263 : vector<32x32xf32>
    %cst_148 = arith.constant 1.000000e+00 : f32
    %266 = vector.broadcast %cst_148 : f32 to vector<32x32xf32>
    %267 = arith.addf %266, %265 : vector<32x32xf32>
    %cst_149 = arith.constant 1.000000e+00 : f32
    %268 = vector.broadcast %cst_149 : f32 to vector<32x32xf32>
    %269 = arith.divf %268, %267 : vector<32x32xf32>
    %cst_150 = arith.constant 1.06140542 : f32
    %270 = vector.broadcast %cst_150 : f32 to vector<32x32xf32>
    %271 = arith.mulf %270, %269 : vector<32x32xf32>
    %cst_151 = arith.constant -1.45315206 : f32
    %272 = vector.broadcast %cst_151 : f32 to vector<32x32xf32>
    %273 = arith.addf %271, %272 : vector<32x32xf32>
    %274 = arith.mulf %273, %269 : vector<32x32xf32>
    %cst_152 = arith.constant 1.42141378 : f32
    %275 = vector.broadcast %cst_152 : f32 to vector<32x32xf32>
    %276 = arith.addf %274, %275 : vector<32x32xf32>
    %277 = arith.mulf %276, %269 : vector<32x32xf32>
    %cst_153 = arith.constant -0.284496725 : f32
    %278 = vector.broadcast %cst_153 : f32 to vector<32x32xf32>
    %279 = arith.addf %277, %278 : vector<32x32xf32>
    %280 = arith.mulf %279, %269 : vector<32x32xf32>
    %cst_154 = arith.constant 0.254829586 : f32
    %281 = vector.broadcast %cst_154 : f32 to vector<32x32xf32>
    %282 = arith.addf %280, %281 : vector<32x32xf32>
    %283 = arith.mulf %282, %269 : vector<32x32xf32>
    %cst_155 = arith.constant 0.000000e+00 : f32
    %284 = vector.broadcast %cst_155 : f32 to vector<32x32xf32>
    %285 = arith.subf %284, %263 : vector<32x32xf32>
    %286 = arith.mulf %285, %263 : vector<32x32xf32>
    %287 = math.exp %286 : vector<32x32xf32>
    %288 = arith.mulf %283, %287 : vector<32x32xf32>
    %cst_156 = arith.constant 1.000000e+00 : f32
    %289 = vector.broadcast %cst_156 : f32 to vector<32x32xf32>
    %290 = arith.subf %289, %288 : vector<32x32xf32>
    %291 = arith.mulf %262, %290 : vector<32x32xf32>
    %cst_157 = arith.constant 5.000000e-01 : f32
    %292 = vector.broadcast %cst_157 : f32 to vector<32x32xf32>
    %293 = arith.mulf %292, %255 : vector<32x32xf32>
    %cst_158 = arith.constant 1.000000e+00 : f32
    %294 = vector.broadcast %cst_158 : f32 to vector<32x32xf32>
    %295 = arith.addf %294, %291 : vector<32x32xf32>
    %296 = arith.mulf %293, %295 : vector<32x32xf32>
    %c0_159 = arith.constant 0 : index
    %c0_160 = arith.constant 0 : index
    %c0_161 = arith.constant 0 : index
    %297 = vector.load %arg25[%c0_159, %c0_160, %c0_161] : memref<2x32x32xf32, #tpu.memory_space<vmem>>, vector<1x32x32xf32>
    %298 = vector.shape_cast %297 : vector<1x32x32xf32> to vector<32x32xf32>
    %cst_162 = arith.constant dense<0.000000e+00> : vector<32x32xf32>
    %299 = tpu.matmul %298, %296, %cst_162 {dimension_numbers = #tpu.dot_dimension_numbers<[1], [1], [0], [0], [0, 0, 1, 0], [], []>} : vector<32x32xf32>, vector<32x32xf32>, vector<32x32xf32> -> vector<32x32xf32>
    %c0_163 = arith.constant 0 : index
    %c0_164 = arith.constant 0 : index
    %c0_165 = arith.constant 0 : index
    %300 = vector.load %arg26[%c0_163, %c0_164, %c0_165] : memref<2x32x1xf32, #tpu.memory_space<vmem>>, vector<1x32x1xf32>
    %301 = vector.shape_cast %300 : vector<1x32x1xf32> to vector<32x1xf32>
    %302 = vector.broadcast %301 : vector<32x1xf32> to vector<32x32xf32>
    %303 = arith.addf %299, %302 : vector<32x32xf32>
    %304 = arith.addf %135, %303 : vector<32x32xf32>
    %c1_166 = arith.constant 1 : index
    %c0_167 = arith.constant 0 : index
    %c0_168 = arith.constant 0 : index
    %305 = vector.load %arg15[%c1_166, %c0_167, %c0_168] : memref<2x32x128xf32, #tpu.memory_space<vmem>>, vector<1x32x128xf32>
    %306 = vector.shape_cast %305 : vector<1x32x128xf32> to vector<32x128xf32>
    %cst_169 = arith.constant dense<0.000000e+00> : vector<32x128xf32>
    %307 = tpu.matmul %129, %306, %cst_169 {dimension_numbers = #tpu.dot_dimension_numbers<[1], [0], [0], [1], [0, 0, 1, 1], [], []>} : vector<32x32xf32>, vector<32x128xf32>, vector<32x128xf32> -> vector<32x128xf32>
    %c1_170 = arith.constant 1 : index
    %c0_171 = arith.constant 0 : index
    %c0_172 = arith.constant 0 : index
    %308 = vector.load %arg16[%c1_170, %c0_171, %c0_172] : memref<2x32x128xf32, #tpu.memory_space<vmem>>, vector<1x32x128xf32>
    %309 = vector.shape_cast %308 : vector<1x32x128xf32> to vector<32x128xf32>
    %cst_173 = arith.constant dense<0.000000e+00> : vector<32x128xf32>
    %310 = tpu.matmul %129, %309, %cst_173 {dimension_numbers = #tpu.dot_dimension_numbers<[1], [0], [0], [1], [0, 0, 1, 1], [], []>} : vector<32x32xf32>, vector<32x128xf32>, vector<32x128xf32> -> vector<32x128xf32>
    %c1_174 = arith.constant 1 : index
    %c0_175 = arith.constant 0 : index
    %c0_176 = arith.constant 0 : index
    %311 = vector.load %arg16[%c1_174, %c0_175, %c0_176] : memref<2x32x128xf32, #tpu.memory_space<vmem>>, vector<1x32x128xf32>
    %312 = vector.shape_cast %311 : vector<1x32x128xf32> to vector<32x128xf32>
    %cst_177 = arith.constant dense<0.000000e+00> : vector<32x128xf32>
    %313 = tpu.matmul %304, %312, %cst_177 {dimension_numbers = #tpu.dot_dimension_numbers<[1], [0], [0], [1], [0, 0, 1, 1], [], []>} : vector<32x32xf32>, vector<32x128xf32>, vector<32x128xf32> -> vector<32x128xf32>
    %c1_178 = arith.constant 1 : index
    %c0_179 = arith.constant 0 : index
    %c0_180 = arith.constant 0 : index
    %314 = vector.load %arg17[%c1_178, %c0_179, %c0_180] : memref<2x128x32xf32, #tpu.memory_space<vmem>>, vector<1x128x32xf32>
    %315 = vector.shape_cast %314 : vector<1x128x32xf32> to vector<128x32xf32>
    %cst_181 = arith.constant 0.000000e+00 : f32
    %316 = vector.broadcast %cst_181 : f32 to vector<32x32xf32>
    %317 = vector.extract_strided_slice %310 {offsets = [0, 0], sizes = [32, 32], strides = [1, 1]} : vector<32x128xf32> to vector<32x32xf32>
    %318 = vector.extract_strided_slice %313 {offsets = [0, 0], sizes = [32, 32], strides = [1, 1]} : vector<32x128xf32> to vector<32x32xf32>
    %cst_182 = arith.constant dense<0.000000e+00> : vector<32x32xf32>
    %319 = tpu.matmul %317, %318, %cst_182 {dimension_numbers = #tpu.dot_dimension_numbers<[0], [0], [1], [1], [0, 1, 1, 1], [], []>} : vector<32x32xf32>, vector<32x32xf32>, vector<32x32xf32> -> vector<32x32xf32>
    %320 = vector.extract_strided_slice %307 {offsets = [0, 0], sizes = [32, 32], strides = [1, 1]} : vector<32x128xf32> to vector<32x32xf32>
    %cst_183 = arith.constant dense<0.000000e+00> : vector<32x32xf32>
    %321 = tpu.matmul %320, %319, %cst_183 {dimension_numbers = #tpu.dot_dimension_numbers<[1], [0], [0], [1], [0, 0, 1, 1], [], []>} : vector<32x32xf32>, vector<32x32xf32>, vector<32x32xf32> -> vector<32x32xf32>
    %322 = vector.extract_strided_slice %315 {offsets = [0, 0], sizes = [32, 32], strides = [1, 1]} : vector<128x32xf32> to vector<32x32xf32>
    %cst_184 = arith.constant dense<0.000000e+00> : vector<32x32xf32>
    %323 = tpu.matmul %321, %322, %cst_184 {dimension_numbers = #tpu.dot_dimension_numbers<[1], [0], [0], [1], [0, 0, 1, 1], [], []>} : vector<32x32xf32>, vector<32x32xf32>, vector<32x32xf32> -> vector<32x32xf32>
    %324 = arith.addf %316, %323 : vector<32x32xf32>
    %325 = vector.extract_strided_slice %310 {offsets = [0, 32], sizes = [32, 32], strides = [1, 1]} : vector<32x128xf32> to vector<32x32xf32>
    %326 = vector.extract_strided_slice %313 {offsets = [0, 32], sizes = [32, 32], strides = [1, 1]} : vector<32x128xf32> to vector<32x32xf32>
    %cst_185 = arith.constant dense<0.000000e+00> : vector<32x32xf32>
    %327 = tpu.matmul %325, %326, %cst_185 {dimension_numbers = #tpu.dot_dimension_numbers<[0], [0], [1], [1], [0, 1, 1, 1], [], []>} : vector<32x32xf32>, vector<32x32xf32>, vector<32x32xf32> -> vector<32x32xf32>
    %328 = vector.extract_strided_slice %307 {offsets = [0, 32], sizes = [32, 32], strides = [1, 1]} : vector<32x128xf32> to vector<32x32xf32>
    %cst_186 = arith.constant dense<0.000000e+00> : vector<32x32xf32>
    %329 = tpu.matmul %328, %327, %cst_186 {dimension_numbers = #tpu.dot_dimension_numbers<[1], [0], [0], [1], [0, 0, 1, 1], [], []>} : vector<32x32xf32>, vector<32x32xf32>, vector<32x32xf32> -> vector<32x32xf32>
    %330 = vector.extract_strided_slice %315 {offsets = [32, 0], sizes = [32, 32], strides = [1, 1]} : vector<128x32xf32> to vector<32x32xf32>
    %cst_187 = arith.constant dense<0.000000e+00> : vector<32x32xf32>
    %331 = tpu.matmul %329, %330, %cst_187 {dimension_numbers = #tpu.dot_dimension_numbers<[1], [0], [0], [1], [0, 0, 1, 1], [], []>} : vector<32x32xf32>, vector<32x32xf32>, vector<32x32xf32> -> vector<32x32xf32>
    %332 = arith.addf %324, %331 : vector<32x32xf32>
    %333 = vector.extract_strided_slice %310 {offsets = [0, 64], sizes = [32, 32], strides = [1, 1]} : vector<32x128xf32> to vector<32x32xf32>
    %334 = vector.extract_strided_slice %313 {offsets = [0, 64], sizes = [32, 32], strides = [1, 1]} : vector<32x128xf32> to vector<32x32xf32>
    %cst_188 = arith.constant dense<0.000000e+00> : vector<32x32xf32>
    %335 = tpu.matmul %333, %334, %cst_188 {dimension_numbers = #tpu.dot_dimension_numbers<[0], [0], [1], [1], [0, 1, 1, 1], [], []>} : vector<32x32xf32>, vector<32x32xf32>, vector<32x32xf32> -> vector<32x32xf32>
    %336 = vector.extract_strided_slice %307 {offsets = [0, 64], sizes = [32, 32], strides = [1, 1]} : vector<32x128xf32> to vector<32x32xf32>
    %cst_189 = arith.constant dense<0.000000e+00> : vector<32x32xf32>
    %337 = tpu.matmul %336, %335, %cst_189 {dimension_numbers = #tpu.dot_dimension_numbers<[1], [0], [0], [1], [0, 0, 1, 1], [], []>} : vector<32x32xf32>, vector<32x32xf32>, vector<32x32xf32> -> vector<32x32xf32>
    %338 = vector.extract_strided_slice %315 {offsets = [64, 0], sizes = [32, 32], strides = [1, 1]} : vector<128x32xf32> to vector<32x32xf32>
    %cst_190 = arith.constant dense<0.000000e+00> : vector<32x32xf32>
    %339 = tpu.matmul %337, %338, %cst_190 {dimension_numbers = #tpu.dot_dimension_numbers<[1], [0], [0], [1], [0, 0, 1, 1], [], []>} : vector<32x32xf32>, vector<32x32xf32>, vector<32x32xf32> -> vector<32x32xf32>
    %340 = arith.addf %332, %339 : vector<32x32xf32>
    %341 = vector.extract_strided_slice %310 {offsets = [0, 96], sizes = [32, 32], strides = [1, 1]} : vector<32x128xf32> to vector<32x32xf32>
    %342 = vector.extract_strided_slice %313 {offsets = [0, 96], sizes = [32, 32], strides = [1, 1]} : vector<32x128xf32> to vector<32x32xf32>
    %cst_191 = arith.constant dense<0.000000e+00> : vector<32x32xf32>
    %343 = tpu.matmul %341, %342, %cst_191 {dimension_numbers = #tpu.dot_dimension_numbers<[0], [0], [1], [1], [0, 1, 1, 1], [], []>} : vector<32x32xf32>, vector<32x32xf32>, vector<32x32xf32> -> vector<32x32xf32>
    %344 = vector.extract_strided_slice %307 {offsets = [0, 96], sizes = [32, 32], strides = [1, 1]} : vector<32x128xf32> to vector<32x32xf32>
    %cst_192 = arith.constant dense<0.000000e+00> : vector<32x32xf32>
    %345 = tpu.matmul %344, %343, %cst_192 {dimension_numbers = #tpu.dot_dimension_numbers<[1], [0], [0], [1], [0, 0, 1, 1], [], []>} : vector<32x32xf32>, vector<32x32xf32>, vector<32x32xf32> -> vector<32x32xf32>
    %346 = vector.extract_strided_slice %315 {offsets = [96, 0], sizes = [32, 32], strides = [1, 1]} : vector<128x32xf32> to vector<32x32xf32>
    %cst_193 = arith.constant dense<0.000000e+00> : vector<32x32xf32>
    %347 = tpu.matmul %345, %346, %cst_193 {dimension_numbers = #tpu.dot_dimension_numbers<[1], [0], [0], [1], [0, 0, 1, 1], [], []>} : vector<32x32xf32>, vector<32x32xf32>, vector<32x32xf32> -> vector<32x32xf32>
    %348 = arith.addf %340, %347 : vector<32x32xf32>
    %cst_194 = arith.constant 3.125000e-02 : f32
    %349 = vector.broadcast %cst_194 : f32 to vector<32x32xf32>
    %350 = arith.mulf %348, %349 : vector<32x32xf32>
    %c1_195 = arith.constant 1 : index
    %c0_196 = arith.constant 0 : index
    %c0_197 = arith.constant 0 : index
    %351 = vector.load %arg18[%c1_195, %c0_196, %c0_197] : memref<2x1x32xf32, #tpu.memory_space<vmem>>, vector<1x1x32xf32>
    %352 = vector.shape_cast %351 : vector<1x1x32xf32> to vector<1x32xf32>
    %353 = vector.broadcast %352 : vector<1x32xf32> to vector<32x32xf32>
    %354 = arith.addf %350, %353 : vector<32x32xf32>
    %cst_198 = arith.constant 1.000000e+00 : f32
    %355 = vector.broadcast %cst_198 : f32 to vector<1x1xf32>
    %356 = arith.mulf %7, %355 : vector<1x1xf32>
    %c1_199 = arith.constant 1 : index
    %c0_200 = arith.constant 0 : index
    %c0_201 = arith.constant 0 : index
    %357 = vector.load %arg19[%c1_199, %c0_200, %c0_201] : memref<2x32x1xf32, #tpu.memory_space<vmem>>, vector<1x32x1xf32>
    %358 = vector.shape_cast %357 : vector<1x32x1xf32> to vector<32x1xf32>
    %359 = vector.broadcast %356 : vector<1x1xf32> to vector<32x1xf32>
    %360 = arith.mulf %359, %358 : vector<32x1xf32>
    %c1_202 = arith.constant 1 : index
    %c0_203 = arith.constant 0 : index
    %c0_204 = arith.constant 0 : index
    %361 = vector.load %arg20[%c1_202, %c0_203, %c0_204] : memref<2x32x1xf32, #tpu.memory_space<vmem>>, vector<1x32x1xf32>
    %362 = vector.shape_cast %361 : vector<1x32x1xf32> to vector<32x1xf32>
    %363 = arith.addf %360, %362 : vector<32x1xf32>
    %c1_205 = arith.constant 1 : index
    %c0_206 = arith.constant 0 : index
    %c0_207 = arith.constant 0 : index
    %364 = vector.load %arg21[%c1_205, %c0_206, %c0_207] : memref<2x33x32xf32, #tpu.memory_space<vmem>>, vector<1x33x32xf32>
    %365 = vector.shape_cast %364 : vector<1x33x32xf32> to vector<33x32xf32>
    %366 = vector.extract_strided_slice %365 {offsets = [0, 0], sizes = [32, 32], strides = [1, 1]} : vector<33x32xf32> to vector<32x32xf32>
    %cst_208 = arith.constant dense<0.000000e+00> : vector<32x32xf32>
    %367 = tpu.matmul %354, %366, %cst_208 {dimension_numbers = #tpu.dot_dimension_numbers<[0], [0], [1], [1], [0, 1, 1, 1], [], []>} : vector<32x32xf32>, vector<32x32xf32>, vector<32x32xf32> -> vector<32x32xf32>
    %368 = vector.extract_strided_slice %365 {offsets = [32, 0], sizes = [1, 32], strides = [1, 1]} : vector<33x32xf32> to vector<1x32xf32>
    %369 = vector.broadcast %363 : vector<32x1xf32> to vector<32x32xf32>
    %370 = vector.broadcast %368 : vector<1x32xf32> to vector<32x32xf32>
    %371 = arith.mulf %369, %370 : vector<32x32xf32>
    %372 = arith.addf %367, %371 : vector<32x32xf32>
    %c1_209 = arith.constant 1 : index
    %c0_210 = arith.constant 0 : index
    %c0_211 = arith.constant 0 : index
    %373 = vector.load %arg22[%c1_209, %c0_210, %c0_211] : memref<2x1x32xf32, #tpu.memory_space<vmem>>, vector<1x1x32xf32>
    %374 = vector.shape_cast %373 : vector<1x1x32xf32> to vector<1x32xf32>
    %375 = vector.broadcast %374 : vector<1x32xf32> to vector<32x32xf32>
    %376 = arith.addf %372, %375 : vector<32x32xf32>
    %cst_212 = arith.constant 0.707106769 : f32
    %377 = vector.broadcast %cst_212 : f32 to vector<32x32xf32>
    %378 = arith.mulf %376, %377 : vector<32x32xf32>
    %cst_213 = arith.constant 0.000000e+00 : f32
    %379 = vector.broadcast %cst_213 : f32 to vector<32x32xf32>
    %380 = arith.cmpf oge, %378, %379 : vector<32x32xf32>
    %cst_214 = arith.constant 1.000000e+00 : f32
    %cst_215 = arith.constant -1.000000e+00 : f32
    %381 = vector.broadcast %cst_214 : f32 to vector<32x32xf32>
    %382 = vector.broadcast %cst_215 : f32 to vector<32x32xf32>
    %383 = arith.select %380, %381, %382 : vector<32x32xi1>, vector<32x32xf32>
    %384 = math.absf %378 : vector<32x32xf32>
    %cst_216 = arith.constant 0.327591091 : f32
    %385 = vector.broadcast %cst_216 : f32 to vector<32x32xf32>
    %386 = arith.mulf %385, %384 : vector<32x32xf32>
    %cst_217 = arith.constant 1.000000e+00 : f32
    %387 = vector.broadcast %cst_217 : f32 to vector<32x32xf32>
    %388 = arith.addf %387, %386 : vector<32x32xf32>
    %cst_218 = arith.constant 1.000000e+00 : f32
    %389 = vector.broadcast %cst_218 : f32 to vector<32x32xf32>
    %390 = arith.divf %389, %388 : vector<32x32xf32>
    %cst_219 = arith.constant 1.06140542 : f32
    %391 = vector.broadcast %cst_219 : f32 to vector<32x32xf32>
    %392 = arith.mulf %391, %390 : vector<32x32xf32>
    %cst_220 = arith.constant -1.45315206 : f32
    %393 = vector.broadcast %cst_220 : f32 to vector<32x32xf32>
    %394 = arith.addf %392, %393 : vector<32x32xf32>
    %395 = arith.mulf %394, %390 : vector<32x32xf32>
    %cst_221 = arith.constant 1.42141378 : f32
    %396 = vector.broadcast %cst_221 : f32 to vector<32x32xf32>
    %397 = arith.addf %395, %396 : vector<32x32xf32>
    %398 = arith.mulf %397, %390 : vector<32x32xf32>
    %cst_222 = arith.constant -0.284496725 : f32
    %399 = vector.broadcast %cst_222 : f32 to vector<32x32xf32>
    %400 = arith.addf %398, %399 : vector<32x32xf32>
    %401 = arith.mulf %400, %390 : vector<32x32xf32>
    %cst_223 = arith.constant 0.254829586 : f32
    %402 = vector.broadcast %cst_223 : f32 to vector<32x32xf32>
    %403 = arith.addf %401, %402 : vector<32x32xf32>
    %404 = arith.mulf %403, %390 : vector<32x32xf32>
    %cst_224 = arith.constant 0.000000e+00 : f32
    %405 = vector.broadcast %cst_224 : f32 to vector<32x32xf32>
    %406 = arith.subf %405, %384 : vector<32x32xf32>
    %407 = arith.mulf %406, %384 : vector<32x32xf32>
    %408 = math.exp %407 : vector<32x32xf32>
    %409 = arith.mulf %404, %408 : vector<32x32xf32>
    %cst_225 = arith.constant 1.000000e+00 : f32
    %410 = vector.broadcast %cst_225 : f32 to vector<32x32xf32>
    %411 = arith.subf %410, %409 : vector<32x32xf32>
    %412 = arith.mulf %383, %411 : vector<32x32xf32>
    %cst_226 = arith.constant 5.000000e-01 : f32
    %413 = vector.broadcast %cst_226 : f32 to vector<32x32xf32>
    %414 = arith.mulf %413, %376 : vector<32x32xf32>
    %cst_227 = arith.constant 1.000000e+00 : f32
    %415 = vector.broadcast %cst_227 : f32 to vector<32x32xf32>
    %416 = arith.addf %415, %412 : vector<32x32xf32>
    %417 = arith.mulf %414, %416 : vector<32x32xf32>
    %c1_228 = arith.constant 1 : index
    %c0_229 = arith.constant 0 : index
    %c0_230 = arith.constant 0 : index
    %418 = vector.load %arg23[%c1_228, %c0_229, %c0_230] : memref<2x32x32xf32, #tpu.memory_space<vmem>>, vector<1x32x32xf32>
    %419 = vector.shape_cast %418 : vector<1x32x32xf32> to vector<32x32xf32>
    %cst_231 = arith.constant dense<0.000000e+00> : vector<32x32xf32>
    %420 = tpu.matmul %417, %419, %cst_231 {dimension_numbers = #tpu.dot_dimension_numbers<[1], [0], [0], [1], [0, 0, 1, 1], [], []>} : vector<32x32xf32>, vector<32x32xf32>, vector<32x32xf32> -> vector<32x32xf32>
    %c1_232 = arith.constant 1 : index
    %c0_233 = arith.constant 0 : index
    %c0_234 = arith.constant 0 : index
    %421 = vector.load %arg24[%c1_232, %c0_233, %c0_234] : memref<2x1x32xf32, #tpu.memory_space<vmem>>, vector<1x1x32xf32>
    %422 = vector.shape_cast %421 : vector<1x1x32xf32> to vector<1x32xf32>
    %423 = vector.broadcast %422 : vector<1x32xf32> to vector<32x32xf32>
    %424 = arith.addf %420, %423 : vector<32x32xf32>
    %cst_235 = arith.constant 0.707106769 : f32
    %425 = vector.broadcast %cst_235 : f32 to vector<32x32xf32>
    %426 = arith.mulf %424, %425 : vector<32x32xf32>
    %cst_236 = arith.constant 0.000000e+00 : f32
    %427 = vector.broadcast %cst_236 : f32 to vector<32x32xf32>
    %428 = arith.cmpf oge, %426, %427 : vector<32x32xf32>
    %cst_237 = arith.constant 1.000000e+00 : f32
    %cst_238 = arith.constant -1.000000e+00 : f32
    %429 = vector.broadcast %cst_237 : f32 to vector<32x32xf32>
    %430 = vector.broadcast %cst_238 : f32 to vector<32x32xf32>
    %431 = arith.select %428, %429, %430 : vector<32x32xi1>, vector<32x32xf32>
    %432 = math.absf %426 : vector<32x32xf32>
    %cst_239 = arith.constant 0.327591091 : f32
    %433 = vector.broadcast %cst_239 : f32 to vector<32x32xf32>
    %434 = arith.mulf %433, %432 : vector<32x32xf32>
    %cst_240 = arith.constant 1.000000e+00 : f32
    %435 = vector.broadcast %cst_240 : f32 to vector<32x32xf32>
    %436 = arith.addf %435, %434 : vector<32x32xf32>
    %cst_241 = arith.constant 1.000000e+00 : f32
    %437 = vector.broadcast %cst_241 : f32 to vector<32x32xf32>
    %438 = arith.divf %437, %436 : vector<32x32xf32>
    %cst_242 = arith.constant 1.06140542 : f32
    %439 = vector.broadcast %cst_242 : f32 to vector<32x32xf32>
    %440 = arith.mulf %439, %438 : vector<32x32xf32>
    %cst_243 = arith.constant -1.45315206 : f32
    %441 = vector.broadcast %cst_243 : f32 to vector<32x32xf32>
    %442 = arith.addf %440, %441 : vector<32x32xf32>
    %443 = arith.mulf %442, %438 : vector<32x32xf32>
    %cst_244 = arith.constant 1.42141378 : f32
    %444 = vector.broadcast %cst_244 : f32 to vector<32x32xf32>
    %445 = arith.addf %443, %444 : vector<32x32xf32>
    %446 = arith.mulf %445, %438 : vector<32x32xf32>
    %cst_245 = arith.constant -0.284496725 : f32
    %447 = vector.broadcast %cst_245 : f32 to vector<32x32xf32>
    %448 = arith.addf %446, %447 : vector<32x32xf32>
    %449 = arith.mulf %448, %438 : vector<32x32xf32>
    %cst_246 = arith.constant 0.254829586 : f32
    %450 = vector.broadcast %cst_246 : f32 to vector<32x32xf32>
    %451 = arith.addf %449, %450 : vector<32x32xf32>
    %452 = arith.mulf %451, %438 : vector<32x32xf32>
    %cst_247 = arith.constant 0.000000e+00 : f32
    %453 = vector.broadcast %cst_247 : f32 to vector<32x32xf32>
    %454 = arith.subf %453, %432 : vector<32x32xf32>
    %455 = arith.mulf %454, %432 : vector<32x32xf32>
    %456 = math.exp %455 : vector<32x32xf32>
    %457 = arith.mulf %452, %456 : vector<32x32xf32>
    %cst_248 = arith.constant 1.000000e+00 : f32
    %458 = vector.broadcast %cst_248 : f32 to vector<32x32xf32>
    %459 = arith.subf %458, %457 : vector<32x32xf32>
    %460 = arith.mulf %431, %459 : vector<32x32xf32>
    %cst_249 = arith.constant 5.000000e-01 : f32
    %461 = vector.broadcast %cst_249 : f32 to vector<32x32xf32>
    %462 = arith.mulf %461, %424 : vector<32x32xf32>
    %cst_250 = arith.constant 1.000000e+00 : f32
    %463 = vector.broadcast %cst_250 : f32 to vector<32x32xf32>
    %464 = arith.addf %463, %460 : vector<32x32xf32>
    %465 = arith.mulf %462, %464 : vector<32x32xf32>
    %c1_251 = arith.constant 1 : index
    %c0_252 = arith.constant 0 : index
    %c0_253 = arith.constant 0 : index
    %466 = vector.load %arg25[%c1_251, %c0_252, %c0_253] : memref<2x32x32xf32, #tpu.memory_space<vmem>>, vector<1x32x32xf32>
    %467 = vector.shape_cast %466 : vector<1x32x32xf32> to vector<32x32xf32>
    %cst_254 = arith.constant dense<0.000000e+00> : vector<32x32xf32>
    %468 = tpu.matmul %467, %465, %cst_254 {dimension_numbers = #tpu.dot_dimension_numbers<[1], [1], [0], [0], [0, 0, 1, 0], [], []>} : vector<32x32xf32>, vector<32x32xf32>, vector<32x32xf32> -> vector<32x32xf32>
    %c1_255 = arith.constant 1 : index
    %c0_256 = arith.constant 0 : index
    %c0_257 = arith.constant 0 : index
    %469 = vector.load %arg26[%c1_255, %c0_256, %c0_257] : memref<2x32x1xf32, #tpu.memory_space<vmem>>, vector<1x32x1xf32>
    %470 = vector.shape_cast %469 : vector<1x32x1xf32> to vector<32x1xf32>
    %471 = vector.broadcast %470 : vector<32x1xf32> to vector<32x32xf32>
    %472 = arith.addf %468, %471 : vector<32x32xf32>
    %473 = arith.addf %304, %472 : vector<32x32xf32>
    %c0_258 = arith.constant 0 : index
    %c0_259 = arith.constant 0 : index
    %474 = vector.load %arg27[%c0_258, %c0_259] : memref<64x32xf32, #tpu.memory_space<vmem>>, vector<64x32xf32>
    %cst_260 = arith.constant dense<0.000000e+00> : vector<64x32xf32>
    %475 = tpu.matmul %474, %473, %cst_260 {dimension_numbers = #tpu.dot_dimension_numbers<[1], [0], [0], [1], [0, 0, 1, 1], [], []>} : vector<64x32xf32>, vector<32x32xf32>, vector<64x32xf32> -> vector<64x32xf32>
    %c0_261 = arith.constant 0 : index
    %c0_262 = arith.constant 0 : index
    %476 = vector.load %arg28[%c0_261, %c0_262] : memref<32x32xf32, #tpu.memory_space<vmem>>, vector<32x32xf32>
    %cst_263 = arith.constant dense<0.000000e+00> : vector<64x32xf32>
    %477 = tpu.matmul %475, %476, %cst_263 {dimension_numbers = #tpu.dot_dimension_numbers<[1], [0], [0], [1], [0, 0, 1, 1], [], []>} : vector<64x32xf32>, vector<32x32xf32>, vector<64x32xf32> -> vector<64x32xf32>
    %c0_264 = arith.constant 0 : index
    %c0_265 = arith.constant 0 : index
    %478 = vector.load %arg29[%c0_264, %c0_265] : memref<1x32xf32, #tpu.memory_space<vmem>>, vector<1x32xf32>
    %479 = vector.broadcast %478 : vector<1x32xf32> to vector<64x32xf32>
    %480 = arith.addf %477, %479 : vector<64x32xf32>
    %cst_266 = arith.constant 0.707106769 : f32
    %481 = vector.broadcast %cst_266 : f32 to vector<64x32xf32>
    %482 = arith.mulf %480, %481 : vector<64x32xf32>
    %cst_267 = arith.constant 0.000000e+00 : f32
    %483 = vector.broadcast %cst_267 : f32 to vector<64x32xf32>
    %484 = arith.cmpf oge, %482, %483 : vector<64x32xf32>
    %cst_268 = arith.constant 1.000000e+00 : f32
    %cst_269 = arith.constant -1.000000e+00 : f32
    %485 = vector.broadcast %cst_268 : f32 to vector<64x32xf32>
    %486 = vector.broadcast %cst_269 : f32 to vector<64x32xf32>
    %487 = arith.select %484, %485, %486 : vector<64x32xi1>, vector<64x32xf32>
    %488 = math.absf %482 : vector<64x32xf32>
    %cst_270 = arith.constant 0.327591091 : f32
    %489 = vector.broadcast %cst_270 : f32 to vector<64x32xf32>
    %490 = arith.mulf %489, %488 : vector<64x32xf32>
    %cst_271 = arith.constant 1.000000e+00 : f32
    %491 = vector.broadcast %cst_271 : f32 to vector<64x32xf32>
    %492 = arith.addf %491, %490 : vector<64x32xf32>
    %cst_272 = arith.constant 1.000000e+00 : f32
    %493 = vector.broadcast %cst_272 : f32 to vector<64x32xf32>
    %494 = arith.divf %493, %492 : vector<64x32xf32>
    %cst_273 = arith.constant 1.06140542 : f32
    %495 = vector.broadcast %cst_273 : f32 to vector<64x32xf32>
    %496 = arith.mulf %495, %494 : vector<64x32xf32>
    %cst_274 = arith.constant -1.45315206 : f32
    %497 = vector.broadcast %cst_274 : f32 to vector<64x32xf32>
    %498 = arith.addf %496, %497 : vector<64x32xf32>
    %499 = arith.mulf %498, %494 : vector<64x32xf32>
    %cst_275 = arith.constant 1.42141378 : f32
    %500 = vector.broadcast %cst_275 : f32 to vector<64x32xf32>
    %501 = arith.addf %499, %500 : vector<64x32xf32>
    %502 = arith.mulf %501, %494 : vector<64x32xf32>
    %cst_276 = arith.constant -0.284496725 : f32
    %503 = vector.broadcast %cst_276 : f32 to vector<64x32xf32>
    %504 = arith.addf %502, %503 : vector<64x32xf32>
    %505 = arith.mulf %504, %494 : vector<64x32xf32>
    %cst_277 = arith.constant 0.254829586 : f32
    %506 = vector.broadcast %cst_277 : f32 to vector<64x32xf32>
    %507 = arith.addf %505, %506 : vector<64x32xf32>
    %508 = arith.mulf %507, %494 : vector<64x32xf32>
    %cst_278 = arith.constant 0.000000e+00 : f32
    %509 = vector.broadcast %cst_278 : f32 to vector<64x32xf32>
    %510 = arith.subf %509, %488 : vector<64x32xf32>
    %511 = arith.mulf %510, %488 : vector<64x32xf32>
    %512 = math.exp %511 : vector<64x32xf32>
    %513 = arith.mulf %508, %512 : vector<64x32xf32>
    %cst_279 = arith.constant 1.000000e+00 : f32
    %514 = vector.broadcast %cst_279 : f32 to vector<64x32xf32>
    %515 = arith.subf %514, %513 : vector<64x32xf32>
    %516 = arith.mulf %487, %515 : vector<64x32xf32>
    %cst_280 = arith.constant 5.000000e-01 : f32
    %517 = vector.broadcast %cst_280 : f32 to vector<64x32xf32>
    %518 = arith.mulf %517, %480 : vector<64x32xf32>
    %cst_281 = arith.constant 1.000000e+00 : f32
    %519 = vector.broadcast %cst_281 : f32 to vector<64x32xf32>
    %520 = arith.addf %519, %516 : vector<64x32xf32>
    %521 = arith.mulf %518, %520 : vector<64x32xf32>
    %c0_282 = arith.constant 0 : index
    %c0_283 = arith.constant 0 : index
    %522 = vector.load %arg30[%c0_282, %c0_283] : memref<32x32xf32, #tpu.memory_space<vmem>>, vector<32x32xf32>
    %cst_284 = arith.constant dense<0.000000e+00> : vector<64x32xf32>
    %523 = tpu.matmul %521, %522, %cst_284 {dimension_numbers = #tpu.dot_dimension_numbers<[1], [0], [0], [1], [0, 0, 1, 1], [], []>} : vector<64x32xf32>, vector<32x32xf32>, vector<64x32xf32> -> vector<64x32xf32>
    %c0_285 = arith.constant 0 : index
    %c0_286 = arith.constant 0 : index
    %524 = vector.load %arg31[%c0_285, %c0_286] : memref<1x32xf32, #tpu.memory_space<vmem>>, vector<1x32xf32>
    %525 = vector.broadcast %524 : vector<1x32xf32> to vector<64x32xf32>
    %526 = arith.addf %523, %525 : vector<64x32xf32>
    %cst_287 = arith.constant 0.707106769 : f32
    %527 = vector.broadcast %cst_287 : f32 to vector<64x32xf32>
    %528 = arith.mulf %526, %527 : vector<64x32xf32>
    %cst_288 = arith.constant 0.000000e+00 : f32
    %529 = vector.broadcast %cst_288 : f32 to vector<64x32xf32>
    %530 = arith.cmpf oge, %528, %529 : vector<64x32xf32>
    %cst_289 = arith.constant 1.000000e+00 : f32
    %cst_290 = arith.constant -1.000000e+00 : f32
    %531 = vector.broadcast %cst_289 : f32 to vector<64x32xf32>
    %532 = vector.broadcast %cst_290 : f32 to vector<64x32xf32>
    %533 = arith.select %530, %531, %532 : vector<64x32xi1>, vector<64x32xf32>
    %534 = math.absf %528 : vector<64x32xf32>
    %cst_291 = arith.constant 0.327591091 : f32
    %535 = vector.broadcast %cst_291 : f32 to vector<64x32xf32>
    %536 = arith.mulf %535, %534 : vector<64x32xf32>
    %cst_292 = arith.constant 1.000000e+00 : f32
    %537 = vector.broadcast %cst_292 : f32 to vector<64x32xf32>
    %538 = arith.addf %537, %536 : vector<64x32xf32>
    %cst_293 = arith.constant 1.000000e+00 : f32
    %539 = vector.broadcast %cst_293 : f32 to vector<64x32xf32>
    %540 = arith.divf %539, %538 : vector<64x32xf32>
    %cst_294 = arith.constant 1.06140542 : f32
    %541 = vector.broadcast %cst_294 : f32 to vector<64x32xf32>
    %542 = arith.mulf %541, %540 : vector<64x32xf32>
    %cst_295 = arith.constant -1.45315206 : f32
    %543 = vector.broadcast %cst_295 : f32 to vector<64x32xf32>
    %544 = arith.addf %542, %543 : vector<64x32xf32>
    %545 = arith.mulf %544, %540 : vector<64x32xf32>
    %cst_296 = arith.constant 1.42141378 : f32
    %546 = vector.broadcast %cst_296 : f32 to vector<64x32xf32>
    %547 = arith.addf %545, %546 : vector<64x32xf32>
    %548 = arith.mulf %547, %540 : vector<64x32xf32>
    %cst_297 = arith.constant -0.284496725 : f32
    %549 = vector.broadcast %cst_297 : f32 to vector<64x32xf32>
    %550 = arith.addf %548, %549 : vector<64x32xf32>
    %551 = arith.mulf %550, %540 : vector<64x32xf32>
    %cst_298 = arith.constant 0.254829586 : f32
    %552 = vector.broadcast %cst_298 : f32 to vector<64x32xf32>
    %553 = arith.addf %551, %552 : vector<64x32xf32>
    %554 = arith.mulf %553, %540 : vector<64x32xf32>
    %cst_299 = arith.constant 0.000000e+00 : f32
    %555 = vector.broadcast %cst_299 : f32 to vector<64x32xf32>
    %556 = arith.subf %555, %534 : vector<64x32xf32>
    %557 = arith.mulf %556, %534 : vector<64x32xf32>
    %558 = math.exp %557 : vector<64x32xf32>
    %559 = arith.mulf %554, %558 : vector<64x32xf32>
    %cst_300 = arith.constant 1.000000e+00 : f32
    %560 = vector.broadcast %cst_300 : f32 to vector<64x32xf32>
    %561 = arith.subf %560, %559 : vector<64x32xf32>
    %562 = arith.mulf %533, %561 : vector<64x32xf32>
    %cst_301 = arith.constant 5.000000e-01 : f32
    %563 = vector.broadcast %cst_301 : f32 to vector<64x32xf32>
    %564 = arith.mulf %563, %526 : vector<64x32xf32>
    %cst_302 = arith.constant 1.000000e+00 : f32
    %565 = vector.broadcast %cst_302 : f32 to vector<64x32xf32>
    %566 = arith.addf %565, %562 : vector<64x32xf32>
    %567 = arith.mulf %564, %566 : vector<64x32xf32>
    %c0_303 = arith.constant 0 : index
    %c0_304 = arith.constant 0 : index
    %568 = vector.load %arg32[%c0_303, %c0_304] : memref<1x32xf32, #tpu.memory_space<vmem>>, vector<1x32xf32>
    %cst_305 = arith.constant dense<0.000000e+00> : vector<1x64xf32>
    %569 = tpu.matmul %568, %567, %cst_305 {dimension_numbers = #tpu.dot_dimension_numbers<[1], [1], [0], [0], [0, 0, 1, 0], [], []>} : vector<1x32xf32>, vector<64x32xf32>, vector<1x64xf32> -> vector<1x64xf32>
    %c0_306 = arith.constant 0 : index
    %c0_307 = arith.constant 0 : index
    %570 = vector.load %arg33[%c0_306, %c0_307] : memref<1x1xf32, #tpu.memory_space<vmem>>, vector<1x1xf32>
    %571 = vector.broadcast %570 : vector<1x1xf32> to vector<1x64xf32>
    %572 = arith.addf %569, %571 : vector<1x64xf32>
    %573 = arith.addf %9, %572 : vector<1x64xf32>
    %c0_308 = arith.constant 0 : index
    %c0_309 = arith.constant 0 : index
    %c0_310 = arith.constant 0 : index
    %574 = vector.load %arg34[%c0_308, %c0_309, %c0_310] : memref<1x1x64xf32, #tpu.memory_space<vmem>>, vector<1x1x64xf32>
    %575 = vector.shape_cast %574 : vector<1x1x64xf32> to vector<1x64xf32>
    %576 = vector.shape_cast %573 : vector<1x64xf32> to vector<1x1x64xf32>
    tpu.vector_store %arg34[%c0_308, %c0_309, %c0_310], %576 {strides = array<i32>} : memref<1x1x64xf32, #tpu.memory_space<vmem>>, vector<1x1x64xf32>,
    return
  }
  func.func @transform_0(%arg0: i32) -> (i32, i32, i32) {
    %c0_i32 = arith.constant 0 : i32
    %c0_i32_0 = arith.constant 0 : i32
    %c0_i32_1 = arith.constant 0 : i32
    return %arg0, %c0_i32, %c0_i32_0 : i32, i32, i32
  }
  func.func @transform_1(%arg0: i32) -> (i32, i32, i32) {
    %c0_i32 = arith.constant 0 : i32
    %c0_i32_0 = arith.constant 0 : i32
    %c0_i32_1 = arith.constant 0 : i32
    return %arg0, %c0_i32, %c0_i32_0 : i32, i32, i32
  }
  func.func @transform_2(%arg0: i32) -> (i32, i32, i32) {
    %c0_i32 = arith.constant 0 : i32
    %c0_i32_0 = arith.constant 0 : i32
    %c0_i32_1 = arith.constant 0 : i32
    return %arg0, %c0_i32, %c0_i32_0 : i32, i32, i32
  }
  func.func @transform_3(%arg0: i32) -> (i32, i32, i32) {
    %c0_i32 = arith.constant 0 : i32
    %c0_i32_0 = arith.constant 0 : i32
    %c0_i32_1 = arith.constant 0 : i32
    return %arg0, %c0_i32, %c0_i32_0 : i32, i32, i32
  }
  func.func @transform_4(%arg0: i32) -> (i32, i32) {
    %c0_i32 = arith.constant 0 : i32
    %c0_i32_0 = arith.constant 0 : i32
    %c0_i32_1 = arith.constant 0 : i32
    return %c0_i32, %c0_i32_0 : i32, i32
  }
  func.func @transform_5(%arg0: i32) -> (i32, i32) {
    %c0_i32 = arith.constant 0 : i32
    %c0_i32_0 = arith.constant 0 : i32
    %c0_i32_1 = arith.constant 0 : i32
    return %c0_i32, %c0_i32_0 : i32, i32
  }
  func.func @transform_6(%arg0: i32) -> (i32, i32) {
    %c0_i32 = arith.constant 0 : i32
    %c0_i32_0 = arith.constant 0 : i32
    %c0_i32_1 = arith.constant 0 : i32
    return %c0_i32, %c0_i32_0 : i32, i32
  }
  func.func @transform_7(%arg0: i32) -> (i32, i32, i32) {
    %c0_i32 = arith.constant 0 : i32
    %c0_i32_0 = arith.constant 0 : i32
    %c0_i32_1 = arith.constant 0 : i32
    %c0_i32_2 = arith.constant 0 : i32
    return %c0_i32, %c0_i32_0, %c0_i32_1 : i32, i32, i32
  }
  func.func @transform_8(%arg0: i32) -> (i32, i32, i32) {
    %c0_i32 = arith.constant 0 : i32
    %c0_i32_0 = arith.constant 0 : i32
    %c0_i32_1 = arith.constant 0 : i32
    %c0_i32_2 = arith.constant 0 : i32
    return %c0_i32, %c0_i32_0, %c0_i32_1 : i32, i32, i32
  }
  func.func @transform_9(%arg0: i32) -> (i32, i32) {
    %c0_i32 = arith.constant 0 : i32
    %c0_i32_0 = arith.constant 0 : i32
    %c0_i32_1 = arith.constant 0 : i32
    return %c0_i32, %c0_i32_0 : i32, i32
  }
  func.func @transform_10(%arg0: i32) -> (i32, i32) {
    %c0_i32 = arith.constant 0 : i32
    %c0_i32_0 = arith.constant 0 : i32
    %c0_i32_1 = arith.constant 0 : i32
    return %c0_i32, %c0_i32_0 : i32, i32
  }
  func.func @transform_11(%arg0: i32) -> (i32, i32) {
    %c0_i32 = arith.constant 0 : i32
    %c0_i32_0 = arith.constant 0 : i32
    %c0_i32_1 = arith.constant 0 : i32
    return %c0_i32, %c0_i32_0 : i32, i32
  }
  func.func @transform_12(%arg0: i32) -> (i32, i32) {
    %c0_i32 = arith.constant 0 : i32
    %c0_i32_0 = arith.constant 0 : i32
    %c0_i32_1 = arith.constant 0 : i32
    return %c0_i32, %c0_i32_0 : i32, i32
  }
  func.func @transform_13(%arg0: i32) -> (i32, i32) {
    %c0_i32 = arith.constant 0 : i32
    %c0_i32_0 = arith.constant 0 : i32
    %c0_i32_1 = arith.constant 0 : i32
    return %c0_i32, %c0_i32_0 : i32, i32
  }
  func.func @transform_14(%arg0: i32) -> (i32, i32, i32) {
    %c0_i32 = arith.constant 0 : i32
    %c0_i32_0 = arith.constant 0 : i32
    %c0_i32_1 = arith.constant 0 : i32
    %c0_i32_2 = arith.constant 0 : i32
    return %c0_i32, %c0_i32_0, %c0_i32_1 : i32, i32, i32
  }
  func.func @transform_15(%arg0: i32) -> (i32, i32, i32) {
    %c0_i32 = arith.constant 0 : i32
    %c0_i32_0 = arith.constant 0 : i32
    %c0_i32_1 = arith.constant 0 : i32
    %c0_i32_2 = arith.constant 0 : i32
    return %c0_i32, %c0_i32_0, %c0_i32_1 : i32, i32, i32
  }
  func.func @transform_16(%arg0: i32) -> (i32, i32, i32) {
    %c0_i32 = arith.constant 0 : i32
    %c0_i32_0 = arith.constant 0 : i32
    %c0_i32_1 = arith.constant 0 : i32
    %c0_i32_2 = arith.constant 0 : i32
    return %c0_i32, %c0_i32_0, %c0_i32_1 : i32, i32, i32
  }
  func.func @transform_17(%arg0: i32) -> (i32, i32, i32) {
    %c0_i32 = arith.constant 0 : i32
    %c0_i32_0 = arith.constant 0 : i32
    %c0_i32_1 = arith.constant 0 : i32
    %c0_i32_2 = arith.constant 0 : i32
    return %c0_i32, %c0_i32_0, %c0_i32_1 : i32, i32, i32
  }
  func.func @transform_18(%arg0: i32) -> (i32, i32, i32) {
    %c0_i32 = arith.constant 0 : i32
    %c0_i32_0 = arith.constant 0 : i32
    %c0_i32_1 = arith.constant 0 : i32
    %c0_i32_2 = arith.constant 0 : i32
    return %c0_i32, %c0_i32_0, %c0_i32_1 : i32, i32, i32
  }
  func.func @transform_19(%arg0: i32) -> (i32, i32, i32) {
    %c0_i32 = arith.constant 0 : i32
    %c0_i32_0 = arith.constant 0 : i32
    %c0_i32_1 = arith.constant 0 : i32
    %c0_i32_2 = arith.constant 0 : i32
    return %c0_i32, %c0_i32_0, %c0_i32_1 : i32, i32, i32
  }
  func.func @transform_20(%arg0: i32) -> (i32, i32, i32) {
    %c0_i32 = arith.constant 0 : i32
    %c0_i32_0 = arith.constant 0 : i32
    %c0_i32_1 = arith.constant 0 : i32
    %c0_i32_2 = arith.constant 0 : i32
    return %c0_i32, %c0_i32_0, %c0_i32_1 : i32, i32, i32
  }
  func.func @transform_21(%arg0: i32) -> (i32, i32, i32) {
    %c0_i32 = arith.constant 0 : i32
    %c0_i32_0 = arith.constant 0 : i32
    %c0_i32_1 = arith.constant 0 : i32
    %c0_i32_2 = arith.constant 0 : i32
    return %c0_i32, %c0_i32_0, %c0_i32_1 : i32, i32, i32
  }
  func.func @transform_22(%arg0: i32) -> (i32, i32, i32) {
    %c0_i32 = arith.constant 0 : i32
    %c0_i32_0 = arith.constant 0 : i32
    %c0_i32_1 = arith.constant 0 : i32
    %c0_i32_2 = arith.constant 0 : i32
    return %c0_i32, %c0_i32_0, %c0_i32_1 : i32, i32, i32
  }
  func.func @transform_23(%arg0: i32) -> (i32, i32, i32) {
    %c0_i32 = arith.constant 0 : i32
    %c0_i32_0 = arith.constant 0 : i32
    %c0_i32_1 = arith.constant 0 : i32
    %c0_i32_2 = arith.constant 0 : i32
    return %c0_i32, %c0_i32_0, %c0_i32_1 : i32, i32, i32
  }
  func.func @transform_24(%arg0: i32) -> (i32, i32, i32) {
    %c0_i32 = arith.constant 0 : i32
    %c0_i32_0 = arith.constant 0 : i32
    %c0_i32_1 = arith.constant 0 : i32
    %c0_i32_2 = arith.constant 0 : i32
    return %c0_i32, %c0_i32_0, %c0_i32_1 : i32, i32, i32
  }
  func.func @transform_25(%arg0: i32) -> (i32, i32, i32) {
    %c0_i32 = arith.constant 0 : i32
    %c0_i32_0 = arith.constant 0 : i32
    %c0_i32_1 = arith.constant 0 : i32
    %c0_i32_2 = arith.constant 0 : i32
    return %c0_i32, %c0_i32_0, %c0_i32_1 : i32, i32, i32
  }
  func.func @transform_26(%arg0: i32) -> (i32, i32) {
    %c0_i32 = arith.constant 0 : i32
    %c0_i32_0 = arith.constant 0 : i32
    %c0_i32_1 = arith.constant 0 : i32
    return %c0_i32, %c0_i32_0 : i32, i32
  }
  func.func @transform_27(%arg0: i32) -> (i32, i32) {
    %c0_i32 = arith.constant 0 : i32
    %c0_i32_0 = arith.constant 0 : i32
    %c0_i32_1 = arith.constant 0 : i32
    return %c0_i32, %c0_i32_0 : i32, i32
  }
  func.func @transform_28(%arg0: i32) -> (i32, i32) {
    %c0_i32 = arith.constant 0 : i32
    %c0_i32_0 = arith.constant 0 : i32
    %c0_i32_1 = arith.constant 0 : i32
    return %c0_i32, %c0_i32_0 : i32, i32
  }
  func.func @transform_29(%arg0: i32) -> (i32, i32) {
    %c0_i32 = arith.constant 0 : i32
    %c0_i32_0 = arith.constant 0 : i32
    %c0_i32_1 = arith.constant 0 : i32
    return %c0_i32, %c0_i32_0 : i32, i32
  }
  func.func @transform_30(%arg0: i32) -> (i32, i32) {
    %c0_i32 = arith.constant 0 : i32
    %c0_i32_0 = arith.constant 0 : i32
    %c0_i32_1 = arith.constant 0 : i32
    return %c0_i32, %c0_i32_0 : i32, i32
  }
  func.func @transform_31(%arg0: i32) -> (i32, i32) {
    %c0_i32 = arith.constant 0 : i32
    %c0_i32_0 = arith.constant 0 : i32
    %c0_i32_1 = arith.constant 0 : i32
    return %c0_i32, %c0_i32_0 : i32, i32
  }
  func.func @transform_32(%arg0: i32) -> (i32, i32) {
    %c0_i32 = arith.constant 0 : i32
    %c0_i32_0 = arith.constant 0 : i32
    %c0_i32_1 = arith.constant 0 : i32
    return %c0_i32, %c0_i32_0 : i32, i32
  }
  func.func @transform_33(%arg0: i32) -> (i32, i32, i32) {
    %c0_i32 = arith.constant 0 : i32
    %c0_i32_0 = arith.constant 0 : i32
    %c0_i32_1 = arith.constant 0 : i32
    return %arg0, %c0_i32, %c0_i32_0 : i32, i32, i32
  }
}

</mosaic_0001>

<llo_original>
// kernel: squeeze.1
$region0: #{squeeze.1}
  %s0 = inlined_call_operand.vmem [shape: f32[2,8,8], index: 0, kind: input, shape index: {}]
  %s1 = inlined_call_operand.vmem [shape: f32[2,1,64], index: 1, kind: output, shape index: {}]
  $region1: #{squeeze.1} parent=0
    #allocation0 [shape = 'u8[4096]{0}', space=vmem, size = 0x1000, scoped, tag = 'scoped mem for output reshape']
    %s2 = smov 3
    %v3 = vld [vmem:[%s0] ss:$8 sm:%s2]
    %vm4 = vcmask 64512
    %5 = vst.msk [vmem:[#allocation0] sm:$0x3] %vm4, %v3
    %s6 = scalar_lea.vmem %s0, 7
    %s7 = smov 3
    %v8 = vld [vmem:[%s6] ss:$8 sm:%s7]
    %9 = vrot.lane.b32.xlu0 %v8, 56
    %v10 = vpop.permute.xlu0 %9
    %vm11 = vcmask 523712
    %12 = vst.msk [vmem:[#allocation0] sm:$0x3] %vm11, %v10
    %s13 = scalar_lea.vmem %s0, 6
    %s14 = smov 3
    %v15 = vld [vmem:[%s13] ss:$8 sm:%s14]
    %16 = vrot.lane.b32.xlu0 %v15, 48
    %v17 = vpop.permute.xlu0 %16
    %vm18 = vcmask 458112
    %19 = vst.msk [vmem:[#allocation0] sm:$0x3] %vm18, %v17
    %s20 = scalar_lea.vmem %s0, 5
    %s21 = smov 3
    %v22 = vld [vmem:[%s20] ss:$8 sm:%s21]
    %23 = vrot.lane.b32.xlu0 %v22, 40
    %v24 = vpop.permute.xlu0 %23
    %vm25 = vcmask 392512
    %26 = vst.msk [vmem:[#allocation0] sm:$0x3] %vm25, %v24
    %s27 = scalar_lea.vmem %s0, 4
    %s28 = smov 3
    %v29 = vld [vmem:[%s27] ss:$8 sm:%s28]
    %30 = vrot.lane.b32.xlu0 %v29, 32
    %v31 = vpop.permute.xlu0 %30
    %vm32 = vcmask 326912
    %33 = vst.msk [vmem:[#allocation0] sm:$0x3] %vm32, %v31
    %s34 = scalar_lea.vmem %s0, 3
    %s35 = smov 3
    %v36 = vld [vmem:[%s34] ss:$8 sm:%s35]
    %37 = vrot.lane.b32.xlu0 %v36, 24
    %v38 = vpop.permute.xlu0 %37
    %vm39 = vcmask 261312
    %40 = vst.msk [vmem:[#allocation0] sm:$0x3] %vm39, %v38
    %s41 = scalar_lea.vmem %s0, 2
    %s42 = smov 3
    %v43 = vld [vmem:[%s41] ss:$8 sm:%s42]
    %44 = vrot.lane.b32.xlu0 %v43, 16
    %v45 = vpop.permute.xlu0 %44
    %vm46 = vcmask 195712
    %47 = vst.msk [vmem:[#allocation0] sm:$0x3] %vm46, %v45
    %s48 = scalar_lea.vmem %s0, 1
    %s49 = smov 3
    %v50 = vld [vmem:[%s48] ss:$8 sm:%s49]
    %51 = vrot.lane.b32.xlu0 %v50, 8
    %v52 = vpop.permute.xlu0 %51
    %vm53 = vcmask 130112
    %54 = vst.msk [vmem:[#allocation0] sm:$0x3] %vm53, %v52
    %s56 = sshllo.u32 0, 2
    %v58 = vld [vmem:[#allocation0] sm:%s56]
    %s59 = sshllo.u32 0, 2
    %60 = vst [vmem:[%s1] sm:%s59] %v58

// kernel: pitt2d_forward.1
$region0: #{pitt2d_forward.1}
  #allocation0 [shape = 'u32[]', space=smem, size = 0x4, offset = 0x4, fixed_abs, tag = 'smem constant byte address 0x4 - core index']
  #allocation1 [shape = 'u32[144,128]{1,0:T(1,128)}', space=vmem, size = 0x12000, scoped, tag = 'internal scratch']
  #allocation2 [shape = 'f32[1,1]{1,0:T(1,128)S(1)}', space=vmem, size = 0x200, scoped, tag = 'scoped memory for pitt2d_forward.1']
  %s0 = inlined_call_operand.smem [shape: u32[34], index: -1, kind: input, shape index: {}]
  %s1 = sld [smem:[%s0]]
  %s2 = scalar_lea.smem %s0, 1
  %s3 = sld [smem:[%s2]]
  %s4 = scalar_lea.smem %s0, 2
  %s5 = sld [smem:[%s4]]
  %s6 = scalar_lea.smem %s0, 3
  %s7 = sld [smem:[%s6]]
  %s8 = scalar_lea.smem %s0, 4
  %s9 = sld [smem:[%s8]]
  %s10 = scalar_lea.smem %s0, 5
  %s11 = sld [smem:[%s10]]
  %s12 = scalar_lea.smem %s0, 6
  %s13 = sld [smem:[%s12]]
  %s14 = scalar_lea.smem %s0, 7
  %s15 = sld [smem:[%s14]]
  %s16 = scalar_lea.smem %s0, 8
  %s17 = sld [smem:[%s16]]
  %s18 = scalar_lea.smem %s0, 9
  %s19 = sld [smem:[%s18]]
  %s20 = scalar_lea.smem %s0, 10
  %s21 = sld [smem:[%s20]]
  %s22 = scalar_lea.smem %s0, 11
  %s23 = sld [smem:[%s22]]
  %s24 = scalar_lea.smem %s0, 12
  %s25 = sld [smem:[%s24]]
  %s26 = scalar_lea.smem %s0, 13
  %s27 = sld [smem:[%s26]]
  %s28 = scalar_lea.smem %s0, 14
  %s29 = sld [smem:[%s28]]
  %s30 = scalar_lea.smem %s0, 15
  %s31 = sld [smem:[%s30]]
  %s32 = scalar_lea.smem %s0, 16
  %s33 = sld [smem:[%s32]]
  %s34 = scalar_lea.smem %s0, 17
  %s35 = sld [smem:[%s34]]
  %s36 = scalar_lea.smem %s0, 18
  %s37 = sld [smem:[%s36]]
  %s38 = scalar_lea.smem %s0, 19
  %s39 = sld [smem:[%s38]]
  %s40 = scalar_lea.smem %s0, 20
  %s41 = sld [smem:[%s40]]
  %s42 = scalar_lea.smem %s0, 21
  %s43 = sld [smem:[%s42]]
  %s44 = scalar_lea.smem %s0, 22
  %s45 = sld [smem:[%s44]]
  %s46 = scalar_lea.smem %s0, 23
  %s47 = sld [smem:[%s46]]
  %s48 = scalar_lea.smem %s0, 24
  %s49 = sld [smem:[%s48]]
  %s50 = scalar_lea.smem %s0, 25
  %s51 = sld [smem:[%s50]]
  %s52 = scalar_lea.smem %s0, 26
  %s53 = sld [smem:[%s52]]
  %s54 = scalar_lea.smem %s0, 27
  %s55 = sld [smem:[%s54]]
  %s56 = scalar_lea.smem %s0, 28
  %s57 = sld [smem:[%s56]]
  %s58 = scalar_lea.smem %s0, 29
  %s59 = sld [smem:[%s58]]
  %s60 = scalar_lea.smem %s0, 30
  %s61 = sld [smem:[%s60]]
  %s62 = scalar_lea.smem %s0, 31
  %s63 = sld [smem:[%s62]]
  %s64 = scalar_lea.smem %s0, 32
  %s65 = sld [smem:[%s64]]
  %s66 = scalar_lea.smem %s0, 33
  %s67 = sld [smem:[%s66]]
  %s68 = sld [smem:[#allocation0]]
  $region165: #{pitt2d_forward.1} parent=0
    _
  %s70 = ssub.s32 1, %s68
  %s71 = scalar_select 0, %s70, %s68
  %v72 = vstv %s65
  %73 = vst [vmem:[#allocation2] sm:$0x1] %v72
  loop: start=0, step=1, limit=4
  $region2: #{pitt2d_forward.1} parent=0 // loop_pre_header
    _
  $region3: #{pitt2d_forward.1} parent=0 // loop_header
    %s75 = sphi 0, %s79
    %p76 = scmp.ge.s32.totalorder %s75, 4
    %s85 = sphi 0, %s87
    %s88 = sphi 0, %s85
    %s89 = sphi 0, %s88
    %s105 = sphi 0, %s89
    %s111 = sphi 0, %s113
    %s114 = sphi 0, %s111
    %s115 = sphi 0, %s114
    %s131 = sphi 0, %s115
    %s137 = sphi 0, %s139
    %s140 = sphi 0, %s137
    %s141 = sphi 0, %s140
    %s157 = sphi 0, %s141
    %s163 = sphi 0, %s165
    %s166 = sphi 0, %s163
    %s167 = sphi 0, %s166
    %s183 = sphi 0, %s167
    %s187 = sphi 0, %s187
    %s189 = sphi 0, %s187
    %s190 = sphi 0, %s189
    %s204 = sphi 0, %s190
    %s208 = sphi 0, %s208
    %s210 = sphi 0, %s208
    %s211 = sphi 0, %s210
    %s225 = sphi 0, %s211
    %s229 = sphi 0, %s229
    %s231 = sphi 0, %s229
    %s232 = sphi 0, %s231
    %s246 = sphi 0, %s232
    %s250 = sphi 0, %s250
    %s252 = sphi 0, %s250
    %s253 = sphi 0, %s252
    %s267 = sphi 0, %s253
    %s271 = sphi 0, %s271
    %s273 = sphi 0, %s271
    %s274 = sphi 0, %s273
    %s288 = sphi 0, %s274
    %s292 = sphi 0, %s292
    %s294 = sphi 0, %s292
    %s295 = sphi 0, %s294
    %s309 = sphi 0, %s295
    %s313 = sphi 0, %s313
    %s315 = sphi 0, %s313
    %s316 = sphi 0, %s315
    %s330 = sphi 0, %s316
    %s334 = sphi 0, %s334
    %s336 = sphi 0, %s334
    %s337 = sphi 0, %s336
    %s351 = sphi 0, %s337
    %s355 = sphi 0, %s355
    %s357 = sphi 0, %s355
    %s358 = sphi 0, %s357
    %s372 = sphi 0, %s358
    %s376 = sphi 0, %s376
    %s378 = sphi 0, %s376
    %s379 = sphi 0, %s378
    %s393 = sphi 0, %s379
    %s397 = sphi 0, %s397
    %s399 = sphi 0, %s397
    %s400 = sphi 0, %s399
    %s414 = sphi 0, %s400
    %s418 = sphi 0, %s418
    %s420 = sphi 0, %s418
    %s421 = sphi 0, %s420
    %s435 = sphi 0, %s421
    %s439 = sphi 0, %s439
    %s441 = sphi 0, %s439
    %s442 = sphi 0, %s441
    %s456 = sphi 0, %s442
    %s460 = sphi 0, %s460
    %s462 = sphi 0, %s460
    %s463 = sphi 0, %s462
    %s477 = sphi 0, %s463
    %s481 = sphi 0, %s481
    %s483 = sphi 0, %s481
    %s484 = sphi 0, %s483
    %s498 = sphi 0, %s484
    %s502 = sphi 0, %s502
    %s504 = sphi 0, %s502
    %s505 = sphi 0, %s504
    %s519 = sphi 0, %s505
    %s523 = sphi 0, %s523
    %s525 = sphi 0, %s523
    %s526 = sphi 0, %s525
    %s540 = sphi 0, %s526
    %s544 = sphi 0, %s544
    %s546 = sphi 0, %s544
    %s547 = sphi 0, %s546
    %s561 = sphi 0, %s547
    %s565 = sphi 0, %s565
    %s567 = sphi 0, %s565
    %s568 = sphi 0, %s567
    %s582 = sphi 0, %s568
    %s586 = sphi 0, %s586
    %s588 = sphi 0, %s586
    %s589 = sphi 0, %s588
    %s603 = sphi 0, %s589
    %s607 = sphi 0, %s607
    %s609 = sphi 0, %s607
    %s610 = sphi 0, %s609
    %s624 = sphi 0, %s610
    %s628 = sphi 0, %s628
    %s630 = sphi 0, %s628
    %s631 = sphi 0, %s630
    %s645 = sphi 0, %s631
    %s649 = sphi 0, %s649
    %s651 = sphi 0, %s649
    %s652 = sphi 0, %s651
    %s666 = sphi 0, %s652
    %s670 = sphi 0, %s670
    %s672 = sphi 0, %s670
    %s673 = sphi 0, %s672
    %s687 = sphi 0, %s673
    %s691 = sphi 0, %s691
    %s693 = sphi 0, %s691
    %s694 = sphi 0, %s693
    %s708 = sphi 0, %s694
    %s712 = sphi 0, %s712
    %s714 = sphi 0, %s712
    %s715 = sphi 0, %s714
    %s729 = sphi 0, %s715
    %s733 = sphi 0, %s733
    %s735 = sphi 0, %s733
    %s736 = sphi 0, %s735
    %s750 = sphi 0, %s736
    %s754 = sphi 0, %s754
    %s756 = sphi 0, %s754
    %s757 = sphi 0, %s756
    %s771 = sphi 0, %s757
    %s775 = sphi 0, %s775
    %s777 = sphi 0, %s775
    %s778 = sphi 0, %s777
    %s792 = sphi 0, %s778
    %s798 = sphi 0, %s800
    %s801 = sphi 0, %s798
    %s802 = sphi 0, %s801
    %s818 = sphi 0, %s802
  $region4: #{pitt2d_forward.1} parent=0 // loop_header_branch
    %78 = sbr.rel (%p76) target = $region8
  $region5: #{pitt2d_forward.1} parent=0 // loop_body
    %s80 = ssub.s32 %s75, 1
    %s81 = ssub.s32 %s75, 2
    %s82 = sadd.s32 %s75, 1
    %s83 = ssub.s32 %s75, %s82
    %p84 = scmp.eq.s32.totalorder %s83, 0
    %s86 = sadd.s32 %s85, 1
    %s87 = scalar_select %p84, %s85, %s86
    %p90 = pneg %p84
    %p91 = scmp.eq.s32.totalorder %s75, 1
    %p92 = por %p90, %p91
    %p93 = scmp.ne.s32.totalorder %s85, %s88
    %p94 = scmp.eq.s32.totalorder %s75, 0
    %p95 = por %p93, %p94
    %p96 = scmp.ne.s32.totalorder %s85, %s88
    %p97 = scmp.eq.s32.totalorder %s80, 1
    %p98 = por %p96, %p97
    %p99 = scmp.ne.s32.totalorder %s88, %s89
    %p100 = scmp.eq.s32.totalorder %s80, 0
    %p101 = por %p99, %p100
    %p102 = scmp.ne.s32.totalorder %s88, %s89
    %p103 = scmp.eq.s32.totalorder %s81, 1
    %p104 = por %p102, %p103
    %p106 = scmp.ne.s32.totalorder %s89, %s105
    %p107 = scmp.eq.s32.totalorder %s81, 0
    %p108 = por %p106, %p107
    %s109 = ssub.s32 %s75, %s82
    %p110 = scmp.eq.s32.totalorder %s109, 0
    %s112 = sadd.s32 %s111, 1
    %s113 = scalar_select %p110, %s111, %s112
    %p116 = pneg %p110
    %p117 = scmp.eq.s32.totalorder %s75, 1
    %p118 = por %p116, %p117
    %p119 = scmp.ne.s32.totalorder %s111, %s114
    %p120 = scmp.eq.s32.totalorder %s75, 0
    %p121 = por %p119, %p120
    %p122 = scmp.ne.s32.totalorder %s111, %s114
    %p123 = scmp.eq.s32.totalorder %s80, 1
    %p124 = por %p122, %p123
    %p125 = scmp.ne.s32.totalorder %s114, %s115
    %p126 = scmp.eq.s32.totalorder %s80, 0
    %p127 = por %p125, %p126
    %p128 = scmp.ne.s32.totalorder %s114, %s115
    %p129 = scmp.eq.s32.totalorder %s81, 1
    %p130 = por %p128, %p129
    %p132 = scmp.ne.s32.totalorder %s115, %s131
    %p133 = scmp.eq.s32.totalorder %s81, 0
    %p134 = por %p132, %p133
    %s135 = ssub.s32 %s75, %s82
    %p136 = scmp.eq.s32.totalorder %s135, 0
    %s138 = sadd.s32 %s137, 1
    %s139 = scalar_select %p136, %s137, %s138
    %p142 = pneg %p136
    %p143 = scmp.eq.s32.totalorder %s75, 1
    %p144 = por %p142, %p143
    %p145 = scmp.ne.s32.totalorder %s137, %s140
    %p146 = scmp.eq.s32.totalorder %s75, 0
    %p147 = por %p145, %p146
    %p148 = scmp.ne.s32.totalorder %s137, %s140
    %p149 = scmp.eq.s32.totalorder %s80, 1
    %p150 = por %p148, %p149
    %p151 = scmp.ne.s32.totalorder %s140, %s141
    %p152 = scmp.eq.s32.totalorder %s80, 0
    %p153 = por %p151, %p152
    %p154 = scmp.ne.s32.totalorder %s140, %s141
    %p155 = scmp.eq.s32.totalorder %s81, 1
    %p156 = por %p154, %p155
    %p158 = scmp.ne.s32.totalorder %s141, %s157
    %p159 = scmp.eq.s32.totalorder %s81, 0
    %p160 = por %p158, %p159
    %s161 = ssub.s32 %s75, %s82
    %p162 = scmp.eq.s32.totalorder %s161, 0
    %s164 = sadd.s32 %s163, 1
    %s165 = scalar_select %p162, %s163, %s164
    %p168 = pneg %p162
    %p169 = scmp.eq.s32.totalorder %s75, 1
    %p170 = por %p168, %p169
    %p171 = scmp.ne.s32.totalorder %s163, %s166
    %p172 = scmp.eq.s32.totalorder %s75, 0
    %p173 = por %p171, %p172
    %p174 = scmp.ne.s32.totalorder %s163, %s166
    %p175 = scmp.eq.s32.totalorder %s80, 1
    %p176 = por %p174, %p175
    %p177 = scmp.ne.s32.totalorder %s166, %s167
    %p178 = scmp.eq.s32.totalorder %s80, 0
    %p179 = por %p177, %p178
    %p180 = scmp.ne.s32.totalorder %s166, %s167
    %p181 = scmp.eq.s32.totalorder %s81, 1
    %p182 = por %p180, %p181
    %p184 = scmp.ne.s32.totalorder %s167, %s183
    %p185 = scmp.eq.s32.totalorder %s81, 0
    %p186 = por %p184, %p185
    %s188 = sadd.s32 %s187, 1
    %p191 = scmp.eq.s32.totalorder %s75, 1
    %p192 = scmp.ne.s32.totalorder %s187, %s189
    %p193 = scmp.eq.s32.totalorder %s75, 0
    %p194 = por %p192, %p193
    %p195 = scmp.ne.s32.totalorder %s187, %s189
    %p196 = scmp.eq.s32.totalorder %s80, 1
    %p197 = por %p195, %p196
    %p198 = scmp.ne.s32.totalorder %s189, %s190
    %p199 = scmp.eq.s32.totalorder %s80, 0
    %p200 = por %p198, %p199
    %p201 = scmp.ne.s32.totalorder %s189, %s190
    %p202 = scmp.eq.s32.totalorder %s81, 1
    %p203 = por %p201, %p202
    %p205 = scmp.ne.s32.totalorder %s190, %s204
    %p206 = scmp.eq.s32.totalorder %s81, 0
    %p207 = por %p205, %p206
    %s209 = sadd.s32 %s208, 1
    %p212 = scmp.eq.s32.totalorder %s75, 1
    %p213 = scmp.ne.s32.totalorder %s208, %s210
    %p214 = scmp.eq.s32.totalorder %s75, 0
    %p215 = por %p213, %p214
    %p216 = scmp.ne.s32.totalorder %s208, %s210
    %p217 = scmp.eq.s32.totalorder %s80, 1
    %p218 = por %p216, %p217
    %p219 = scmp.ne.s32.totalorder %s210, %s211
    %p220 = scmp.eq.s32.totalorder %s80, 0
    %p221 = por %p219, %p220
    %p222 = scmp.ne.s32.totalorder %s210, %s211
    %p223 = scmp.eq.s32.totalorder %s81, 1
    %p224 = por %p222, %p223
    %p226 = scmp.ne.s32.totalorder %s211, %s225
    %p227 = scmp.eq.s32.totalorder %s81, 0
    %p228 = por %p226, %p227
    %s230 = sadd.s32 %s229, 1
    %p233 = scmp.eq.s32.totalorder %s75, 1
    %p234 = scmp.ne.s32.totalorder %s229, %s231
    %p235 = scmp.eq.s32.totalorder %s75, 0
    %p236 = por %p234, %p235
    %p237 = scmp.ne.s32.totalorder %s229, %s231
    %p238 = scmp.eq.s32.totalorder %s80, 1
    %p239 = por %p237, %p238
    %p240 = scmp.ne.s32.totalorder %s231, %s232
    %p241 = scmp.eq.s32.totalorder %s80, 0
    %p242 = por %p240, %p241
    %p243 = scmp.ne.s32.totalorder %s231, %s232
    %p244 = scmp.eq.s32.totalorder %s81, 1
    %p245 = por %p243, %p244
    %p247 = scmp.ne.s32.totalorder %s232, %s246
    %p248 = scmp.eq.s32.totalorder %s81, 0
    %p249 = por %p247, %p248
    %s251 = sadd.s32 %s250, 1
    %p254 = scmp.eq.s32.totalorder %s75, 1
    %p255 = scmp.ne.s32.totalorder %s250, %s252
    %p256 = scmp.eq.s32.totalorder %s75, 0
    %p257 = por %p255, %p256
    %p258 = scmp.ne.s32.totalorder %s250, %s252
    %p259 = scmp.eq.s32.totalorder %s80, 1
    %p260 = por %p258, %p259
    %p261 = scmp.ne.s32.totalorder %s252, %s253
    %p262 = scmp.eq.s32.totalorder %s80, 0
    %p263 = por %p261, %p262
    %p264 = scmp.ne.s32.totalorder %s252, %s253
    %p265 = scmp.eq.s32.totalorder %s81, 1
    %p266 = por %p264, %p265
    %p268 = scmp.ne.s32.totalorder %s253, %s267
    %p269 = scmp.eq.s32.totalorder %s81, 0
    %p270 = por %p268, %p269
    %s272 = sadd.s32 %s271, 1
    %p275 = scmp.eq.s32.totalorder %s75, 1
    %p276 = scmp.ne.s32.totalorder %s271, %s273
    %p277 = scmp.eq.s32.totalorder %s75, 0
    %p278 = por %p276, %p277
    %p279 = scmp.ne.s32.totalorder %s271, %s273
    %p280 = scmp.eq.s32.totalorder %s80, 1
    %p281 = por %p279, %p280
    %p282 = scmp.ne.s32.totalorder %s273, %s274
    %p283 = scmp.eq.s32.totalorder %s80, 0
    %p284 = por %p282, %p283
    %p285 = scmp.ne.s32.totalorder %s273, %s274
    %p286 = scmp.eq.s32.totalorder %s81, 1
    %p287 = por %p285, %p286
    %p289 = scmp.ne.s32.totalorder %s274, %s288
    %p290 = scmp.eq.s32.totalorder %s81, 0
    %p291 = por %p289, %p290
    %s293 = sadd.s32 %s292, 1
    %p296 = scmp.eq.s32.totalorder %s75, 1
    %p297 = scmp.ne.s32.totalorder %s292, %s294
    %p298 = scmp.eq.s32.totalorder %s75, 0
    %p299 = por %p297, %p298
    %p300 = scmp.ne.s32.totalorder %s292, %s294
    %p301 = scmp.eq.s32.totalorder %s80, 1
    %p302 = por %p300, %p301
    %p303 = scmp.ne.s32.totalorder %s294, %s295
    %p304 = scmp.eq.s32.totalorder %s80, 0
    %p305 = por %p303, %p304
    %p306 = scmp.ne.s32.totalorder %s294, %s295
    %p307 = scmp.eq.s32.totalorder %s81, 1
    %p308 = por %p306, %p307
    %p310 = scmp.ne.s32.totalorder %s295, %s309
    %p311 = scmp.eq.s32.totalorder %s81, 0
    %p312 = por %p310, %p311
    %s314 = sadd.s32 %s313, 1
    %p317 = scmp.eq.s32.totalorder %s75, 1
    %p318 = scmp.ne.s32.totalorder %s313, %s315
    %p319 = scmp.eq.s32.totalorder %s75, 0
    %p320 = por %p318, %p319
    %p321 = scmp.ne.s32.totalorder %s313, %s315
    %p322 = scmp.eq.s32.totalorder %s80, 1
    %p323 = por %p321, %p322
    %p324 = scmp.ne.s32.totalorder %s315, %s316
    %p325 = scmp.eq.s32.totalorder %s80, 0
    %p326 = por %p324, %p325
    %p327 = scmp.ne.s32.totalorder %s315, %s316
    %p328 = scmp.eq.s32.totalorder %s81, 1
    %p329 = por %p327, %p328
    %p331 = scmp.ne.s32.totalorder %s316, %s330
    %p332 = scmp.eq.s32.totalorder %s81, 0
    %p333 = por %p331, %p332
    %s335 = sadd.s32 %s334, 1
    %p338 = scmp.eq.s32.totalorder %s75, 1
    %p339 = scmp.ne.s32.totalorder %s334, %s336
    %p340 = scmp.eq.s32.totalorder %s75, 0
    %p341 = por %p339, %p340
    %p342 = scmp.ne.s32.totalorder %s334, %s336
    %p343 = scmp.eq.s32.totalorder %s80, 1
    %p344 = por %p342, %p343
    %p345 = scmp.ne.s32.totalorder %s336, %s337
    %p346 = scmp.eq.s32.totalorder %s80, 0
    %p347 = por %p345, %p346
    %p348 = scmp.ne.s32.totalorder %s336, %s337
    %p349 = scmp.eq.s32.totalorder %s81, 1
    %p350 = por %p348, %p349
    %p352 = scmp.ne.s32.totalorder %s337, %s351
    %p353 = scmp.eq.s32.totalorder %s81, 0
    %p354 = por %p352, %p353
    %s356 = sadd.s32 %s355, 1
    %p359 = scmp.eq.s32.totalorder %s75, 1
    %p360 = scmp.ne.s32.totalorder %s355, %s357
    %p361 = scmp.eq.s32.totalorder %s75, 0
    %p362 = por %p360, %p361
    %p363 = scmp.ne.s32.totalorder %s355, %s357
    %p364 = scmp.eq.s32.totalorder %s80, 1
    %p365 = por %p363, %p364
    %p366 = scmp.ne.s32.totalorder %s357, %s358
    %p367 = scmp.eq.s32.totalorder %s80, 0
    %p368 = por %p366, %p367
    %p369 = scmp.ne.s32.totalorder %s357, %s358
    %p370 = scmp.eq.s32.totalorder %s81, 1
    %p371 = por %p369, %p370
    %p373 = scmp.ne.s32.totalorder %s358, %s372
    %p374 = scmp.eq.s32.totalorder %s81, 0
    %p375 = por %p373, %p374
    %s377 = sadd.s32 %s376, 1
    %p380 = scmp.eq.s32.totalorder %s75, 1
    %p381 = scmp.ne.s32.totalorder %s376, %s378
    %p382 = scmp.eq.s32.totalorder %s75, 0
    %p383 = por %p381, %p382
    %p384 = scmp.ne.s32.totalorder %s376, %s378
    %p385 = scmp.eq.s32.totalorder %s80, 1
    %p386 = por %p384, %p385
    %p387 = scmp.ne.s32.totalorder %s378, %s379
    %p388 = scmp.eq.s32.totalorder %s80, 0
    %p389 = por %p387, %p388
    %p390 = scmp.ne.s32.totalorder %s378, %s379
    %p391 = scmp.eq.s32.totalorder %s81, 1
    %p392 = por %p390, %p391
    %p394 = scmp.ne.s32.totalorder %s379, %s393
    %p395 = scmp.eq.s32.totalorder %s81, 0
    %p396 = por %p394, %p395
    %s398 = sadd.s32 %s397, 1
    %p401 = scmp.eq.s32.totalorder %s75, 1
    %p402 = scmp.ne.s32.totalorder %s397, %s399
    %p403 = scmp.eq.s32.totalorder %s75, 0
    %p404 = por %p402, %p403
    %p405 = scmp.ne.s32.totalorder %s397, %s399
    %p406 = scmp.eq.s32.totalorder %s80, 1
    %p407 = por %p405, %p406
    %p408 = scmp.ne.s32.totalorder %s399, %s400
    %p409 = scmp.eq.s32.totalorder %s80, 0
    %p410 = por %p408, %p409
    %p411 = scmp.ne.s32.totalorder %s399, %s400
    %p412 = scmp.eq.s32.totalorder %s81, 1
    %p413 = por %p411, %p412
    %p415 = scmp.ne.s32.totalorder %s400, %s414
    %p416 = scmp.eq.s32.totalorder %s81, 0
    %p417 = por %p415, %p416
    %s419 = sadd.s32 %s418, 1
    %p422 = scmp.eq.s32.totalorder %s75, 1
    %p423 = scmp.ne.s32.totalorder %s418, %s420
    %p424 = scmp.eq.s32.totalorder %s75, 0
    %p425 = por %p423, %p424
    %p426 = scmp.ne.s32.totalorder %s418, %s420
    %p427 = scmp.eq.s32.totalorder %s80, 1
    %p428 = por %p426, %p427
    %p429 = scmp.ne.s32.totalorder %s420, %s421
    %p430 = scmp.eq.s32.totalorder %s80, 0
    %p431 = por %p429, %p430
    %p432 = scmp.ne.s32.totalorder %s420, %s421
    %p433 = scmp.eq.s32.totalorder %s81, 1
    %p434 = por %p432, %p433
    %p436 = scmp.ne.s32.totalorder %s421, %s435
    %p437 = scmp.eq.s32.totalorder %s81, 0
    %p438 = por %p436, %p437
    %s440 = sadd.s32 %s439, 1
    %p443 = scmp.eq.s32.totalorder %s75, 1
    %p444 = scmp.ne.s32.totalorder %s439, %s441
    %p445 = scmp.eq.s32.totalorder %s75, 0
    %p446 = por %p444, %p445
    %p447 = scmp.ne.s32.totalorder %s439, %s441
    %p448 = scmp.eq.s32.totalorder %s80, 1
    %p449 = por %p447, %p448
    %p450 = scmp.ne.s32.totalorder %s441, %s442
    %p451 = scmp.eq.s32.totalorder %s80, 0
    %p452 = por %p450, %p451
    %p453 = scmp.ne.s32.totalorder %s441, %s442
    %p454 = scmp.eq.s32.totalorder %s81, 1
    %p455 = por %p453, %p454
    %p457 = scmp.ne.s32.totalorder %s442, %s456
    %p458 = scmp.eq.s32.totalorder %s81, 0
    %p459 = por %p457, %p458
    %s461 = sadd.s32 %s460, 1
    %p464 = scmp.eq.s32.totalorder %s75, 1
    %p465 = scmp.ne.s32.totalorder %s460, %s462
    %p466 = scmp.eq.s32.totalorder %s75, 0
    %p467 = por %p465, %p466
    %p468 = scmp.ne.s32.totalorder %s460, %s462
    %p469 = scmp.eq.s32.totalorder %s80, 1
    %p470 = por %p468, %p469
    %p471 = scmp.ne.s32.totalorder %s462, %s463
    %p472 = scmp.eq.s32.totalorder %s80, 0
    %p473 = por %p471, %p472
    %p474 = scmp.ne.s32.totalorder %s462, %s463
    %p475 = scmp.eq.s32.totalorder %s81, 1
    %p476 = por %p474, %p475
    %p478 = scmp.ne.s32.totalorder %s463, %s477
    %p479 = scmp.eq.s32.totalorder %s81, 0
    %p480 = por %p478, %p479
    %s482 = sadd.s32 %s481, 1
    %p485 = scmp.eq.s32.totalorder %s75, 1
    %p486 = scmp.ne.s32.totalorder %s481, %s483
    %p487 = scmp.eq.s32.totalorder %s75, 0
    %p488 = por %p486, %p487
    %p489 = scmp.ne.s32.totalorder %s481, %s483
    %p490 = scmp.eq.s32.totalorder %s80, 1
    %p491 = por %p489, %p490
    %p492 = scmp.ne.s32.totalorder %s483, %s484
    %p493 = scmp.eq.s32.totalorder %s80, 0
    %p494 = por %p492, %p493
    %p495 = scmp.ne.s32.totalorder %s483, %s484
    %p496 = scmp.eq.s32.totalorder %s81, 1
    %p497 = por %p495, %p496
    %p499 = scmp.ne.s32.totalorder %s484, %s498
    %p500 = scmp.eq.s32.totalorder %s81, 0
    %p501 = por %p499, %p500
    %s503 = sadd.s32 %s502, 1
    %p506 = scmp.eq.s32.totalorder %s75, 1
    %p507 = scmp.ne.s32.totalorder %s502, %s504
    %p508 = scmp.eq.s32.totalorder %s75, 0
    %p509 = por %p507, %p508
    %p510 = scmp.ne.s32.totalorder %s502, %s504
    %p511 = scmp.eq.s32.totalorder %s80, 1
    %p512 = por %p510, %p511
    %p513 = scmp.ne.s32.totalorder %s504, %s505
    %p514 = scmp.eq.s32.totalorder %s80, 0
    %p515 = por %p513, %p514
    %p516 = scmp.ne.s32.totalorder %s504, %s505
    %p517 = scmp.eq.s32.totalorder %s81, 1
    %p518 = por %p516, %p517
    %p520 = scmp.ne.s32.totalorder %s505, %s519
    %p521 = scmp.eq.s32.totalorder %s81, 0
    %p522 = por %p520, %p521
    %s524 = sadd.s32 %s523, 1
    %p527 = scmp.eq.s32.totalorder %s75, 1
    %p528 = scmp.ne.s32.totalorder %s523, %s525
    %p529 = scmp.eq.s32.totalorder %s75, 0
    %p530 = por %p528, %p529
    %p531 = scmp.ne.s32.totalorder %s523, %s525
    %p532 = scmp.eq.s32.totalorder %s80, 1
    %p533 = por %p531, %p532
    %p534 = scmp.ne.s32.totalorder %s525, %s526
    %p535 = scmp.eq.s32.totalorder %s80, 0
    %p536 = por %p534, %p535
    %p537 = scmp.ne.s32.totalorder %s525, %s526
    %p538 = scmp.eq.s32.totalorder %s81, 1
    %p539 = por %p537, %p538
    %p541 = scmp.ne.s32.totalorder %s526, %s540
    %p542 = scmp.eq.s32.totalorder %s81, 0
    %p543 = por %p541, %p542
    %s545 = sadd.s32 %s544, 1
    %p548 = scmp.eq.s32.totalorder %s75, 1
    %p549 = scmp.ne.s32.totalorder %s544, %s546
    %p550 = scmp.eq.s32.totalorder %s75, 0
    %p551 = por %p549, %p550
    %p552 = scmp.ne.s32.totalorder %s544, %s546
    %p553 = scmp.eq.s32.totalorder %s80, 1
    %p554 = por %p552, %p553
    %p555 = scmp.ne.s32.totalorder %s546, %s547
    %p556 = scmp.eq.s32.totalorder %s80, 0
    %p557 = por %p555, %p556
    %p558 = scmp.ne.s32.totalorder %s546, %s547
    %p559 = scmp.eq.s32.totalorder %s81, 1
    %p560 = por %p558, %p559
    %p562 = scmp.ne.s32.totalorder %s547, %s561
    %p563 = scmp.eq.s32.totalorder %s81, 0
    %p564 = por %p562, %p563
    %s566 = sadd.s32 %s565, 1
    %p569 = scmp.eq.s32.totalorder %s75, 1
    %p570 = scmp.ne.s32.totalorder %s565, %s567
    %p571 = scmp.eq.s32.totalorder %s75, 0
    %p572 = por %p570, %p571
    %p573 = scmp.ne.s32.totalorder %s565, %s567
    %p574 = scmp.eq.s32.totalorder %s80, 1
    %p575 = por %p573, %p574
    %p576 = scmp.ne.s32.totalorder %s567, %s568
    %p577 = scmp.eq.s32.totalorder %s80, 0
    %p578 = por %p576, %p577
    %p579 = scmp.ne.s32.totalorder %s567, %s568
    %p580 = scmp.eq.s32.totalorder %s81, 1
    %p581 = por %p579, %p580
    %p583 = scmp.ne.s32.totalorder %s568, %s582
    %p584 = scmp.eq.s32.totalorder %s81, 0
    %p585 = por %p583, %p584
    %s587 = sadd.s32 %s586, 1
    %p590 = scmp.eq.s32.totalorder %s75, 1
    %p591 = scmp.ne.s32.totalorder %s586, %s588
    %p592 = scmp.eq.s32.totalorder %s75, 0
    %p593 = por %p591, %p592
    %p594 = scmp.ne.s32.totalorder %s586, %s588
    %p595 = scmp.eq.s32.totalorder %s80, 1
    %p596 = por %p594, %p595
    %p597 = scmp.ne.s32.totalorder %s588, %s589
    %p598 = scmp.eq.s32.totalorder %s80, 0
    %p599 = por %p597, %p598
    %p600 = scmp.ne.s32.totalorder %s588, %s589
    %p601 = scmp.eq.s32.totalorder %s81, 1
    %p602 = por %p600, %p601
    %p604 = scmp.ne.s32.totalorder %s589, %s603
    %p605 = scmp.eq.s32.totalorder %s81, 0
    %p606 = por %p604, %p605
    %s608 = sadd.s32 %s607, 1
    %p611 = scmp.eq.s32.totalorder %s75, 1
    %p612 = scmp.ne.s32.totalorder %s607, %s609
    %p613 = scmp.eq.s32.totalorder %s75, 0
    %p614 = por %p612, %p613
    %p615 = scmp.ne.s32.totalorder %s607, %s609
    %p616 = scmp.eq.s32.totalorder %s80, 1
    %p617 = por %p615, %p616
    %p618 = scmp.ne.s32.totalorder %s609, %s610
    %p619 = scmp.eq.s32.totalorder %s80, 0
    %p620 = por %p618, %p619
    %p621 = scmp.ne.s32.totalorder %s609, %s610
    %p622 = scmp.eq.s32.totalorder %s81, 1
    %p623 = por %p621, %p622
    %p625 = scmp.ne.s32.totalorder %s610, %s624
    %p626 = scmp.eq.s32.totalorder %s81, 0
    %p627 = por %p625, %p626
    %s629 = sadd.s32 %s628, 1
    %p632 = scmp.eq.s32.totalorder %s75, 1
    %p633 = scmp.ne.s32.totalorder %s628, %s630
    %p634 = scmp.eq.s32.totalorder %s75, 0
    %p635 = por %p633, %p634
    %p636 = scmp.ne.s32.totalorder %s628, %s630
    %p637 = scmp.eq.s32.totalorder %s80, 1
    %p638 = por %p636, %p637
    %p639 = scmp.ne.s32.totalorder %s630, %s631
    %p640 = scmp.eq.s32.totalorder %s80, 0
    %p641 = por %p639, %p640
    %p642 = scmp.ne.s32.totalorder %s630, %s631
    %p643 = scmp.eq.s32.totalorder %s81, 1
    %p644 = por %p642, %p643
    %p646 = scmp.ne.s32.totalorder %s631, %s645
    %p647 = scmp.eq.s32.totalorder %s81, 0
    %p648 = por %p646, %p647
    %s650 = sadd.s32 %s649, 1
    %p653 = scmp.eq.s32.totalorder %s75, 1
    %p654 = scmp.ne.s32.totalorder %s649, %s651
    %p655 = scmp.eq.s32.totalorder %s75, 0
    %p656 = por %p654, %p655
    %p657 = scmp.ne.s32.totalorder %s649, %s651
    %p658 = scmp.eq.s32.totalorder %s80, 1
    %p659 = por %p657, %p658
    %p660 = scmp.ne.s32.totalorder %s651, %s652
    %p661 = scmp.eq.s32.totalorder %s80, 0
    %p662 = por %p660, %p661
    %p663 = scmp.ne.s32.totalorder %s651, %s652
    %p664 = scmp.eq.s32.totalorder %s81, 1
    %p665 = por %p663, %p664
    %p667 = scmp.ne.s32.totalorder %s652, %s666
    %p668 = scmp.eq.s32.totalorder %s81, 0
    %p669 = por %p667, %p668
    %s671 = sadd.s32 %s670, 1
    %p674 = scmp.eq.s32.totalorder %s75, 1
    %p675 = scmp.ne.s32.totalorder %s670, %s672
    %p676 = scmp.eq.s32.totalorder %s75, 0
    %p677 = por %p675, %p676
    %p678 = scmp.ne.s32.totalorder %s670, %s672
    %p679 = scmp.eq.s32.totalorder %s80, 1
    %p680 = por %p678, %p679
    %p681 = scmp.ne.s32.totalorder %s672, %s673
    %p682 = scmp.eq.s32.totalorder %s80, 0
    %p683 = por %p681, %p682
    %p684 = scmp.ne.s32.totalorder %s672, %s673
    %p685 = scmp.eq.s32.totalorder %s81, 1
    %p686 = por %p684, %p685
    %p688 = scmp.ne.s32.totalorder %s673, %s687
    %p689 = scmp.eq.s32.totalorder %s81, 0
    %p690 = por %p688, %p689
    %s692 = sadd.s32 %s691, 1
    %p695 = scmp.eq.s32.totalorder %s75, 1
    %p696 = scmp.ne.s32.totalorder %s691, %s693
    %p697 = scmp.eq.s32.totalorder %s75, 0
    %p698 = por %p696, %p697
    %p699 = scmp.ne.s32.totalorder %s691, %s693
    %p700 = scmp.eq.s32.totalorder %s80, 1
    %p701 = por %p699, %p700
    %p702 = scmp.ne.s32.totalorder %s693, %s694
    %p703 = scmp.eq.s32.totalorder %s80, 0
    %p704 = por %p702, %p703
    %p705 = scmp.ne.s32.totalorder %s693, %s694
    %p706 = scmp.eq.s32.totalorder %s81, 1
    %p707 = por %p705, %p706
    %p709 = scmp.ne.s32.totalorder %s694, %s708
    %p710 = scmp.eq.s32.totalorder %s81, 0
    %p711 = por %p709, %p710
    %s713 = sadd.s32 %s712, 1
    %p716 = scmp.eq.s32.totalorder %s75, 1
    %p717 = scmp.ne.s32.totalorder %s712, %s714
    %p718 = scmp.eq.s32.totalorder %s75, 0
    %p719 = por %p717, %p718
    %p720 = scmp.ne.s32.totalorder %s712, %s714
    %p721 = scmp.eq.s32.totalorder %s80, 1
    %p722 = por %p720, %p721
    %p723 = scmp.ne.s32.totalorder %s714, %s715
    %p724 = scmp.eq.s32.totalorder %s80, 0
    %p725 = por %p723, %p724
    %p726 = scmp.ne.s32.totalorder %s714, %s715
    %p727 = scmp.eq.s32.totalorder %s81, 1
    %p728 = por %p726, %p727
    %p730 = scmp.ne.s32.totalorder %s715, %s729
    %p731 = scmp.eq.s32.totalorder %s81, 0
    %p732 = por %p730, %p731
    %s734 = sadd.s32 %s733, 1
    %p737 = scmp.eq.s32.totalorder %s75, 1
    %p738 = scmp.ne.s32.totalorder %s733, %s735
    %p739 = scmp.eq.s32.totalorder %s75, 0
    %p740 = por %p738, %p739
    %p741 = scmp.ne.s32.totalorder %s733, %s735
    %p742 = scmp.eq.s32.totalorder %s80, 1
    %p743 = por %p741, %p742
    %p744 = scmp.ne.s32.totalorder %s735, %s736
    %p745 = scmp.eq.s32.totalorder %s80, 0
    %p746 = por %p744, %p745
    %p747 = scmp.ne.s32.totalorder %s735, %s736
    %p748 = scmp.eq.s32.totalorder %s81, 1
    %p749 = por %p747, %p748
    %p751 = scmp.ne.s32.totalorder %s736, %s750
    %p752 = scmp.eq.s32.totalorder %s81, 0
    %p753 = por %p751, %p752
    %s755 = sadd.s32 %s754, 1
    %p758 = scmp.eq.s32.totalorder %s75, 1
    %p759 = scmp.ne.s32.totalorder %s754, %s756
    %p760 = scmp.eq.s32.totalorder %s75, 0
    %p761 = por %p759, %p760
    %p762 = scmp.ne.s32.totalorder %s754, %s756
    %p763 = scmp.eq.s32.totalorder %s80, 1
    %p764 = por %p762, %p763
    %p765 = scmp.ne.s32.totalorder %s756, %s757
    %p766 = scmp.eq.s32.totalorder %s80, 0
    %p767 = por %p765, %p766
    %p768 = scmp.ne.s32.totalorder %s756, %s757
    %p769 = scmp.eq.s32.totalorder %s81, 1
    %p770 = por %p768, %p769
    %p772 = scmp.ne.s32.totalorder %s757, %s771
    %p773 = scmp.eq.s32.totalorder %s81, 0
    %p774 = por %p772, %p773
    %s776 = sadd.s32 %s775, 1
    %p779 = scmp.eq.s32.totalorder %s75, 1
    %p780 = scmp.ne.s32.totalorder %s775, %s777
    %p781 = scmp.eq.s32.totalorder %s75, 0
    %p782 = por %p780, %p781
    %p783 = scmp.ne.s32.totalorder %s775, %s777
    %p784 = scmp.eq.s32.totalorder %s80, 1
    %p785 = por %p783, %p784
    %p786 = scmp.ne.s32.totalorder %s777, %s778
    %p787 = scmp.eq.s32.totalorder %s80, 0
    %p788 = por %p786, %p787
    %p789 = scmp.ne.s32.totalorder %s777, %s778
    %p790 = scmp.eq.s32.totalorder %s81, 1
    %p791 = por %p789, %p790
    %p793 = scmp.ne.s32.totalorder %s778, %s792
    %p794 = scmp.eq.s32.totalorder %s81, 0
    %p795 = por %p793, %p794
    %s796 = ssub.s32 %s75, %s82
    %p797 = scmp.eq.s32.totalorder %s796, 0
    %s799 = sadd.s32 %s798, 1
    %s800 = scalar_select %p797, %s798, %s799
    %p803 = pneg %p797
    %p804 = scmp.eq.s32.totalorder %s75, 1
    %p805 = por %p803, %p804
    %p806 = scmp.ne.s32.totalorder %s798, %s801
    %p807 = scmp.eq.s32.totalorder %s75, 0
    %p808 = por %p806, %p807
    %p809 = scmp.ne.s32.totalorder %s798, %s801
    %p810 = scmp.eq.s32.totalorder %s80, 1
    %p811 = por %p809, %p810
    %p812 = scmp.ne.s32.totalorder %s801, %s802
    %p813 = scmp.eq.s32.totalorder %s80, 0
    %p814 = por %p812, %p813
    %p815 = scmp.ne.s32.totalorder %s801, %s802
    %p816 = scmp.eq.s32.totalorder %s81, 1
    %p817 = por %p815, %p816
    %p819 = scmp.ne.s32.totalorder %s802, %s818
    %p820 = scmp.eq.s32.totalorder %s81, 0
    %p821 = por %p819, %p820
    %p822 = scmp.le.s32.totalorder 1, %s75
    %p823 = scmp.lt.s32.totalorder %s75, 3
    %p824 = pnand %p822, %p823
    %p825 = pneg %p824
    // Predicated region
    $region9: #{pitt2d_forward.1} parent=5 // pred_check
      _
    $region10: #{pitt2d_forward.1} parent=5 // pred_check_branch
      %827 = sbr.rel (%p824) target = $region12
    $region11: #{pitt2d_forward.1} parent=5 // pred_region
      %s828 = ssub.s32 %s75, 1
      // Predicated region
      $region13: #{pitt2d_forward.1} parent=11 // pred_check
        %p829 = pneg %p200
      $region14: #{pitt2d_forward.1} parent=11 // pred_check_branch
        %831 = sbr.rel (%p829) target = $region16
      $region15: #{pitt2d_forward.1} parent=11 // pred_region
        _
      $region16: #{pitt2d_forward.1} parent=11 // pred_fallthru
        _
      // Predicated region
      $region17: #{pitt2d_forward.1} parent=11 // pred_check
        %p832 = pneg %p221
      $region18: #{pitt2d_forward.1} parent=11 // pred_check_branch
        %834 = sbr.rel (%p832) target = $region20
      $region19: #{pitt2d_forward.1} parent=11 // pred_region
        _
      $region20: #{pitt2d_forward.1} parent=11 // pred_fallthru
        _
      // Predicated region
      $region21: #{pitt2d_forward.1} parent=11 // pred_check
        %p835 = pneg %p242
      $region22: #{pitt2d_forward.1} parent=11 // pred_check_branch
        %837 = sbr.rel (%p835) target = $region24
      $region23: #{pitt2d_forward.1} parent=11 // pred_region
        _
      $region24: #{pitt2d_forward.1} parent=11 // pred_fallthru
        _
      // Predicated region
      $region25: #{pitt2d_forward.1} parent=11 // pred_check
        %p838 = pneg %p263
      $region26: #{pitt2d_forward.1} parent=11 // pred_check_branch
        %840 = sbr.rel (%p838) target = $region28
      $region27: #{pitt2d_forward.1} parent=11 // pred_region
        _
      $region28: #{pitt2d_forward.1} parent=11 // pred_fallthru
        _
      // Predicated region
      $region29: #{pitt2d_forward.1} parent=11 // pred_check
        %p841 = pneg %p284
      $region30: #{pitt2d_forward.1} parent=11 // pred_check_branch
        %843 = sbr.rel (%p841) target = $region32
      $region31: #{pitt2d_forward.1} parent=11 // pred_region
        _
      $region32: #{pitt2d_forward.1} parent=11 // pred_fallthru
        _
      // Predicated region
      $region33: #{pitt2d_forward.1} parent=11 // pred_check
        %p844 = pneg %p305
      $region34: #{pitt2d_forward.1} parent=11 // pred_check_branch
        %846 = sbr.rel (%p844) target = $region36
      $region35: #{pitt2d_forward.1} parent=11 // pred_region
        _
      $region36: #{pitt2d_forward.1} parent=11 // pred_fallthru
        _
      // Predicated region
      $region37: #{pitt2d_forward.1} parent=11 // pred_check
        %p847 = pneg %p326
      $region38: #{pitt2d_forward.1} parent=11 // pred_check_branch
        %849 = sbr.rel (%p847) target = $region40
      $region39: #{pitt2d_forward.1} parent=11 // pred_region
        _
      $region40: #{pitt2d_forward.1} parent=11 // pred_fallthru
        _
      // Predicated region
      $region41: #{pitt2d_forward.1} parent=11 // pred_check
        %p850 = pneg %p347
      $region42: #{pitt2d_forward.1} parent=11 // pred_check_branch
        %852 = sbr.rel (%p850) target = $region44
      $region43: #{pitt2d_forward.1} parent=11 // pred_region
        _
      $region44: #{pitt2d_forward.1} parent=11 // pred_fallthru
        _
      // Predicated region
      $region45: #{pitt2d_forward.1} parent=11 // pred_check
        %p853 = pneg %p368
      $region46: #{pitt2d_forward.1} parent=11 // pred_check_branch
        %855 = sbr.rel (%p853) target = $region48
      $region47: #{pitt2d_forward.1} parent=11 // pred_region
        _
      $region48: #{pitt2d_forward.1} parent=11 // pred_fallthru
        _
      // Predicated region
      $region49: #{pitt2d_forward.1} parent=11 // pred_check
        %p856 = pneg %p389
      $region50: #{pitt2d_forward.1} parent=11 // pred_check_branch
        %858 = sbr.rel (%p856) target = $region52
      $region51: #{pitt2d_forward.1} parent=11 // pred_region
        _
      $region52: #{pitt2d_forward.1} parent=11 // pred_fallthru
        _
      // Predicated region
      $region53: #{pitt2d_forward.1} parent=11 // pred_check
        %p859 = pneg %p410
      $region54: #{pitt2d_forward.1} parent=11 // pred_check_branch
        %861 = sbr.rel (%p859) target = $region56
      $region55: #{pitt2d_forward.1} parent=11 // pred_region
        _
      $region56: #{pitt2d_forward.1} parent=11 // pred_fallthru
        _
      // Predicated region
      $region57: #{pitt2d_forward.1} parent=11 // pred_check
        %p862 = pneg %p431
      $region58: #{pitt2d_forward.1} parent=11 // pred_check_branch
        %864 = sbr.rel (%p862) target = $region60
      $region59: #{pitt2d_forward.1} parent=11 // pred_region
        _
      $region60: #{pitt2d_forward.1} parent=11 // pred_fallthru
        _
      // Predicated region
      $region61: #{pitt2d_forward.1} parent=11 // pred_check
        %p865 = pneg %p452
      $region62: #{pitt2d_forward.1} parent=11 // pred_check_branch
        %867 = sbr.rel (%p865) target = $region64
      $region63: #{pitt2d_forward.1} parent=11 // pred_region
        _
      $region64: #{pitt2d_forward.1} parent=11 // pred_fallthru
        _
      // Predicated region
      $region65: #{pitt2d_forward.1} parent=11 // pred_check
        %p868 = pneg %p473
      $region66: #{pitt2d_forward.1} parent=11 // pred_check_branch
        %870 = sbr.rel (%p868) target = $region68
      $region67: #{pitt2d_forward.1} parent=11 // pred_region
        _
      $region68: #{pitt2d_forward.1} parent=11 // pred_fallthru
        _
      // Predicated region
      $region69: #{pitt2d_forward.1} parent=11 // pred_check
        %p871 = pneg %p494
      $region70: #{pitt2d_forward.1} parent=11 // pred_check_branch
        %873 = sbr.rel (%p871) target = $region72
      $region71: #{pitt2d_forward.1} parent=11 // pred_region
        _
      $region72: #{pitt2d_forward.1} parent=11 // pred_fallthru
        _
      // Predicated region
      $region73: #{pitt2d_forward.1} parent=11 // pred_check
        %p874 = pneg %p515
      $region74: #{pitt2d_forward.1} parent=11 // pred_check_branch
        %876 = sbr.rel (%p874) target = $region76
      $region75: #{pitt2d_forward.1} parent=11 // pred_region
        _
      $region76: #{pitt2d_forward.1} parent=11 // pred_fallthru
        _
      // Predicated region
      $region77: #{pitt2d_forward.1} parent=11 // pred_check
        %p877 = pneg %p536
      $region78: #{pitt2d_forward.1} parent=11 // pred_check_branch
        %879 = sbr.rel (%p877) target = $region80
      $region79: #{pitt2d_forward.1} parent=11 // pred_region
        _
      $region80: #{pitt2d_forward.1} parent=11 // pred_fallthru
        _
      // Predicated region
      $region81: #{pitt2d_forward.1} parent=11 // pred_check
        %p880 = pneg %p557
      $region82: #{pitt2d_forward.1} parent=11 // pred_check_branch
        %882 = sbr.rel (%p880) target = $region84
      $region83: #{pitt2d_forward.1} parent=11 // pred_region
        _
      $region84: #{pitt2d_forward.1} parent=11 // pred_fallthru
        _
      // Predicated region
      $region85: #{pitt2d_forward.1} parent=11 // pred_check
        %p883 = pneg %p578
      $region86: #{pitt2d_forward.1} parent=11 // pred_check_branch
        %885 = sbr.rel (%p883) target = $region88
      $region87: #{pitt2d_forward.1} parent=11 // pred_region
        _
      $region88: #{pitt2d_forward.1} parent=11 // pred_fallthru
        _
      // Predicated region
      $region89: #{pitt2d_forward.1} parent=11 // pred_check
        %p886 = pneg %p599
      $region90: #{pitt2d_forward.1} parent=11 // pred_check_branch
        %888 = sbr.rel (%p886) target = $region92
      $region91: #{pitt2d_forward.1} parent=11 // pred_region
        _
      $region92: #{pitt2d_forward.1} parent=11 // pred_fallthru
        _
      // Predicated region
      $region93: #{pitt2d_forward.1} parent=11 // pred_check
        %p889 = pneg %p620
      $region94: #{pitt2d_forward.1} parent=11 // pred_check_branch
        %891 = sbr.rel (%p889) target = $region96
      $region95: #{pitt2d_forward.1} parent=11 // pred_region
        _
      $region96: #{pitt2d_forward.1} parent=11 // pred_fallthru
        _
      // Predicated region
      $region97: #{pitt2d_forward.1} parent=11 // pred_check
        %p892 = pneg %p641
      $region98: #{pitt2d_forward.1} parent=11 // pred_check_branch
        %894 = sbr.rel (%p892) target = $region100
      $region99: #{pitt2d_forward.1} parent=11 // pred_region
        _
      $region100: #{pitt2d_forward.1} parent=11 // pred_fallthru
        _
      // Predicated region
      $region101: #{pitt2d_forward.1} parent=11 // pred_check
        %p895 = pneg %p662
      $region102: #{pitt2d_forward.1} parent=11 // pred_check_branch
        %897 = sbr.rel (%p895) target = $region104
      $region103: #{pitt2d_forward.1} parent=11 // pred_region
        _
      $region104: #{pitt2d_forward.1} parent=11 // pred_fallthru
        _
      // Predicated region
      $region105: #{pitt2d_forward.1} parent=11 // pred_check
        %p898 = pneg %p683
      $region106: #{pitt2d_forward.1} parent=11 // pred_check_branch
        %900 = sbr.rel (%p898) target = $region108
      $region107: #{pitt2d_forward.1} parent=11 // pred_region
        _
      $region108: #{pitt2d_forward.1} parent=11 // pred_fallthru
        _
      // Predicated region
      $region109: #{pitt2d_forward.1} parent=11 // pred_check
        %p901 = pneg %p704
      $region110: #{pitt2d_forward.1} parent=11 // pred_check_branch
        %903 = sbr.rel (%p901) target = $region112
      $region111: #{pitt2d_forward.1} parent=11 // pred_region
        _
      $region112: #{pitt2d_forward.1} parent=11 // pred_fallthru
        _
      // Predicated region
      $region113: #{pitt2d_forward.1} parent=11 // pred_check
        %p904 = pneg %p725
      $region114: #{pitt2d_forward.1} parent=11 // pred_check_branch
        %906 = sbr.rel (%p904) target = $region116
      $region115: #{pitt2d_forward.1} parent=11 // pred_region
        _
      $region116: #{pitt2d_forward.1} parent=11 // pred_fallthru
        _
      // Predicated region
      $region117: #{pitt2d_forward.1} parent=11 // pred_check
        %p907 = pneg %p746
      $region118: #{pitt2d_forward.1} parent=11 // pred_check_branch
        %909 = sbr.rel (%p907) target = $region120
      $region119: #{pitt2d_forward.1} parent=11 // pred_region
        _
      $region120: #{pitt2d_forward.1} parent=11 // pred_fallthru
        _
      // Predicated region
      $region121: #{pitt2d_forward.1} parent=11 // pred_check
        %p910 = pneg %p767
      $region122: #{pitt2d_forward.1} parent=11 // pred_check_branch
        %912 = sbr.rel (%p910) target = $region124
      $region123: #{pitt2d_forward.1} parent=11 // pred_region
        _
      $region124: #{pitt2d_forward.1} parent=11 // pred_fallthru
        _
      // Predicated region
      $region125: #{pitt2d_forward.1} parent=11 // pred_check
        %p913 = pneg %p788
      $region126: #{pitt2d_forward.1} parent=11 // pred_check_branch
        %915 = sbr.rel (%p913) target = $region128
      $region127: #{pitt2d_forward.1} parent=11 // pred_region
        _
      $region128: #{pitt2d_forward.1} parent=11 // pred_fallthru
        _
    $region12: #{pitt2d_forward.1} parent=5 // pred_fallthru
      _
    %p916 = scmp.lt.s32.totalorder %s75, 2
    // Predicated region
    $region129: #{pitt2d_forward.1} parent=5 // pred_check
      %p917 = pneg %p916
    $region130: #{pitt2d_forward.1} parent=5 // pred_check_branch
      %919 = sbr.rel (%p917) target = $region132
    $region131: #{pitt2d_forward.1} parent=5 // pred_region
      // Predicated region
      $region133: #{pitt2d_forward.1} parent=131 // pred_check
        %p920 = pneg %p95
      $region134: #{pitt2d_forward.1} parent=131 // pred_check_branch
        %922 = sbr.rel (%p920) target = $region136
      $region135: #{pitt2d_forward.1} parent=131 // pred_region
        %p923 = scmp.lt.s32.totalorder %s75, 1
        %s924 = scalar_select %p923, %s75, 1
        %s925 = smul.addr %s924, 3
        %s926 = scalar_lea.vmem %s1, %s925
      $region136: #{pitt2d_forward.1} parent=131 // pred_fallthru
        _
      // Predicated region
      $region137: #{pitt2d_forward.1} parent=131 // pred_check
        %p927 = pneg %p121
      $region138: #{pitt2d_forward.1} parent=131 // pred_check_branch
        %929 = sbr.rel (%p927) target = $region140
      $region139: #{pitt2d_forward.1} parent=131 // pred_region
        %p930 = scmp.lt.s32.totalorder %s75, 1
        %s931 = scalar_select %p930, %s75, 1
        %s932 = scalar_lea.vmem %s3, %s931
      $region140: #{pitt2d_forward.1} parent=131 // pred_fallthru
        _
      // Predicated region
      $region141: #{pitt2d_forward.1} parent=131 // pred_check
        %p933 = pneg %p147
      $region142: #{pitt2d_forward.1} parent=131 // pred_check_branch
        %935 = sbr.rel (%p933) target = $region144
      $region143: #{pitt2d_forward.1} parent=131 // pred_region
        %p936 = scmp.lt.s32.totalorder %s75, 1
        %s937 = scalar_select %p936, %s75, 1
        %s938 = scalar_lea.vmem %s5, %s937
      $region144: #{pitt2d_forward.1} parent=131 // pred_fallthru
        _
      // Predicated region
      $region145: #{pitt2d_forward.1} parent=131 // pred_check
        %p939 = pneg %p173
      $region146: #{pitt2d_forward.1} parent=131 // pred_check_branch
        %941 = sbr.rel (%p939) target = $region148
      $region147: #{pitt2d_forward.1} parent=131 // pred_region
        %p942 = scmp.lt.s32.totalorder %s75, 1
        %s943 = scalar_select %p942, %s75, 1
        %s944 = scalar_lea.vmem %s7, %s943
      $region148: #{pitt2d_forward.1} parent=131 // pred_fallthru
        _
    $region132: #{pitt2d_forward.1} parent=5 // pred_fallthru
      _
    %p945 = scmp.le.s32.totalorder 1, %s75
    %p946 = scmp.lt.s32.totalorder %s75, 3
    %p947 = pnand %p945, %p946
    %p948 = pneg %p947
    // Predicated region
    $region149: #{pitt2d_forward.1} parent=5 // pred_check
      _
    $region150: #{pitt2d_forward.1} parent=5 // pred_check_branch
      %950 = sbr.rel (%p947) target = $region152
    $region151: #{pitt2d_forward.1} parent=5 // pred_region
      %s951 = ssub.s32 %s75, 1
      %p952 = scmp.lt.s32.totalorder %s80, 1
      %s953 = scalar_select %p952, %s80, 1
      %s954 = smul.addr %s953, 3
      %s955 = scalar_lea.vmem %s1, %s954
      %p956 = pneg %p101
      %p957 = pneg %p98
      %p958 = scmp.lt.s32.totalorder %s80, 1
      %s959 = scalar_select %p958, %s80, 1
      %s960 = scalar_lea.vmem %s3, %s959
      %p961 = pneg %p127
      %p962 = pneg %p124
      %p963 = scmp.lt.s32.totalorder %s80, 1
      %s964 = scalar_select %p963, %s80, 1
      %s965 = scalar_lea.vmem %s5, %s964
      %p966 = pneg %p153
      %p967 = pneg %p150
      %p968 = scmp.lt.s32.totalorder %s80, 1
      %s969 = scalar_select %p968, %s80, 1
      %s970 = scalar_lea.vmem %s7, %s969
      %p971 = pneg %p179
      %p972 = pneg %p176
      %p973 = pneg %p200
      %p974 = pneg %p197
      %p975 = pneg %p221
      %p976 = pneg %p218
      %p977 = pneg %p242
      %p978 = pneg %p239
      %p979 = pneg %p263
      %p980 = pneg %p260
      %p981 = pneg %p284
      %p982 = pneg %p281
      %p983 = pneg %p305
      %p984 = pneg %p302
      %p985 = pneg %p326
      %p986 = pneg %p323
      %p987 = pneg %p347
      %p988 = pneg %p344
      %p989 = pneg %p368
      %p990 = pneg %p365
      %p991 = pneg %p389
      %p992 = pneg %p386
      %p993 = pneg %p410
      %p994 = pneg %p407
      %p995 = pneg %p431
      %p996 = pneg %p428
      %p997 = pneg %p452
      %p998 = pneg %p449
      %p999 = pneg %p473
      %p1000 = pneg %p470
      %p1001 = pneg %p494
      %p1002 = pneg %p491
      %p1003 = pneg %p515
      %p1004 = pneg %p512
      %p1005 = pneg %p536
      %p1006 = pneg %p533
      %p1007 = pneg %p557
      %p1008 = pneg %p554
      %p1009 = pneg %p578
      %p1010 = pneg %p575
      %p1011 = pneg %p599
      %p1012 = pneg %p596
      %p1013 = pneg %p620
      %p1014 = pneg %p617
      %p1015 = pneg %p641
      %p1016 = pneg %p638
      %p1017 = pneg %p662
      %p1018 = pneg %p659
      %p1019 = pneg %p683
      %p1020 = pneg %p680
      %p1021 = pneg %p704
      %p1022 = pneg %p701
      %p1023 = pneg %p725
      %p1024 = pneg %p722
      %p1025 = pneg %p746
      %p1026 = pneg %p743
      %p1027 = pneg %p767
      %p1028 = pneg %p764
      %p1029 = pneg %p788
      %p1030 = pneg %p785
      %p1031 = pneg %p814
      %p1032 = pneg %p811
      %p1033 = scmp.lt.s32.totalorder %s80, 1
      %s1034 = scalar_select %p1033, %s80, 1
      %s1035 = scalar_lea.vmem %s67, %s1034
      %p1036 = scmp.lt.s32.totalorder %s80, 1
      %s1037 = scalar_select %p1036, %s80, 1
      %s1038 = smul.addr %s1037, 3
      %s1039 = scalar_lea.vmem %s1, %s1038
      %p1040 = scmp.lt.s32.totalorder %s80, 1
      %s1041 = scalar_select %p1040, %s80, 1
      %s1042 = scalar_lea.vmem %s3, %s1041
      %p1043 = scmp.lt.s32.totalorder %s80, 1
      %s1044 = scalar_select %p1043, %s80, 1
      %s1045 = scalar_lea.vmem %s5, %s1044
      %p1046 = scmp.lt.s32.totalorder %s80, 1
      %s1047 = scalar_select %p1046, %s80, 1
      %s1048 = scalar_lea.vmem %s7, %s1047
      %p1049 = scmp.lt.s32.totalorder %s80, 1
      %s1050 = scalar_select %p1049, %s80, 1
      %s1051 = scalar_lea.vmem %s67, %s1050
      %v1052 = vld [vmem:[%s1039] sm:$0x7]
      %v1053 = vld [vmem:[%s1042] sm:$0x1]
      %v1054 = vld [vmem:[%s1045] sm:$0x1]
      %v1055 = vld [vmem:[%s1048] sm:$0x1]
      %v1056 = vld [vmem:[%s9] sm:$0xff]
      %v1057 = vld [vmem:[%s9 + $0x8] sm:$0xff]
      %v1058 = vld [vmem:[%s9 + $0x10] sm:$0xff]
      %v1059 = vld [vmem:[%s9 + $0x18] sm:$0xff]
      %v1060 = vld [vmem:[%s9 + $0x20] sm:$0xff]
      %v1061 = vld [vmem:[%s9 + $0x28] sm:$0xff]
      %v1062 = vld [vmem:[%s9 + $0x30] sm:$0xff]
      %v1063 = vld [vmem:[%s9 + $0x38] sm:$0xff]
      %v1064 = vld [vmem:[%s9 + $0x40] sm:$0xff]
      %v1065 = vld [vmem:[%s9 + $0x48] sm:$0xff]
      %v1066 = vld [vmem:[%s9 + $0x50] sm:$0xff]
      %v1067 = vld [vmem:[%s9 + $0x58] sm:$0xff]
      %v1068 = vld [vmem:[%s9 + $0x60] sm:$0xff]
      %v1069 = vld [vmem:[%s9 + $0x68] sm:$0xff]
      %v1070 = vld [vmem:[%s9 + $0x70] sm:$0xff]
      %v1071 = vld [vmem:[%s9 + $0x78] sm:$0xff]
      %v1072 = vld [vmem:[%s9 + $0x80] sm:$0xff]
      %v1073 = vld [vmem:[%s9 + $0x88] sm:$0xff]
      %v1074 = vld [vmem:[%s9 + $0x90] sm:$0xff]
      %v1075 = vld [vmem:[%s9 + $0x98] sm:$0xff]
      %v1076 = vld [vmem:[%s9 + $0xa0] sm:$0xff]
      %v1077 = vld [vmem:[%s9 + $0xa8] sm:$0xff]
      %v1078 = vld [vmem:[%s9 + $0xb0] sm:$0xff]
      %v1079 = vld [vmem:[%s9 + $0xb8] sm:$0xff]
      %v1080 = vld [vmem:[%s9 + $0xc0] sm:$0xff]
      %v1081 = vld [vmem:[%s9 + $0xc8] sm:$0xff]
      %v1082 = vld [vmem:[%s9 + $0xd0] sm:$0xff]
      %v1083 = vld [vmem:[%s9 + $0xd8] sm:$0xff]
      %v1084 = vld [vmem:[%s9 + $0xe0] sm:$0xff]
      %v1085 = vld [vmem:[%s9 + $0xe8] sm:$0xff]
      %v1086 = vld [vmem:[%s9 + $0xf0] sm:$0xff]
      %v1087 = vld [vmem:[%s9 + $0xf8] sm:$0xff]
      %v1088 = vld [vmem:[%s9 + $0x100] sm:$0xff]
      %v1089 = vld [vmem:[%s9 + $0x108] sm:$0xff]
      %v1090 = vld [vmem:[%s9 + $0x110] sm:$0xff]
      %v1091 = vld [vmem:[%s9 + $0x118] sm:$0xff]
      %v1092 = vld [vmem:[%s9 + $0x120] sm:$0xff]
      %v1093 = vld [vmem:[%s9 + $0x128] sm:$0xff]
      %v1094 = vld [vmem:[%s9 + $0x130] sm:$0xff]
      %v1095 = vld [vmem:[%s9 + $0x138] sm:$0xff]
      %v1096 = vld [vmem:[%s9 + $0x140] sm:$0xff]
      %v1097 = vld [vmem:[%s9 + $0x148] sm:$0xff]
      %v1098 = vld [vmem:[%s9 + $0x150] sm:$0xff]
      %v1099 = vld [vmem:[%s9 + $0x158] sm:$0xff]
      %v1100 = vld [vmem:[%s9 + $0x160] sm:$0xff]
      %v1101 = vld [vmem:[%s9 + $0x168] sm:$0xff]
      %v1102 = vld [vmem:[%s9 + $0x170] sm:$0xff]
      %v1103 = vld [vmem:[%s9 + $0x178] sm:$0xff]
      %v1105 = vlaneseq
      %v1106 = vshrl.u32 %v1105, 7
      %v1107 = vsub.s32 0, %v1106
      %v1108 = vrot.slane %v1052, %v1107
      %v1109 = vlaneseq
      %v1110 = vshrl.u32 %v1109, 7
      %v1111 = vsub.s32 1, %v1110
      %v1112 = vrot.slane %v1052, %v1111
      %v1113 = vlaneseq
      %v1114 = vshrl.u32 %v1113, 7
      %v1115 = vsub.s32 2, %v1114
      %v1116 = vrot.slane %v1052, %v1115
      %1120 = vmatprep.subr.mxu0 0.0
      %1121 = vmatpush1.msra.mxu0 %v1056
      %1122 = vmatprep.subr.mxu0 0.0
      %1123 = vmatpush1.msra.mxu0 %v1057
      %1124 = vmatprep.subr.mxu0 0.0
      %1125 = vmatpush1.msra.mxu0 %v1058
      %1126 = vmatprep.subr.mxu0 0.0
      %1127 = vmatpush1.msra.mxu0 %v1059
      %1128 = vmatprep.subr.mxu0 0.0
      %1129 = vmatpush1.msra.mxu0 %v1060
      %1130 = vmatprep.subr.mxu0 0.0
      %1131 = vmatpush1.msra.mxu0 %v1061
      %1132 = vmatprep.subr.mxu0 0.0
      %1133 = vmatpush1.msra.mxu0 %v1062
      %1134 = vmatprep.subr.mxu0 0.0
      %1135 = vmatpush1.msra.mxu0 %v1063
      %1136 = vmatprep.subr.mxu0 0.0
      %1137 = vmatpush1.msra.mxu0 %v1064
      %1138 = vmatprep.subr.mxu0 0.0
      %1139 = vmatpush1.msra.mxu0 %v1065
      %1140 = vmatprep.subr.mxu0 0.0
      %1141 = vmatpush1.msra.mxu0 %v1066
      %1142 = vmatprep.subr.mxu0 0.0
      %1143 = vmatpush1.msra.mxu0 %v1067
      %1144 = vmatprep.subr.mxu0 0.0
      %1145 = vmatpush1.msra.mxu0 %v1068
      %1146 = vmatprep.subr.mxu0 0.0
      %1147 = vmatpush1.msra.mxu0 %v1069
      %1148 = vmatprep.subr.mxu0 0.0
      %1149 = vmatpush1.msra.mxu0 %v1070
      %1150 = vmatprep.subr.mxu0 0.0
      %1151 = vmatpush1.msra.mxu0 %v1071
      %1152 = vmatprep.subr.mxu0 0.0
      %1153 = vmatpush1.msra.mxu0 %v1072
      %1154 = vmatprep.subr.mxu0 0.0
      %1155 = vmatpush1.msra.mxu0 %v1073
      %1156 = vmatprep.subr.mxu0 0.0
      %1157 = vmatpush1.msra.mxu0 %v1074
      %1158 = vmatprep.subr.mxu0 0.0
      %1159 = vmatpush1.msra.mxu0 %v1075
      %1160 = vmatprep.subr.mxu0 0.0
      %1161 = vmatpush1.msra.mxu0 %v1076
      %1162 = vmatprep.subr.mxu0 0.0
      %1163 = vmatpush1.msra.mxu0 %v1077
      %1164 = vmatprep.subr.mxu0 0.0
      %1165 = vmatpush1.msra.mxu0 %v1078
      %1166 = vmatprep.subr.mxu0 0.0
      %1167 = vmatpush1.msra.mxu0 %v1079
      %1168 = vmatprep.subr.mxu0 0.0
      %1169 = vmatpush1.msra.mxu0 %v1080
      %1170 = vmatprep.subr.mxu0 0.0
      %1171 = vmatpush1.msra.mxu0 %v1081
      %1172 = vmatprep.subr.mxu0 0.0
      %1173 = vmatpush1.msra.mxu0 %v1082
      %1174 = vmatprep.subr.mxu0 0.0
      %1175 = vmatpush1.msra.mxu0 %v1083
      %1176 = vmatprep.subr.mxu0 0.0
      %1177 = vmatpush1.msra.mxu0 %v1084
      %1178 = vmatprep.subr.mxu0 0.0
      %1179 = vmatpush1.msra.mxu0 %v1085
      %1180 = vmatprep.subr.mxu0 0.0
      %1181 = vmatpush1.msra.mxu0 %v1086
      %1182 = vmatprep.subr.mxu0 0.0
      %1183 = vmatpush1.msra.mxu0 %v1087
      %1184 = vmatprep.mubr.f32.mxu0 %v1112
      %1185 = vmatmul.mubr.f32.gmra.mrb[0].mxu0 %v1108
      %v1186 = vpop.f32.mrb[0].mxu0
      %v1187 = vadd.f32 0.0, %v1186
      %v1188 = vpop.f32.mrb[0].mxu0
      %1189 = vdwg.mxu0
      %1190 = vmatprep.subr.mxu0 0.0
      %1191 = vmatpush1.msra.mxu0 %v1088
      %1192 = vmatprep.subr.mxu0 0.0
      %1193 = vmatpush1.msra.mxu0 %v1089
      %1194 = vmatprep.subr.mxu0 0.0
      %1195 = vmatpush1.msra.mxu0 %v1090
      %1196 = vmatprep.subr.mxu0 0.0
      %1197 = vmatpush1.msra.mxu0 %v1091
      %1198 = vmatprep.subr.mxu0 0.0
      %1199 = vmatpush1.msra.mxu0 %v1092
      %1200 = vmatprep.subr.mxu0 0.0
      %1201 = vmatpush1.msra.mxu0 %v1093
      %1202 = vmatprep.subr.mxu0 0.0
      %1203 = vmatpush1.msra.mxu0 %v1094
      %1204 = vmatprep.subr.mxu0 0.0
      %1205 = vmatpush1.msra.mxu0 %v1095
      %1206 = vmatprep.subr.mxu0 0.0
      %1207 = vmatpush1.msra.mxu0 %v1096
      %1208 = vmatprep.subr.mxu0 0.0
      %1209 = vmatpush1.msra.mxu0 %v1097
      %1210 = vmatprep.subr.mxu0 0.0
      %1211 = vmatpush1.msra.mxu0 %v1098
      %1212 = vmatprep.subr.mxu0 0.0
      %1213 = vmatpush1.msra.mxu0 %v1099
      %1214 = vmatprep.subr.mxu0 0.0
      %1215 = vmatpush1.msra.mxu0 %v1100
      %1216 = vmatprep.subr.mxu0 0.0
      %1217 = vmatpush1.msra.mxu0 %v1101
      %1218 = vmatprep.subr.mxu0 0.0
      %1219 = vmatpush1.msra.mxu0 %v1102
      %1220 = vmatprep.subr.mxu0 0.0
      %1221 = vmatpush1.msra.mxu0 %v1103
      %1222 = vmatprep.subr.mxu0 0.0
      %1223 = vmatpush1.msra.mxu0 0.0
      %1224 = vmatprep.subr.mxu0 0.0
      %1225 = vmatpush1.msra.mxu0 0.0
      %1226 = vmatprep.subr.mxu0 0.0
      %1227 = vmatpush1.msra.mxu0 0.0
      %1228 = vmatprep.subr.mxu0 0.0
      %1229 = vmatpush1.msra.mxu0 0.0
      %1230 = vmatprep.subr.mxu0 0.0
      %1231 = vmatpush1.msra.mxu0 0.0
      %1232 = vmatprep.subr.mxu0 0.0
      %1233 = vmatpush1.msra.mxu0 0.0
      %1234 = vmatprep.subr.mxu0 0.0
      %1235 = vmatpush1.msra.mxu0 0.0
      %1236 = vmatprep.subr.mxu0 0.0
      %1237 = vmatpush1.msra.mxu0 0.0
      %1238 = vmatprep.subr.mxu0 0.0
      %1239 = vmatpush1.msra.mxu0 0.0
      %1240 = vmatprep.subr.mxu0 0.0
      %1241 = vmatpush1.msra.mxu0 0.0
      %1242 = vmatprep.subr.mxu0 0.0
      %1243 = vmatpush1.msra.mxu0 0.0
      %1244 = vmatprep.subr.mxu0 0.0
      %1245 = vmatpush1.msra.mxu0 0.0
      %1246 = vmatprep.subr.mxu0 0.0
      %1247 = vmatpush1.msra.mxu0 0.0
      %1248 = vmatprep.subr.mxu0 0.0
      %1249 = vmatpush1.msra.mxu0 0.0
      %1250 = vmatprep.subr.mxu0 0.0
      %1251 = vmatpush1.msra.mxu0 0.0
      %1252 = vmatprep.subr.mxu0 0.0
      %1253 = vmatpush1.msra.mxu0 0.0
      %1254 = vmatprep.mubr.f32.mxu0 0.0
      %1255 = vmatmul.mubr.f32.gmra.mrb[0].mxu0 %v1116
      %v1256 = vpop.f32.mrb[0].mxu0
      %v1257 = vadd.f32 %v1187, %v1256
      %v1258 = vpop.f32.mrb[0].mxu0
      %1259 = vdwg.mxu0
      %v1260 = vsub.f32 %v1257, %v1053
      %v1261 = vld [vmem:[%s11] sm:$0xff]
      %v1262 = vld [vmem:[%s11 + $0x8] sm:$0xff]
      %v1263 = vld [vmem:[%s11 + $0x10] sm:$0xff]
      %v1264 = vld [vmem:[%s11 + $0x18] sm:$0xff]
      %v1266 = vlaneseq
      %v1267 = vshrl.u32 %v1266, 7
      %v1268 = vsub.s32 0, %v1267
      %v1269 = vrot.slane %v1054, %v1268
      %v1271 = vmul.f32 %v1261, %v1269
      %v1272 = vmul.f32 %v1262, %v1269
      %v1273 = vmul.f32 %v1263, %v1269
      %v1274 = vmul.f32 %v1264, %v1269
      %vm1275 = vcmask 130048
      %v1276 = vsel %vm1275, %v1271, 0.0
      %1277 = vadd.xlane.f32.xlu0 %v1276
      %v1278 = vpop.xlane.xlu0 %1277
      %v1279 = vsel %vm1275, %v1272, 0.0
      %1280 = vadd.xlane.f32.xlu0 %v1279
      %v1281 = vpop.xlane.xlu0 %1280
      %v1282 = vsel %vm1275, %v1273, 0.0
      %1283 = vadd.xlane.f32.xlu0 %v1282
      %v1284 = vpop.xlane.xlu0 %1283
      %v1285 = vsel %vm1275, %v1274, 0.0
      %1286 = vadd.xlane.f32.xlu0 %v1285
      %v1287 = vpop.xlane.xlu0 %1286
      %v1288 = vld [vmem:[%s13] sm:$0x7]
      %v1289 = vlaneseq
      %v1290 = vshrl.u32 %v1289, 7
      %v1291 = vsub.s32 0, %v1290
      %v1292 = vrot.slane %v1288, %v1291
      %v1293 = vmul.f32 %v1278, %v1292
      %v1294 = vmul.f32 %v1281, %v1292
      %v1295 = vmul.f32 %v1284, %v1292
      %v1296 = vmul.f32 %v1287, %v1292
      %v1297 = vlaneseq
      %v1298 = vshrl.u32 %v1297, 7
      %v1299 = vsub.s32 1, %v1298
      %v1300 = vrot.slane %v1288, %v1299
      %v1301 = vmul.f32 %v1278, %v1300
      %v1302 = vmul.f32 %v1281, %v1300
      %v1303 = vmul.f32 %v1284, %v1300
      %v1304 = vmul.f32 %v1287, %v1300
      %v1305 = vlaneseq
      %v1306 = vshrl.u32 %v1305, 7
      %v1307 = vsub.s32 2, %v1306
      %v1308 = vrot.slane %v1288, %v1307
      %v1309 = vmul.f32 %v1278, %v1308
      %v1310 = vmul.f32 %v1281, %v1308
      %v1311 = vmul.f32 %v1284, %v1308
      %v1312 = vmul.f32 %v1287, %v1308
      %v1313 = vld [vmem:[%s15] sm:$0xff]
      %v1314 = vld [vmem:[%s15 + $0x8] sm:$0xff]
      %v1315 = vld [vmem:[%s15 + $0x10] sm:$0xff]
      %v1316 = vld [vmem:[%s15 + $0x18] sm:$0xff]
      %v1317 = vld [vmem:[%s17] sm:$0x1]
      %v1319 = vlaneseq
      %v1320 = vshrl.u32 %v1319, 7
      %v1321 = vsub.s32 0, %v1320
      %v1322 = vrot.slane %v1317, %v1321
      %vm1324 = vcmask 261120
      %v1326 = vsel %vm1324, %v1293, 0
      %v1329 = vsel %vm1324, %v1294, 0
      %v1332 = vsel %vm1324, %v1295, 0
      %v1335 = vsel %vm1324, %v1296, 0
      %1337 = vmatprep.subr.mxu0 0.0
      %1338 = vmatpush1.msra.mxu0 %v1313
      %1339 = vmatprep.subr.mxu0 0.0
      %1340 = vmatpush1.msra.mxu0 %v1314
      %1341 = vmatprep.subr.mxu0 0.0
      %1342 = vmatpush1.msra.mxu0 %v1315
      %1343 = vmatprep.subr.mxu0 0.0
      %1344 = vmatpush1.msra.mxu0 %v1316
      %1345 = vmatprep.subr.mxu0 0.0
      %1346 = vmatpush1.msra.mxu0 0.0
      %1347 = vmatprep.subr.mxu0 0.0
      %1348 = vmatpush1.msra.mxu0 0.0
      %1349 = vmatprep.subr.mxu0 0.0
      %1350 = vmatpush1.msra.mxu0 0.0
      %1351 = vmatprep.subr.mxu0 0.0
      %1352 = vmatpush1.msra.mxu0 0.0
      %1353 = vmatprep.subr.mxu0 0.0
      %1354 = vmatpush1.msra.mxu0 0.0
      %1355 = vmatprep.subr.mxu0 0.0
      %1356 = vmatpush1.msra.mxu0 0.0
      %1357 = vmatprep.subr.mxu0 0.0
      %1358 = vmatpush1.msra.mxu0 0.0
      %1359 = vmatprep.subr.mxu0 0.0
      %1360 = vmatpush1.msra.mxu0 0.0
      %1361 = vmatprep.subr.mxu0 0.0
      %1362 = vmatpush1.msra.mxu0 0.0
      %1363 = vmatprep.subr.mxu0 0.0
      %1364 = vmatpush1.msra.mxu0 0.0
      %1365 = vmatprep.subr.mxu0 0.0
      %1366 = vmatpush1.msra.mxu0 0.0
      %1367 = vmatprep.subr.mxu0 0.0
      %1368 = vmatpush1.msra.mxu0 0.0
      %1369 = vmatprep.subr.mxu0 0.0
      %1370 = vmatpush1.msra.mxu0 0.0
      %1371 = vmatprep.subr.mxu0 0.0
      %1372 = vmatpush1.msra.mxu0 0.0
      %1373 = vmatprep.subr.mxu0 0.0
      %1374 = vmatpush1.msra.mxu0 0.0
      %1375 = vmatprep.subr.mxu0 0.0
      %1376 = vmatpush1.msra.mxu0 0.0
      %1377 = vmatprep.subr.mxu0 0.0
      %1378 = vmatpush1.msra.mxu0 0.0
      %1379 = vmatprep.subr.mxu0 0.0
      %1380 = vmatpush1.msra.mxu0 0.0
      %1381 = vmatprep.subr.mxu0 0.0
      %1382 = vmatpush1.msra.mxu0 0.0
      %1383 = vmatprep.subr.mxu0 0.0
      %1384 = vmatpush1.msra.mxu0 0.0
      %1385 = vmatprep.subr.mxu0 0.0
      %1386 = vmatpush1.msra.mxu0 0.0
      %1387 = vmatprep.subr.mxu0 0.0
      %1388 = vmatpush1.msra.mxu0 0.0
      %1389 = vmatprep.subr.mxu0 0.0
      %1390 = vmatpush1.msra.mxu0 0.0
      %1391 = vmatprep.subr.mxu0 0.0
      %1392 = vmatpush1.msra.mxu0 0.0
      %1393 = vmatprep.subr.mxu0 0.0
      %1394 = vmatpush1.msra.mxu0 0.0
      %1395 = vmatprep.subr.mxu0 0.0
      %1396 = vmatpush1.msra.mxu0 0.0
      %1397 = vmatprep.subr.mxu0 0.0
      %1398 = vmatpush1.msra.mxu0 0.0
      %1399 = vmatprep.subr.mxu0 0.0
      %1400 = vmatpush1.msra.mxu0 0.0
      %1401 = vmatprep.mubr.f32.mxu0 0.0
      %1402 = vmatmul.mubr.f32.gmra.mrb[0].mxu0 %v1326
      %v1403 = vpop.f32.mrb[0].mxu0
      %v1404 = vadd.f32 %v1322, %v1403
      %v1405 = vpop.f32.mrb[0].mxu0
      %1406 = vmatprep.mubr.f32.mxu0 0.0
      %1407 = vmatmul.mubr.f32.gmra.mrb[0].mxu0 %v1329
      %v1408 = vpop.f32.mrb[0].mxu0
      %v1409 = vadd.f32 %v1322, %v1408
      %v1410 = vpop.f32.mrb[0].mxu0
      %1411 = vmatprep.mubr.f32.mxu0 0.0
      %1412 = vmatmul.mubr.f32.gmra.mrb[0].mxu0 %v1332
      %v1413 = vpop.f32.mrb[0].mxu0
      %v1414 = vadd.f32 %v1322, %v1413
      %v1415 = vpop.f32.mrb[0].mxu0
      %1416 = vmatprep.mubr.f32.mxu0 0.0
      %1417 = vmatmul.mubr.f32.gmra.mrb[0].mxu0 %v1335
      %v1418 = vpop.f32.mrb[0].mxu0
      %v1419 = vadd.f32 %v1322, %v1418
      %v1420 = vpop.f32.mrb[0].mxu0
      %1421 = vdwg.mxu0
      %s1422 = scalar_lea.vmem %s15, 32
      %v1423 = vld [vmem:[%s1422] sm:$0xff]
      %v1424 = vld [vmem:[%s1422 + $0x8] sm:$0xff]
      %v1425 = vld [vmem:[%s1422 + $0x10] sm:$0xff]
      %v1426 = vld [vmem:[%s1422 + $0x18] sm:$0xff]
      %s1427 = scalar_lea.vmem %s17, 1
      %v1428 = vld [vmem:[%s1427] sm:$0x1]
      %v1430 = vlaneseq
      %v1431 = vshrl.u32 %v1430, 7
      %v1432 = vsub.s32 0, %v1431
      %v1433 = vrot.slane %v1428, %v1432
      %v1436 = vsel %vm1324, %v1301, 0
      %v1439 = vsel %vm1324, %v1302, 0
      %v1442 = vsel %vm1324, %v1303, 0
      %v1445 = vsel %vm1324, %v1304, 0
      %1447 = vmatprep.subr.mxu0 0.0
      %1448 = vmatpush1.msra.mxu0 %v1423
      %1449 = vmatprep.subr.mxu0 0.0
      %1450 = vmatpush1.msra.mxu0 %v1424
      %1451 = vmatprep.subr.mxu0 0.0
      %1452 = vmatpush1.msra.mxu0 %v1425
      %1453 = vmatprep.subr.mxu0 0.0
      %1454 = vmatpush1.msra.mxu0 %v1426
      %1455 = vmatprep.subr.mxu0 0.0
      %1456 = vmatpush1.msra.mxu0 0.0
      %1457 = vmatprep.subr.mxu0 0.0
      %1458 = vmatpush1.msra.mxu0 0.0
      %1459 = vmatprep.subr.mxu0 0.0
      %1460 = vmatpush1.msra.mxu0 0.0
      %1461 = vmatprep.subr.mxu0 0.0
      %1462 = vmatpush1.msra.mxu0 0.0
      %1463 = vmatprep.subr.mxu0 0.0
      %1464 = vmatpush1.msra.mxu0 0.0
      %1465 = vmatprep.subr.mxu0 0.0
      %1466 = vmatpush1.msra.mxu0 0.0
      %1467 = vmatprep.subr.mxu0 0.0
      %1468 = vmatpush1.msra.mxu0 0.0
      %1469 = vmatprep.subr.mxu0 0.0
      %1470 = vmatpush1.msra.mxu0 0.0
      %1471 = vmatprep.subr.mxu0 0.0
      %1472 = vmatpush1.msra.mxu0 0.0
      %1473 = vmatprep.subr.mxu0 0.0
      %1474 = vmatpush1.msra.mxu0 0.0
      %1475 = vmatprep.subr.mxu0 0.0
      %1476 = vmatpush1.msra.mxu0 0.0
      %1477 = vmatprep.subr.mxu0 0.0
      %1478 = vmatpush1.msra.mxu0 0.0
      %1479 = vmatprep.subr.mxu0 0.0
      %1480 = vmatpush1.msra.mxu0 0.0
      %1481 = vmatprep.subr.mxu0 0.0
      %1482 = vmatpush1.msra.mxu0 0.0
      %1483 = vmatprep.subr.mxu0 0.0
      %1484 = vmatpush1.msra.mxu0 0.0
      %1485 = vmatprep.subr.mxu0 0.0
      %1486 = vmatpush1.msra.mxu0 0.0
      %1487 = vmatprep.subr.mxu0 0.0
      %1488 = vmatpush1.msra.mxu0 0.0
      %1489 = vmatprep.subr.mxu0 0.0
      %1490 = vmatpush1.msra.mxu0 0.0
      %1491 = vmatprep.subr.mxu0 0.0
      %1492 = vmatpush1.msra.mxu0 0.0
      %1493 = vmatprep.subr.mxu0 0.0
      %1494 = vmatpush1.msra.mxu0 0.0
      %1495 = vmatprep.subr.mxu0 0.0
      %1496 = vmatpush1.msra.mxu0 0.0
      %1497 = vmatprep.subr.mxu0 0.0
      %1498 = vmatpush1.msra.mxu0 0.0
      %1499 = vmatprep.subr.mxu0 0.0
      %1500 = vmatpush1.msra.mxu0 0.0
      %1501 = vmatprep.subr.mxu0 0.0
      %1502 = vmatpush1.msra.mxu0 0.0
      %1503 = vmatprep.subr.mxu0 0.0
      %1504 = vmatpush1.msra.mxu0 0.0
      %1505 = vmatprep.subr.mxu0 0.0
      %1506 = vmatpush1.msra.mxu0 0.0
      %1507 = vmatprep.subr.mxu0 0.0
      %1508 = vmatpush1.msra.mxu0 0.0
      %1509 = vmatprep.subr.mxu0 0.0
      %1510 = vmatpush1.msra.mxu0 0.0
      %1511 = vmatprep.mubr.f32.mxu0 0.0
      %1512 = vmatmul.mubr.f32.gmra.mrb[0].mxu0 %v1436
      %v1513 = vpop.f32.mrb[0].mxu0
      %v1514 = vadd.f32 %v1433, %v1513
      %v1515 = vpop.f32.mrb[0].mxu0
      %1516 = vmatprep.mubr.f32.mxu0 0.0
      %1517 = vmatmul.mubr.f32.gmra.mrb[0].mxu0 %v1439
      %v1518 = vpop.f32.mrb[0].mxu0
      %v1519 = vadd.f32 %v1433, %v1518
      %v1520 = vpop.f32.mrb[0].mxu0
      %1521 = vmatprep.mubr.f32.mxu0 0.0
      %1522 = vmatmul.mubr.f32.gmra.mrb[0].mxu0 %v1442
      %v1523 = vpop.f32.mrb[0].mxu0
      %v1524 = vadd.f32 %v1433, %v1523
      %v1525 = vpop.f32.mrb[0].mxu0
      %1526 = vmatprep.mubr.f32.mxu0 0.0
      %1527 = vmatmul.mubr.f32.gmra.mrb[0].mxu0 %v1445
      %v1528 = vpop.f32.mrb[0].mxu0
      %v1529 = vadd.f32 %v1433, %v1528
      %v1530 = vpop.f32.mrb[0].mxu0
      %1531 = vdwg.mxu0
      %s1532 = scalar_lea.vmem %s15, 64
      %v1533 = vld [vmem:[%s1532] sm:$0xff]
      %v1534 = vld [vmem:[%s1532 + $0x8] sm:$0xff]
      %v1535 = vld [vmem:[%s1532 + $0x10] sm:$0xff]
      %v1536 = vld [vmem:[%s1532 + $0x18] sm:$0xff]
      %s1537 = scalar_lea.vmem %s17, 2
      %v1538 = vld [vmem:[%s1537] sm:$0x1]
      %v1540 = vlaneseq
      %v1541 = vshrl.u32 %v1540, 7
      %v1542 = vsub.s32 0, %v1541
      %v1543 = vrot.slane %v1538, %v1542
      %v1546 = vsel %vm1324, %v1309, 0
      %v1549 = vsel %vm1324, %v1310, 0
      %v1552 = vsel %vm1324, %v1311, 0
      %v1555 = vsel %vm1324, %v1312, 0
      %1557 = vmatprep.subr.mxu0 0.0
      %1558 = vmatpush1.msra.mxu0 %v1533
      %1559 = vmatprep.subr.mxu0 0.0
      %1560 = vmatpush1.msra.mxu0 %v1534
      %1561 = vmatprep.subr.mxu0 0.0
      %1562 = vmatpush1.msra.mxu0 %v1535
      %1563 = vmatprep.subr.mxu0 0.0
      %1564 = vmatpush1.msra.mxu0 %v1536
      %1565 = vmatprep.subr.mxu0 0.0
      %1566 = vmatpush1.msra.mxu0 0.0
      %1567 = vmatprep.subr.mxu0 0.0
      %1568 = vmatpush1.msra.mxu0 0.0
      %1569 = vmatprep.subr.mxu0 0.0
      %1570 = vmatpush1.msra.mxu0 0.0
      %1571 = vmatprep.subr.mxu0 0.0
      %1572 = vmatpush1.msra.mxu0 0.0
      %1573 = vmatprep.subr.mxu0 0.0
      %1574 = vmatpush1.msra.mxu0 0.0
      %1575 = vmatprep.subr.mxu0 0.0
      %1576 = vmatpush1.msra.mxu0 0.0
      %1577 = vmatprep.subr.mxu0 0.0
      %1578 = vmatpush1.msra.mxu0 0.0
      %1579 = vmatprep.subr.mxu0 0.0
      %1580 = vmatpush1.msra.mxu0 0.0
      %1581 = vmatprep.subr.mxu0 0.0
      %1582 = vmatpush1.msra.mxu0 0.0
      %1583 = vmatprep.subr.mxu0 0.0
      %1584 = vmatpush1.msra.mxu0 0.0
      %1585 = vmatprep.subr.mxu0 0.0
      %1586 = vmatpush1.msra.mxu0 0.0
      %1587 = vmatprep.subr.mxu0 0.0
      %1588 = vmatpush1.msra.mxu0 0.0
      %1589 = vmatprep.subr.mxu0 0.0
      %1590 = vmatpush1.msra.mxu0 0.0
      %1591 = vmatprep.subr.mxu0 0.0
      %1592 = vmatpush1.msra.mxu0 0.0
      %1593 = vmatprep.subr.mxu0 0.0
      %1594 = vmatpush1.msra.mxu0 0.0
      %1595 = vmatprep.subr.mxu0 0.0
      %1596 = vmatpush1.msra.mxu0 0.0
      %1597 = vmatprep.subr.mxu0 0.0
      %1598 = vmatpush1.msra.mxu0 0.0
      %1599 = vmatprep.subr.mxu0 0.0
      %1600 = vmatpush1.msra.mxu0 0.0
      %1601 = vmatprep.subr.mxu0 0.0
      %1602 = vmatpush1.msra.mxu0 0.0
      %1603 = vmatprep.subr.mxu0 0.0
      %1604 = vmatpush1.msra.mxu0 0.0
      %1605 = vmatprep.subr.mxu0 0.0
      %1606 = vmatpush1.msra.mxu0 0.0
      %1607 = vmatprep.subr.mxu0 0.0
      %1608 = vmatpush1.msra.mxu0 0.0
      %1609 = vmatprep.subr.mxu0 0.0
      %1610 = vmatpush1.msra.mxu0 0.0
      %1611 = vmatprep.subr.mxu0 0.0
      %1612 = vmatpush1.msra.mxu0 0.0
      %1613 = vmatprep.subr.mxu0 0.0
      %1614 = vmatpush1.msra.mxu0 0.0
      %1615 = vmatprep.subr.mxu0 0.0
      %1616 = vmatpush1.msra.mxu0 0.0
      %1617 = vmatprep.subr.mxu0 0.0
      %1618 = vmatpush1.msra.mxu0 0.0
      %1619 = vmatprep.subr.mxu0 0.0
      %1620 = vmatpush1.msra.mxu0 0.0
      %1621 = vmatprep.mubr.f32.mxu0 0.0
      %1622 = vmatmul.mubr.f32.gmra.mrb[0].mxu0 %v1546
      %v1623 = vpop.f32.mrb[0].mxu0
      %v1624 = vadd.f32 %v1543, %v1623
      %v1625 = vpop.f32.mrb[0].mxu0
      %1626 = vmatprep.mubr.f32.mxu0 0.0
      %1627 = vmatmul.mubr.f32.gmra.mrb[0].mxu0 %v1549
      %v1628 = vpop.f32.mrb[0].mxu0
      %v1629 = vadd.f32 %v1543, %v1628
      %v1630 = vpop.f32.mrb[0].mxu0
      %1631 = vmatprep.mubr.f32.mxu0 0.0
      %1632 = vmatmul.mubr.f32.gmra.mrb[0].mxu0 %v1552
      %v1633 = vpop.f32.mrb[0].mxu0
      %v1634 = vadd.f32 %v1543, %v1633
      %v1635 = vpop.f32.mrb[0].mxu0
      %1636 = vmatprep.mubr.f32.mxu0 0.0
      %1637 = vmatmul.mubr.f32.gmra.mrb[0].mxu0 %v1555
      %v1638 = vpop.f32.mrb[0].mxu0
      %v1639 = vadd.f32 %v1543, %v1638
      %v1640 = vpop.f32.mrb[0].mxu0
      %1641 = vdwg.mxu0
      %v1642 = vld [vmem:[%s19] sm:$0xff]
      %v1643 = vld [vmem:[%s19 + $0x8] sm:$0xff]
      %v1644 = vld [vmem:[%s19 + $0x10] sm:$0xff]
      %v1645 = vld [vmem:[%s19 + $0x18] sm:$0xff]
      %v1646 = vmul.f32 %v1404, 0.35355338
      %v1647 = vmul.f32 %v1409, 0.35355338
      %v1648 = vmul.f32 %v1414, 0.35355338
      %v1649 = vmul.f32 %v1419, 0.35355338
      %vm1650 = vcmask 64512
      %v1652 = vsel %vm1650, %v1646, 0
      %v1655 = vsel %vm1650, %v1647, 0
      %v1658 = vsel %vm1650, %v1648, 0
      %v1661 = vsel %vm1650, %v1649, 0
      %v1664 = vsel %vm1650, %v1514, 0
      %v1667 = vsel %vm1650, %v1519, 0
      %v1670 = vsel %vm1650, %v1524, 0
      %v1673 = vsel %vm1650, %v1529, 0
      %1675 = vmatprep.subr.mxu0 0.0
      %1676 = vmatpush1.xpose.msra.mxu0 %v1664
      %1677 = vmatprep.subr.mxu0 0.0
      %1678 = vmatpush1.xpose.msra.mxu0 %v1667
      %1679 = vmatprep.subr.mxu0 0.0
      %1680 = vmatpush1.xpose.msra.mxu0 %v1670
      %1681 = vmatprep.subr.mxu0 0.0
      %1682 = vmatpush1.xpose.msra.mxu0 %v1673
      %1683 = vmatprep.subr.mxu0 0.0
      %1684 = vmatpush1.xpose.msra.mxu0 0.0
      %1685 = vmatprep.subr.mxu0 0.0
      %1686 = vmatpush1.xpose.msra.mxu0 0.0
      %1687 = vmatprep.subr.mxu0 0.0
      %1688 = vmatpush1.xpose.msra.mxu0 0.0
      %1689 = vmatprep.subr.mxu0 0.0
      %1690 = vmatpush1.xpose.msra.mxu0 0.0
      %1691 = vmatprep.subr.mxu0 0.0
      %1692 = vmatpush1.xpose.msra.mxu0 0.0
      %1693 = vmatprep.subr.mxu0 0.0
      %1694 = vmatpush1.xpose.msra.mxu0 0.0
      %1695 = vmatprep.subr.mxu0 0.0
      %1696 = vmatpush1.xpose.msra.mxu0 0.0
      %1697 = vmatprep.subr.mxu0 0.0
      %1698 = vmatpush1.xpose.msra.mxu0 0.0
      %1699 = vmatprep.subr.mxu0 0.0
      %1700 = vmatpush1.xpose.msra.mxu0 0.0
      %1701 = vmatprep.subr.mxu0 0.0
      %1702 = vmatpush1.xpose.msra.mxu0 0.0
      %1703 = vmatprep.subr.mxu0 0.0
      %1704 = vmatpush1.xpose.msra.mxu0 0.0
      %1705 = vmatprep.subr.mxu0 0.0
      %1706 = vmatpush1.xpose.msra.mxu0 0.0
      %1707 = vmatprep.subr.mxu0 0.0
      %1708 = vmatpush1.xpose.msra.mxu0 0.0
      %1709 = vmatprep.subr.mxu0 0.0
      %1710 = vmatpush1.xpose.msra.mxu0 0.0
      %1711 = vmatprep.subr.mxu0 0.0
      %1712 = vmatpush1.xpose.msra.mxu0 0.0
      %1713 = vmatprep.subr.mxu0 0.0
      %1714 = vmatpush1.xpose.msra.mxu0 0.0
      %1715 = vmatprep.subr.mxu0 0.0
      %1716 = vmatpush1.xpose.msra.mxu0 0.0
      %1717 = vmatprep.subr.mxu0 0.0
      %1718 = vmatpush1.xpose.msra.mxu0 0.0
      %1719 = vmatprep.subr.mxu0 0.0
      %1720 = vmatpush1.xpose.msra.mxu0 0.0
      %1721 = vmatprep.subr.mxu0 0.0
      %1722 = vmatpush1.xpose.msra.mxu0 0.0
      %1723 = vmatprep.subr.mxu0 0.0
      %1724 = vmatpush1.xpose.msra.mxu0 0.0
      %1725 = vmatprep.subr.mxu0 0.0
      %1726 = vmatpush1.xpose.msra.mxu0 0.0
      %1727 = vmatprep.subr.mxu0 0.0
      %1728 = vmatpush1.xpose.msra.mxu0 0.0
      %1729 = vmatprep.subr.mxu0 0.0
      %1730 = vmatpush1.xpose.msra.mxu0 0.0
      %1731 = vmatprep.subr.mxu0 0.0
      %1732 = vmatpush1.xpose.msra.mxu0 0.0
      %1733 = vmatprep.subr.mxu0 0.0
      %1734 = vmatpush1.xpose.msra.mxu0 0.0
      %1735 = vmatprep.subr.mxu0 0.0
      %1736 = vmatpush1.xpose.msra.mxu0 0.0
      %1737 = vmatprep.subr.mxu0 0.0
      %1738 = vmatpush1.xpose.msra.mxu0 0.0
      %1739 = vmatprep.mubr.f32.mxu0 0.0
      %1740 = vmatmul.mubr.f32.gmra.mrb[0].mxu0 %v1652
      %v1741 = vpop.f32.mrb[0].mxu0
      %v1742 = vadd.f32 0.0, %v1741
      %v1743 = vpop.f32.mrb[0].mxu0
      %1744 = vmatprep.mubr.f32.mxu0 0.0
      %1745 = vmatmul.mubr.f32.gmra.mrb[0].mxu0 %v1655
      %v1746 = vpop.f32.mrb[0].mxu0
      %v1747 = vadd.f32 0.0, %v1746
      %v1748 = vpop.f32.mrb[0].mxu0
      %1749 = vmatprep.mubr.f32.mxu0 0.0
      %1750 = vmatmul.mubr.f32.gmra.mrb[0].mxu0 %v1658
      %v1751 = vpop.f32.mrb[0].mxu0
      %v1752 = vadd.f32 0.0, %v1751
      %v1753 = vpop.f32.mrb[0].mxu0
      %1754 = vmatprep.mubr.f32.mxu0 0.0
      %1755 = vmatmul.mubr.f32.gmra.mrb[0].mxu0 %v1661
      %v1756 = vpop.f32.mrb[0].mxu0
      %v1757 = vadd.f32 0.0, %v1756
      %v1758 = vpop.f32.mrb[0].mxu0
      %1759 = vdwg.mxu0
      %v1760 = vsel %vm1324, %v1742, -inf
      %1761 = vmax.xlane.f32.xlu0 %v1760
      %v1762 = vpop.xlane.xlu0 %1761
      %v1763 = vsel %vm1324, %v1747, -inf
      %1764 = vmax.xlane.f32.xlu0 %v1763
      %v1765 = vpop.xlane.xlu0 %1764
      %v1766 = vsel %vm1324, %v1752, -inf
      %1767 = vmax.xlane.f32.xlu0 %v1766
      %v1768 = vpop.xlane.xlu0 %1767
      %v1769 = vsel %vm1324, %v1757, -inf
      %1770 = vmax.xlane.f32.xlu0 %v1769
      %v1771 = vpop.xlane.xlu0 %1770
      %v1772 = vsub.f32 %v1742, %v1762
      %v1773 = vsub.f32 %v1747, %v1765
      %v1774 = vsub.f32 %v1752, %v1768
      %v1775 = vsub.f32 %v1757, %v1771
      %v1776 = vmul.f32 %v1772, 1.442695
      %v1777 = vpow.pop %v1776
      %v1778 = vmul.f32 %v1773, 1.442695
      %v1779 = vpow.pop %v1778
      %v1780 = vmul.f32 %v1774, 1.442695
      %v1781 = vpow.pop %v1780
      %v1782 = vmul.f32 %v1775, 1.442695
      %v1783 = vpow.pop %v1782
      %v1784 = vsel %vm1324, %v1777, 0.0
      %1785 = vadd.xlane.f32.xlu0 %v1784
      %v1786 = vpop.xlane.xlu0 %1785
      %v1787 = vsel %vm1324, %v1779, 0.0
      %1788 = vadd.xlane.f32.xlu0 %v1787
      %v1789 = vpop.xlane.xlu0 %1788
      %v1790 = vsel %vm1324, %v1781, 0.0
      %1791 = vadd.xlane.f32.xlu0 %v1790
      %v1792 = vpop.xlane.xlu0 %1791
      %v1793 = vsel %vm1324, %v1783, 0.0
      %1794 = vadd.xlane.f32.xlu0 %v1793
      %v1795 = vpop.xlane.xlu0 %1794
      %v1796 = vrcp.pop %v1786
      %v1797 = vmul.f32 %v1777, %v1796
      %v1798 = vrcp.pop %v1789
      %v1799 = vmul.f32 %v1779, %v1798
      %v1800 = vrcp.pop %v1792
      %v1801 = vmul.f32 %v1781, %v1800
      %v1802 = vrcp.pop %v1795
      %v1803 = vmul.f32 %v1783, %v1802
      %v1805 = vsel %vm1324, %v1797, 0
      %v1808 = vsel %vm1324, %v1799, 0
      %v1811 = vsel %vm1324, %v1801, 0
      %v1814 = vsel %vm1324, %v1803, 0
      %1816 = vmatprep.subr.mxu0 0.0
      %1817 = vmatpush1.msra.mxu0 %v1624
      %1818 = vmatprep.subr.mxu0 0.0
      %1819 = vmatpush1.msra.mxu0 %v1629
      %1820 = vmatprep.subr.mxu0 0.0
      %1821 = vmatpush1.msra.mxu0 %v1634
      %1822 = vmatprep.subr.mxu0 0.0
      %1823 = vmatpush1.msra.mxu0 %v1639
      %1824 = vmatprep.subr.mxu0 0.0
      %1825 = vmatpush1.msra.mxu0 0.0
      %1826 = vmatprep.subr.mxu0 0.0
      %1827 = vmatpush1.msra.mxu0 0.0
      %1828 = vmatprep.subr.mxu0 0.0
      %1829 = vmatpush1.msra.mxu0 0.0
      %1830 = vmatprep.subr.mxu0 0.0
      %1831 = vmatpush1.msra.mxu0 0.0
      %1832 = vmatprep.subr.mxu0 0.0
      %1833 = vmatpush1.msra.mxu0 0.0
      %1834 = vmatprep.subr.mxu0 0.0
      %1835 = vmatpush1.msra.mxu0 0.0
      %1836 = vmatprep.subr.mxu0 0.0
      %1837 = vmatpush1.msra.mxu0 0.0
      %1838 = vmatprep.subr.mxu0 0.0
      %1839 = vmatpush1.msra.mxu0 0.0
      %1840 = vmatprep.subr.mxu0 0.0
      %1841 = vmatpush1.msra.mxu0 0.0
      %1842 = vmatprep.subr.mxu0 0.0
      %1843 = vmatpush1.msra.mxu0 0.0
      %1844 = vmatprep.subr.mxu0 0.0
      %1845 = vmatpush1.msra.mxu0 0.0
      %1846 = vmatprep.subr.mxu0 0.0
      %1847 = vmatpush1.msra.mxu0 0.0
      %1848 = vmatprep.subr.mxu0 0.0
      %1849 = vmatpush1.msra.mxu0 0.0
      %1850 = vmatprep.subr.mxu0 0.0
      %1851 = vmatpush1.msra.mxu0 0.0
      %1852 = vmatprep.subr.mxu0 0.0
      %1853 = vmatpush1.msra.mxu0 0.0
      %1854 = vmatprep.subr.mxu0 0.0
      %1855 = vmatpush1.msra.mxu0 0.0
      %1856 = vmatprep.subr.mxu0 0.0
      %1857 = vmatpush1.msra.mxu0 0.0
      %1858 = vmatprep.subr.mxu0 0.0
      %1859 = vmatpush1.msra.mxu0 0.0
      %1860 = vmatprep.subr.mxu0 0.0
      %1861 = vmatpush1.msra.mxu0 0.0
      %1862 = vmatprep.subr.mxu0 0.0
      %1863 = vmatpush1.msra.mxu0 0.0
      %1864 = vmatprep.subr.mxu0 0.0
      %1865 = vmatpush1.msra.mxu0 0.0
      %1866 = vmatprep.subr.mxu0 0.0
      %1867 = vmatpush1.msra.mxu0 0.0
      %1868 = vmatprep.subr.mxu0 0.0
      %1869 = vmatpush1.msra.mxu0 0.0
      %1870 = vmatprep.subr.mxu0 0.0
      %1871 = vmatpush1.msra.mxu0 0.0
      %1872 = vmatprep.subr.mxu0 0.0
      %1873 = vmatpush1.msra.mxu0 0.0
      %1874 = vmatprep.subr.mxu0 0.0
      %1875 = vmatpush1.msra.mxu0 0.0
      %1876 = vmatprep.subr.mxu0 0.0
      %1877 = vmatpush1.msra.mxu0 0.0
      %1878 = vmatprep.subr.mxu0 0.0
      %1879 = vmatpush1.msra.mxu0 0.0
      %1880 = vmatprep.mubr.f32.mxu0 0.0
      %1881 = vmatmul.mubr.f32.gmra.mrb[0].mxu0 %v1805
      %v1882 = vpop.f32.mrb[0].mxu0
      %v1883 = vadd.f32 0.0, %v1882
      %v1884 = vpop.f32.mrb[0].mxu0
      %1885 = vmatprep.mubr.f32.mxu0 0.0
      %1886 = vmatmul.mubr.f32.gmra.mrb[0].mxu0 %v1808
      %v1887 = vpop.f32.mrb[0].mxu0
      %v1888 = vadd.f32 0.0, %v1887
      %v1889 = vpop.f32.mrb[0].mxu0
      %1890 = vmatprep.mubr.f32.mxu0 0.0
      %1891 = vmatmul.mubr.f32.gmra.mrb[0].mxu0 %v1811
      %v1892 = vpop.f32.mrb[0].mxu0
      %v1893 = vadd.f32 0.0, %v1892
      %v1894 = vpop.f32.mrb[0].mxu0
      %1895 = vmatprep.mubr.f32.mxu0 0.0
      %1896 = vmatmul.mubr.f32.gmra.mrb[0].mxu0 %v1814
      %v1897 = vpop.f32.mrb[0].mxu0
      %v1898 = vadd.f32 0.0, %v1897
      %v1899 = vpop.f32.mrb[0].mxu0
      %1900 = vdwg.mxu0
      %1901 = vrot.lane.b32.xlu0 %v1646, 120
      %v1902 = vpop.permute.xlu0 %1901
      %1903 = vrot.lane.b32.xlu0 %v1647, 120
      %v1904 = vpop.permute.xlu0 %1903
      %1905 = vrot.lane.b32.xlu0 %v1648, 120
      %v1906 = vpop.permute.xlu0 %1905
      %1907 = vrot.lane.b32.xlu0 %v1649, 120
      %v1908 = vpop.permute.xlu0 %1907
      %1909 = vrot.lane.b32.xlu0 %v1514, 120
      %v1910 = vpop.permute.xlu0 %1909
      %1911 = vrot.lane.b32.xlu0 %v1519, 120
      %v1912 = vpop.permute.xlu0 %1911
      %1913 = vrot.lane.b32.xlu0 %v1524, 120
      %v1914 = vpop.permute.xlu0 %1913
      %1915 = vrot.lane.b32.xlu0 %v1529, 120
      %v1916 = vpop.permute.xlu0 %1915
      %v1917 = vsel %vm1650, %v1902, 0
      %v1919 = vsel %vm1650, %v1904, 0
      %v1921 = vsel %vm1650, %v1906, 0
      %v1923 = vsel %vm1650, %v1908, 0
      %v1925 = vsel %vm1650, %v1910, 0
      %v1927 = vsel %vm1650, %v1912, 0
      %v1929 = vsel %vm1650, %v1914, 0
      %v1931 = vsel %vm1650, %v1916, 0
      %1933 = vmatprep.subr.mxu0 0.0
      %1934 = vmatpush1.xpose.msra.mxu0 %v1925
      %1935 = vmatprep.subr.mxu0 0.0
      %1936 = vmatpush1.xpose.msra.mxu0 %v1927
      %1937 = vmatprep.subr.mxu0 0.0
      %1938 = vmatpush1.xpose.msra.mxu0 %v1929
      %1939 = vmatprep.subr.mxu0 0.0
      %1940 = vmatpush1.xpose.msra.mxu0 %v1931
      %1941 = vmatprep.subr.mxu0 0.0
      %1942 = vmatpush1.xpose.msra.mxu0 0.0
      %1943 = vmatprep.subr.mxu0 0.0
      %1944 = vmatpush1.xpose.msra.mxu0 0.0
      %1945 = vmatprep.subr.mxu0 0.0
      %1946 = vmatpush1.xpose.msra.mxu0 0.0
      %1947 = vmatprep.subr.mxu0 0.0
      %1948 = vmatpush1.xpose.msra.mxu0 0.0
      %1949 = vmatprep.subr.mxu0 0.0
      %1950 = vmatpush1.xpose.msra.mxu0 0.0
      %1951 = vmatprep.subr.mxu0 0.0
      %1952 = vmatpush1.xpose.msra.mxu0 0.0
      %1953 = vmatprep.subr.mxu0 0.0
      %1954 = vmatpush1.xpose.msra.mxu0 0.0
      %1955 = vmatprep.subr.mxu0 0.0
      %1956 = vmatpush1.xpose.msra.mxu0 0.0
      %1957 = vmatprep.subr.mxu0 0.0
      %1958 = vmatpush1.xpose.msra.mxu0 0.0
      %1959 = vmatprep.subr.mxu0 0.0
      %1960 = vmatpush1.xpose.msra.mxu0 0.0
      %1961 = vmatprep.subr.mxu0 0.0
      %1962 = vmatpush1.xpose.msra.mxu0 0.0
      %1963 = vmatprep.subr.mxu0 0.0
      %1964 = vmatpush1.xpose.msra.mxu0 0.0
      %1965 = vmatprep.subr.mxu0 0.0
      %1966 = vmatpush1.xpose.msra.mxu0 0.0
      %1967 = vmatprep.subr.mxu0 0.0
      %1968 = vmatpush1.xpose.msra.mxu0 0.0
      %1969 = vmatprep.subr.mxu0 0.0
      %1970 = vmatpush1.xpose.msra.mxu0 0.0
      %1971 = vmatprep.subr.mxu0 0.0
      %1972 = vmatpush1.xpose.msra.mxu0 0.0
      %1973 = vmatprep.subr.mxu0 0.0
      %1974 = vmatpush1.xpose.msra.mxu0 0.0
      %1975 = vmatprep.subr.mxu0 0.0
      %1976 = vmatpush1.xpose.msra.mxu0 0.0
      %1977 = vmatprep.subr.mxu0 0.0
      %1978 = vmatpush1.xpose.msra.mxu0 0.0
      %1979 = vmatprep.subr.mxu0 0.0
      %1980 = vmatpush1.xpose.msra.mxu0 0.0
      %1981 = vmatprep.subr.mxu0 0.0
      %1982 = vmatpush1.xpose.msra.mxu0 0.0
      %1983 = vmatprep.subr.mxu0 0.0
      %1984 = vmatpush1.xpose.msra.mxu0 0.0
      %1985 = vmatprep.subr.mxu0 0.0
      %1986 = vmatpush1.xpose.msra.mxu0 0.0
      %1987 = vmatprep.subr.mxu0 0.0
      %1988 = vmatpush1.xpose.msra.mxu0 0.0
      %1989 = vmatprep.subr.mxu0 0.0
      %1990 = vmatpush1.xpose.msra.mxu0 0.0
      %1991 = vmatprep.subr.mxu0 0.0
      %1992 = vmatpush1.xpose.msra.mxu0 0.0
      %1993 = vmatprep.subr.mxu0 0.0
      %1994 = vmatpush1.xpose.msra.mxu0 0.0
      %1995 = vmatprep.subr.mxu0 0.0
      %1996 = vmatpush1.xpose.msra.mxu0 0.0
      %1997 = vmatprep.mubr.f32.mxu0 0.0
      %1998 = vmatmul.mubr.f32.gmra.mrb[0].mxu0 %v1917
      %v1999 = vpop.f32.mrb[0].mxu0
      %v2000 = vadd.f32 0.0, %v1999
      %v2001 = vpop.f32.mrb[0].mxu0
      %2002 = vmatprep.mubr.f32.mxu0 0.0
      %2003 = vmatmul.mubr.f32.gmra.mrb[0].mxu0 %v1919
      %v2004 = vpop.f32.mrb[0].mxu0
      %v2005 = vadd.f32 0.0, %v2004
      %v2006 = vpop.f32.mrb[0].mxu0
      %2007 = vmatprep.mubr.f32.mxu0 0.0
      %2008 = vmatmul.mubr.f32.gmra.mrb[0].mxu0 %v1921
      %v2009 = vpop.f32.mrb[0].mxu0
      %v2010 = vadd.f32 0.0, %v2009
      %v2011 = vpop.f32.mrb[0].mxu0
      %2012 = vmatprep.mubr.f32.mxu0 0.0
      %2013 = vmatmul.mubr.f32.gmra.mrb[0].mxu0 %v1923
      %v2014 = vpop.f32.mrb[0].mxu0
      %v2015 = vadd.f32 0.0, %v2014
      %v2016 = vpop.f32.mrb[0].mxu0
      %2017 = vdwg.mxu0
      %v2018 = vsel %vm1324, %v2000, -inf
      %2019 = vmax.xlane.f32.xlu0 %v2018
      %v2020 = vpop.xlane.xlu0 %2019
      %v2021 = vsel %vm1324, %v2005, -inf
      %2022 = vmax.xlane.f32.xlu0 %v2021
      %v2023 = vpop.xlane.xlu0 %2022
      %v2024 = vsel %vm1324, %v2010, -inf
      %2025 = vmax.xlane.f32.xlu0 %v2024
      %v2026 = vpop.xlane.xlu0 %2025
      %v2027 = vsel %vm1324, %v2015, -inf
      %2028 = vmax.xlane.f32.xlu0 %v2027
      %v2029 = vpop.xlane.xlu0 %2028
      %v2030 = vsub.f32 %v2000, %v2020
      %v2031 = vsub.f32 %v2005, %v2023
      %v2032 = vsub.f32 %v2010, %v2026
      %v2033 = vsub.f32 %v2015, %v2029
      %v2034 = vmul.f32 %v2030, 1.442695
      %v2035 = vpow.pop %v2034
      %v2036 = vmul.f32 %v2031, 1.442695
      %v2037 = vpow.pop %v2036
      %v2038 = vmul.f32 %v2032, 1.442695
      %v2039 = vpow.pop %v2038
      %v2040 = vmul.f32 %v2033, 1.442695
      %v2041 = vpow.pop %v2040
      %v2042 = vsel %vm1324, %v2035, 0.0
      %2043 = vadd.xlane.f32.xlu0 %v2042
      %v2044 = vpop.xlane.xlu0 %2043
      %v2045 = vsel %vm1324, %v2037, 0.0
      %2046 = vadd.xlane.f32.xlu0 %v2045
      %v2047 = vpop.xlane.xlu0 %2046
      %v2048 = vsel %vm1324, %v2039, 0.0
      %2049 = vadd.xlane.f32.xlu0 %v2048
      %v2050 = vpop.xlane.xlu0 %2049
      %v2051 = vsel %vm1324, %v2041, 0.0
      %2052 = vadd.xlane.f32.xlu0 %v2051
      %v2053 = vpop.xlane.xlu0 %2052
      %v2054 = vrcp.pop %v2044
      %v2055 = vmul.f32 %v2035, %v2054
      %v2056 = vrcp.pop %v2047
      %v2057 = vmul.f32 %v2037, %v2056
      %v2058 = vrcp.pop %v2050
      %v2059 = vmul.f32 %v2039, %v2058
      %v2060 = vrcp.pop %v2053
      %v2061 = vmul.f32 %v2041, %v2060
      %2066 = vrot.lane.b32.xlu0 %v1624, 120
      %v2067 = vpop.permute.xlu0 %2066
      %2068 = vrot.lane.b32.xlu0 %v1629, 120
      %v2069 = vpop.permute.xlu0 %2068
      %2070 = vrot.lane.b32.xlu0 %v1634, 120
      %v2071 = vpop.permute.xlu0 %2070
      %2072 = vrot.lane.b32.xlu0 %v1639, 120
      %v2073 = vpop.permute.xlu0 %2072
      %v2079 = vsel %vm1324, %v2055, 0
      %v2082 = vsel %vm1324, %v2057, 0
      %v2085 = vsel %vm1324, %v2059, 0
      %v2088 = vsel %vm1324, %v2061, 0
      %2090 = vmatprep.subr.mxu0 0.0
      %2091 = vmatpush1.msra.mxu0 %v2067
      %2092 = vmatprep.subr.mxu0 0.0
      %2093 = vmatpush1.msra.mxu0 %v2069
      %2094 = vmatprep.subr.mxu0 0.0
      %2095 = vmatpush1.msra.mxu0 %v2071
      %2096 = vmatprep.subr.mxu0 0.0
      %2097 = vmatpush1.msra.mxu0 %v2073
      %2098 = vmatprep.subr.mxu0 0.0
      %2099 = vmatpush1.msra.mxu0 0.0
      %2100 = vmatprep.subr.mxu0 0.0
      %2101 = vmatpush1.msra.mxu0 0.0
      %2102 = vmatprep.subr.mxu0 0.0
      %2103 = vmatpush1.msra.mxu0 0.0
      %2104 = vmatprep.subr.mxu0 0.0
      %2105 = vmatpush1.msra.mxu0 0.0
      %2106 = vmatprep.subr.mxu0 0.0
      %2107 = vmatpush1.msra.mxu0 0.0
      %2108 = vmatprep.subr.mxu0 0.0
      %2109 = vmatpush1.msra.mxu0 0.0
      %2110 = vmatprep.subr.mxu0 0.0
      %2111 = vmatpush1.msra.mxu0 0.0
      %2112 = vmatprep.subr.mxu0 0.0
      %2113 = vmatpush1.msra.mxu0 0.0
      %2114 = vmatprep.subr.mxu0 0.0
      %2115 = vmatpush1.msra.mxu0 0.0
      %2116 = vmatprep.subr.mxu0 0.0
      %2117 = vmatpush1.msra.mxu0 0.0
      %2118 = vmatprep.subr.mxu0 0.0
      %2119 = vmatpush1.msra.mxu0 0.0
      %2120 = vmatprep.subr.mxu0 0.0
      %2121 = vmatpush1.msra.mxu0 0.0
      %2122 = vmatprep.subr.mxu0 0.0
      %2123 = vmatpush1.msra.mxu0 0.0
      %2124 = vmatprep.subr.mxu0 0.0
      %2125 = vmatpush1.msra.mxu0 0.0
      %2126 = vmatprep.subr.mxu0 0.0
      %2127 = vmatpush1.msra.mxu0 0.0
      %2128 = vmatprep.subr.mxu0 0.0
      %2129 = vmatpush1.msra.mxu0 0.0
      %2130 = vmatprep.subr.mxu0 0.0
      %2131 = vmatpush1.msra.mxu0 0.0
      %2132 = vmatprep.subr.mxu0 0.0
      %2133 = vmatpush1.msra.mxu0 0.0
      %2134 = vmatprep.subr.mxu0 0.0
      %2135 = vmatpush1.msra.mxu0 0.0
      %2136 = vmatprep.subr.mxu0 0.0
      %2137 = vmatpush1.msra.mxu0 0.0
      %2138 = vmatprep.subr.mxu0 0.0
      %2139 = vmatpush1.msra.mxu0 0.0
      %2140 = vmatprep.subr.mxu0 0.0
      %2141 = vmatpush1.msra.mxu0 0.0
      %2142 = vmatprep.subr.mxu0 0.0
      %2143 = vmatpush1.msra.mxu0 0.0
      %2144 = vmatprep.subr.mxu0 0.0
      %2145 = vmatpush1.msra.mxu0 0.0
      %2146 = vmatprep.subr.mxu0 0.0
      %2147 = vmatpush1.msra.mxu0 0.0
      %2148 = vmatprep.subr.mxu0 0.0
      %2149 = vmatpush1.msra.mxu0 0.0
      %2150 = vmatprep.subr.mxu0 0.0
      %2151 = vmatpush1.msra.mxu0 0.0
      %2152 = vmatprep.subr.mxu0 0.0
      %2153 = vmatpush1.msra.mxu0 0.0
      %2154 = vmatprep.mubr.f32.mxu0 0.0
      %2155 = vmatmul.mubr.f32.gmra.mrb[0].mxu0 %v2079
      %v2156 = vpop.f32.mrb[0].mxu0
      %v2157 = vadd.f32 0.0, %v2156
      %v2158 = vpop.f32.mrb[0].mxu0
      %2159 = vmatprep.mubr.f32.mxu0 0.0
      %2160 = vmatmul.mubr.f32.gmra.mrb[0].mxu0 %v2082
      %v2161 = vpop.f32.mrb[0].mxu0
      %v2162 = vadd.f32 0.0, %v2161
      %v2163 = vpop.f32.mrb[0].mxu0
      %2164 = vmatprep.mubr.f32.mxu0 0.0
      %2165 = vmatmul.mubr.f32.gmra.mrb[0].mxu0 %v2085
      %v2166 = vpop.f32.mrb[0].mxu0
      %v2167 = vadd.f32 0.0, %v2166
      %v2168 = vpop.f32.mrb[0].mxu0
      %2169 = vmatprep.mubr.f32.mxu0 0.0
      %2170 = vmatmul.mubr.f32.gmra.mrb[0].mxu0 %v2088
      %v2171 = vpop.f32.mrb[0].mxu0
      %v2172 = vadd.f32 0.0, %v2171
      %v2173 = vpop.f32.mrb[0].mxu0
      %2174 = vdwg.mxu0
      %v2176 = vsel %vm1650, %v2157, 0
      %v2179 = vsel %vm1650, %v2162, 0
      %v2182 = vsel %vm1650, %v2167, 0
      %v2185 = vsel %vm1650, %v2172, 0
      %2187 = vmatprep.subr.mxu0 0.0
      %2188 = vmatpush1.msra.mxu0 %v1643
      %2189 = vmatprep.subr.mxu0 0.0
      %2190 = vmatpush1.msra.mxu0 0.0
      %2191 = vmatprep.subr.mxu0 0.0
      %2192 = vmatpush1.msra.mxu0 0.0
      %2193 = vmatprep.subr.mxu0 0.0
      %2194 = vmatpush1.msra.mxu0 0.0
      %2195 = vmatprep.subr.mxu0 0.0
      %2196 = vmatpush1.msra.mxu0 0.0
      %2197 = vmatprep.subr.mxu0 0.0
      %2198 = vmatpush1.msra.mxu0 0.0
      %2199 = vmatprep.subr.mxu0 0.0
      %2200 = vmatpush1.msra.mxu0 0.0
      %2201 = vmatprep.subr.mxu0 0.0
      %2202 = vmatpush1.msra.mxu0 0.0
      %2203 = vmatprep.subr.mxu0 0.0
      %2204 = vmatpush1.msra.mxu0 0.0
      %2205 = vmatprep.subr.mxu0 0.0
      %2206 = vmatpush1.msra.mxu0 0.0
      %2207 = vmatprep.subr.mxu0 0.0
      %2208 = vmatpush1.msra.mxu0 0.0
      %2209 = vmatprep.subr.mxu0 0.0
      %2210 = vmatpush1.msra.mxu0 0.0
      %2211 = vmatprep.subr.mxu0 0.0
      %2212 = vmatpush1.msra.mxu0 0.0
      %2213 = vmatprep.subr.mxu0 0.0
      %2214 = vmatpush1.msra.mxu0 0.0
      %2215 = vmatprep.subr.mxu0 0.0
      %2216 = vmatpush1.msra.mxu0 0.0
      %2217 = vmatprep.subr.mxu0 0.0
      %2218 = vmatpush1.msra.mxu0 0.0
      %2219 = vmatprep.subr.mxu0 0.0
      %2220 = vmatpush1.msra.mxu0 0.0
      %2221 = vmatprep.subr.mxu0 0.0
      %2222 = vmatpush1.msra.mxu0 0.0
      %2223 = vmatprep.subr.mxu0 0.0
      %2224 = vmatpush1.msra.mxu0 0.0
      %2225 = vmatprep.subr.mxu0 0.0
      %2226 = vmatpush1.msra.mxu0 0.0
      %2227 = vmatprep.subr.mxu0 0.0
      %2228 = vmatpush1.msra.mxu0 0.0
      %2229 = vmatprep.subr.mxu0 0.0
      %2230 = vmatpush1.msra.mxu0 0.0
      %2231 = vmatprep.subr.mxu0 0.0
      %2232 = vmatpush1.msra.mxu0 0.0
      %2233 = vmatprep.subr.mxu0 0.0
      %2234 = vmatpush1.msra.mxu0 0.0
      %2235 = vmatprep.subr.mxu0 0.0
      %2236 = vmatpush1.msra.mxu0 0.0
      %2237 = vmatprep.subr.mxu0 0.0
      %2238 = vmatpush1.msra.mxu0 0.0
      %2239 = vmatprep.subr.mxu0 0.0
      %2240 = vmatpush1.msra.mxu0 0.0
      %2241 = vmatprep.subr.mxu0 0.0
      %2242 = vmatpush1.msra.mxu0 0.0
      %2243 = vmatprep.subr.mxu0 0.0
      %2244 = vmatpush1.msra.mxu0 0.0
      %2245 = vmatprep.subr.mxu0 0.0
      %2246 = vmatpush1.msra.mxu0 0.0
      %2247 = vmatprep.subr.mxu0 0.0
      %2248 = vmatpush1.msra.mxu0 0.0
      %2249 = vmatprep.subr.mxu0 0.0
      %2250 = vmatpush1.msra.mxu0 0.0
      %2251 = vmatprep.mubr.f32.mxu0 0.0
      %2252 = vmatmul.mubr.f32.gmra.mrb[0].mxu0 %v2176
      %v2253 = vpop.f32.mrb[0].mxu0
      %v2254 = vadd.f32 0.0, %v2253
      %v2255 = vpop.f32.mrb[0].mxu0
      %2256 = vmatprep.mubr.f32.mxu0 0.0
      %2257 = vmatmul.mubr.f32.gmra.mrb[0].mxu0 %v2179
      %v2258 = vpop.f32.mrb[0].mxu0
      %v2259 = vadd.f32 0.0, %v2258
      %v2260 = vpop.f32.mrb[0].mxu0
      %2261 = vmatprep.mubr.f32.mxu0 0.0
      %2262 = vmatmul.mubr.f32.gmra.mrb[0].mxu0 %v2182
      %v2263 = vpop.f32.mrb[0].mxu0
      %v2264 = vadd.f32 0.0, %v2263
      %v2265 = vpop.f32.mrb[0].mxu0
      %2266 = vmatprep.mubr.f32.mxu0 0.0
      %2267 = vmatmul.mubr.f32.gmra.mrb[0].mxu0 %v2185
      %v2268 = vpop.f32.mrb[0].mxu0
      %v2269 = vadd.f32 0.0, %v2268
      %v2270 = vpop.f32.mrb[0].mxu0
      %2271 = vdwg.mxu0
      %v2273 = vsel %vm1650, %v1883, 0
      %v2276 = vsel %vm1650, %v1888, 0
      %v2279 = vsel %vm1650, %v1893, 0
      %v2282 = vsel %vm1650, %v1898, 0
      %2284 = vmatprep.subr.mxu0 0.0
      %2285 = vmatpush1.msra.mxu0 %v1642
      %2286 = vmatprep.subr.mxu0 0.0
      %2287 = vmatpush1.msra.mxu0 0.0
      %2288 = vmatprep.subr.mxu0 0.0
      %2289 = vmatpush1.msra.mxu0 0.0
      %2290 = vmatprep.subr.mxu0 0.0
      %2291 = vmatpush1.msra.mxu0 0.0
      %2292 = vmatprep.subr.mxu0 0.0
      %2293 = vmatpush1.msra.mxu0 0.0
      %2294 = vmatprep.subr.mxu0 0.0
      %2295 = vmatpush1.msra.mxu0 0.0
      %2296 = vmatprep.subr.mxu0 0.0
      %2297 = vmatpush1.msra.mxu0 0.0
      %2298 = vmatprep.subr.mxu0 0.0
      %2299 = vmatpush1.msra.mxu0 0.0
      %2300 = vmatprep.subr.mxu0 0.0
      %2301 = vmatpush1.msra.mxu0 0.0
      %2302 = vmatprep.subr.mxu0 0.0
      %2303 = vmatpush1.msra.mxu0 0.0
      %2304 = vmatprep.subr.mxu0 0.0
      %2305 = vmatpush1.msra.mxu0 0.0
      %2306 = vmatprep.subr.mxu0 0.0
      %2307 = vmatpush1.msra.mxu0 0.0
      %2308 = vmatprep.subr.mxu0 0.0
      %2309 = vmatpush1.msra.mxu0 0.0
      %2310 = vmatprep.subr.mxu0 0.0
      %2311 = vmatpush1.msra.mxu0 0.0
      %2312 = vmatprep.subr.mxu0 0.0
      %2313 = vmatpush1.msra.mxu0 0.0
      %2314 = vmatprep.subr.mxu0 0.0
      %2315 = vmatpush1.msra.mxu0 0.0
      %2316 = vmatprep.subr.mxu0 0.0
      %2317 = vmatpush1.msra.mxu0 0.0
      %2318 = vmatprep.subr.mxu0 0.0
      %2319 = vmatpush1.msra.mxu0 0.0
      %2320 = vmatprep.subr.mxu0 0.0
      %2321 = vmatpush1.msra.mxu0 0.0
      %2322 = vmatprep.subr.mxu0 0.0
      %2323 = vmatpush1.msra.mxu0 0.0
      %2324 = vmatprep.subr.mxu0 0.0
      %2325 = vmatpush1.msra.mxu0 0.0
      %2326 = vmatprep.subr.mxu0 0.0
      %2327 = vmatpush1.msra.mxu0 0.0
      %2328 = vmatprep.subr.mxu0 0.0
      %2329 = vmatpush1.msra.mxu0 0.0
      %2330 = vmatprep.subr.mxu0 0.0
      %2331 = vmatpush1.msra.mxu0 0.0
      %2332 = vmatprep.subr.mxu0 0.0
      %2333 = vmatpush1.msra.mxu0 0.0
      %2334 = vmatprep.subr.mxu0 0.0
      %2335 = vmatpush1.msra.mxu0 0.0
      %2336 = vmatprep.subr.mxu0 0.0
      %2337 = vmatpush1.msra.mxu0 0.0
      %2338 = vmatprep.subr.mxu0 0.0
      %2339 = vmatpush1.msra.mxu0 0.0
      %2340 = vmatprep.subr.mxu0 0.0
      %2341 = vmatpush1.msra.mxu0 0.0
      %2342 = vmatprep.subr.mxu0 0.0
      %2343 = vmatpush1.msra.mxu0 0.0
      %2344 = vmatprep.subr.mxu0 0.0
      %2345 = vmatpush1.msra.mxu0 0.0
      %2346 = vmatprep.subr.mxu0 0.0
      %2347 = vmatpush1.msra.mxu0 0.0
      %2348 = vmatprep.mubr.f32.mxu0 0.0
      %2349 = vmatmul.mubr.f32.gmra.mrb[0].mxu0 %v2273
      %v2350 = vpop.f32.mrb[0].mxu0
      %v2351 = vadd.f32 %v2254, %v2350
      %v2352 = vpop.f32.mrb[0].mxu0
      %2353 = vmatprep.mubr.f32.mxu0 0.0
      %2354 = vmatmul.mubr.f32.gmra.mrb[0].mxu0 %v2276
      %v2355 = vpop.f32.mrb[0].mxu0
      %v2356 = vadd.f32 %v2259, %v2355
      %v2357 = vpop.f32.mrb[0].mxu0
      %2358 = vmatprep.mubr.f32.mxu0 0.0
      %2359 = vmatmul.mubr.f32.gmra.mrb[0].mxu0 %v2279
      %v2360 = vpop.f32.mrb[0].mxu0
      %v2361 = vadd.f32 %v2264, %v2360
      %v2362 = vpop.f32.mrb[0].mxu0
      %2363 = vmatprep.mubr.f32.mxu0 0.0
      %2364 = vmatmul.mubr.f32.gmra.mrb[0].mxu0 %v2282
      %v2365 = vpop.f32.mrb[0].mxu0
      %v2366 = vadd.f32 %v2269, %v2365
      %v2367 = vpop.f32.mrb[0].mxu0
      %2368 = vdwg.mxu0
      %2369 = vrot.lane.b32.xlu0 %v1646, 112
      %v2370 = vpop.permute.xlu0 %2369
      %2371 = vrot.lane.b32.xlu0 %v1647, 112
      %v2372 = vpop.permute.xlu0 %2371
      %2373 = vrot.lane.b32.xlu0 %v1648, 112
      %v2374 = vpop.permute.xlu0 %2373
      %2375 = vrot.lane.b32.xlu0 %v1649, 112
      %v2376 = vpop.permute.xlu0 %2375
      %2377 = vrot.lane.b32.xlu0 %v1514, 112
      %v2378 = vpop.permute.xlu0 %2377
      %2379 = vrot.lane.b32.xlu0 %v1519, 112
      %v2380 = vpop.permute.xlu0 %2379
      %2381 = vrot.lane.b32.xlu0 %v1524, 112
      %v2382 = vpop.permute.xlu0 %2381
      %2383 = vrot.lane.b32.xlu0 %v1529, 112
      %v2384 = vpop.permute.xlu0 %2383
      %v2385 = vsel %vm1650, %v2370, 0
      %v2387 = vsel %vm1650, %v2372, 0
      %v2389 = vsel %vm1650, %v2374, 0
      %v2391 = vsel %vm1650, %v2376, 0
      %v2393 = vsel %vm1650, %v2378, 0
      %v2395 = vsel %vm1650, %v2380, 0
      %v2397 = vsel %vm1650, %v2382, 0
      %v2399 = vsel %vm1650, %v2384, 0
      %2401 = vmatprep.subr.mxu0 0.0
      %2402 = vmatpush1.xpose.msra.mxu0 %v2393
      %2403 = vmatprep.subr.mxu0 0.0
      %2404 = vmatpush1.xpose.msra.mxu0 %v2395
      %2405 = vmatprep.subr.mxu0 0.0
      %2406 = vmatpush1.xpose.msra.mxu0 %v2397
      %2407 = vmatprep.subr.mxu0 0.0
      %2408 = vmatpush1.xpose.msra.mxu0 %v2399
      %2409 = vmatprep.subr.mxu0 0.0
      %2410 = vmatpush1.xpose.msra.mxu0 0.0
      %2411 = vmatprep.subr.mxu0 0.0
      %2412 = vmatpush1.xpose.msra.mxu0 0.0
      %2413 = vmatprep.subr.mxu0 0.0
      %2414 = vmatpush1.xpose.msra.mxu0 0.0
      %2415 = vmatprep.subr.mxu0 0.0
      %2416 = vmatpush1.xpose.msra.mxu0 0.0
      %2417 = vmatprep.subr.mxu0 0.0
      %2418 = vmatpush1.xpose.msra.mxu0 0.0
      %2419 = vmatprep.subr.mxu0 0.0
      %2420 = vmatpush1.xpose.msra.mxu0 0.0
      %2421 = vmatprep.subr.mxu0 0.0
      %2422 = vmatpush1.xpose.msra.mxu0 0.0
      %2423 = vmatprep.subr.mxu0 0.0
      %2424 = vmatpush1.xpose.msra.mxu0 0.0
      %2425 = vmatprep.subr.mxu0 0.0
      %2426 = vmatpush1.xpose.msra.mxu0 0.0
      %2427 = vmatprep.subr.mxu0 0.0
      %2428 = vmatpush1.xpose.msra.mxu0 0.0
      %2429 = vmatprep.subr.mxu0 0.0
      %2430 = vmatpush1.xpose.msra.mxu0 0.0
      %2431 = vmatprep.subr.mxu0 0.0
      %2432 = vmatpush1.xpose.msra.mxu0 0.0
      %2433 = vmatprep.subr.mxu0 0.0
      %2434 = vmatpush1.xpose.msra.mxu0 0.0
      %2435 = vmatprep.subr.mxu0 0.0
      %2436 = vmatpush1.xpose.msra.mxu0 0.0
      %2437 = vmatprep.subr.mxu0 0.0
      %2438 = vmatpush1.xpose.msra.mxu0 0.0
      %2439 = vmatprep.subr.mxu0 0.0
      %2440 = vmatpush1.xpose.msra.mxu0 0.0
      %2441 = vmatprep.subr.mxu0 0.0
      %2442 = vmatpush1.xpose.msra.mxu0 0.0
      %2443 = vmatprep.subr.mxu0 0.0
      %2444 = vmatpush1.xpose.msra.mxu0 0.0
      %2445 = vmatprep.subr.mxu0 0.0
      %2446 = vmatpush1.xpose.msra.mxu0 0.0
      %2447 = vmatprep.subr.mxu0 0.0
      %2448 = vmatpush1.xpose.msra.mxu0 0.0
      %2449 = vmatprep.subr.mxu0 0.0
      %2450 = vmatpush1.xpose.msra.mxu0 0.0
      %2451 = vmatprep.subr.mxu0 0.0
      %2452 = vmatpush1.xpose.msra.mxu0 0.0
      %2453 = vmatprep.subr.mxu0 0.0
      %2454 = vmatpush1.xpose.msra.mxu0 0.0
      %2455 = vmatprep.subr.mxu0 0.0
      %2456 = vmatpush1.xpose.msra.mxu0 0.0
      %2457 = vmatprep.subr.mxu0 0.0
      %2458 = vmatpush1.xpose.msra.mxu0 0.0
      %2459 = vmatprep.subr.mxu0 0.0
      %2460 = vmatpush1.xpose.msra.mxu0 0.0
      %2461 = vmatprep.subr.mxu0 0.0
      %2462 = vmatpush1.xpose.msra.mxu0 0.0
      %2463 = vmatprep.subr.mxu0 0.0
      %2464 = vmatpush1.xpose.msra.mxu0 0.0
      %2465 = vmatprep.mubr.f32.mxu0 0.0
      %2466 = vmatmul.mubr.f32.gmra.mrb[0].mxu0 %v2385
      %v2467 = vpop.f32.mrb[0].mxu0
      %v2468 = vadd.f32 0.0, %v2467
      %v2469 = vpop.f32.mrb[0].mxu0
      %2470 = vmatprep.mubr.f32.mxu0 0.0
      %2471 = vmatmul.mubr.f32.gmra.mrb[0].mxu0 %v2387
      %v2472 = vpop.f32.mrb[0].mxu0
      %v2473 = vadd.f32 0.0, %v2472
      %v2474 = vpop.f32.mrb[0].mxu0
      %2475 = vmatprep.mubr.f32.mxu0 0.0
      %2476 = vmatmul.mubr.f32.gmra.mrb[0].mxu0 %v2389
      %v2477 = vpop.f32.mrb[0].mxu0
      %v2478 = vadd.f32 0.0, %v2477
      %v2479 = vpop.f32.mrb[0].mxu0
      %2480 = vmatprep.mubr.f32.mxu0 0.0
      %2481 = vmatmul.mubr.f32.gmra.mrb[0].mxu0 %v2391
      %v2482 = vpop.f32.mrb[0].mxu0
      %v2483 = vadd.f32 0.0, %v2482
      %v2484 = vpop.f32.mrb[0].mxu0
      %2485 = vdwg.mxu0
      %v2486 = vsel %vm1324, %v2468, -inf
      %2487 = vmax.xlane.f32.xlu0 %v2486
      %v2488 = vpop.xlane.xlu0 %2487
      %v2489 = vsel %vm1324, %v2473, -inf
      %2490 = vmax.xlane.f32.xlu0 %v2489
      %v2491 = vpop.xlane.xlu0 %2490
      %v2492 = vsel %vm1324, %v2478, -inf
      %2493 = vmax.xlane.f32.xlu0 %v2492
      %v2494 = vpop.xlane.xlu0 %2493
      %v2495 = vsel %vm1324, %v2483, -inf
      %2496 = vmax.xlane.f32.xlu0 %v2495
      %v2497 = vpop.xlane.xlu0 %2496
      %v2498 = vsub.f32 %v2468, %v2488
      %v2499 = vsub.f32 %v2473, %v2491
      %v2500 = vsub.f32 %v2478, %v2494
      %v2501 = vsub.f32 %v2483, %v2497
      %v2502 = vmul.f32 %v2498, 1.442695
      %v2503 = vpow.pop %v2502
      %v2504 = vmul.f32 %v2499, 1.442695
      %v2505 = vpow.pop %v2504
      %v2506 = vmul.f32 %v2500, 1.442695
      %v2507 = vpow.pop %v2506
      %v2508 = vmul.f32 %v2501, 1.442695
      %v2509 = vpow.pop %v2508
      %v2510 = vsel %vm1324, %v2503, 0.0
      %2511 = vadd.xlane.f32.xlu0 %v2510
      %v2512 = vpop.xlane.xlu0 %2511
      %v2513 = vsel %vm1324, %v2505, 0.0
      %2514 = vadd.xlane.f32.xlu0 %v2513
      %v2515 = vpop.xlane.xlu0 %2514
      %v2516 = vsel %vm1324, %v2507, 0.0
      %2517 = vadd.xlane.f32.xlu0 %v2516
      %v2518 = vpop.xlane.xlu0 %2517
      %v2519 = vsel %vm1324, %v2509, 0.0
      %2520 = vadd.xlane.f32.xlu0 %v2519
      %v2521 = vpop.xlane.xlu0 %2520
      %v2522 = vrcp.pop %v2512
      %v2523 = vmul.f32 %v2503, %v2522
      %v2524 = vrcp.pop %v2515
      %v2525 = vmul.f32 %v2505, %v2524
      %v2526 = vrcp.pop %v2518
      %v2527 = vmul.f32 %v2507, %v2526
      %v2528 = vrcp.pop %v2521
      %v2529 = vmul.f32 %v2509, %v2528
      %2530 = vrot.lane.b32.xlu0 %v1624, 112
      %v2531 = vpop.permute.xlu0 %2530
      %2532 = vrot.lane.b32.xlu0 %v1629, 112
      %v2533 = vpop.permute.xlu0 %2532
      %2534 = vrot.lane.b32.xlu0 %v1634, 112
      %v2535 = vpop.permute.xlu0 %2534
      %2536 = vrot.lane.b32.xlu0 %v1639, 112
      %v2537 = vpop.permute.xlu0 %2536
      %v2543 = vsel %vm1324, %v2523, 0
      %v2546 = vsel %vm1324, %v2525, 0
      %v2549 = vsel %vm1324, %v2527, 0
      %v2552 = vsel %vm1324, %v2529, 0
      %2554 = vmatprep.subr.mxu0 0.0
      %2555 = vmatpush1.msra.mxu0 %v2531
      %2556 = vmatprep.subr.mxu0 0.0
      %2557 = vmatpush1.msra.mxu0 %v2533
      %2558 = vmatprep.subr.mxu0 0.0
      %2559 = vmatpush1.msra.mxu0 %v2535
      %2560 = vmatprep.subr.mxu0 0.0
      %2561 = vmatpush1.msra.mxu0 %v2537
      %2562 = vmatprep.subr.mxu0 0.0
      %2563 = vmatpush1.msra.mxu0 0.0
      %2564 = vmatprep.subr.mxu0 0.0
      %2565 = vmatpush1.msra.mxu0 0.0
      %2566 = vmatprep.subr.mxu0 0.0
      %2567 = vmatpush1.msra.mxu0 0.0
      %2568 = vmatprep.subr.mxu0 0.0
      %2569 = vmatpush1.msra.mxu0 0.0
      %2570 = vmatprep.subr.mxu0 0.0
      %2571 = vmatpush1.msra.mxu0 0.0
      %2572 = vmatprep.subr.mxu0 0.0
      %2573 = vmatpush1.msra.mxu0 0.0
      %2574 = vmatprep.subr.mxu0 0.0
      %2575 = vmatpush1.msra.mxu0 0.0
      %2576 = vmatprep.subr.mxu0 0.0
      %2577 = vmatpush1.msra.mxu0 0.0
      %2578 = vmatprep.subr.mxu0 0.0
      %2579 = vmatpush1.msra.mxu0 0.0
      %2580 = vmatprep.subr.mxu0 0.0
      %2581 = vmatpush1.msra.mxu0 0.0
      %2582 = vmatprep.subr.mxu0 0.0
      %2583 = vmatpush1.msra.mxu0 0.0
      %2584 = vmatprep.subr.mxu0 0.0
      %2585 = vmatpush1.msra.mxu0 0.0
      %2586 = vmatprep.subr.mxu0 0.0
      %2587 = vmatpush1.msra.mxu0 0.0
      %2588 = vmatprep.subr.mxu0 0.0
      %2589 = vmatpush1.msra.mxu0 0.0
      %2590 = vmatprep.subr.mxu0 0.0
      %2591 = vmatpush1.msra.mxu0 0.0
      %2592 = vmatprep.subr.mxu0 0.0
      %2593 = vmatpush1.msra.mxu0 0.0
      %2594 = vmatprep.subr.mxu0 0.0
      %2595 = vmatpush1.msra.mxu0 0.0
      %2596 = vmatprep.subr.mxu0 0.0
      %2597 = vmatpush1.msra.mxu0 0.0
      %2598 = vmatprep.subr.mxu0 0.0
      %2599 = vmatpush1.msra.mxu0 0.0
      %2600 = vmatprep.subr.mxu0 0.0
      %2601 = vmatpush1.msra.mxu0 0.0
      %2602 = vmatprep.subr.mxu0 0.0
      %2603 = vmatpush1.msra.mxu0 0.0
      %2604 = vmatprep.subr.mxu0 0.0
      %2605 = vmatpush1.msra.mxu0 0.0
      %2606 = vmatprep.subr.mxu0 0.0
      %2607 = vmatpush1.msra.mxu0 0.0
      %2608 = vmatprep.subr.mxu0 0.0
      %2609 = vmatpush1.msra.mxu0 0.0
      %2610 = vmatprep.subr.mxu0 0.0
      %2611 = vmatpush1.msra.mxu0 0.0
      %2612 = vmatprep.subr.mxu0 0.0
      %2613 = vmatpush1.msra.mxu0 0.0
      %2614 = vmatprep.subr.mxu0 0.0
      %2615 = vmatpush1.msra.mxu0 0.0
      %2616 = vmatprep.subr.mxu0 0.0
      %2617 = vmatpush1.msra.mxu0 0.0
      %2618 = vmatprep.mubr.f32.mxu0 0.0
      %2619 = vmatmul.mubr.f32.gmra.mrb[0].mxu0 %v2543
      %v2620 = vpop.f32.mrb[0].mxu0
      %v2621 = vadd.f32 0.0, %v2620
      %v2622 = vpop.f32.mrb[0].mxu0
      %2623 = vmatprep.mubr.f32.mxu0 0.0
      %2624 = vmatmul.mubr.f32.gmra.mrb[0].mxu0 %v2546
      %v2625 = vpop.f32.mrb[0].mxu0
      %v2626 = vadd.f32 0.0, %v2625
      %v2627 = vpop.f32.mrb[0].mxu0
      %2628 = vmatprep.mubr.f32.mxu0 0.0
      %2629 = vmatmul.mubr.f32.gmra.mrb[0].mxu0 %v2549
      %v2630 = vpop.f32.mrb[0].mxu0
      %v2631 = vadd.f32 0.0, %v2630
      %v2632 = vpop.f32.mrb[0].mxu0
      %2633 = vmatprep.mubr.f32.mxu0 0.0
      %2634 = vmatmul.mubr.f32.gmra.mrb[0].mxu0 %v2552
      %v2635 = vpop.f32.mrb[0].mxu0
      %v2636 = vadd.f32 0.0, %v2635
      %v2637 = vpop.f32.mrb[0].mxu0
      %2638 = vdwg.mxu0
      %v2640 = vsel %vm1650, %v2621, 0
      %v2643 = vsel %vm1650, %v2626, 0
      %v2646 = vsel %vm1650, %v2631, 0
      %v2649 = vsel %vm1650, %v2636, 0
      %2651 = vmatprep.subr.mxu0 0.0
      %2652 = vmatpush1.msra.mxu0 %v1644
      %2653 = vmatprep.subr.mxu0 0.0
      %2654 = vmatpush1.msra.mxu0 0.0
      %2655 = vmatprep.subr.mxu0 0.0
      %2656 = vmatpush1.msra.mxu0 0.0
      %2657 = vmatprep.subr.mxu0 0.0
      %2658 = vmatpush1.msra.mxu0 0.0
      %2659 = vmatprep.subr.mxu0 0.0
      %2660 = vmatpush1.msra.mxu0 0.0
      %2661 = vmatprep.subr.mxu0 0.0
      %2662 = vmatpush1.msra.mxu0 0.0
      %2663 = vmatprep.subr.mxu0 0.0
      %2664 = vmatpush1.msra.mxu0 0.0
      %2665 = vmatprep.subr.mxu0 0.0
      %2666 = vmatpush1.msra.mxu0 0.0
      %2667 = vmatprep.subr.mxu0 0.0
      %2668 = vmatpush1.msra.mxu0 0.0
      %2669 = vmatprep.subr.mxu0 0.0
      %2670 = vmatpush1.msra.mxu0 0.0
      %2671 = vmatprep.subr.mxu0 0.0
      %2672 = vmatpush1.msra.mxu0 0.0
      %2673 = vmatprep.subr.mxu0 0.0
      %2674 = vmatpush1.msra.mxu0 0.0
      %2675 = vmatprep.subr.mxu0 0.0
      %2676 = vmatpush1.msra.mxu0 0.0
      %2677 = vmatprep.subr.mxu0 0.0
      %2678 = vmatpush1.msra.mxu0 0.0
      %2679 = vmatprep.subr.mxu0 0.0
      %2680 = vmatpush1.msra.mxu0 0.0
      %2681 = vmatprep.subr.mxu0 0.0
      %2682 = vmatpush1.msra.mxu0 0.0
      %2683 = vmatprep.subr.mxu0 0.0
      %2684 = vmatpush1.msra.mxu0 0.0
      %2685 = vmatprep.subr.mxu0 0.0
      %2686 = vmatpush1.msra.mxu0 0.0
      %2687 = vmatprep.subr.mxu0 0.0
      %2688 = vmatpush1.msra.mxu0 0.0
      %2689 = vmatprep.subr.mxu0 0.0
      %2690 = vmatpush1.msra.mxu0 0.0
      %2691 = vmatprep.subr.mxu0 0.0
      %2692 = vmatpush1.msra.mxu0 0.0
      %2693 = vmatprep.subr.mxu0 0.0
      %2694 = vmatpush1.msra.mxu0 0.0
      %2695 = vmatprep.subr.mxu0 0.0
      %2696 = vmatpush1.msra.mxu0 0.0
      %2697 = vmatprep.subr.mxu0 0.0
      %2698 = vmatpush1.msra.mxu0 0.0
      %2699 = vmatprep.subr.mxu0 0.0
      %2700 = vmatpush1.msra.mxu0 0.0
      %2701 = vmatprep.subr.mxu0 0.0
      %2702 = vmatpush1.msra.mxu0 0.0
      %2703 = vmatprep.subr.mxu0 0.0
      %2704 = vmatpush1.msra.mxu0 0.0
      %2705 = vmatprep.subr.mxu0 0.0
      %2706 = vmatpush1.msra.mxu0 0.0
      %2707 = vmatprep.subr.mxu0 0.0
      %2708 = vmatpush1.msra.mxu0 0.0
      %2709 = vmatprep.subr.mxu0 0.0
      %2710 = vmatpush1.msra.mxu0 0.0
      %2711 = vmatprep.subr.mxu0 0.0
      %2712 = vmatpush1.msra.mxu0 0.0
      %2713 = vmatprep.subr.mxu0 0.0
      %2714 = vmatpush1.msra.mxu0 0.0
      %2715 = vmatprep.mubr.f32.mxu0 0.0
      %2716 = vmatmul.mubr.f32.gmra.mrb[0].mxu0 %v2640
      %v2717 = vpop.f32.mrb[0].mxu0
      %v2718 = vadd.f32 0.0, %v2717
      %v2719 = vpop.f32.mrb[0].mxu0
      %2720 = vmatprep.mubr.f32.mxu0 0.0
      %2721 = vmatmul.mubr.f32.gmra.mrb[0].mxu0 %v2643
      %v2722 = vpop.f32.mrb[0].mxu0
      %v2723 = vadd.f32 0.0, %v2722
      %v2724 = vpop.f32.mrb[0].mxu0
      %2725 = vmatprep.mubr.f32.mxu0 0.0
      %2726 = vmatmul.mubr.f32.gmra.mrb[0].mxu0 %v2646
      %v2727 = vpop.f32.mrb[0].mxu0
      %v2728 = vadd.f32 0.0, %v2727
      %v2729 = vpop.f32.mrb[0].mxu0
      %2730 = vmatprep.mubr.f32.mxu0 0.0
      %2731 = vmatmul.mubr.f32.gmra.mrb[0].mxu0 %v2649
      %v2732 = vpop.f32.mrb[0].mxu0
      %v2733 = vadd.f32 0.0, %v2732
      %v2734 = vpop.f32.mrb[0].mxu0
      %2735 = vdwg.mxu0
      %v2736 = vadd.f32 %v2351, %v2718
      %v2737 = vadd.f32 %v2356, %v2723
      %v2738 = vadd.f32 %v2361, %v2728
      %v2739 = vadd.f32 %v2366, %v2733
      %2740 = vrot.lane.b32.xlu0 %v1646, 104
      %v2741 = vpop.permute.xlu0 %2740
      %2742 = vrot.lane.b32.xlu0 %v1647, 104
      %v2743 = vpop.permute.xlu0 %2742
      %2744 = vrot.lane.b32.xlu0 %v1648, 104
      %v2745 = vpop.permute.xlu0 %2744
      %2746 = vrot.lane.b32.xlu0 %v1649, 104
      %v2747 = vpop.permute.xlu0 %2746
      %2748 = vrot.lane.b32.xlu0 %v1514, 104
      %v2749 = vpop.permute.xlu0 %2748
      %2750 = vrot.lane.b32.xlu0 %v1519, 104
      %v2751 = vpop.permute.xlu0 %2750
      %2752 = vrot.lane.b32.xlu0 %v1524, 104
      %v2753 = vpop.permute.xlu0 %2752
      %2754 = vrot.lane.b32.xlu0 %v1529, 104
      %v2755 = vpop.permute.xlu0 %2754
      %v2756 = vsel %vm1650, %v2741, 0
      %v2758 = vsel %vm1650, %v2743, 0
      %v2760 = vsel %vm1650, %v2745, 0
      %v2762 = vsel %vm1650, %v2747, 0
      %v2764 = vsel %vm1650, %v2749, 0
      %v2766 = vsel %vm1650, %v2751, 0
      %v2768 = vsel %vm1650, %v2753, 0
      %v2770 = vsel %vm1650, %v2755, 0
      %2772 = vmatprep.subr.mxu0 0.0
      %2773 = vmatpush1.xpose.msra.mxu0 %v2764
      %2774 = vmatprep.subr.mxu0 0.0
      %2775 = vmatpush1.xpose.msra.mxu0 %v2766
      %2776 = vmatprep.subr.mxu0 0.0
      %2777 = vmatpush1.xpose.msra.mxu0 %v2768
      %2778 = vmatprep.subr.mxu0 0.0
      %2779 = vmatpush1.xpose.msra.mxu0 %v2770
      %2780 = vmatprep.subr.mxu0 0.0
      %2781 = vmatpush1.xpose.msra.mxu0 0.0
      %2782 = vmatprep.subr.mxu0 0.0
      %2783 = vmatpush1.xpose.msra.mxu0 0.0
      %2784 = vmatprep.subr.mxu0 0.0
      %2785 = vmatpush1.xpose.msra.mxu0 0.0
      %2786 = vmatprep.subr.mxu0 0.0
      %2787 = vmatpush1.xpose.msra.mxu0 0.0
      %2788 = vmatprep.subr.mxu0 0.0
      %2789 = vmatpush1.xpose.msra.mxu0 0.0
      %2790 = vmatprep.subr.mxu0 0.0
      %2791 = vmatpush1.xpose.msra.mxu0 0.0
      %2792 = vmatprep.subr.mxu0 0.0
      %2793 = vmatpush1.xpose.msra.mxu0 0.0
      %2794 = vmatprep.subr.mxu0 0.0
      %2795 = vmatpush1.xpose.msra.mxu0 0.0
      %2796 = vmatprep.subr.mxu0 0.0
      %2797 = vmatpush1.xpose.msra.mxu0 0.0
      %2798 = vmatprep.subr.mxu0 0.0
      %2799 = vmatpush1.xpose.msra.mxu0 0.0
      %2800 = vmatprep.subr.mxu0 0.0
      %2801 = vmatpush1.xpose.msra.mxu0 0.0
      %2802 = vmatprep.subr.mxu0 0.0
      %2803 = vmatpush1.xpose.msra.mxu0 0.0
      %2804 = vmatprep.subr.mxu0 0.0
      %2805 = vmatpush1.xpose.msra.mxu0 0.0
      %2806 = vmatprep.subr.mxu0 0.0
      %2807 = vmatpush1.xpose.msra.mxu0 0.0
      %2808 = vmatprep.subr.mxu0 0.0
      %2809 = vmatpush1.xpose.msra.mxu0 0.0
      %2810 = vmatprep.subr.mxu0 0.0
      %2811 = vmatpush1.xpose.msra.mxu0 0.0
      %2812 = vmatprep.subr.mxu0 0.0
      %2813 = vmatpush1.xpose.msra.mxu0 0.0
      %2814 = vmatprep.subr.mxu0 0.0
      %2815 = vmatpush1.xpose.msra.mxu0 0.0
      %2816 = vmatprep.subr.mxu0 0.0
      %2817 = vmatpush1.xpose.msra.mxu0 0.0
      %2818 = vmatprep.subr.mxu0 0.0
      %2819 = vmatpush1.xpose.msra.mxu0 0.0
      %2820 = vmatprep.subr.mxu0 0.0
      %2821 = vmatpush1.xpose.msra.mxu0 0.0
      %2822 = vmatprep.subr.mxu0 0.0
      %2823 = vmatpush1.xpose.msra.mxu0 0.0
      %2824 = vmatprep.subr.mxu0 0.0
      %2825 = vmatpush1.xpose.msra.mxu0 0.0
      %2826 = vmatprep.subr.mxu0 0.0
      %2827 = vmatpush1.xpose.msra.mxu0 0.0
      %2828 = vmatprep.subr.mxu0 0.0
      %2829 = vmatpush1.xpose.msra.mxu0 0.0
      %2830 = vmatprep.subr.mxu0 0.0
      %2831 = vmatpush1.xpose.msra.mxu0 0.0
      %2832 = vmatprep.subr.mxu0 0.0
      %2833 = vmatpush1.xpose.msra.mxu0 0.0
      %2834 = vmatprep.subr.mxu0 0.0
      %2835 = vmatpush1.xpose.msra.mxu0 0.0
      %2836 = vmatprep.mubr.f32.mxu0 0.0
      %2837 = vmatmul.mubr.f32.gmra.mrb[0].mxu0 %v2756
      %v2838 = vpop.f32.mrb[0].mxu0
      %v2839 = vadd.f32 0.0, %v2838
      %v2840 = vpop.f32.mrb[0].mxu0
      %2841 = vmatprep.mubr.f32.mxu0 0.0
      %2842 = vmatmul.mubr.f32.gmra.mrb[0].mxu0 %v2758
      %v2843 = vpop.f32.mrb[0].mxu0
      %v2844 = vadd.f32 0.0, %v2843
      %v2845 = vpop.f32.mrb[0].mxu0
      %2846 = vmatprep.mubr.f32.mxu0 0.0
      %2847 = vmatmul.mubr.f32.gmra.mrb[0].mxu0 %v2760
      %v2848 = vpop.f32.mrb[0].mxu0
      %v2849 = vadd.f32 0.0, %v2848
      %v2850 = vpop.f32.mrb[0].mxu0
      %2851 = vmatprep.mubr.f32.mxu0 0.0
      %2852 = vmatmul.mubr.f32.gmra.mrb[0].mxu0 %v2762
      %v2853 = vpop.f32.mrb[0].mxu0
      %v2854 = vadd.f32 0.0, %v2853
      %v2855 = vpop.f32.mrb[0].mxu0
      %2856 = vdwg.mxu0
      %v2857 = vsel %vm1324, %v2839, -inf
      %2858 = vmax.xlane.f32.xlu0 %v2857
      %v2859 = vpop.xlane.xlu0 %2858
      %v2860 = vsel %vm1324, %v2844, -inf
      %2861 = vmax.xlane.f32.xlu0 %v2860
      %v2862 = vpop.xlane.xlu0 %2861
      %v2863 = vsel %vm1324, %v2849, -inf
      %2864 = vmax.xlane.f32.xlu0 %v2863
      %v2865 = vpop.xlane.xlu0 %2864
      %v2866 = vsel %vm1324, %v2854, -inf
      %2867 = vmax.xlane.f32.xlu0 %v2866
      %v2868 = vpop.xlane.xlu0 %2867
      %v2869 = vsub.f32 %v2839, %v2859
      %v2870 = vsub.f32 %v2844, %v2862
      %v2871 = vsub.f32 %v2849, %v2865
      %v2872 = vsub.f32 %v2854, %v2868
      %v2873 = vmul.f32 %v2869, 1.442695
      %v2874 = vpow.pop %v2873
      %v2875 = vmul.f32 %v2870, 1.442695
      %v2876 = vpow.pop %v2875
      %v2877 = vmul.f32 %v2871, 1.442695
      %v2878 = vpow.pop %v2877
      %v2879 = vmul.f32 %v2872, 1.442695
      %v2880 = vpow.pop %v2879
      %v2881 = vsel %vm1324, %v2874, 0.0
      %2882 = vadd.xlane.f32.xlu0 %v2881
      %v2883 = vpop.xlane.xlu0 %2882
      %v2884 = vsel %vm1324, %v2876, 0.0
      %2885 = vadd.xlane.f32.xlu0 %v2884
      %v2886 = vpop.xlane.xlu0 %2885
      %v2887 = vsel %vm1324, %v2878, 0.0
      %2888 = vadd.xlane.f32.xlu0 %v2887
      %v2889 = vpop.xlane.xlu0 %2888
      %v2890 = vsel %vm1324, %v2880, 0.0
      %2891 = vadd.xlane.f32.xlu0 %v2890
      %v2892 = vpop.xlane.xlu0 %2891
      %v2893 = vrcp.pop %v2883
      %v2894 = vmul.f32 %v2874, %v2893
      %v2895 = vrcp.pop %v2886
      %v2896 = vmul.f32 %v2876, %v2895
      %v2897 = vrcp.pop %v2889
      %v2898 = vmul.f32 %v2878, %v2897
      %v2899 = vrcp.pop %v2892
      %v2900 = vmul.f32 %v2880, %v2899
      %2901 = vrot.lane.b32.xlu0 %v1624, 104
      %v2902 = vpop.permute.xlu0 %2901
      %2903 = vrot.lane.b32.xlu0 %v1629, 104
      %v2904 = vpop.permute.xlu0 %2903
      %2905 = vrot.lane.b32.xlu0 %v1634, 104
      %v2906 = vpop.permute.xlu0 %2905
      %2907 = vrot.lane.b32.xlu0 %v1639, 104
      %v2908 = vpop.permute.xlu0 %2907
      %v2914 = vsel %vm1324, %v2894, 0
      %v2917 = vsel %vm1324, %v2896, 0
      %v2920 = vsel %vm1324, %v2898, 0
      %v2923 = vsel %vm1324, %v2900, 0
      %2925 = vmatprep.subr.mxu0 0.0
      %2926 = vmatpush1.msra.mxu0 %v2902
      %2927 = vmatprep.subr.mxu0 0.0
      %2928 = vmatpush1.msra.mxu0 %v2904
      %2929 = vmatprep.subr.mxu0 0.0
      %2930 = vmatpush1.msra.mxu0 %v2906
      %2931 = vmatprep.subr.mxu0 0.0
      %2932 = vmatpush1.msra.mxu0 %v2908
      %2933 = vmatprep.subr.mxu0 0.0
      %2934 = vmatpush1.msra.mxu0 0.0
      %2935 = vmatprep.subr.mxu0 0.0
      %2936 = vmatpush1.msra.mxu0 0.0
      %2937 = vmatprep.subr.mxu0 0.0
      %2938 = vmatpush1.msra.mxu0 0.0
      %2939 = vmatprep.subr.mxu0 0.0
      %2940 = vmatpush1.msra.mxu0 0.0
      %2941 = vmatprep.subr.mxu0 0.0
      %2942 = vmatpush1.msra.mxu0 0.0
      %2943 = vmatprep.subr.mxu0 0.0
      %2944 = vmatpush1.msra.mxu0 0.0
      %2945 = vmatprep.subr.mxu0 0.0
      %2946 = vmatpush1.msra.mxu0 0.0
      %2947 = vmatprep.subr.mxu0 0.0
      %2948 = vmatpush1.msra.mxu0 0.0
      %2949 = vmatprep.subr.mxu0 0.0
      %2950 = vmatpush1.msra.mxu0 0.0
      %2951 = vmatprep.subr.mxu0 0.0
      %2952 = vmatpush1.msra.mxu0 0.0
      %2953 = vmatprep.subr.mxu0 0.0
      %2954 = vmatpush1.msra.mxu0 0.0
      %2955 = vmatprep.subr.mxu0 0.0
      %2956 = vmatpush1.msra.mxu0 0.0
      %2957 = vmatprep.subr.mxu0 0.0
      %2958 = vmatpush1.msra.mxu0 0.0
      %2959 = vmatprep.subr.mxu0 0.0
      %2960 = vmatpush1.msra.mxu0 0.0
      %2961 = vmatprep.subr.mxu0 0.0
      %2962 = vmatpush1.msra.mxu0 0.0
      %2963 = vmatprep.subr.mxu0 0.0
      %2964 = vmatpush1.msra.mxu0 0.0
      %2965 = vmatprep.subr.mxu0 0.0
      %2966 = vmatpush1.msra.mxu0 0.0
      %2967 = vmatprep.subr.mxu0 0.0
      %2968 = vmatpush1.msra.mxu0 0.0
      %2969 = vmatprep.subr.mxu0 0.0
      %2970 = vmatpush1.msra.mxu0 0.0
      %2971 = vmatprep.subr.mxu0 0.0
      %2972 = vmatpush1.msra.mxu0 0.0
      %2973 = vmatprep.subr.mxu0 0.0
      %2974 = vmatpush1.msra.mxu0 0.0
      %2975 = vmatprep.subr.mxu0 0.0
      %2976 = vmatpush1.msra.mxu0 0.0
      %2977 = vmatprep.subr.mxu0 0.0
      %2978 = vmatpush1.msra.mxu0 0.0
      %2979 = vmatprep.subr.mxu0 0.0
      %2980 = vmatpush1.msra.mxu0 0.0
      %2981 = vmatprep.subr.mxu0 0.0
      %2982 = vmatpush1.msra.mxu0 0.0
      %2983 = vmatprep.subr.mxu0 0.0
      %2984 = vmatpush1.msra.mxu0 0.0
      %2985 = vmatprep.subr.mxu0 0.0
      %2986 = vmatpush1.msra.mxu0 0.0
      %2987 = vmatprep.subr.mxu0 0.0
      %2988 = vmatpush1.msra.mxu0 0.0
      %2989 = vmatprep.mubr.f32.mxu0 0.0
      %2990 = vmatmul.mubr.f32.gmra.mrb[0].mxu0 %v2914
      %v2991 = vpop.f32.mrb[0].mxu0
      %v2992 = vadd.f32 0.0, %v2991
      %v2993 = vpop.f32.mrb[0].mxu0
      %2994 = vmatprep.mubr.f32.mxu0 0.0
      %2995 = vmatmul.mubr.f32.gmra.mrb[0].mxu0 %v2917
      %v2996 = vpop.f32.mrb[0].mxu0
      %v2997 = vadd.f32 0.0, %v2996
      %v2998 = vpop.f32.mrb[0].mxu0
      %2999 = vmatprep.mubr.f32.mxu0 0.0
      %3000 = vmatmul.mubr.f32.gmra.mrb[0].mxu0 %v2920
      %v3001 = vpop.f32.mrb[0].mxu0
      %v3002 = vadd.f32 0.0, %v3001
      %v3003 = vpop.f32.mrb[0].mxu0
      %3004 = vmatprep.mubr.f32.mxu0 0.0
      %3005 = vmatmul.mubr.f32.gmra.mrb[0].mxu0 %v2923
      %v3006 = vpop.f32.mrb[0].mxu0
      %v3007 = vadd.f32 0.0, %v3006
      %v3008 = vpop.f32.mrb[0].mxu0
      %3009 = vdwg.mxu0
      %v3011 = vsel %vm1650, %v2992, 0
      %v3014 = vsel %vm1650, %v2997, 0
      %v3017 = vsel %vm1650, %v3002, 0
      %v3020 = vsel %vm1650, %v3007, 0
      %3022 = vmatprep.subr.mxu0 0.0
      %3023 = vmatpush1.msra.mxu0 %v1645
      %3024 = vmatprep.subr.mxu0 0.0
      %3025 = vmatpush1.msra.mxu0 0.0
      %3026 = vmatprep.subr.mxu0 0.0
      %3027 = vmatpush1.msra.mxu0 0.0
      %3028 = vmatprep.subr.mxu0 0.0
      %3029 = vmatpush1.msra.mxu0 0.0
      %3030 = vmatprep.subr.mxu0 0.0
      %3031 = vmatpush1.msra.mxu0 0.0
      %3032 = vmatprep.subr.mxu0 0.0
      %3033 = vmatpush1.msra.mxu0 0.0
      %3034 = vmatprep.subr.mxu0 0.0
      %3035 = vmatpush1.msra.mxu0 0.0
      %3036 = vmatprep.subr.mxu0 0.0
      %3037 = vmatpush1.msra.mxu0 0.0
      %3038 = vmatprep.subr.mxu0 0.0
      %3039 = vmatpush1.msra.mxu0 0.0
      %3040 = vmatprep.subr.mxu0 0.0
      %3041 = vmatpush1.msra.mxu0 0.0
      %3042 = vmatprep.subr.mxu0 0.0
      %3043 = vmatpush1.msra.mxu0 0.0
      %3044 = vmatprep.subr.mxu0 0.0
      %3045 = vmatpush1.msra.mxu0 0.0
      %3046 = vmatprep.subr.mxu0 0.0
      %3047 = vmatpush1.msra.mxu0 0.0
      %3048 = vmatprep.subr.mxu0 0.0
      %3049 = vmatpush1.msra.mxu0 0.0
      %3050 = vmatprep.subr.mxu0 0.0
      %3051 = vmatpush1.msra.mxu0 0.0
      %3052 = vmatprep.subr.mxu0 0.0
      %3053 = vmatpush1.msra.mxu0 0.0
      %3054 = vmatprep.subr.mxu0 0.0
      %3055 = vmatpush1.msra.mxu0 0.0
      %3056 = vmatprep.subr.mxu0 0.0
      %3057 = vmatpush1.msra.mxu0 0.0
      %3058 = vmatprep.subr.mxu0 0.0
      %3059 = vmatpush1.msra.mxu0 0.0
      %3060 = vmatprep.subr.mxu0 0.0
      %3061 = vmatpush1.msra.mxu0 0.0
      %3062 = vmatprep.subr.mxu0 0.0
      %3063 = vmatpush1.msra.mxu0 0.0
      %3064 = vmatprep.subr.mxu0 0.0
      %3065 = vmatpush1.msra.mxu0 0.0
      %3066 = vmatprep.subr.mxu0 0.0
      %3067 = vmatpush1.msra.mxu0 0.0
      %3068 = vmatprep.subr.mxu0 0.0
      %3069 = vmatpush1.msra.mxu0 0.0
      %3070 = vmatprep.subr.mxu0 0.0
      %3071 = vmatpush1.msra.mxu0 0.0
      %3072 = vmatprep.subr.mxu0 0.0
      %3073 = vmatpush1.msra.mxu0 0.0
      %3074 = vmatprep.subr.mxu0 0.0
      %3075 = vmatpush1.msra.mxu0 0.0
      %3076 = vmatprep.subr.mxu0 0.0
      %3077 = vmatpush1.msra.mxu0 0.0
      %3078 = vmatprep.subr.mxu0 0.0
      %3079 = vmatpush1.msra.mxu0 0.0
      %3080 = vmatprep.subr.mxu0 0.0
      %3081 = vmatpush1.msra.mxu0 0.0
      %3082 = vmatprep.subr.mxu0 0.0
      %3083 = vmatpush1.msra.mxu0 0.0
      %3084 = vmatprep.subr.mxu0 0.0
      %3085 = vmatpush1.msra.mxu0 0.0
      %3086 = vmatprep.mubr.f32.mxu0 0.0
      %3087 = vmatmul.mubr.f32.gmra.mrb[0].mxu0 %v3011
      %v3088 = vpop.f32.mrb[0].mxu0
      %v3089 = vadd.f32 0.0, %v3088
      %v3090 = vpop.f32.mrb[0].mxu0
      %3091 = vmatprep.mubr.f32.mxu0 0.0
      %3092 = vmatmul.mubr.f32.gmra.mrb[0].mxu0 %v3014
      %v3093 = vpop.f32.mrb[0].mxu0
      %v3094 = vadd.f32 0.0, %v3093
      %v3095 = vpop.f32.mrb[0].mxu0
      %3096 = vmatprep.mubr.f32.mxu0 0.0
      %3097 = vmatmul.mubr.f32.gmra.mrb[0].mxu0 %v3017
      %v3098 = vpop.f32.mrb[0].mxu0
      %v3099 = vadd.f32 0.0, %v3098
      %v3100 = vpop.f32.mrb[0].mxu0
      %3101 = vmatprep.mubr.f32.mxu0 0.0
      %3102 = vmatmul.mubr.f32.gmra.mrb[0].mxu0 %v3020
      %v3103 = vpop.f32.mrb[0].mxu0
      %v3104 = vadd.f32 0.0, %v3103
      %v3105 = vpop.f32.mrb[0].mxu0
      %3106 = vdwg.mxu0
      %v3107 = vadd.f32 %v2736, %v3089
      %v3108 = vadd.f32 %v2737, %v3094
      %v3109 = vadd.f32 %v2738, %v3099
      %v3110 = vadd.f32 %v2739, %v3104
      %v3111 = vld [vmem:[%s21] sm:$0x1]
      %v3113 = vlaneseq
      %v3114 = vshrl.u32 %v3113, 7
      %v3115 = vsub.s32 0, %v3114
      %v3116 = vrot.slane %v3111, %v3115
      %v3118 = vadd.f32 %v3107, %v3116
      %v3119 = vadd.f32 %v3108, %v3116
      %v3120 = vadd.f32 %v3109, %v3116
      %v3121 = vadd.f32 %v3110, %v3116
      %v3122 = vld [vmem:[%s23] sm:$0xff]
      %v3123 = vld [vmem:[%s23 + $0x8] sm:$0xff]
      %v3124 = vld [vmem:[%s23 + $0x10] sm:$0xff]
      %v3125 = vld [vmem:[%s23 + $0x18] sm:$0xff]
      %v3127 = vsel %vm1324, %v3118, 0
      %v3130 = vsel %vm1324, %v3119, 0
      %v3133 = vsel %vm1324, %v3120, 0
      %v3136 = vsel %vm1324, %v3121, 0
      %3138 = vmatprep.subr.mxu0 0.0
      %3139 = vmatpush1.msra.mxu0 %v3122
      %3140 = vmatprep.subr.mxu0 0.0
      %3141 = vmatpush1.msra.mxu0 %v3123
      %3142 = vmatprep.subr.mxu0 0.0
      %3143 = vmatpush1.msra.mxu0 %v3124
      %3144 = vmatprep.subr.mxu0 0.0
      %3145 = vmatpush1.msra.mxu0 %v3125
      %3146 = vmatprep.subr.mxu0 0.0
      %3147 = vmatpush1.msra.mxu0 0.0
      %3148 = vmatprep.subr.mxu0 0.0
      %3149 = vmatpush1.msra.mxu0 0.0
      %3150 = vmatprep.subr.mxu0 0.0
      %3151 = vmatpush1.msra.mxu0 0.0
      %3152 = vmatprep.subr.mxu0 0.0
      %3153 = vmatpush1.msra.mxu0 0.0
      %3154 = vmatprep.subr.mxu0 0.0
      %3155 = vmatpush1.msra.mxu0 0.0
      %3156 = vmatprep.subr.mxu0 0.0
      %3157 = vmatpush1.msra.mxu0 0.0
      %3158 = vmatprep.subr.mxu0 0.0
      %3159 = vmatpush1.msra.mxu0 0.0
      %3160 = vmatprep.subr.mxu0 0.0
      %3161 = vmatpush1.msra.mxu0 0.0
      %3162 = vmatprep.subr.mxu0 0.0
      %3163 = vmatpush1.msra.mxu0 0.0
      %3164 = vmatprep.subr.mxu0 0.0
      %3165 = vmatpush1.msra.mxu0 0.0
      %3166 = vmatprep.subr.mxu0 0.0
      %3167 = vmatpush1.msra.mxu0 0.0
      %3168 = vmatprep.subr.mxu0 0.0
      %3169 = vmatpush1.msra.mxu0 0.0
      %3170 = vmatprep.subr.mxu0 0.0
      %3171 = vmatpush1.msra.mxu0 0.0
      %3172 = vmatprep.subr.mxu0 0.0
      %3173 = vmatpush1.msra.mxu0 0.0
      %3174 = vmatprep.subr.mxu0 0.0
      %3175 = vmatpush1.msra.mxu0 0.0
      %3176 = vmatprep.subr.mxu0 0.0
      %3177 = vmatpush1.msra.mxu0 0.0
      %3178 = vmatprep.subr.mxu0 0.0
      %3179 = vmatpush1.msra.mxu0 0.0
      %3180 = vmatprep.subr.mxu0 0.0
      %3181 = vmatpush1.msra.mxu0 0.0
      %3182 = vmatprep.subr.mxu0 0.0
      %3183 = vmatpush1.msra.mxu0 0.0
      %3184 = vmatprep.subr.mxu0 0.0
      %3185 = vmatpush1.msra.mxu0 0.0
      %3186 = vmatprep.subr.mxu0 0.0
      %3187 = vmatpush1.msra.mxu0 0.0
      %3188 = vmatprep.subr.mxu0 0.0
      %3189 = vmatpush1.msra.mxu0 0.0
      %3190 = vmatprep.subr.mxu0 0.0
      %3191 = vmatpush1.msra.mxu0 0.0
      %3192 = vmatprep.subr.mxu0 0.0
      %3193 = vmatpush1.msra.mxu0 0.0
      %3194 = vmatprep.subr.mxu0 0.0
      %3195 = vmatpush1.msra.mxu0 0.0
      %3196 = vmatprep.subr.mxu0 0.0
      %3197 = vmatpush1.msra.mxu0 0.0
      %3198 = vmatprep.subr.mxu0 0.0
      %3199 = vmatpush1.msra.mxu0 0.0
      %3200 = vmatprep.subr.mxu0 0.0
      %3201 = vmatpush1.msra.mxu0 0.0
      %3202 = vmatprep.mubr.f32.mxu0 0.0
      %3203 = vmatmul.mubr.f32.gmra.mrb[0].mxu0 %v3127
      %v3204 = vpop.f32.mrb[0].mxu0
      %v3205 = vadd.f32 0.0, %v3204
      %v3206 = vpop.f32.mrb[0].mxu0
      %3207 = vmatprep.mubr.f32.mxu0 0.0
      %3208 = vmatmul.mubr.f32.gmra.mrb[0].mxu0 %v3130
      %v3209 = vpop.f32.mrb[0].mxu0
      %v3210 = vadd.f32 0.0, %v3209
      %v3211 = vpop.f32.mrb[0].mxu0
      %3212 = vmatprep.mubr.f32.mxu0 0.0
      %3213 = vmatmul.mubr.f32.gmra.mrb[0].mxu0 %v3133
      %v3214 = vpop.f32.mrb[0].mxu0
      %v3215 = vadd.f32 0.0, %v3214
      %v3216 = vpop.f32.mrb[0].mxu0
      %3217 = vmatprep.mubr.f32.mxu0 0.0
      %3218 = vmatmul.mubr.f32.gmra.mrb[0].mxu0 %v3136
      %v3219 = vpop.f32.mrb[0].mxu0
      %v3220 = vadd.f32 0.0, %v3219
      %v3221 = vpop.f32.mrb[0].mxu0
      %3222 = vdwg.mxu0
      %v3223 = vld [vmem:[%s25] sm:$0xff]
      %v3224 = vld [vmem:[%s25 + $0x8] sm:$0xff]
      %v3225 = vld [vmem:[%s25 + $0x10] sm:$0xff]
      %v3226 = vld [vmem:[%s25 + $0x18] sm:$0xff]
      %v3227 = vlaneseq
      %v3228 = vshrl.u32 %v3227, 7
      %v3229 = vsub.s32 0, %v3228
      %v3230 = vrot.slane %v1260, %v3229
      %v3231 = vmul.f32 %v3223, %v3230
      %v3232 = vmul.f32 %v3224, %v3230
      %v3233 = vmul.f32 %v3225, %v3230
      %v3234 = vmul.f32 %v3226, %v3230
      %vm3235 = vcmask 523264
      %v3236 = vsel %vm3235, %v3231, 0.0
      %3237 = vadd.xlane.f32.xlu0 %v3236
      %v3238 = vpop.xlane.xlu0 %3237
      %v3239 = vsel %vm3235, %v3232, 0.0
      %3240 = vadd.xlane.f32.xlu0 %v3239
      %v3241 = vpop.xlane.xlu0 %3240
      %v3242 = vsel %vm3235, %v3233, 0.0
      %3243 = vadd.xlane.f32.xlu0 %v3242
      %v3244 = vpop.xlane.xlu0 %3243
      %v3245 = vsel %vm3235, %v3234, 0.0
      %3246 = vadd.xlane.f32.xlu0 %v3245
      %v3247 = vpop.xlane.xlu0 %3246
      %v3248 = vld [vmem:[%s27] sm:$0x1]
      %v3250 = vlaneseq
      %v3251 = vshrl.u32 %v3250, 7
      %v3252 = vsub.s32 0, %v3251
      %v3253 = vrot.slane %v3248, %v3252
      %v3255 = vmul.f32 %v3238, %v3253
      %v3256 = vmul.f32 %v3241, %v3253
      %v3257 = vmul.f32 %v3244, %v3253
      %v3258 = vmul.f32 %v3247, %v3253
      %v3259 = vld [vmem:[%s29] sm:$0xff]
      %v3260 = vld [vmem:[%s29 + $0x8] sm:$0xff]
      %v3261 = vld [vmem:[%s29 + $0x10] sm:$0xff]
      %v3262 = vld [vmem:[%s29 + $0x18] sm:$0xff]
      %v3264 = vsel %vm1324, %v3205, 0
      %v3267 = vsel %vm1324, %v3210, 0
      %v3270 = vsel %vm1324, %v3215, 0
      %v3273 = vsel %vm1324, %v3220, 0
      %3275 = vmatprep.subr.mxu0 0.0
      %3276 = vmatpush1.msra.mxu0 %v3259
      %3277 = vmatprep.subr.mxu0 0.0
      %3278 = vmatpush1.msra.mxu0 %v3260
      %3279 = vmatprep.subr.mxu0 0.0
      %3280 = vmatpush1.msra.mxu0 %v3261
      %3281 = vmatprep.subr.mxu0 0.0
      %3282 = vmatpush1.msra.mxu0 %v3262
      %3283 = vmatprep.subr.mxu0 0.0
      %3284 = vmatpush1.msra.mxu0 0.0
      %3285 = vmatprep.subr.mxu0 0.0
      %3286 = vmatpush1.msra.mxu0 0.0
      %3287 = vmatprep.subr.mxu0 0.0
      %3288 = vmatpush1.msra.mxu0 0.0
      %3289 = vmatprep.subr.mxu0 0.0
      %3290 = vmatpush1.msra.mxu0 0.0
      %3291 = vmatprep.subr.mxu0 0.0
      %3292 = vmatpush1.msra.mxu0 0.0
      %3293 = vmatprep.subr.mxu0 0.0
      %3294 = vmatpush1.msra.mxu0 0.0
      %3295 = vmatprep.subr.mxu0 0.0
      %3296 = vmatpush1.msra.mxu0 0.0
      %3297 = vmatprep.subr.mxu0 0.0
      %3298 = vmatpush1.msra.mxu0 0.0
      %3299 = vmatprep.subr.mxu0 0.0
      %3300 = vmatpush1.msra.mxu0 0.0
      %3301 = vmatprep.subr.mxu0 0.0
      %3302 = vmatpush1.msra.mxu0 0.0
      %3303 = vmatprep.subr.mxu0 0.0
      %3304 = vmatpush1.msra.mxu0 0.0
      %3305 = vmatprep.subr.mxu0 0.0
      %3306 = vmatpush1.msra.mxu0 0.0
      %3307 = vmatprep.subr.mxu0 0.0
      %3308 = vmatpush1.msra.mxu0 0.0
      %3309 = vmatprep.subr.mxu0 0.0
      %3310 = vmatpush1.msra.mxu0 0.0
      %3311 = vmatprep.subr.mxu0 0.0
      %3312 = vmatpush1.msra.mxu0 0.0
      %3313 = vmatprep.subr.mxu0 0.0
      %3314 = vmatpush1.msra.mxu0 0.0
      %3315 = vmatprep.subr.mxu0 0.0
      %3316 = vmatpush1.msra.mxu0 0.0
      %3317 = vmatprep.subr.mxu0 0.0
      %3318 = vmatpush1.msra.mxu0 0.0
      %3319 = vmatprep.subr.mxu0 0.0
      %3320 = vmatpush1.msra.mxu0 0.0
      %3321 = vmatprep.subr.mxu0 0.0
      %3322 = vmatpush1.msra.mxu0 0.0
      %3323 = vmatprep.subr.mxu0 0.0
      %3324 = vmatpush1.msra.mxu0 0.0
      %3325 = vmatprep.subr.mxu0 0.0
      %3326 = vmatpush1.msra.mxu0 0.0
      %3327 = vmatprep.subr.mxu0 0.0
      %3328 = vmatpush1.msra.mxu0 0.0
      %3329 = vmatprep.subr.mxu0 0.0
      %3330 = vmatpush1.msra.mxu0 0.0
      %3331 = vmatprep.subr.mxu0 0.0
      %3332 = vmatpush1.msra.mxu0 0.0
      %3333 = vmatprep.subr.mxu0 0.0
      %3334 = vmatpush1.msra.mxu0 0.0
      %3335 = vmatprep.subr.mxu0 0.0
      %3336 = vmatpush1.msra.mxu0 0.0
      %3337 = vmatprep.subr.mxu0 0.0
      %3338 = vmatpush1.msra.mxu0 0.0
      %3339 = vmatprep.mubr.f32.mxu0 0.0
      %3340 = vmatmul.mubr.f32.gmra.mrb[0].mxu0 %v3264
      %v3341 = vpop.f32.mrb[0].mxu0
      %v3342 = vadd.f32 0.0, %v3341
      %v3343 = vpop.f32.mrb[0].mxu0
      %3344 = vmatprep.mubr.f32.mxu0 0.0
      %3345 = vmatmul.mubr.f32.gmra.mrb[0].mxu0 %v3267
      %v3346 = vpop.f32.mrb[0].mxu0
      %v3347 = vadd.f32 0.0, %v3346
      %v3348 = vpop.f32.mrb[0].mxu0
      %3349 = vmatprep.mubr.f32.mxu0 0.0
      %3350 = vmatmul.mubr.f32.gmra.mrb[0].mxu0 %v3270
      %v3351 = vpop.f32.mrb[0].mxu0
      %v3352 = vadd.f32 0.0, %v3351
      %v3353 = vpop.f32.mrb[0].mxu0
      %3354 = vmatprep.mubr.f32.mxu0 0.0
      %3355 = vmatmul.mubr.f32.gmra.mrb[0].mxu0 %v3273
      %v3356 = vpop.f32.mrb[0].mxu0
      %v3357 = vadd.f32 0.0, %v3356
      %v3358 = vpop.f32.mrb[0].mxu0
      %3359 = vdwg.mxu0
      %v3360 = vld [vmem:[%s31] sm:$0xff]
      %v3361 = vld [vmem:[%s31 + $0x8] sm:$0xff]
      %v3362 = vld [vmem:[%s31 + $0x10] sm:$0xff]
      %v3363 = vld [vmem:[%s31 + $0x18] sm:$0xff]
      %3364 = vmatprep.subr.mxu0 0.0
      %3365 = vmatpush1.msra.mxu0 %v3360
      %3366 = vmatprep.subr.mxu0 0.0
      %3367 = vmatpush1.msra.mxu0 %v3361
      %3368 = vmatprep.subr.mxu0 0.0
      %3369 = vmatpush1.msra.mxu0 %v3362
      %3370 = vmatprep.subr.mxu0 0.0
      %3371 = vmatpush1.msra.mxu0 %v3363
      %3372 = vmatprep.subr.mxu0 0.0
      %3373 = vmatpush1.msra.mxu0 0.0
      %3374 = vmatprep.subr.mxu0 0.0
      %3375 = vmatpush1.msra.mxu0 0.0
      %3376 = vmatprep.subr.mxu0 0.0
      %3377 = vmatpush1.msra.mxu0 0.0
      %3378 = vmatprep.subr.mxu0 0.0
      %3379 = vmatpush1.msra.mxu0 0.0
      %3380 = vmatprep.subr.mxu0 0.0
      %3381 = vmatpush1.msra.mxu0 0.0
      %3382 = vmatprep.subr.mxu0 0.0
      %3383 = vmatpush1.msra.mxu0 0.0
      %3384 = vmatprep.subr.mxu0 0.0
      %3385 = vmatpush1.msra.mxu0 0.0
      %3386 = vmatprep.subr.mxu0 0.0
      %3387 = vmatpush1.msra.mxu0 0.0
      %3388 = vmatprep.subr.mxu0 0.0
      %3389 = vmatpush1.msra.mxu0 0.0
      %3390 = vmatprep.subr.mxu0 0.0
      %3391 = vmatpush1.msra.mxu0 0.0
      %3392 = vmatprep.subr.mxu0 0.0
      %3393 = vmatpush1.msra.mxu0 0.0
      %3394 = vmatprep.subr.mxu0 0.0
      %3395 = vmatpush1.msra.mxu0 0.0
      %3396 = vmatprep.subr.mxu0 0.0
      %3397 = vmatpush1.msra.mxu0 0.0
      %3398 = vmatprep.subr.mxu0 0.0
      %3399 = vmatpush1.msra.mxu0 0.0
      %3400 = vmatprep.subr.mxu0 0.0
      %3401 = vmatpush1.msra.mxu0 0.0
      %3402 = vmatprep.subr.mxu0 0.0
      %3403 = vmatpush1.msra.mxu0 0.0
      %3404 = vmatprep.subr.mxu0 0.0
      %3405 = vmatpush1.msra.mxu0 0.0
      %3406 = vmatprep.subr.mxu0 0.0
      %3407 = vmatpush1.msra.mxu0 0.0
      %3408 = vmatprep.subr.mxu0 0.0
      %3409 = vmatpush1.msra.mxu0 0.0
      %3410 = vmatprep.subr.mxu0 0.0
      %3411 = vmatpush1.msra.mxu0 0.0
      %3412 = vmatprep.subr.mxu0 0.0
      %3413 = vmatpush1.msra.mxu0 0.0
      %3414 = vmatprep.subr.mxu0 0.0
      %3415 = vmatpush1.msra.mxu0 0.0
      %3416 = vmatprep.subr.mxu0 0.0
      %3417 = vmatpush1.msra.mxu0 0.0
      %3418 = vmatprep.subr.mxu0 0.0
      %3419 = vmatpush1.msra.mxu0 0.0
      %3420 = vmatprep.subr.mxu0 0.0
      %3421 = vmatpush1.msra.mxu0 0.0
      %3422 = vmatprep.subr.mxu0 0.0
      %3423 = vmatpush1.msra.mxu0 0.0
      %3424 = vmatprep.subr.mxu0 0.0
      %3425 = vmatpush1.msra.mxu0 0.0
      %3426 = vmatprep.subr.mxu0 0.0
      %3427 = vmatpush1.msra.mxu0 0.0
      %3428 = vmatprep.mubr.f32.mxu0 0.0
      %3429 = vmatmul.mubr.f32.gmra.mrb[0].mxu0 %v3264
      %v3430 = vpop.f32.mrb[0].mxu0
      %v3431 = vadd.f32 0.0, %v3430
      %v3432 = vpop.f32.mrb[0].mxu0
      %3433 = vmatprep.mubr.f32.mxu0 0.0
      %3434 = vmatmul.mubr.f32.gmra.mrb[0].mxu0 %v3267
      %v3435 = vpop.f32.mrb[0].mxu0
      %v3436 = vadd.f32 0.0, %v3435
      %v3437 = vpop.f32.mrb[0].mxu0
      %3438 = vmatprep.mubr.f32.mxu0 0.0
      %3439 = vmatmul.mubr.f32.gmra.mrb[0].mxu0 %v3270
      %v3440 = vpop.f32.mrb[0].mxu0
      %v3441 = vadd.f32 0.0, %v3440
      %v3442 = vpop.f32.mrb[0].mxu0
      %3443 = vmatprep.mubr.f32.mxu0 0.0
      %3444 = vmatmul.mubr.f32.gmra.mrb[0].mxu0 %v3273
      %v3445 = vpop.f32.mrb[0].mxu0
      %v3446 = vadd.f32 0.0, %v3445
      %v3447 = vpop.f32.mrb[0].mxu0
      %3448 = vdwg.mxu0
      %v3450 = vsel %vm1324, %v3255, 0
      %v3453 = vsel %vm1324, %v3256, 0
      %v3456 = vsel %vm1324, %v3257, 0
      %v3459 = vsel %vm1324, %v3258, 0
      %3461 = vmatprep.subr.mxu0 0.0
      %3462 = vmatpush1.msra.mxu0 %v3360
      %3463 = vmatprep.subr.mxu0 0.0
      %3464 = vmatpush1.msra.mxu0 %v3361
      %3465 = vmatprep.subr.mxu0 0.0
      %3466 = vmatpush1.msra.mxu0 %v3362
      %3467 = vmatprep.subr.mxu0 0.0
      %3468 = vmatpush1.msra.mxu0 %v3363
      %3469 = vmatprep.subr.mxu0 0.0
      %3470 = vmatpush1.msra.mxu0 0.0
      %3471 = vmatprep.subr.mxu0 0.0
      %3472 = vmatpush1.msra.mxu0 0.0
      %3473 = vmatprep.subr.mxu0 0.0
      %3474 = vmatpush1.msra.mxu0 0.0
      %3475 = vmatprep.subr.mxu0 0.0
      %3476 = vmatpush1.msra.mxu0 0.0
      %3477 = vmatprep.subr.mxu0 0.0
      %3478 = vmatpush1.msra.mxu0 0.0
      %3479 = vmatprep.subr.mxu0 0.0
      %3480 = vmatpush1.msra.mxu0 0.0
      %3481 = vmatprep.subr.mxu0 0.0
      %3482 = vmatpush1.msra.mxu0 0.0
      %3483 = vmatprep.subr.mxu0 0.0
      %3484 = vmatpush1.msra.mxu0 0.0
      %3485 = vmatprep.subr.mxu0 0.0
      %3486 = vmatpush1.msra.mxu0 0.0
      %3487 = vmatprep.subr.mxu0 0.0
      %3488 = vmatpush1.msra.mxu0 0.0
      %3489 = vmatprep.subr.mxu0 0.0
      %3490 = vmatpush1.msra.mxu0 0.0
      %3491 = vmatprep.subr.mxu0 0.0
      %3492 = vmatpush1.msra.mxu0 0.0
      %3493 = vmatprep.subr.mxu0 0.0
      %3494 = vmatpush1.msra.mxu0 0.0
      %3495 = vmatprep.subr.mxu0 0.0
      %3496 = vmatpush1.msra.mxu0 0.0
      %3497 = vmatprep.subr.mxu0 0.0
      %3498 = vmatpush1.msra.mxu0 0.0
      %3499 = vmatprep.subr.mxu0 0.0
      %3500 = vmatpush1.msra.mxu0 0.0
      %3501 = vmatprep.subr.mxu0 0.0
      %3502 = vmatpush1.msra.mxu0 0.0
      %3503 = vmatprep.subr.mxu0 0.0
      %3504 = vmatpush1.msra.mxu0 0.0
      %3505 = vmatprep.subr.mxu0 0.0
      %3506 = vmatpush1.msra.mxu0 0.0
      %3507 = vmatprep.subr.mxu0 0.0
      %3508 = vmatpush1.msra.mxu0 0.0
      %3509 = vmatprep.subr.mxu0 0.0
      %3510 = vmatpush1.msra.mxu0 0.0
      %3511 = vmatprep.subr.mxu0 0.0
      %3512 = vmatpush1.msra.mxu0 0.0
      %3513 = vmatprep.subr.mxu0 0.0
      %3514 = vmatpush1.msra.mxu0 0.0
      %3515 = vmatprep.subr.mxu0 0.0
      %3516 = vmatpush1.msra.mxu0 0.0
      %3517 = vmatprep.subr.mxu0 0.0
      %3518 = vmatpush1.msra.mxu0 0.0
      %3519 = vmatprep.subr.mxu0 0.0
      %3520 = vmatpush1.msra.mxu0 0.0
      %3521 = vmatprep.subr.mxu0 0.0
      %3522 = vmatpush1.msra.mxu0 0.0
      %3523 = vmatprep.subr.mxu0 0.0
      %3524 = vmatpush1.msra.mxu0 0.0
      %3525 = vmatprep.mubr.f32.mxu0 0.0
      %3526 = vmatmul.mubr.f32.gmra.mrb[0].mxu0 %v3450
      %v3527 = vpop.f32.mrb[0].mxu0
      %v3528 = vadd.f32 0.0, %v3527
      %v3529 = vpop.f32.mrb[0].mxu0
      %3530 = vmatprep.mubr.f32.mxu0 0.0
      %3531 = vmatmul.mubr.f32.gmra.mrb[0].mxu0 %v3453
      %v3532 = vpop.f32.mrb[0].mxu0
      %v3533 = vadd.f32 0.0, %v3532
      %v3534 = vpop.f32.mrb[0].mxu0
      %3535 = vmatprep.mubr.f32.mxu0 0.0
      %3536 = vmatmul.mubr.f32.gmra.mrb[0].mxu0 %v3456
      %v3537 = vpop.f32.mrb[0].mxu0
      %v3538 = vadd.f32 0.0, %v3537
      %v3539 = vpop.f32.mrb[0].mxu0
      %3540 = vmatprep.mubr.f32.mxu0 0.0
      %3541 = vmatmul.mubr.f32.gmra.mrb[0].mxu0 %v3459
      %v3542 = vpop.f32.mrb[0].mxu0
      %v3543 = vadd.f32 0.0, %v3542
      %v3544 = vpop.f32.mrb[0].mxu0
      %3545 = vdwg.mxu0
      %v3546 = vld [vmem:[%s33] sm:$0xff]
      %v3547 = vld [vmem:[%s33 + $0x8] sm:$0xff]
      %v3548 = vld [vmem:[%s33 + $0x10] sm:$0xff]
      %v3549 = vld [vmem:[%s33 + $0x18] sm:$0xff]
      %v3550 = vld [vmem:[%s33 + $0x20] sm:$0xff]
      %v3551 = vld [vmem:[%s33 + $0x28] sm:$0xff]
      %v3552 = vld [vmem:[%s33 + $0x30] sm:$0xff]
      %v3553 = vld [vmem:[%s33 + $0x38] sm:$0xff]
      %v3554 = vld [vmem:[%s33 + $0x40] sm:$0xff]
      %v3555 = vld [vmem:[%s33 + $0x48] sm:$0xff]
      %v3556 = vld [vmem:[%s33 + $0x50] sm:$0xff]
      %v3557 = vld [vmem:[%s33 + $0x58] sm:$0xff]
      %v3558 = vld [vmem:[%s33 + $0x60] sm:$0xff]
      %v3559 = vld [vmem:[%s33 + $0x68] sm:$0xff]
      %v3560 = vld [vmem:[%s33 + $0x70] sm:$0xff]
      %v3561 = vld [vmem:[%s33 + $0x78] sm:$0xff]
      %3562 = vxpose.xlu0.b32.start [1/16] %v3431, 128
      %3563 = vxpose.xlu0.b32.cont [2/16] %v3436, 128
      %3564 = vxpose.xlu0.b32.cont [3/16] %v3441, 128
      %3565 = vxpose.xlu0.b32.cont [4/16] %v3446, 128
      %3566 = vxpose.xlu0.b32.cont [5/16] 0.0, 128
      %3567 = vxpose.xlu0.b32.cont [6/16] 0.0, 128
      %3568 = vxpose.xlu0.b32.cont [7/16] 0.0, 128
      %3569 = vxpose.xlu0.b32.cont [8/16] 0.0, 128
      %3570 = vxpose.xlu0.b32.cont [9/16] 0.0, 128
      %3571 = vxpose.xlu0.b32.cont [10/16] 0.0, 128
      %3572 = vxpose.xlu0.b32.cont [11/16] 0.0, 128
      %3573 = vxpose.xlu0.b32.cont [12/16] 0.0, 128
      %3574 = vxpose.xlu0.b32.cont [13/16] 0.0, 128
      %3575 = vxpose.xlu0.b32.cont [14/16] 0.0, 128
      %3576 = vxpose.xlu0.b32.cont [15/16] 0.0, 128
      %3577 = vxpose.xlu0.b32.end [16/16] 0.0, 128
      %v3578 = vpop.trf.xlu0
      %v3579 = vpop.trf.xlu0
      %v3580 = vpop.trf.xlu0
      %v3581 = vpop.trf.xlu0
      %v3582 = vpop.trf.xlu0
      %v3583 = vpop.trf.xlu0
      %v3584 = vpop.trf.xlu0
      %v3585 = vpop.trf.xlu0
      %v3586 = vpop.trf.xlu0
      %v3587 = vpop.trf.xlu0
      %v3588 = vpop.trf.xlu0
      %v3589 = vpop.trf.xlu0
      %v3590 = vpop.trf.xlu0
      %v3591 = vpop.trf.xlu0
      %v3592 = vpop.trf.xlu0
      %v3593 = vpop.trf.xlu0
      %v3595 = vsel %vm1324, %v3578, 0
      %v3598 = vsel %vm1324, %v3579, 0
      %v3601 = vsel %vm1324, %v3580, 0
      %v3604 = vsel %vm1324, %v3581, 0
      %3606 = vmatprep.subr.mxu0 0.0
      %3607 = vmatpush1.msra.mxu0 %v3528
      %3608 = vmatprep.subr.mxu0 0.0
      %3609 = vmatpush1.msra.mxu0 %v3533
      %3610 = vmatprep.subr.mxu0 0.0
      %3611 = vmatpush1.msra.mxu0 %v3538
      %3612 = vmatprep.subr.mxu0 0.0
      %3613 = vmatpush1.msra.mxu0 %v3543
      %3614 = vmatprep.subr.mxu0 0.0
      %3615 = vmatpush1.msra.mxu0 0.0
      %3616 = vmatprep.subr.mxu0 0.0
      %3617 = vmatpush1.msra.mxu0 0.0
      %3618 = vmatprep.subr.mxu0 0.0
      %3619 = vmatpush1.msra.mxu0 0.0
      %3620 = vmatprep.subr.mxu0 0.0
      %3621 = vmatpush1.msra.mxu0 0.0
      %3622 = vmatprep.subr.mxu0 0.0
      %3623 = vmatpush1.msra.mxu0 0.0
      %3624 = vmatprep.subr.mxu0 0.0
      %3625 = vmatpush1.msra.mxu0 0.0
      %3626 = vmatprep.subr.mxu0 0.0
      %3627 = vmatpush1.msra.mxu0 0.0
      %3628 = vmatprep.subr.mxu0 0.0
      %3629 = vmatpush1.msra.mxu0 0.0
      %3630 = vmatprep.subr.mxu0 0.0
      %3631 = vmatpush1.msra.mxu0 0.0
      %3632 = vmatprep.subr.mxu0 0.0
      %3633 = vmatpush1.msra.mxu0 0.0
      %3634 = vmatprep.subr.mxu0 0.0
      %3635 = vmatpush1.msra.mxu0 0.0
      %3636 = vmatprep.subr.mxu0 0.0
      %3637 = vmatpush1.msra.mxu0 0.0
      %3638 = vmatprep.subr.mxu0 0.0
      %3639 = vmatpush1.msra.mxu0 0.0
      %3640 = vmatprep.subr.mxu0 0.0
      %3641 = vmatpush1.msra.mxu0 0.0
      %3642 = vmatprep.subr.mxu0 0.0
      %3643 = vmatpush1.msra.mxu0 0.0
      %3644 = vmatprep.subr.mxu0 0.0
      %3645 = vmatpush1.msra.mxu0 0.0
      %3646 = vmatprep.subr.mxu0 0.0
      %3647 = vmatpush1.msra.mxu0 0.0
      %3648 = vmatprep.subr.mxu0 0.0
      %3649 = vmatpush1.msra.mxu0 0.0
      %3650 = vmatprep.subr.mxu0 0.0
      %3651 = vmatpush1.msra.mxu0 0.0
      %3652 = vmatprep.subr.mxu0 0.0
      %3653 = vmatpush1.msra.mxu0 0.0
      %3654 = vmatprep.subr.mxu0 0.0
      %3655 = vmatpush1.msra.mxu0 0.0
      %3656 = vmatprep.subr.mxu0 0.0
      %3657 = vmatpush1.msra.mxu0 0.0
      %3658 = vmatprep.subr.mxu0 0.0
      %3659 = vmatpush1.msra.mxu0 0.0
      %3660 = vmatprep.subr.mxu0 0.0
      %3661 = vmatpush1.msra.mxu0 0.0
      %3662 = vmatprep.subr.mxu0 0.0
      %3663 = vmatpush1.msra.mxu0 0.0
      %3664 = vmatprep.subr.mxu0 0.0
      %3665 = vmatpush1.msra.mxu0 0.0
      %3666 = vmatprep.subr.mxu0 0.0
      %3667 = vmatpush1.msra.mxu0 0.0
      %3668 = vmatprep.subr.mxu0 0.0
      %3669 = vmatpush1.msra.mxu0 0.0
      %3670 = vmatprep.mubr.f32.mxu0 0.0
      %3671 = vmatmul.mubr.f32.gmra.mrb[0].mxu0 %v3595
      %v3672 = vpop.f32.mrb[0].mxu0
      %v3673 = vadd.f32 0.0, %v3672
      %v3674 = vpop.f32.mrb[0].mxu0
      %3675 = vmatprep.mubr.f32.mxu0 0.0
      %3676 = vmatmul.mubr.f32.gmra.mrb[0].mxu0 %v3598
      %v3677 = vpop.f32.mrb[0].mxu0
      %v3678 = vadd.f32 0.0, %v3677
      %v3679 = vpop.f32.mrb[0].mxu0
      %3680 = vmatprep.mubr.f32.mxu0 0.0
      %3681 = vmatmul.mubr.f32.gmra.mrb[0].mxu0 %v3601
      %v3682 = vpop.f32.mrb[0].mxu0
      %v3683 = vadd.f32 0.0, %v3682
      %v3684 = vpop.f32.mrb[0].mxu0
      %3685 = vmatprep.mubr.f32.mxu0 0.0
      %3686 = vmatmul.mubr.f32.gmra.mrb[0].mxu0 %v3604
      %v3687 = vpop.f32.mrb[0].mxu0
      %v3688 = vadd.f32 0.0, %v3687
      %v3689 = vpop.f32.mrb[0].mxu0
      %3690 = vdwg.mxu0
      %v3692 = vsel %vm1324, %v3342, 0
      %v3695 = vsel %vm1324, %v3347, 0
      %v3698 = vsel %vm1324, %v3352, 0
      %v3701 = vsel %vm1324, %v3357, 0
      %3703 = vmatprep.subr.mxu0 0.0
      %3704 = vmatpush1.msra.mxu0 %v3673
      %3705 = vmatprep.subr.mxu0 0.0
      %3706 = vmatpush1.msra.mxu0 %v3678
      %3707 = vmatprep.subr.mxu0 0.0
      %3708 = vmatpush1.msra.mxu0 %v3683
      %3709 = vmatprep.subr.mxu0 0.0
      %3710 = vmatpush1.msra.mxu0 %v3688
      %3711 = vmatprep.subr.mxu0 0.0
      %3712 = vmatpush1.msra.mxu0 0.0
      %3713 = vmatprep.subr.mxu0 0.0
      %3714 = vmatpush1.msra.mxu0 0.0
      %3715 = vmatprep.subr.mxu0 0.0
      %3716 = vmatpush1.msra.mxu0 0.0
      %3717 = vmatprep.subr.mxu0 0.0
      %3718 = vmatpush1.msra.mxu0 0.0
      %3719 = vmatprep.subr.mxu0 0.0
      %3720 = vmatpush1.msra.mxu0 0.0
      %3721 = vmatprep.subr.mxu0 0.0
      %3722 = vmatpush1.msra.mxu0 0.0
      %3723 = vmatprep.subr.mxu0 0.0
      %3724 = vmatpush1.msra.mxu0 0.0
      %3725 = vmatprep.subr.mxu0 0.0
      %3726 = vmatpush1.msra.mxu0 0.0
      %3727 = vmatprep.subr.mxu0 0.0
      %3728 = vmatpush1.msra.mxu0 0.0
      %3729 = vmatprep.subr.mxu0 0.0
      %3730 = vmatpush1.msra.mxu0 0.0
      %3731 = vmatprep.subr.mxu0 0.0
      %3732 = vmatpush1.msra.mxu0 0.0
      %3733 = vmatprep.subr.mxu0 0.0
      %3734 = vmatpush1.msra.mxu0 0.0
      %3735 = vmatprep.subr.mxu0 0.0
      %3736 = vmatpush1.msra.mxu0 0.0
      %3737 = vmatprep.subr.mxu0 0.0
      %3738 = vmatpush1.msra.mxu0 0.0
      %3739 = vmatprep.subr.mxu0 0.0
      %3740 = vmatpush1.msra.mxu0 0.0
      %3741 = vmatprep.subr.mxu0 0.0
      %3742 = vmatpush1.msra.mxu0 0.0
      %3743 = vmatprep.subr.mxu0 0.0
      %3744 = vmatpush1.msra.mxu0 0.0
      %3745 = vmatprep.subr.mxu0 0.0
      %3746 = vmatpush1.msra.mxu0 0.0
      %3747 = vmatprep.subr.mxu0 0.0
      %3748 = vmatpush1.msra.mxu0 0.0
      %3749 = vmatprep.subr.mxu0 0.0
      %3750 = vmatpush1.msra.mxu0 0.0
      %3751 = vmatprep.subr.mxu0 0.0
      %3752 = vmatpush1.msra.mxu0 0.0
      %3753 = vmatprep.subr.mxu0 0.0
      %3754 = vmatpush1.msra.mxu0 0.0
      %3755 = vmatprep.subr.mxu0 0.0
      %3756 = vmatpush1.msra.mxu0 0.0
      %3757 = vmatprep.subr.mxu0 0.0
      %3758 = vmatpush1.msra.mxu0 0.0
      %3759 = vmatprep.subr.mxu0 0.0
      %3760 = vmatpush1.msra.mxu0 0.0
      %3761 = vmatprep.subr.mxu0 0.0
      %3762 = vmatpush1.msra.mxu0 0.0
      %3763 = vmatprep.subr.mxu0 0.0
      %3764 = vmatpush1.msra.mxu0 0.0
      %3765 = vmatprep.subr.mxu0 0.0
      %3766 = vmatpush1.msra.mxu0 0.0
      %3767 = vmatprep.mubr.f32.mxu0 0.0
      %3768 = vmatmul.mubr.f32.gmra.mrb[0].mxu0 %v3692
      %v3769 = vpop.f32.mrb[0].mxu0
      %v3770 = vadd.f32 0.0, %v3769
      %v3771 = vpop.f32.mrb[0].mxu0
      %3772 = vmatprep.mubr.f32.mxu0 0.0
      %3773 = vmatmul.mubr.f32.gmra.mrb[0].mxu0 %v3695
      %v3774 = vpop.f32.mrb[0].mxu0
      %v3775 = vadd.f32 0.0, %v3774
      %v3776 = vpop.f32.mrb[0].mxu0
      %3777 = vmatprep.mubr.f32.mxu0 0.0
      %3778 = vmatmul.mubr.f32.gmra.mrb[0].mxu0 %v3698
      %v3779 = vpop.f32.mrb[0].mxu0
      %v3780 = vadd.f32 0.0, %v3779
      %v3781 = vpop.f32.mrb[0].mxu0
      %3782 = vmatprep.mubr.f32.mxu0 0.0
      %3783 = vmatmul.mubr.f32.gmra.mrb[0].mxu0 %v3701
      %v3784 = vpop.f32.mrb[0].mxu0
      %v3785 = vadd.f32 0.0, %v3784
      %v3786 = vpop.f32.mrb[0].mxu0
      %3787 = vdwg.mxu0
      %3792 = vrot.lane.b32.xlu0 %v3431, 96
      %v3793 = vpop.permute.xlu0 %3792
      %3794 = vrot.lane.b32.xlu0 %v3436, 96
      %v3795 = vpop.permute.xlu0 %3794
      %3796 = vrot.lane.b32.xlu0 %v3441, 96
      %v3797 = vpop.permute.xlu0 %3796
      %3798 = vrot.lane.b32.xlu0 %v3446, 96
      %v3799 = vpop.permute.xlu0 %3798
      %3804 = vxpose.xlu0.b32.start [1/16] %v3793, 128
      %3805 = vxpose.xlu0.b32.cont [2/16] %v3795, 128
      %3806 = vxpose.xlu0.b32.cont [3/16] %v3797, 128
      %3807 = vxpose.xlu0.b32.cont [4/16] %v3799, 128
      %3808 = vxpose.xlu0.b32.cont [5/16] 0.0, 128
      %3809 = vxpose.xlu0.b32.cont [6/16] 0.0, 128
      %3810 = vxpose.xlu0.b32.cont [7/16] 0.0, 128
      %3811 = vxpose.xlu0.b32.cont [8/16] 0.0, 128
      %3812 = vxpose.xlu0.b32.cont [9/16] 0.0, 128
      %3813 = vxpose.xlu0.b32.cont [10/16] 0.0, 128
      %3814 = vxpose.xlu0.b32.cont [11/16] 0.0, 128
      %3815 = vxpose.xlu0.b32.cont [12/16] 0.0, 128
      %3816 = vxpose.xlu0.b32.cont [13/16] 0.0, 128
      %3817 = vxpose.xlu0.b32.cont [14/16] 0.0, 128
      %3818 = vxpose.xlu0.b32.cont [15/16] 0.0, 128
      %3819 = vxpose.xlu0.b32.end [16/16] 0.0, 128
      %v3820 = vpop.trf.xlu0
      %v3821 = vpop.trf.xlu0
      %v3822 = vpop.trf.xlu0
      %v3823 = vpop.trf.xlu0
      %v3824 = vpop.trf.xlu0
      %v3825 = vpop.trf.xlu0
      %v3826 = vpop.trf.xlu0
      %v3827 = vpop.trf.xlu0
      %v3828 = vpop.trf.xlu0
      %v3829 = vpop.trf.xlu0
      %v3830 = vpop.trf.xlu0
      %v3831 = vpop.trf.xlu0
      %v3832 = vpop.trf.xlu0
      %v3833 = vpop.trf.xlu0
      %v3834 = vpop.trf.xlu0
      %v3835 = vpop.trf.xlu0
      %3840 = vrot.lane.b32.xlu0 %v3528, 96
      %v3841 = vpop.permute.xlu0 %3840
      %3842 = vrot.lane.b32.xlu0 %v3533, 96
      %v3843 = vpop.permute.xlu0 %3842
      %3844 = vrot.lane.b32.xlu0 %v3538, 96
      %v3845 = vpop.permute.xlu0 %3844
      %3846 = vrot.lane.b32.xlu0 %v3543, 96
      %v3847 = vpop.permute.xlu0 %3846
      %v3853 = vsel %vm1324, %v3820, 0
      %v3856 = vsel %vm1324, %v3821, 0
      %v3859 = vsel %vm1324, %v3822, 0
      %v3862 = vsel %vm1324, %v3823, 0
      %3864 = vmatprep.subr.mxu0 0.0
      %3865 = vmatpush1.msra.mxu0 %v3841
      %3866 = vmatprep.subr.mxu0 0.0
      %3867 = vmatpush1.msra.mxu0 %v3843
      %3868 = vmatprep.subr.mxu0 0.0
      %3869 = vmatpush1.msra.mxu0 %v3845
      %3870 = vmatprep.subr.mxu0 0.0
      %3871 = vmatpush1.msra.mxu0 %v3847
      %3872 = vmatprep.subr.mxu0 0.0
      %3873 = vmatpush1.msra.mxu0 0.0
      %3874 = vmatprep.subr.mxu0 0.0
      %3875 = vmatpush1.msra.mxu0 0.0
      %3876 = vmatprep.subr.mxu0 0.0
      %3877 = vmatpush1.msra.mxu0 0.0
      %3878 = vmatprep.subr.mxu0 0.0
      %3879 = vmatpush1.msra.mxu0 0.0
      %3880 = vmatprep.subr.mxu0 0.0
      %3881 = vmatpush1.msra.mxu0 0.0
      %3882 = vmatprep.subr.mxu0 0.0
      %3883 = vmatpush1.msra.mxu0 0.0
      %3884 = vmatprep.subr.mxu0 0.0
      %3885 = vmatpush1.msra.mxu0 0.0
      %3886 = vmatprep.subr.mxu0 0.0
      %3887 = vmatpush1.msra.mxu0 0.0
      %3888 = vmatprep.subr.mxu0 0.0
      %3889 = vmatpush1.msra.mxu0 0.0
      %3890 = vmatprep.subr.mxu0 0.0
      %3891 = vmatpush1.msra.mxu0 0.0
      %3892 = vmatprep.subr.mxu0 0.0
      %3893 = vmatpush1.msra.mxu0 0.0
      %3894 = vmatprep.subr.mxu0 0.0
      %3895 = vmatpush1.msra.mxu0 0.0
      %3896 = vmatprep.subr.mxu0 0.0
      %3897 = vmatpush1.msra.mxu0 0.0
      %3898 = vmatprep.subr.mxu0 0.0
      %3899 = vmatpush1.msra.mxu0 0.0
      %3900 = vmatprep.subr.mxu0 0.0
      %3901 = vmatpush1.msra.mxu0 0.0
      %3902 = vmatprep.subr.mxu0 0.0
      %3903 = vmatpush1.msra.mxu0 0.0
      %3904 = vmatprep.subr.mxu0 0.0
      %3905 = vmatpush1.msra.mxu0 0.0
      %3906 = vmatprep.subr.mxu0 0.0
      %3907 = vmatpush1.msra.mxu0 0.0
      %3908 = vmatprep.subr.mxu0 0.0
      %3909 = vmatpush1.msra.mxu0 0.0
      %3910 = vmatprep.subr.mxu0 0.0
      %3911 = vmatpush1.msra.mxu0 0.0
      %3912 = vmatprep.subr.mxu0 0.0
      %3913 = vmatpush1.msra.mxu0 0.0
      %3914 = vmatprep.subr.mxu0 0.0
      %3915 = vmatpush1.msra.mxu0 0.0
      %3916 = vmatprep.subr.mxu0 0.0
      %3917 = vmatpush1.msra.mxu0 0.0
      %3918 = vmatprep.subr.mxu0 0.0
      %3919 = vmatpush1.msra.mxu0 0.0
      %3920 = vmatprep.subr.mxu0 0.0
      %3921 = vmatpush1.msra.mxu0 0.0
      %3922 = vmatprep.subr.mxu0 0.0
      %3923 = vmatpush1.msra.mxu0 0.0
      %3924 = vmatprep.subr.mxu0 0.0
      %3925 = vmatpush1.msra.mxu0 0.0
      %3926 = vmatprep.subr.mxu0 0.0
      %3927 = vmatpush1.msra.mxu0 0.0
      %3928 = vmatprep.mubr.f32.mxu0 0.0
      %3929 = vmatmul.mubr.f32.gmra.mrb[0].mxu0 %v3853
      %v3930 = vpop.f32.mrb[0].mxu0
      %v3931 = vadd.f32 0.0, %v3930
      %v3932 = vpop.f32.mrb[0].mxu0
      %3933 = vmatprep.mubr.f32.mxu0 0.0
      %3934 = vmatmul.mubr.f32.gmra.mrb[0].mxu0 %v3856
      %v3935 = vpop.f32.mrb[0].mxu0
      %v3936 = vadd.f32 0.0, %v3935
      %v3937 = vpop.f32.mrb[0].mxu0
      %3938 = vmatprep.mubr.f32.mxu0 0.0
      %3939 = vmatmul.mubr.f32.gmra.mrb[0].mxu0 %v3859
      %v3940 = vpop.f32.mrb[0].mxu0
      %v3941 = vadd.f32 0.0, %v3940
      %v3942 = vpop.f32.mrb[0].mxu0
      %3943 = vmatprep.mubr.f32.mxu0 0.0
      %3944 = vmatmul.mubr.f32.gmra.mrb[0].mxu0 %v3862
      %v3945 = vpop.f32.mrb[0].mxu0
      %v3946 = vadd.f32 0.0, %v3945
      %v3947 = vpop.f32.mrb[0].mxu0
      %3948 = vdwg.mxu0
      %3949 = vrot.lane.b32.xlu0 %v3342, 96
      %v3950 = vpop.permute.xlu0 %3949
      %3951 = vrot.lane.b32.xlu0 %v3347, 96
      %v3952 = vpop.permute.xlu0 %3951
      %3953 = vrot.lane.b32.xlu0 %v3352, 96
      %v3954 = vpop.permute.xlu0 %3953
      %3955 = vrot.lane.b32.xlu0 %v3357, 96
      %v3956 = vpop.permute.xlu0 %3955
      %v3957 = vsel %vm1324, %v3950, 0
      %v3959 = vsel %vm1324, %v3952, 0
      %v3961 = vsel %vm1324, %v3954, 0
      %v3963 = vsel %vm1324, %v3956, 0
      %3965 = vmatprep.subr.mxu0 0.0
      %3966 = vmatpush1.msra.mxu0 %v3931
      %3967 = vmatprep.subr.mxu0 0.0
      %3968 = vmatpush1.msra.mxu0 %v3936
      %3969 = vmatprep.subr.mxu0 0.0
      %3970 = vmatpush1.msra.mxu0 %v3941
      %3971 = vmatprep.subr.mxu0 0.0
      %3972 = vmatpush1.msra.mxu0 %v3946
      %3973 = vmatprep.subr.mxu0 0.0
      %3974 = vmatpush1.msra.mxu0 0.0
      %3975 = vmatprep.subr.mxu0 0.0
      %3976 = vmatpush1.msra.mxu0 0.0
      %3977 = vmatprep.subr.mxu0 0.0
      %3978 = vmatpush1.msra.mxu0 0.0
      %3979 = vmatprep.subr.mxu0 0.0
      %3980 = vmatpush1.msra.mxu0 0.0
      %3981 = vmatprep.subr.mxu0 0.0
      %3982 = vmatpush1.msra.mxu0 0.0
      %3983 = vmatprep.subr.mxu0 0.0
      %3984 = vmatpush1.msra.mxu0 0.0
      %3985 = vmatprep.subr.mxu0 0.0
      %3986 = vmatpush1.msra.mxu0 0.0
      %3987 = vmatprep.subr.mxu0 0.0
      %3988 = vmatpush1.msra.mxu0 0.0
      %3989 = vmatprep.subr.mxu0 0.0
      %3990 = vmatpush1.msra.mxu0 0.0
      %3991 = vmatprep.subr.mxu0 0.0
      %3992 = vmatpush1.msra.mxu0 0.0
      %3993 = vmatprep.subr.mxu0 0.0
      %3994 = vmatpush1.msra.mxu0 0.0
      %3995 = vmatprep.subr.mxu0 0.0
      %3996 = vmatpush1.msra.mxu0 0.0
      %3997 = vmatprep.subr.mxu0 0.0
      %3998 = vmatpush1.msra.mxu0 0.0
      %3999 = vmatprep.subr.mxu0 0.0
      %4000 = vmatpush1.msra.mxu0 0.0
      %4001 = vmatprep.subr.mxu0 0.0
      %4002 = vmatpush1.msra.mxu0 0.0
      %4003 = vmatprep.subr.mxu0 0.0
      %4004 = vmatpush1.msra.mxu0 0.0
      %4005 = vmatprep.subr.mxu0 0.0
      %4006 = vmatpush1.msra.mxu0 0.0
      %4007 = vmatprep.subr.mxu0 0.0
      %4008 = vmatpush1.msra.mxu0 0.0
      %4009 = vmatprep.subr.mxu0 0.0
      %4010 = vmatpush1.msra.mxu0 0.0
      %4011 = vmatprep.subr.mxu0 0.0
      %4012 = vmatpush1.msra.mxu0 0.0
      %4013 = vmatprep.subr.mxu0 0.0
      %4014 = vmatpush1.msra.mxu0 0.0
      %4015 = vmatprep.subr.mxu0 0.0
      %4016 = vmatpush1.msra.mxu0 0.0
      %4017 = vmatprep.subr.mxu0 0.0
      %4018 = vmatpush1.msra.mxu0 0.0
      %4019 = vmatprep.subr.mxu0 0.0
      %4020 = vmatpush1.msra.mxu0 0.0
      %4021 = vmatprep.subr.mxu0 0.0
      %4022 = vmatpush1.msra.mxu0 0.0
      %4023 = vmatprep.subr.mxu0 0.0
      %4024 = vmatpush1.msra.mxu0 0.0
      %4025 = vmatprep.subr.mxu0 0.0
      %4026 = vmatpush1.msra.mxu0 0.0
      %4027 = vmatprep.subr.mxu0 0.0
      %4028 = vmatpush1.msra.mxu0 0.0
      %4029 = vmatprep.mubr.f32.mxu0 0.0
      %4030 = vmatmul.mubr.f32.gmra.mrb[0].mxu0 %v3957
      %v4031 = vpop.f32.mrb[0].mxu0
      %v4032 = vadd.f32 0.0, %v4031
      %v4033 = vpop.f32.mrb[0].mxu0
      %4034 = vmatprep.mubr.f32.mxu0 0.0
      %4035 = vmatmul.mubr.f32.gmra.mrb[0].mxu0 %v3959
      %v4036 = vpop.f32.mrb[0].mxu0
      %v4037 = vadd.f32 0.0, %v4036
      %v4038 = vpop.f32.mrb[0].mxu0
      %4039 = vmatprep.mubr.f32.mxu0 0.0
      %4040 = vmatmul.mubr.f32.gmra.mrb[0].mxu0 %v3961
      %v4041 = vpop.f32.mrb[0].mxu0
      %v4042 = vadd.f32 0.0, %v4041
      %v4043 = vpop.f32.mrb[0].mxu0
      %4044 = vmatprep.mubr.f32.mxu0 0.0
      %4045 = vmatmul.mubr.f32.gmra.mrb[0].mxu0 %v3963
      %v4046 = vpop.f32.mrb[0].mxu0
      %v4047 = vadd.f32 0.0, %v4046
      %v4048 = vpop.f32.mrb[0].mxu0
      %4049 = vdwg.mxu0
      %v4051 = vsel %vm1324, %v4032, 0
      %v4054 = vsel %vm1324, %v4037, 0
      %v4057 = vsel %vm1324, %v4042, 0
      %v4060 = vsel %vm1324, %v4047, 0
      %4062 = vmatprep.subr.mxu0 0.0
      %4063 = vmatpush1.msra.mxu0 %v3550
      %4064 = vmatprep.subr.mxu0 0.0
      %4065 = vmatpush1.msra.mxu0 %v3551
      %4066 = vmatprep.subr.mxu0 0.0
      %4067 = vmatpush1.msra.mxu0 %v3552
      %4068 = vmatprep.subr.mxu0 0.0
      %4069 = vmatpush1.msra.mxu0 %v3553
      %4070 = vmatprep.subr.mxu0 0.0
      %4071 = vmatpush1.msra.mxu0 0.0
      %4072 = vmatprep.subr.mxu0 0.0
      %4073 = vmatpush1.msra.mxu0 0.0
      %4074 = vmatprep.subr.mxu0 0.0
      %4075 = vmatpush1.msra.mxu0 0.0
      %4076 = vmatprep.subr.mxu0 0.0
      %4077 = vmatpush1.msra.mxu0 0.0
      %4078 = vmatprep.subr.mxu0 0.0
      %4079 = vmatpush1.msra.mxu0 0.0
      %4080 = vmatprep.subr.mxu0 0.0
      %4081 = vmatpush1.msra.mxu0 0.0
      %4082 = vmatprep.subr.mxu0 0.0
      %4083 = vmatpush1.msra.mxu0 0.0
      %4084 = vmatprep.subr.mxu0 0.0
      %4085 = vmatpush1.msra.mxu0 0.0
      %4086 = vmatprep.subr.mxu0 0.0
      %4087 = vmatpush1.msra.mxu0 0.0
      %4088 = vmatprep.subr.mxu0 0.0
      %4089 = vmatpush1.msra.mxu0 0.0
      %4090 = vmatprep.subr.mxu0 0.0
      %4091 = vmatpush1.msra.mxu0 0.0
      %4092 = vmatprep.subr.mxu0 0.0
      %4093 = vmatpush1.msra.mxu0 0.0
      %4094 = vmatprep.subr.mxu0 0.0
      %4095 = vmatpush1.msra.mxu0 0.0
      %4096 = vmatprep.subr.mxu0 0.0
      %4097 = vmatpush1.msra.mxu0 0.0
      %4098 = vmatprep.subr.mxu0 0.0
      %4099 = vmatpush1.msra.mxu0 0.0
      %4100 = vmatprep.subr.mxu0 0.0
      %4101 = vmatpush1.msra.mxu0 0.0
      %4102 = vmatprep.subr.mxu0 0.0
      %4103 = vmatpush1.msra.mxu0 0.0
      %4104 = vmatprep.subr.mxu0 0.0
      %4105 = vmatpush1.msra.mxu0 0.0
      %4106 = vmatprep.subr.mxu0 0.0
      %4107 = vmatpush1.msra.mxu0 0.0
      %4108 = vmatprep.subr.mxu0 0.0
      %4109 = vmatpush1.msra.mxu0 0.0
      %4110 = vmatprep.subr.mxu0 0.0
      %4111 = vmatpush1.msra.mxu0 0.0
      %4112 = vmatprep.subr.mxu0 0.0
      %4113 = vmatpush1.msra.mxu0 0.0
      %4114 = vmatprep.subr.mxu0 0.0
      %4115 = vmatpush1.msra.mxu0 0.0
      %4116 = vmatprep.subr.mxu0 0.0
      %4117 = vmatpush1.msra.mxu0 0.0
      %4118 = vmatprep.subr.mxu0 0.0
      %4119 = vmatpush1.msra.mxu0 0.0
      %4120 = vmatprep.subr.mxu0 0.0
      %4121 = vmatpush1.msra.mxu0 0.0
      %4122 = vmatprep.subr.mxu0 0.0
      %4123 = vmatpush1.msra.mxu0 0.0
      %4124 = vmatprep.subr.mxu0 0.0
      %4125 = vmatpush1.msra.mxu0 0.0
      %4126 = vmatprep.mubr.f32.mxu0 0.0
      %4127 = vmatmul.mubr.f32.gmra.mrb[0].mxu0 %v4051
      %v4128 = vpop.f32.mrb[0].mxu0
      %v4129 = vadd.f32 0.0, %v4128
      %v4130 = vpop.f32.mrb[0].mxu0
      %4131 = vmatprep.mubr.f32.mxu0 0.0
      %4132 = vmatmul.mubr.f32.gmra.mrb[0].mxu0 %v4054
      %v4133 = vpop.f32.mrb[0].mxu0
      %v4134 = vadd.f32 0.0, %v4133
      %v4135 = vpop.f32.mrb[0].mxu0
      %4136 = vmatprep.mubr.f32.mxu0 0.0
      %4137 = vmatmul.mubr.f32.gmra.mrb[0].mxu0 %v4057
      %v4138 = vpop.f32.mrb[0].mxu0
      %v4139 = vadd.f32 0.0, %v4138
      %v4140 = vpop.f32.mrb[0].mxu0
      %4141 = vmatprep.mubr.f32.mxu0 0.0
      %4142 = vmatmul.mubr.f32.gmra.mrb[0].mxu0 %v4060
      %v4143 = vpop.f32.mrb[0].mxu0
      %v4144 = vadd.f32 0.0, %v4143
      %v4145 = vpop.f32.mrb[0].mxu0
      %4146 = vdwg.mxu0
      %v4148 = vsel %vm1324, %v3770, 0
      %v4151 = vsel %vm1324, %v3775, 0
      %v4154 = vsel %vm1324, %v3780, 0
      %v4157 = vsel %vm1324, %v3785, 0
      %4159 = vmatprep.subr.mxu0 0.0
      %4160 = vmatpush1.msra.mxu0 %v3546
      %4161 = vmatprep.subr.mxu0 0.0
      %4162 = vmatpush1.msra.mxu0 %v3547
      %4163 = vmatprep.subr.mxu0 0.0
      %4164 = vmatpush1.msra.mxu0 %v3548
      %4165 = vmatprep.subr.mxu0 0.0
      %4166 = vmatpush1.msra.mxu0 %v3549
      %4167 = vmatprep.subr.mxu0 0.0
      %4168 = vmatpush1.msra.mxu0 0.0
      %4169 = vmatprep.subr.mxu0 0.0
      %4170 = vmatpush1.msra.mxu0 0.0
      %4171 = vmatprep.subr.mxu0 0.0
      %4172 = vmatpush1.msra.mxu0 0.0
      %4173 = vmatprep.subr.mxu0 0.0
      %4174 = vmatpush1.msra.mxu0 0.0
      %4175 = vmatprep.subr.mxu0 0.0
      %4176 = vmatpush1.msra.mxu0 0.0
      %4177 = vmatprep.subr.mxu0 0.0
      %4178 = vmatpush1.msra.mxu0 0.0
      %4179 = vmatprep.subr.mxu0 0.0
      %4180 = vmatpush1.msra.mxu0 0.0
      %4181 = vmatprep.subr.mxu0 0.0
      %4182 = vmatpush1.msra.mxu0 0.0
      %4183 = vmatprep.subr.mxu0 0.0
      %4184 = vmatpush1.msra.mxu0 0.0
      %4185 = vmatprep.subr.mxu0 0.0
      %4186 = vmatpush1.msra.mxu0 0.0
      %4187 = vmatprep.subr.mxu0 0.0
      %4188 = vmatpush1.msra.mxu0 0.0
      %4189 = vmatprep.subr.mxu0 0.0
      %4190 = vmatpush1.msra.mxu0 0.0
      %4191 = vmatprep.subr.mxu0 0.0
      %4192 = vmatpush1.msra.mxu0 0.0
      %4193 = vmatprep.subr.mxu0 0.0
      %4194 = vmatpush1.msra.mxu0 0.0
      %4195 = vmatprep.subr.mxu0 0.0
      %4196 = vmatpush1.msra.mxu0 0.0
      %4197 = vmatprep.subr.mxu0 0.0
      %4198 = vmatpush1.msra.mxu0 0.0
      %4199 = vmatprep.subr.mxu0 0.0
      %4200 = vmatpush1.msra.mxu0 0.0
      %4201 = vmatprep.subr.mxu0 0.0
      %4202 = vmatpush1.msra.mxu0 0.0
      %4203 = vmatprep.subr.mxu0 0.0
      %4204 = vmatpush1.msra.mxu0 0.0
      %4205 = vmatprep.subr.mxu0 0.0
      %4206 = vmatpush1.msra.mxu0 0.0
      %4207 = vmatprep.subr.mxu0 0.0
      %4208 = vmatpush1.msra.mxu0 0.0
      %4209 = vmatprep.subr.mxu0 0.0
      %4210 = vmatpush1.msra.mxu0 0.0
      %4211 = vmatprep.subr.mxu0 0.0
      %4212 = vmatpush1.msra.mxu0 0.0
      %4213 = vmatprep.subr.mxu0 0.0
      %4214 = vmatpush1.msra.mxu0 0.0
      %4215 = vmatprep.subr.mxu0 0.0
      %4216 = vmatpush1.msra.mxu0 0.0
      %4217 = vmatprep.subr.mxu0 0.0
      %4218 = vmatpush1.msra.mxu0 0.0
      %4219 = vmatprep.subr.mxu0 0.0
      %4220 = vmatpush1.msra.mxu0 0.0
      %4221 = vmatprep.subr.mxu0 0.0
      %4222 = vmatpush1.msra.mxu0 0.0
      %4223 = vmatprep.mubr.f32.mxu0 0.0
      %4224 = vmatmul.mubr.f32.gmra.mrb[0].mxu0 %v4148
      %v4225 = vpop.f32.mrb[0].mxu0
      %v4226 = vadd.f32 %v4129, %v4225
      %v4227 = vpop.f32.mrb[0].mxu0
      %4228 = vmatprep.mubr.f32.mxu0 0.0
      %4229 = vmatmul.mubr.f32.gmra.mrb[0].mxu0 %v4151
      %v4230 = vpop.f32.mrb[0].mxu0
      %v4231 = vadd.f32 %v4134, %v4230
      %v4232 = vpop.f32.mrb[0].mxu0
      %4233 = vmatprep.mubr.f32.mxu0 0.0
      %4234 = vmatmul.mubr.f32.gmra.mrb[0].mxu0 %v4154
      %v4235 = vpop.f32.mrb[0].mxu0
      %v4236 = vadd.f32 %v4139, %v4235
      %v4237 = vpop.f32.mrb[0].mxu0
      %4238 = vmatprep.mubr.f32.mxu0 0.0
      %4239 = vmatmul.mubr.f32.gmra.mrb[0].mxu0 %v4157
      %v4240 = vpop.f32.mrb[0].mxu0
      %v4241 = vadd.f32 %v4144, %v4240
      %v4242 = vpop.f32.mrb[0].mxu0
      %4243 = vdwg.mxu0
      %4244 = vrot.lane.b32.xlu0 %v3431, 64
      %v4245 = vpop.permute.xlu0 %4244
      %4246 = vrot.lane.b32.xlu0 %v3436, 64
      %v4247 = vpop.permute.xlu0 %4246
      %4248 = vrot.lane.b32.xlu0 %v3441, 64
      %v4249 = vpop.permute.xlu0 %4248
      %4250 = vrot.lane.b32.xlu0 %v3446, 64
      %v4251 = vpop.permute.xlu0 %4250
      %4256 = vxpose.xlu0.b32.start [1/16] %v4245, 128
      %4257 = vxpose.xlu0.b32.cont [2/16] %v4247, 128
      %4258 = vxpose.xlu0.b32.cont [3/16] %v4249, 128
      %4259 = vxpose.xlu0.b32.cont [4/16] %v4251, 128
      %4260 = vxpose.xlu0.b32.cont [5/16] 0.0, 128
      %4261 = vxpose.xlu0.b32.cont [6/16] 0.0, 128
      %4262 = vxpose.xlu0.b32.cont [7/16] 0.0, 128
      %4263 = vxpose.xlu0.b32.cont [8/16] 0.0, 128
      %4264 = vxpose.xlu0.b32.cont [9/16] 0.0, 128
      %4265 = vxpose.xlu0.b32.cont [10/16] 0.0, 128
      %4266 = vxpose.xlu0.b32.cont [11/16] 0.0, 128
      %4267 = vxpose.xlu0.b32.cont [12/16] 0.0, 128
      %4268 = vxpose.xlu0.b32.cont [13/16] 0.0, 128
      %4269 = vxpose.xlu0.b32.cont [14/16] 0.0, 128
      %4270 = vxpose.xlu0.b32.cont [15/16] 0.0, 128
      %4271 = vxpose.xlu0.b32.end [16/16] 0.0, 128
      %v4272 = vpop.trf.xlu0
      %v4273 = vpop.trf.xlu0
      %v4274 = vpop.trf.xlu0
      %v4275 = vpop.trf.xlu0
      %v4276 = vpop.trf.xlu0
      %v4277 = vpop.trf.xlu0
      %v4278 = vpop.trf.xlu0
      %v4279 = vpop.trf.xlu0
      %v4280 = vpop.trf.xlu0
      %v4281 = vpop.trf.xlu0
      %v4282 = vpop.trf.xlu0
      %v4283 = vpop.trf.xlu0
      %v4284 = vpop.trf.xlu0
      %v4285 = vpop.trf.xlu0
      %v4286 = vpop.trf.xlu0
      %v4287 = vpop.trf.xlu0
      %4288 = vrot.lane.b32.xlu0 %v3528, 64
      %v4289 = vpop.permute.xlu0 %4288
      %4290 = vrot.lane.b32.xlu0 %v3533, 64
      %v4291 = vpop.permute.xlu0 %4290
      %4292 = vrot.lane.b32.xlu0 %v3538, 64
      %v4293 = vpop.permute.xlu0 %4292
      %4294 = vrot.lane.b32.xlu0 %v3543, 64
      %v4295 = vpop.permute.xlu0 %4294
      %v4301 = vsel %vm1324, %v4272, 0
      %v4304 = vsel %vm1324, %v4273, 0
      %v4307 = vsel %vm1324, %v4274, 0
      %v4310 = vsel %vm1324, %v4275, 0
      %4312 = vmatprep.subr.mxu0 0.0
      %4313 = vmatpush1.msra.mxu0 %v4289
      %4314 = vmatprep.subr.mxu0 0.0
      %4315 = vmatpush1.msra.mxu0 %v4291
      %4316 = vmatprep.subr.mxu0 0.0
      %4317 = vmatpush1.msra.mxu0 %v4293
      %4318 = vmatprep.subr.mxu0 0.0
      %4319 = vmatpush1.msra.mxu0 %v4295
      %4320 = vmatprep.subr.mxu0 0.0
      %4321 = vmatpush1.msra.mxu0 0.0
      %4322 = vmatprep.subr.mxu0 0.0
      %4323 = vmatpush1.msra.mxu0 0.0
      %4324 = vmatprep.subr.mxu0 0.0
      %4325 = vmatpush1.msra.mxu0 0.0
      %4326 = vmatprep.subr.mxu0 0.0
      %4327 = vmatpush1.msra.mxu0 0.0
      %4328 = vmatprep.subr.mxu0 0.0
      %4329 = vmatpush1.msra.mxu0 0.0
      %4330 = vmatprep.subr.mxu0 0.0
      %4331 = vmatpush1.msra.mxu0 0.0
      %4332 = vmatprep.subr.mxu0 0.0
      %4333 = vmatpush1.msra.mxu0 0.0
      %4334 = vmatprep.subr.mxu0 0.0
      %4335 = vmatpush1.msra.mxu0 0.0
      %4336 = vmatprep.subr.mxu0 0.0
      %4337 = vmatpush1.msra.mxu0 0.0
      %4338 = vmatprep.subr.mxu0 0.0
      %4339 = vmatpush1.msra.mxu0 0.0
      %4340 = vmatprep.subr.mxu0 0.0
      %4341 = vmatpush1.msra.mxu0 0.0
      %4342 = vmatprep.subr.mxu0 0.0
      %4343 = vmatpush1.msra.mxu0 0.0
      %4344 = vmatprep.subr.mxu0 0.0
      %4345 = vmatpush1.msra.mxu0 0.0
      %4346 = vmatprep.subr.mxu0 0.0
      %4347 = vmatpush1.msra.mxu0 0.0
      %4348 = vmatprep.subr.mxu0 0.0
      %4349 = vmatpush1.msra.mxu0 0.0
      %4350 = vmatprep.subr.mxu0 0.0
      %4351 = vmatpush1.msra.mxu0 0.0
      %4352 = vmatprep.subr.mxu0 0.0
      %4353 = vmatpush1.msra.mxu0 0.0
      %4354 = vmatprep.subr.mxu0 0.0
      %4355 = vmatpush1.msra.mxu0 0.0
      %4356 = vmatprep.subr.mxu0 0.0
      %4357 = vmatpush1.msra.mxu0 0.0
      %4358 = vmatprep.subr.mxu0 0.0
      %4359 = vmatpush1.msra.mxu0 0.0
      %4360 = vmatprep.subr.mxu0 0.0
      %4361 = vmatpush1.msra.mxu0 0.0
      %4362 = vmatprep.subr.mxu0 0.0
      %4363 = vmatpush1.msra.mxu0 0.0
      %4364 = vmatprep.subr.mxu0 0.0
      %4365 = vmatpush1.msra.mxu0 0.0
      %4366 = vmatprep.subr.mxu0 0.0
      %4367 = vmatpush1.msra.mxu0 0.0
      %4368 = vmatprep.subr.mxu0 0.0
      %4369 = vmatpush1.msra.mxu0 0.0
      %4370 = vmatprep.subr.mxu0 0.0
      %4371 = vmatpush1.msra.mxu0 0.0
      %4372 = vmatprep.subr.mxu0 0.0
      %4373 = vmatpush1.msra.mxu0 0.0
      %4374 = vmatprep.subr.mxu0 0.0
      %4375 = vmatpush1.msra.mxu0 0.0
      %4376 = vmatprep.mubr.f32.mxu0 0.0
      %4377 = vmatmul.mubr.f32.gmra.mrb[0].mxu0 %v4301
      %v4378 = vpop.f32.mrb[0].mxu0
      %v4379 = vadd.f32 0.0, %v4378
      %v4380 = vpop.f32.mrb[0].mxu0
      %4381 = vmatprep.mubr.f32.mxu0 0.0
      %4382 = vmatmul.mubr.f32.gmra.mrb[0].mxu0 %v4304
      %v4383 = vpop.f32.mrb[0].mxu0
      %v4384 = vadd.f32 0.0, %v4383
      %v4385 = vpop.f32.mrb[0].mxu0
      %4386 = vmatprep.mubr.f32.mxu0 0.0
      %4387 = vmatmul.mubr.f32.gmra.mrb[0].mxu0 %v4307
      %v4388 = vpop.f32.mrb[0].mxu0
      %v4389 = vadd.f32 0.0, %v4388
      %v4390 = vpop.f32.mrb[0].mxu0
      %4391 = vmatprep.mubr.f32.mxu0 0.0
      %4392 = vmatmul.mubr.f32.gmra.mrb[0].mxu0 %v4310
      %v4393 = vpop.f32.mrb[0].mxu0
      %v4394 = vadd.f32 0.0, %v4393
      %v4395 = vpop.f32.mrb[0].mxu0
      %4396 = vdwg.mxu0
      %4397 = vrot.lane.b32.xlu0 %v3342, 64
      %v4398 = vpop.permute.xlu0 %4397
      %4399 = vrot.lane.b32.xlu0 %v3347, 64
      %v4400 = vpop.permute.xlu0 %4399
      %4401 = vrot.lane.b32.xlu0 %v3352, 64
      %v4402 = vpop.permute.xlu0 %4401
      %4403 = vrot.lane.b32.xlu0 %v3357, 64
      %v4404 = vpop.permute.xlu0 %4403
      %v4405 = vsel %vm1324, %v4398, 0
      %v4407 = vsel %vm1324, %v4400, 0
      %v4409 = vsel %vm1324, %v4402, 0
      %v4411 = vsel %vm1324, %v4404, 0
      %4413 = vmatprep.subr.mxu0 0.0
      %4414 = vmatpush1.msra.mxu0 %v4379
      %4415 = vmatprep.subr.mxu0 0.0
      %4416 = vmatpush1.msra.mxu0 %v4384
      %4417 = vmatprep.subr.mxu0 0.0
      %4418 = vmatpush1.msra.mxu0 %v4389
      %4419 = vmatprep.subr.mxu0 0.0
      %4420 = vmatpush1.msra.mxu0 %v4394
      %4421 = vmatprep.subr.mxu0 0.0
      %4422 = vmatpush1.msra.mxu0 0.0
      %4423 = vmatprep.subr.mxu0 0.0
      %4424 = vmatpush1.msra.mxu0 0.0
      %4425 = vmatprep.subr.mxu0 0.0
      %4426 = vmatpush1.msra.mxu0 0.0
      %4427 = vmatprep.subr.mxu0 0.0
      %4428 = vmatpush1.msra.mxu0 0.0
      %4429 = vmatprep.subr.mxu0 0.0
      %4430 = vmatpush1.msra.mxu0 0.0
      %4431 = vmatprep.subr.mxu0 0.0
      %4432 = vmatpush1.msra.mxu0 0.0
      %4433 = vmatprep.subr.mxu0 0.0
      %4434 = vmatpush1.msra.mxu0 0.0
      %4435 = vmatprep.subr.mxu0 0.0
      %4436 = vmatpush1.msra.mxu0 0.0
      %4437 = vmatprep.subr.mxu0 0.0
      %4438 = vmatpush1.msra.mxu0 0.0
      %4439 = vmatprep.subr.mxu0 0.0
      %4440 = vmatpush1.msra.mxu0 0.0
      %4441 = vmatprep.subr.mxu0 0.0
      %4442 = vmatpush1.msra.mxu0 0.0
      %4443 = vmatprep.subr.mxu0 0.0
      %4444 = vmatpush1.msra.mxu0 0.0
      %4445 = vmatprep.subr.mxu0 0.0
      %4446 = vmatpush1.msra.mxu0 0.0
      %4447 = vmatprep.subr.mxu0 0.0
      %4448 = vmatpush1.msra.mxu0 0.0
      %4449 = vmatprep.subr.mxu0 0.0
      %4450 = vmatpush1.msra.mxu0 0.0
      %4451 = vmatprep.subr.mxu0 0.0
      %4452 = vmatpush1.msra.mxu0 0.0
      %4453 = vmatprep.subr.mxu0 0.0
      %4454 = vmatpush1.msra.mxu0 0.0
      %4455 = vmatprep.subr.mxu0 0.0
      %4456 = vmatpush1.msra.mxu0 0.0
      %4457 = vmatprep.subr.mxu0 0.0
      %4458 = vmatpush1.msra.mxu0 0.0
      %4459 = vmatprep.subr.mxu0 0.0
      %4460 = vmatpush1.msra.mxu0 0.0
      %4461 = vmatprep.subr.mxu0 0.0
      %4462 = vmatpush1.msra.mxu0 0.0
      %4463 = vmatprep.subr.mxu0 0.0
      %4464 = vmatpush1.msra.mxu0 0.0
      %4465 = vmatprep.subr.mxu0 0.0
      %4466 = vmatpush1.msra.mxu0 0.0
      %4467 = vmatprep.subr.mxu0 0.0
      %4468 = vmatpush1.msra.mxu0 0.0
      %4469 = vmatprep.subr.mxu0 0.0
      %4470 = vmatpush1.msra.mxu0 0.0
      %4471 = vmatprep.subr.mxu0 0.0
      %4472 = vmatpush1.msra.mxu0 0.0
      %4473 = vmatprep.subr.mxu0 0.0
      %4474 = vmatpush1.msra.mxu0 0.0
      %4475 = vmatprep.subr.mxu0 0.0
      %4476 = vmatpush1.msra.mxu0 0.0
      %4477 = vmatprep.mubr.f32.mxu0 0.0
      %4478 = vmatmul.mubr.f32.gmra.mrb[0].mxu0 %v4405
      %v4479 = vpop.f32.mrb[0].mxu0
      %v4480 = vadd.f32 0.0, %v4479
      %v4481 = vpop.f32.mrb[0].mxu0
      %4482 = vmatprep.mubr.f32.mxu0 0.0
      %4483 = vmatmul.mubr.f32.gmra.mrb[0].mxu0 %v4407
      %v4484 = vpop.f32.mrb[0].mxu0
      %v4485 = vadd.f32 0.0, %v4484
      %v4486 = vpop.f32.mrb[0].mxu0
      %4487 = vmatprep.mubr.f32.mxu0 0.0
      %4488 = vmatmul.mubr.f32.gmra.mrb[0].mxu0 %v4409
      %v4489 = vpop.f32.mrb[0].mxu0
      %v4490 = vadd.f32 0.0, %v4489
      %v4491 = vpop.f32.mrb[0].mxu0
      %4492 = vmatprep.mubr.f32.mxu0 0.0
      %4493 = vmatmul.mubr.f32.gmra.mrb[0].mxu0 %v4411
      %v4494 = vpop.f32.mrb[0].mxu0
      %v4495 = vadd.f32 0.0, %v4494
      %v4496 = vpop.f32.mrb[0].mxu0
      %4497 = vdwg.mxu0
      %v4499 = vsel %vm1324, %v4480, 0
      %v4502 = vsel %vm1324, %v4485, 0
      %v4505 = vsel %vm1324, %v4490, 0
      %v4508 = vsel %vm1324, %v4495, 0
      %4510 = vmatprep.subr.mxu0 0.0
      %4511 = vmatpush1.msra.mxu0 %v3554
      %4512 = vmatprep.subr.mxu0 0.0
      %4513 = vmatpush1.msra.mxu0 %v3555
      %4514 = vmatprep.subr.mxu0 0.0
      %4515 = vmatpush1.msra.mxu0 %v3556
      %4516 = vmatprep.subr.mxu0 0.0
      %4517 = vmatpush1.msra.mxu0 %v3557
      %4518 = vmatprep.subr.mxu0 0.0
      %4519 = vmatpush1.msra.mxu0 0.0
      %4520 = vmatprep.subr.mxu0 0.0
      %4521 = vmatpush1.msra.mxu0 0.0
      %4522 = vmatprep.subr.mxu0 0.0
      %4523 = vmatpush1.msra.mxu0 0.0
      %4524 = vmatprep.subr.mxu0 0.0
      %4525 = vmatpush1.msra.mxu0 0.0
      %4526 = vmatprep.subr.mxu0 0.0
      %4527 = vmatpush1.msra.mxu0 0.0
      %4528 = vmatprep.subr.mxu0 0.0
      %4529 = vmatpush1.msra.mxu0 0.0
      %4530 = vmatprep.subr.mxu0 0.0
      %4531 = vmatpush1.msra.mxu0 0.0
      %4532 = vmatprep.subr.mxu0 0.0
      %4533 = vmatpush1.msra.mxu0 0.0
      %4534 = vmatprep.subr.mxu0 0.0
      %4535 = vmatpush1.msra.mxu0 0.0
      %4536 = vmatprep.subr.mxu0 0.0
      %4537 = vmatpush1.msra.mxu0 0.0
      %4538 = vmatprep.subr.mxu0 0.0
      %4539 = vmatpush1.msra.mxu0 0.0
      %4540 = vmatprep.subr.mxu0 0.0
      %4541 = vmatpush1.msra.mxu0 0.0
      %4542 = vmatprep.subr.mxu0 0.0
      %4543 = vmatpush1.msra.mxu0 0.0
      %4544 = vmatprep.subr.mxu0 0.0
      %4545 = vmatpush1.msra.mxu0 0.0
      %4546 = vmatprep.subr.mxu0 0.0
      %4547 = vmatpush1.msra.mxu0 0.0
      %4548 = vmatprep.subr.mxu0 0.0
      %4549 = vmatpush1.msra.mxu0 0.0
      %4550 = vmatprep.subr.mxu0 0.0
      %4551 = vmatpush1.msra.mxu0 0.0
      %4552 = vmatprep.subr.mxu0 0.0
      %4553 = vmatpush1.msra.mxu0 0.0
      %4554 = vmatprep.subr.mxu0 0.0
      %4555 = vmatpush1.msra.mxu0 0.0
      %4556 = vmatprep.subr.mxu0 0.0
      %4557 = vmatpush1.msra.mxu0 0.0
      %4558 = vmatprep.subr.mxu0 0.0
      %4559 = vmatpush1.msra.mxu0 0.0
      %4560 = vmatprep.subr.mxu0 0.0
      %4561 = vmatpush1.msra.mxu0 0.0
      %4562 = vmatprep.subr.mxu0 0.0
      %4563 = vmatpush1.msra.mxu0 0.0
      %4564 = vmatprep.subr.mxu0 0.0
      %4565 = vmatpush1.msra.mxu0 0.0
      %4566 = vmatprep.subr.mxu0 0.0
      %4567 = vmatpush1.msra.mxu0 0.0
      %4568 = vmatprep.subr.mxu0 0.0
      %4569 = vmatpush1.msra.mxu0 0.0
      %4570 = vmatprep.subr.mxu0 0.0
      %4571 = vmatpush1.msra.mxu0 0.0
      %4572 = vmatprep.subr.mxu0 0.0
      %4573 = vmatpush1.msra.mxu0 0.0
      %4574 = vmatprep.mubr.f32.mxu0 0.0
      %4575 = vmatmul.mubr.f32.gmra.mrb[0].mxu0 %v4499
      %v4576 = vpop.f32.mrb[0].mxu0
      %v4577 = vadd.f32 0.0, %v4576
      %v4578 = vpop.f32.mrb[0].mxu0
      %4579 = vmatprep.mubr.f32.mxu0 0.0
      %4580 = vmatmul.mubr.f32.gmra.mrb[0].mxu0 %v4502
      %v4581 = vpop.f32.mrb[0].mxu0
      %v4582 = vadd.f32 0.0, %v4581
      %v4583 = vpop.f32.mrb[0].mxu0
      %4584 = vmatprep.mubr.f32.mxu0 0.0
      %4585 = vmatmul.mubr.f32.gmra.mrb[0].mxu0 %v4505
      %v4586 = vpop.f32.mrb[0].mxu0
      %v4587 = vadd.f32 0.0, %v4586
      %v4588 = vpop.f32.mrb[0].mxu0
      %4589 = vmatprep.mubr.f32.mxu0 0.0
      %4590 = vmatmul.mubr.f32.gmra.mrb[0].mxu0 %v4508
      %v4591 = vpop.f32.mrb[0].mxu0
      %v4592 = vadd.f32 0.0, %v4591
      %v4593 = vpop.f32.mrb[0].mxu0
      %4594 = vdwg.mxu0
      %v4595 = vadd.f32 %v4226, %v4577
      %v4596 = vadd.f32 %v4231, %v4582
      %v4597 = vadd.f32 %v4236, %v4587
      %v4598 = vadd.f32 %v4241, %v4592
      %4599 = vrot.lane.b32.xlu0 %v3431, 32
      %v4600 = vpop.permute.xlu0 %4599
      %4601 = vrot.lane.b32.xlu0 %v3436, 32
      %v4602 = vpop.permute.xlu0 %4601
      %4603 = vrot.lane.b32.xlu0 %v3441, 32
      %v4604 = vpop.permute.xlu0 %4603
      %4605 = vrot.lane.b32.xlu0 %v3446, 32
      %v4606 = vpop.permute.xlu0 %4605
      %4611 = vxpose.xlu0.b32.start [1/16] %v4600, 128
      %4612 = vxpose.xlu0.b32.cont [2/16] %v4602, 128
      %4613 = vxpose.xlu0.b32.cont [3/16] %v4604, 128
      %4614 = vxpose.xlu0.b32.cont [4/16] %v4606, 128
      %4615 = vxpose.xlu0.b32.cont [5/16] 0.0, 128
      %4616 = vxpose.xlu0.b32.cont [6/16] 0.0, 128
      %4617 = vxpose.xlu0.b32.cont [7/16] 0.0, 128
      %4618 = vxpose.xlu0.b32.cont [8/16] 0.0, 128
      %4619 = vxpose.xlu0.b32.cont [9/16] 0.0, 128
      %4620 = vxpose.xlu0.b32.cont [10/16] 0.0, 128
      %4621 = vxpose.xlu0.b32.cont [11/16] 0.0, 128
      %4622 = vxpose.xlu0.b32.cont [12/16] 0.0, 128
      %4623 = vxpose.xlu0.b32.cont [13/16] 0.0, 128
      %4624 = vxpose.xlu0.b32.cont [14/16] 0.0, 128
      %4625 = vxpose.xlu0.b32.cont [15/16] 0.0, 128
      %4626 = vxpose.xlu0.b32.end [16/16] 0.0, 128
      %v4627 = vpop.trf.xlu0
      %v4628 = vpop.trf.xlu0
      %v4629 = vpop.trf.xlu0
      %v4630 = vpop.trf.xlu0
      %v4631 = vpop.trf.xlu0
      %v4632 = vpop.trf.xlu0
      %v4633 = vpop.trf.xlu0
      %v4634 = vpop.trf.xlu0
      %v4635 = vpop.trf.xlu0
      %v4636 = vpop.trf.xlu0
      %v4637 = vpop.trf.xlu0
      %v4638 = vpop.trf.xlu0
      %v4639 = vpop.trf.xlu0
      %v4640 = vpop.trf.xlu0
      %v4641 = vpop.trf.xlu0
      %v4642 = vpop.trf.xlu0
      %4643 = vrot.lane.b32.xlu0 %v3528, 32
      %v4644 = vpop.permute.xlu0 %4643
      %4645 = vrot.lane.b32.xlu0 %v3533, 32
      %v4646 = vpop.permute.xlu0 %4645
      %4647 = vrot.lane.b32.xlu0 %v3538, 32
      %v4648 = vpop.permute.xlu0 %4647
      %4649 = vrot.lane.b32.xlu0 %v3543, 32
      %v4650 = vpop.permute.xlu0 %4649
      %v4656 = vsel %vm1324, %v4627, 0
      %v4659 = vsel %vm1324, %v4628, 0
      %v4662 = vsel %vm1324, %v4629, 0
      %v4665 = vsel %vm1324, %v4630, 0
      %4667 = vmatprep.subr.mxu0 0.0
      %4668 = vmatpush1.msra.mxu0 %v4644
      %4669 = vmatprep.subr.mxu0 0.0
      %4670 = vmatpush1.msra.mxu0 %v4646
      %4671 = vmatprep.subr.mxu0 0.0
      %4672 = vmatpush1.msra.mxu0 %v4648
      %4673 = vmatprep.subr.mxu0 0.0
      %4674 = vmatpush1.msra.mxu0 %v4650
      %4675 = vmatprep.subr.mxu0 0.0
      %4676 = vmatpush1.msra.mxu0 0.0
      %4677 = vmatprep.subr.mxu0 0.0
      %4678 = vmatpush1.msra.mxu0 0.0
      %4679 = vmatprep.subr.mxu0 0.0
      %4680 = vmatpush1.msra.mxu0 0.0
      %4681 = vmatprep.subr.mxu0 0.0
      %4682 = vmatpush1.msra.mxu0 0.0
      %4683 = vmatprep.subr.mxu0 0.0
      %4684 = vmatpush1.msra.mxu0 0.0
      %4685 = vmatprep.subr.mxu0 0.0
      %4686 = vmatpush1.msra.mxu0 0.0
      %4687 = vmatprep.subr.mxu0 0.0
      %4688 = vmatpush1.msra.mxu0 0.0
      %4689 = vmatprep.subr.mxu0 0.0
      %4690 = vmatpush1.msra.mxu0 0.0
      %4691 = vmatprep.subr.mxu0 0.0
      %4692 = vmatpush1.msra.mxu0 0.0
      %4693 = vmatprep.subr.mxu0 0.0
      %4694 = vmatpush1.msra.mxu0 0.0
      %4695 = vmatprep.subr.mxu0 0.0
      %4696 = vmatpush1.msra.mxu0 0.0
      %4697 = vmatprep.subr.mxu0 0.0
      %4698 = vmatpush1.msra.mxu0 0.0
      %4699 = vmatprep.subr.mxu0 0.0
      %4700 = vmatpush1.msra.mxu0 0.0
      %4701 = vmatprep.subr.mxu0 0.0
      %4702 = vmatpush1.msra.mxu0 0.0
      %4703 = vmatprep.subr.mxu0 0.0
      %4704 = vmatpush1.msra.mxu0 0.0
      %4705 = vmatprep.subr.mxu0 0.0
      %4706 = vmatpush1.msra.mxu0 0.0
      %4707 = vmatprep.subr.mxu0 0.0
      %4708 = vmatpush1.msra.mxu0 0.0
      %4709 = vmatprep.subr.mxu0 0.0
      %4710 = vmatpush1.msra.mxu0 0.0
      %4711 = vmatprep.subr.mxu0 0.0
      %4712 = vmatpush1.msra.mxu0 0.0
      %4713 = vmatprep.subr.mxu0 0.0
      %4714 = vmatpush1.msra.mxu0 0.0
      %4715 = vmatprep.subr.mxu0 0.0
      %4716 = vmatpush1.msra.mxu0 0.0
      %4717 = vmatprep.subr.mxu0 0.0
      %4718 = vmatpush1.msra.mxu0 0.0
      %4719 = vmatprep.subr.mxu0 0.0
      %4720 = vmatpush1.msra.mxu0 0.0
      %4721 = vmatprep.subr.mxu0 0.0
      %4722 = vmatpush1.msra.mxu0 0.0
      %4723 = vmatprep.subr.mxu0 0.0
      %4724 = vmatpush1.msra.mxu0 0.0
      %4725 = vmatprep.subr.mxu0 0.0
      %4726 = vmatpush1.msra.mxu0 0.0
      %4727 = vmatprep.subr.mxu0 0.0
      %4728 = vmatpush1.msra.mxu0 0.0
      %4729 = vmatprep.subr.mxu0 0.0
      %4730 = vmatpush1.msra.mxu0 0.0
      %4731 = vmatprep.mubr.f32.mxu0 0.0
      %4732 = vmatmul.mubr.f32.gmra.mrb[0].mxu0 %v4656
      %v4733 = vpop.f32.mrb[0].mxu0
      %v4734 = vadd.f32 0.0, %v4733
      %v4735 = vpop.f32.mrb[0].mxu0
      %4736 = vmatprep.mubr.f32.mxu0 0.0
      %4737 = vmatmul.mubr.f32.gmra.mrb[0].mxu0 %v4659
      %v4738 = vpop.f32.mrb[0].mxu0
      %v4739 = vadd.f32 0.0, %v4738
      %v4740 = vpop.f32.mrb[0].mxu0
      %4741 = vmatprep.mubr.f32.mxu0 0.0
      %4742 = vmatmul.mubr.f32.gmra.mrb[0].mxu0 %v4662
      %v4743 = vpop.f32.mrb[0].mxu0
      %v4744 = vadd.f32 0.0, %v4743
      %v4745 = vpop.f32.mrb[0].mxu0
      %4746 = vmatprep.mubr.f32.mxu0 0.0
      %4747 = vmatmul.mubr.f32.gmra.mrb[0].mxu0 %v4665
      %v4748 = vpop.f32.mrb[0].mxu0
      %v4749 = vadd.f32 0.0, %v4748
      %v4750 = vpop.f32.mrb[0].mxu0
      %4751 = vdwg.mxu0
      %4752 = vrot.lane.b32.xlu0 %v3342, 32
      %v4753 = vpop.permute.xlu0 %4752
      %4754 = vrot.lane.b32.xlu0 %v3347, 32
      %v4755 = vpop.permute.xlu0 %4754
      %4756 = vrot.lane.b32.xlu0 %v3352, 32
      %v4757 = vpop.permute.xlu0 %4756
      %4758 = vrot.lane.b32.xlu0 %v3357, 32
      %v4759 = vpop.permute.xlu0 %4758
      %v4760 = vsel %vm1324, %v4753, 0
      %v4762 = vsel %vm1324, %v4755, 0
      %v4764 = vsel %vm1324, %v4757, 0
      %v4766 = vsel %vm1324, %v4759, 0
      %4768 = vmatprep.subr.mxu0 0.0
      %4769 = vmatpush1.msra.mxu0 %v4734
      %4770 = vmatprep.subr.mxu0 0.0
      %4771 = vmatpush1.msra.mxu0 %v4739
      %4772 = vmatprep.subr.mxu0 0.0
      %4773 = vmatpush1.msra.mxu0 %v4744
      %4774 = vmatprep.subr.mxu0 0.0
      %4775 = vmatpush1.msra.mxu0 %v4749
      %4776 = vmatprep.subr.mxu0 0.0
      %4777 = vmatpush1.msra.mxu0 0.0
      %4778 = vmatprep.subr.mxu0 0.0
      %4779 = vmatpush1.msra.mxu0 0.0
      %4780 = vmatprep.subr.mxu0 0.0
      %4781 = vmatpush1.msra.mxu0 0.0
      %4782 = vmatprep.subr.mxu0 0.0
      %4783 = vmatpush1.msra.mxu0 0.0
      %4784 = vmatprep.subr.mxu0 0.0
      %4785 = vmatpush1.msra.mxu0 0.0
      %4786 = vmatprep.subr.mxu0 0.0
      %4787 = vmatpush1.msra.mxu0 0.0
      %4788 = vmatprep.subr.mxu0 0.0
      %4789 = vmatpush1.msra.mxu0 0.0
      %4790 = vmatprep.subr.mxu0 0.0
      %4791 = vmatpush1.msra.mxu0 0.0
      %4792 = vmatprep.subr.mxu0 0.0
      %4793 = vmatpush1.msra.mxu0 0.0
      %4794 = vmatprep.subr.mxu0 0.0
      %4795 = vmatpush1.msra.mxu0 0.0
      %4796 = vmatprep.subr.mxu0 0.0
      %4797 = vmatpush1.msra.mxu0 0.0
      %4798 = vmatprep.subr.mxu0 0.0
      %4799 = vmatpush1.msra.mxu0 0.0
      %4800 = vmatprep.subr.mxu0 0.0
      %4801 = vmatpush1.msra.mxu0 0.0
      %4802 = vmatprep.subr.mxu0 0.0
      %4803 = vmatpush1.msra.mxu0 0.0
      %4804 = vmatprep.subr.mxu0 0.0
      %4805 = vmatpush1.msra.mxu0 0.0
      %4806 = vmatprep.subr.mxu0 0.0
      %4807 = vmatpush1.msra.mxu0 0.0
      %4808 = vmatprep.subr.mxu0 0.0
      %4809 = vmatpush1.msra.mxu0 0.0
      %4810 = vmatprep.subr.mxu0 0.0
      %4811 = vmatpush1.msra.mxu0 0.0
      %4812 = vmatprep.subr.mxu0 0.0
      %4813 = vmatpush1.msra.mxu0 0.0
      %4814 = vmatprep.subr.mxu0 0.0
      %4815 = vmatpush1.msra.mxu0 0.0
      %4816 = vmatprep.subr.mxu0 0.0
      %4817 = vmatpush1.msra.mxu0 0.0
      %4818 = vmatprep.subr.mxu0 0.0
      %4819 = vmatpush1.msra.mxu0 0.0
      %4820 = vmatprep.subr.mxu0 0.0
      %4821 = vmatpush1.msra.mxu0 0.0
      %4822 = vmatprep.subr.mxu0 0.0
      %4823 = vmatpush1.msra.mxu0 0.0
      %4824 = vmatprep.subr.mxu0 0.0
      %4825 = vmatpush1.msra.mxu0 0.0
      %4826 = vmatprep.subr.mxu0 0.0
      %4827 = vmatpush1.msra.mxu0 0.0
      %4828 = vmatprep.subr.mxu0 0.0
      %4829 = vmatpush1.msra.mxu0 0.0
      %4830 = vmatprep.subr.mxu0 0.0
      %4831 = vmatpush1.msra.mxu0 0.0
      %4832 = vmatprep.mubr.f32.mxu0 0.0
      %4833 = vmatmul.mubr.f32.gmra.mrb[0].mxu0 %v4760
      %v4834 = vpop.f32.mrb[0].mxu0
      %v4835 = vadd.f32 0.0, %v4834
      %v4836 = vpop.f32.mrb[0].mxu0
      %4837 = vmatprep.mubr.f32.mxu0 0.0
      %4838 = vmatmul.mubr.f32.gmra.mrb[0].mxu0 %v4762
      %v4839 = vpop.f32.mrb[0].mxu0
      %v4840 = vadd.f32 0.0, %v4839
      %v4841 = vpop.f32.mrb[0].mxu0
      %4842 = vmatprep.mubr.f32.mxu0 0.0
      %4843 = vmatmul.mubr.f32.gmra.mrb[0].mxu0 %v4764
      %v4844 = vpop.f32.mrb[0].mxu0
      %v4845 = vadd.f32 0.0, %v4844
      %v4846 = vpop.f32.mrb[0].mxu0
      %4847 = vmatprep.mubr.f32.mxu0 0.0
      %4848 = vmatmul.mubr.f32.gmra.mrb[0].mxu0 %v4766
      %v4849 = vpop.f32.mrb[0].mxu0
      %v4850 = vadd.f32 0.0, %v4849
      %v4851 = vpop.f32.mrb[0].mxu0
      %4852 = vdwg.mxu0
      %v4854 = vsel %vm1324, %v4835, 0
      %v4857 = vsel %vm1324, %v4840, 0
      %v4860 = vsel %vm1324, %v4845, 0
      %v4863 = vsel %vm1324, %v4850, 0
      %4865 = vmatprep.subr.mxu0 0.0
      %4866 = vmatpush1.msra.mxu0 %v3558
      %4867 = vmatprep.subr.mxu0 0.0
      %4868 = vmatpush1.msra.mxu0 %v3559
      %4869 = vmatprep.subr.mxu0 0.0
      %4870 = vmatpush1.msra.mxu0 %v3560
      %4871 = vmatprep.subr.mxu0 0.0
      %4872 = vmatpush1.msra.mxu0 %v3561
      %4873 = vmatprep.subr.mxu0 0.0
      %4874 = vmatpush1.msra.mxu0 0.0
      %4875 = vmatprep.subr.mxu0 0.0
      %4876 = vmatpush1.msra.mxu0 0.0
      %4877 = vmatprep.subr.mxu0 0.0
      %4878 = vmatpush1.msra.mxu0 0.0
      %4879 = vmatprep.subr.mxu0 0.0
      %4880 = vmatpush1.msra.mxu0 0.0
      %4881 = vmatprep.subr.mxu0 0.0
      %4882 = vmatpush1.msra.mxu0 0.0
      %4883 = vmatprep.subr.mxu0 0.0
      %4884 = vmatpush1.msra.mxu0 0.0
      %4885 = vmatprep.subr.mxu0 0.0
      %4886 = vmatpush1.msra.mxu0 0.0
      %4887 = vmatprep.subr.mxu0 0.0
      %4888 = vmatpush1.msra.mxu0 0.0
      %4889 = vmatprep.subr.mxu0 0.0
      %4890 = vmatpush1.msra.mxu0 0.0
      %4891 = vmatprep.subr.mxu0 0.0
      %4892 = vmatpush1.msra.mxu0 0.0
      %4893 = vmatprep.subr.mxu0 0.0
      %4894 = vmatpush1.msra.mxu0 0.0
      %4895 = vmatprep.subr.mxu0 0.0
      %4896 = vmatpush1.msra.mxu0 0.0
      %4897 = vmatprep.subr.mxu0 0.0
      %4898 = vmatpush1.msra.mxu0 0.0
      %4899 = vmatprep.subr.mxu0 0.0
      %4900 = vmatpush1.msra.mxu0 0.0
      %4901 = vmatprep.subr.mxu0 0.0
      %4902 = vmatpush1.msra.mxu0 0.0
      %4903 = vmatprep.subr.mxu0 0.0
      %4904 = vmatpush1.msra.mxu0 0.0
      %4905 = vmatprep.subr.mxu0 0.0
      %4906 = vmatpush1.msra.mxu0 0.0
      %4907 = vmatprep.subr.mxu0 0.0
      %4908 = vmatpush1.msra.mxu0 0.0
      %4909 = vmatprep.subr.mxu0 0.0
      %4910 = vmatpush1.msra.mxu0 0.0
      %4911 = vmatprep.subr.mxu0 0.0
      %4912 = vmatpush1.msra.mxu0 0.0
      %4913 = vmatprep.subr.mxu0 0.0
      %4914 = vmatpush1.msra.mxu0 0.0
      %4915 = vmatprep.subr.mxu0 0.0
      %4916 = vmatpush1.msra.mxu0 0.0
      %4917 = vmatprep.subr.mxu0 0.0
      %4918 = vmatpush1.msra.mxu0 0.0
      %4919 = vmatprep.subr.mxu0 0.0
      %4920 = vmatpush1.msra.mxu0 0.0
      %4921 = vmatprep.subr.mxu0 0.0
      %4922 = vmatpush1.msra.mxu0 0.0
      %4923 = vmatprep.subr.mxu0 0.0
      %4924 = vmatpush1.msra.mxu0 0.0
      %4925 = vmatprep.subr.mxu0 0.0
      %4926 = vmatpush1.msra.mxu0 0.0
      %4927 = vmatprep.subr.mxu0 0.0
      %4928 = vmatpush1.msra.mxu0 0.0
      %4929 = vmatprep.mubr.f32.mxu0 0.0
      %4930 = vmatmul.mubr.f32.gmra.mrb[0].mxu0 %v4854
      %v4931 = vpop.f32.mrb[0].mxu0
      %v4932 = vadd.f32 0.0, %v4931
      %v4933 = vpop.f32.mrb[0].mxu0
      %4934 = vmatprep.mubr.f32.mxu0 0.0
      %4935 = vmatmul.mubr.f32.gmra.mrb[0].mxu0 %v4857
      %v4936 = vpop.f32.mrb[0].mxu0
      %v4937 = vadd.f32 0.0, %v4936
      %v4938 = vpop.f32.mrb[0].mxu0
      %4939 = vmatprep.mubr.f32.mxu0 0.0
      %4940 = vmatmul.mubr.f32.gmra.mrb[0].mxu0 %v4860
      %v4941 = vpop.f32.mrb[0].mxu0
      %v4942 = vadd.f32 0.0, %v4941
      %v4943 = vpop.f32.mrb[0].mxu0
      %4944 = vmatprep.mubr.f32.mxu0 0.0
      %4945 = vmatmul.mubr.f32.gmra.mrb[0].mxu0 %v4863
      %v4946 = vpop.f32.mrb[0].mxu0
      %v4947 = vadd.f32 0.0, %v4946
      %v4948 = vpop.f32.mrb[0].mxu0
      %4949 = vdwg.mxu0
      %v4950 = vadd.f32 %v4595, %v4932
      %v4951 = vadd.f32 %v4596, %v4937
      %v4952 = vadd.f32 %v4597, %v4942
      %v4953 = vadd.f32 %v4598, %v4947
      %v4954 = vmul.f32 %v4950, 0.03125
      %v4955 = vmul.f32 %v4951, 0.03125
      %v4956 = vmul.f32 %v4952, 0.03125
      %v4957 = vmul.f32 %v4953, 0.03125
      %v4958 = vld [vmem:[%s35] sm:$0x1]
      %v4960 = vlaneseq
      %v4961 = vshrl.u32 %v4960, 7
      %v4962 = vsub.s32 0, %v4961
      %v4963 = vrot.slane %v4958, %v4962
      %v4965 = vadd.f32 %v4954, %v4963
      %v4966 = vadd.f32 %v4955, %v4963
      %v4967 = vadd.f32 %v4956, %v4963
      %v4968 = vadd.f32 %v4957, %v4963
      %v4969 = vmul.f32 %v1055, 0.5
      %v4970 = vld [vmem:[%s37] sm:$0xff]
      %v4971 = vld [vmem:[%s37 + $0x8] sm:$0xff]
      %v4972 = vld [vmem:[%s37 + $0x10] sm:$0xff]
      %v4973 = vld [vmem:[%s37 + $0x18] sm:$0xff]
      %v4975 = vlaneseq
      %v4976 = vshrl.u32 %v4975, 7
      %v4977 = vsub.s32 0, %v4976
      %v4978 = vrot.slane %v4969, %v4977
      %v4980 = vmul.f32 %v4978, %v4970
      %v4981 = vmul.f32 %v4978, %v4971
      %v4982 = vmul.f32 %v4978, %v4972
      %v4983 = vmul.f32 %v4978, %v4973
      %v4984 = vld [vmem:[%s39] sm:$0xff]
      %v4985 = vld [vmem:[%s39 + $0x8] sm:$0xff]
      %v4986 = vld [vmem:[%s39 + $0x10] sm:$0xff]
      %v4987 = vld [vmem:[%s39 + $0x18] sm:$0xff]
      %v4988 = vadd.f32 %v4980, %v4984
      %v4989 = vadd.f32 %v4981, %v4985
      %v4990 = vadd.f32 %v4982, %v4986
      %v4991 = vadd.f32 %v4983, %v4987
      %v4992 = vld [vmem:[%s41] sm:$0xff]
      %v4993 = vld [vmem:[%s41 + $0x8] sm:$0xff]
      %v4994 = vld [vmem:[%s41 + $0x10] sm:$0xff]
      %v4995 = vld [vmem:[%s41 + $0x18] sm:$0xff]
      %v4996 = vld [vmem:[%s41 + $0x20] sm:$0x1]
      %4998 = vset.pattern.permute.xlu0 0
      %4999 = vperm.xlu0 %4998, %v4988
      %v5000 = vpop.permute.xlu0 %4999
      %5003 = vset.pattern.permute.xlu0 0
      %5004 = vperm.xlu0 %5003, %v4989
      %v5005 = vpop.permute.xlu0 %5004
      %5008 = vset.pattern.permute.xlu0 0
      %5009 = vperm.xlu0 %5008, %v4990
      %v5010 = vpop.permute.xlu0 %5009
      %5013 = vset.pattern.permute.xlu0 0
      %5014 = vperm.xlu0 %5013, %v4991
      %v5015 = vpop.permute.xlu0 %5014
      %v5017 = vlaneseq
      %v5018 = vshrl.u32 %v5017, 7
      %v5019 = vsub.s32 0, %v5018
      %v5020 = vrot.slane %v4996, %v5019
      %v5021 = vmul.f32 %v5000, %v5020
      %v5022 = vmul.f32 %v5005, %v5020
      %v5023 = vmul.f32 %v5010, %v5020
      %v5024 = vmul.f32 %v5015, %v5020
      %5025 = vxpose.xlu0.b32.start [1/16] %v4965, 128
      %5026 = vxpose.xlu0.b32.cont [2/16] %v4966, 128
      %5027 = vxpose.xlu0.b32.cont [3/16] %v4967, 128
      %5028 = vxpose.xlu0.b32.cont [4/16] %v4968, 128
      %5029 = vxpose.xlu0.b32.cont [5/16] 0.0, 128
      %5030 = vxpose.xlu0.b32.cont [6/16] 0.0, 128
      %5031 = vxpose.xlu0.b32.cont [7/16] 0.0, 128
      %5032 = vxpose.xlu0.b32.cont [8/16] 0.0, 128
      %5033 = vxpose.xlu0.b32.cont [9/16] 0.0, 128
      %5034 = vxpose.xlu0.b32.cont [10/16] 0.0, 128
      %5035 = vxpose.xlu0.b32.cont [11/16] 0.0, 128
      %5036 = vxpose.xlu0.b32.cont [12/16] 0.0, 128
      %5037 = vxpose.xlu0.b32.cont [13/16] 0.0, 128
      %5038 = vxpose.xlu0.b32.cont [14/16] 0.0, 128
      %5039 = vxpose.xlu0.b32.cont [15/16] 0.0, 128
      %5040 = vxpose.xlu0.b32.end [16/16] 0.0, 128
      %v5041 = vpop.trf.xlu0
      %v5042 = vpop.trf.xlu0
      %v5043 = vpop.trf.xlu0
      %v5044 = vpop.trf.xlu0
      %v5045 = vpop.trf.xlu0
      %v5046 = vpop.trf.xlu0
      %v5047 = vpop.trf.xlu0
      %v5048 = vpop.trf.xlu0
      %v5049 = vpop.trf.xlu0
      %v5050 = vpop.trf.xlu0
      %v5051 = vpop.trf.xlu0
      %v5052 = vpop.trf.xlu0
      %v5053 = vpop.trf.xlu0
      %v5054 = vpop.trf.xlu0
      %v5055 = vpop.trf.xlu0
      %v5056 = vpop.trf.xlu0
      %v5058 = vsel %vm1324, %v5041, 0
      %v5061 = vsel %vm1324, %v5042, 0
      %v5064 = vsel %vm1324, %v5043, 0
      %v5067 = vsel %vm1324, %v5044, 0
      %5069 = vmatprep.subr.mxu0 0.0
      %5070 = vmatpush1.msra.mxu0 %v4992
      %5071 = vmatprep.subr.mxu0 0.0
      %5072 = vmatpush1.msra.mxu0 %v4993
      %5073 = vmatprep.subr.mxu0 0.0
      %5074 = vmatpush1.msra.mxu0 %v4994
      %5075 = vmatprep.subr.mxu0 0.0
      %5076 = vmatpush1.msra.mxu0 %v4995
      %5077 = vmatprep.subr.mxu0 0.0
      %5078 = vmatpush1.msra.mxu0 0.0
      %5079 = vmatprep.subr.mxu0 0.0
      %5080 = vmatpush1.msra.mxu0 0.0
      %5081 = vmatprep.subr.mxu0 0.0
      %5082 = vmatpush1.msra.mxu0 0.0
      %5083 = vmatprep.subr.mxu0 0.0
      %5084 = vmatpush1.msra.mxu0 0.0
      %5085 = vmatprep.subr.mxu0 0.0
      %5086 = vmatpush1.msra.mxu0 0.0
      %5087 = vmatprep.subr.mxu0 0.0
      %5088 = vmatpush1.msra.mxu0 0.0
      %5089 = vmatprep.subr.mxu0 0.0
      %5090 = vmatpush1.msra.mxu0 0.0
      %5091 = vmatprep.subr.mxu0 0.0
      %5092 = vmatpush1.msra.mxu0 0.0
      %5093 = vmatprep.subr.mxu0 0.0
      %5094 = vmatpush1.msra.mxu0 0.0
      %5095 = vmatprep.subr.mxu0 0.0
      %5096 = vmatpush1.msra.mxu0 0.0
      %5097 = vmatprep.subr.mxu0 0.0
      %5098 = vmatpush1.msra.mxu0 0.0
      %5099 = vmatprep.subr.mxu0 0.0
      %5100 = vmatpush1.msra.mxu0 0.0
      %5101 = vmatprep.subr.mxu0 0.0
      %5102 = vmatpush1.msra.mxu0 0.0
      %5103 = vmatprep.subr.mxu0 0.0
      %5104 = vmatpush1.msra.mxu0 0.0
      %5105 = vmatprep.subr.mxu0 0.0
      %5106 = vmatpush1.msra.mxu0 0.0
      %5107 = vmatprep.subr.mxu0 0.0
      %5108 = vmatpush1.msra.mxu0 0.0
      %5109 = vmatprep.subr.mxu0 0.0
      %5110 = vmatpush1.msra.mxu0 0.0
      %5111 = vmatprep.subr.mxu0 0.0
      %5112 = vmatpush1.msra.mxu0 0.0
      %5113 = vmatprep.subr.mxu0 0.0
      %5114 = vmatpush1.msra.mxu0 0.0
      %5115 = vmatprep.subr.mxu0 0.0
      %5116 = vmatpush1.msra.mxu0 0.0
      %5117 = vmatprep.subr.mxu0 0.0
      %5118 = vmatpush1.msra.mxu0 0.0
      %5119 = vmatprep.subr.mxu0 0.0
      %5120 = vmatpush1.msra.mxu0 0.0
      %5121 = vmatprep.subr.mxu0 0.0
      %5122 = vmatpush1.msra.mxu0 0.0
      %5123 = vmatprep.subr.mxu0 0.0
      %5124 = vmatpush1.msra.mxu0 0.0
      %5125 = vmatprep.subr.mxu0 0.0
      %5126 = vmatpush1.msra.mxu0 0.0
      %5127 = vmatprep.subr.mxu0 0.0
      %5128 = vmatpush1.msra.mxu0 0.0
      %5129 = vmatprep.subr.mxu0 0.0
      %5130 = vmatpush1.msra.mxu0 0.0
      %5131 = vmatprep.subr.mxu0 0.0
      %5132 = vmatpush1.msra.mxu0 0.0
      %5133 = vmatprep.mubr.f32.mxu0 0.0
      %5134 = vmatmul.mubr.f32.gmra.mrb[0].mxu0 %v5058
      %v5135 = vpop.f32.mrb[0].mxu0
      %v5136 = vadd.f32 %v5021, %v5135
      %v5137 = vpop.f32.mrb[0].mxu0
      %5138 = vmatprep.mubr.f32.mxu0 0.0
      %5139 = vmatmul.mubr.f32.gmra.mrb[0].mxu0 %v5061
      %v5140 = vpop.f32.mrb[0].mxu0
      %v5141 = vadd.f32 %v5022, %v5140
      %v5142 = vpop.f32.mrb[0].mxu0
      %5143 = vmatprep.mubr.f32.mxu0 0.0
      %5144 = vmatmul.mubr.f32.gmra.mrb[0].mxu0 %v5064
      %v5145 = vpop.f32.mrb[0].mxu0
      %v5146 = vadd.f32 %v5023, %v5145
      %v5147 = vpop.f32.mrb[0].mxu0
      %5148 = vmatprep.mubr.f32.mxu0 0.0
      %5149 = vmatmul.mubr.f32.gmra.mrb[0].mxu0 %v5067
      %v5150 = vpop.f32.mrb[0].mxu0
      %v5151 = vadd.f32 %v5024, %v5150
      %v5152 = vpop.f32.mrb[0].mxu0
      %5153 = vdwg.mxu0
      %v5154 = vld [vmem:[%s43] sm:$0x1]
      %v5156 = vlaneseq
      %v5157 = vshrl.u32 %v5156, 7
      %v5158 = vsub.s32 0, %v5157
      %v5159 = vrot.slane %v5154, %v5158
      %v5161 = vadd.f32 %v5136, %v5159
      %v5162 = vadd.f32 %v5141, %v5159
      %v5163 = vadd.f32 %v5146, %v5159
      %v5164 = vadd.f32 %v5151, %v5159
      %v5165 = vmul.f32 %v5161, 0.70710677
      %v5166 = vmul.f32 %v5162, 0.70710677
      %v5167 = vmul.f32 %v5163, 0.70710677
      %v5168 = vmul.f32 %v5164, 0.70710677
      %vm5169 = vcmp.ge.f32.partialorder %v5165, 0.0
      %vm5170 = vcmp.ge.f32.partialorder %v5166, 0.0
      %vm5171 = vcmp.ge.f32.partialorder %v5167, 0.0
      %vm5172 = vcmp.ge.f32.partialorder %v5168, 0.0
      %v5173 = vsel %vm5169, 1.0, -1.0
      %v5174 = vsel %vm5170, 1.0, -1.0
      %v5175 = vsel %vm5171, 1.0, -1.0
      %v5176 = vsel %vm5172, 1.0, -1.0
      %v5177 = vand.u32 2147483647, %v5165
      %v5178 = vand.u32 2147483647, %v5166
      %v5179 = vand.u32 2147483647, %v5167
      %v5180 = vand.u32 2147483647, %v5168
      %v5181 = vmul.f32 %v5177, 0.3275911
      %v5182 = vmul.f32 %v5178, 0.3275911
      %v5183 = vmul.f32 %v5179, 0.3275911
      %v5184 = vmul.f32 %v5180, 0.3275911
      %v5185 = vadd.f32 %v5181, 1.0
      %v5186 = vadd.f32 %v5182, 1.0
      %v5187 = vadd.f32 %v5183, 1.0
      %v5188 = vadd.f32 %v5184, 1.0
      %v5189 = vrcp.pop %v5185
      %v5190 = vmul.f32 1.0, %v5189
      %v5191 = vrcp.pop %v5186
      %v5192 = vmul.f32 1.0, %v5191
      %v5193 = vrcp.pop %v5187
      %v5194 = vmul.f32 1.0, %v5193
      %v5195 = vrcp.pop %v5188
      %v5196 = vmul.f32 1.0, %v5195
      %v5197 = vmul.f32 %v5190, 1.0614054
      %v5198 = vmul.f32 %v5192, 1.0614054
      %v5199 = vmul.f32 %v5194, 1.0614054
      %v5200 = vmul.f32 %v5196, 1.0614054
      %v5201 = vadd.f32 %v5197, -1.4531521
      %v5202 = vadd.f32 %v5198, -1.4531521
      %v5203 = vadd.f32 %v5199, -1.4531521
      %v5204 = vadd.f32 %v5200, -1.4531521
      %v5205 = vmul.f32 %v5201, %v5190
      %v5206 = vmul.f32 %v5202, %v5192
      %v5207 = vmul.f32 %v5203, %v5194
      %v5208 = vmul.f32 %v5204, %v5196
      %v5209 = vadd.f32 %v5205, 1.4214138
      %v5210 = vadd.f32 %v5206, 1.4214138
      %v5211 = vadd.f32 %v5207, 1.4214138
      %v5212 = vadd.f32 %v5208, 1.4214138
      %v5213 = vmul.f32 %v5209, %v5190
      %v5214 = vmul.f32 %v5210, %v5192
      %v5215 = vmul.f32 %v5211, %v5194
      %v5216 = vmul.f32 %v5212, %v5196
      %v5217 = vadd.f32 %v5213, -0.28449672
      %v5218 = vadd.f32 %v5214, -0.28449672
      %v5219 = vadd.f32 %v5215, -0.28449672
      %v5220 = vadd.f32 %v5216, -0.28449672
      %v5221 = vmul.f32 %v5217, %v5190
      %v5222 = vmul.f32 %v5218, %v5192
      %v5223 = vmul.f32 %v5219, %v5194
      %v5224 = vmul.f32 %v5220, %v5196
      %v5225 = vadd.f32 %v5221, 0.2548296
      %v5226 = vadd.f32 %v5222, 0.2548296
      %v5227 = vadd.f32 %v5223, 0.2548296
      %v5228 = vadd.f32 %v5224, 0.2548296
      %v5229 = vmul.f32 %v5225, %v5190
      %v5230 = vmul.f32 %v5226, %v5192
      %v5231 = vmul.f32 %v5227, %v5194
      %v5232 = vmul.f32 %v5228, %v5196
      %v5233 = vsub.f32 0.0, %v5177
      %v5234 = vsub.f32 0.0, %v5178
      %v5235 = vsub.f32 0.0, %v5179
      %v5236 = vsub.f32 0.0, %v5180
      %v5237 = vmul.f32 %v5233, %v5177
      %v5238 = vmul.f32 %v5234, %v5178
      %v5239 = vmul.f32 %v5235, %v5179
      %v5240 = vmul.f32 %v5236, %v5180
      %v5241 = vmul.f32 %v5237, 1.442695
      %v5242 = vpow.pop %v5241
      %v5243 = vmul.f32 %v5238, 1.442695
      %v5244 = vpow.pop %v5243
      %v5245 = vmul.f32 %v5239, 1.442695
      %v5246 = vpow.pop %v5245
      %v5247 = vmul.f32 %v5240, 1.442695
      %v5248 = vpow.pop %v5247
      %v5249 = vmul.f32 %v5229, %v5242
      %v5250 = vmul.f32 %v5230, %v5244
      %v5251 = vmul.f32 %v5231, %v5246
      %v5252 = vmul.f32 %v5232, %v5248
      %v5253 = vsub.f32 1.0, %v5249
      %v5254 = vsub.f32 1.0, %v5250
      %v5255 = vsub.f32 1.0, %v5251
      %v5256 = vsub.f32 1.0, %v5252
      %v5257 = vmul.f32 %v5173, %v5253
      %v5258 = vmul.f32 %v5174, %v5254
      %v5259 = vmul.f32 %v5175, %v5255
      %v5260 = vmul.f32 %v5176, %v5256
      %v5261 = vmul.f32 %v5161, 0.5
      %v5262 = vmul.f32 %v5162, 0.5
      %v5263 = vmul.f32 %v5163, 0.5
      %v5264 = vmul.f32 %v5164, 0.5
      %v5265 = vadd.f32 %v5257, 1.0
      %v5266 = vadd.f32 %v5258, 1.0
      %v5267 = vadd.f32 %v5259, 1.0
      %v5268 = vadd.f32 %v5260, 1.0
      %v5269 = vmul.f32 %v5261, %v5265
      %v5270 = vmul.f32 %v5262, %v5266
      %v5271 = vmul.f32 %v5263, %v5267
      %v5272 = vmul.f32 %v5264, %v5268
      %v5273 = vld [vmem:[%s45] sm:$0xff]
      %v5274 = vld [vmem:[%s45 + $0x8] sm:$0xff]
      %v5275 = vld [vmem:[%s45 + $0x10] sm:$0xff]
      %v5276 = vld [vmem:[%s45 + $0x18] sm:$0xff]
      %v5277 = vld [vmem:[%s47] sm:$0x1]
      %v5279 = vlaneseq
      %v5280 = vshrl.u32 %v5279, 7
      %v5281 = vsub.s32 0, %v5280
      %v5282 = vrot.slane %v5277, %v5281
      %v5285 = vsel %vm1324, %v5269, 0
      %v5288 = vsel %vm1324, %v5270, 0
      %v5291 = vsel %vm1324, %v5271, 0
      %v5294 = vsel %vm1324, %v5272, 0
      %5296 = vmatprep.subr.mxu0 0.0
      %5297 = vmatpush1.msra.mxu0 %v5273
      %5298 = vmatprep.subr.mxu0 0.0
      %5299 = vmatpush1.msra.mxu0 %v5274
      %5300 = vmatprep.subr.mxu0 0.0
      %5301 = vmatpush1.msra.mxu0 %v5275
      %5302 = vmatprep.subr.mxu0 0.0
      %5303 = vmatpush1.msra.mxu0 %v5276
      %5304 = vmatprep.subr.mxu0 0.0
      %5305 = vmatpush1.msra.mxu0 0.0
      %5306 = vmatprep.subr.mxu0 0.0
      %5307 = vmatpush1.msra.mxu0 0.0
      %5308 = vmatprep.subr.mxu0 0.0
      %5309 = vmatpush1.msra.mxu0 0.0
      %5310 = vmatprep.subr.mxu0 0.0
      %5311 = vmatpush1.msra.mxu0 0.0
      %5312 = vmatprep.subr.mxu0 0.0
      %5313 = vmatpush1.msra.mxu0 0.0
      %5314 = vmatprep.subr.mxu0 0.0
      %5315 = vmatpush1.msra.mxu0 0.0
      %5316 = vmatprep.subr.mxu0 0.0
      %5317 = vmatpush1.msra.mxu0 0.0
      %5318 = vmatprep.subr.mxu0 0.0
      %5319 = vmatpush1.msra.mxu0 0.0
      %5320 = vmatprep.subr.mxu0 0.0
      %5321 = vmatpush1.msra.mxu0 0.0
      %5322 = vmatprep.subr.mxu0 0.0
      %5323 = vmatpush1.msra.mxu0 0.0
      %5324 = vmatprep.subr.mxu0 0.0
      %5325 = vmatpush1.msra.mxu0 0.0
      %5326 = vmatprep.subr.mxu0 0.0
      %5327 = vmatpush1.msra.mxu0 0.0
      %5328 = vmatprep.subr.mxu0 0.0
      %5329 = vmatpush1.msra.mxu0 0.0
      %5330 = vmatprep.subr.mxu0 0.0
      %5331 = vmatpush1.msra.mxu0 0.0
      %5332 = vmatprep.subr.mxu0 0.0
      %5333 = vmatpush1.msra.mxu0 0.0
      %5334 = vmatprep.subr.mxu0 0.0
      %5335 = vmatpush1.msra.mxu0 0.0
      %5336 = vmatprep.subr.mxu0 0.0
      %5337 = vmatpush1.msra.mxu0 0.0
      %5338 = vmatprep.subr.mxu0 0.0
      %5339 = vmatpush1.msra.mxu0 0.0
      %5340 = vmatprep.subr.mxu0 0.0
      %5341 = vmatpush1.msra.mxu0 0.0
      %5342 = vmatprep.subr.mxu0 0.0
      %5343 = vmatpush1.msra.mxu0 0.0
      %5344 = vmatprep.subr.mxu0 0.0
      %5345 = vmatpush1.msra.mxu0 0.0
      %5346 = vmatprep.subr.mxu0 0.0
      %5347 = vmatpush1.msra.mxu0 0.0
      %5348 = vmatprep.subr.mxu0 0.0
      %5349 = vmatpush1.msra.mxu0 0.0
      %5350 = vmatprep.subr.mxu0 0.0
      %5351 = vmatpush1.msra.mxu0 0.0
      %5352 = vmatprep.subr.mxu0 0.0
      %5353 = vmatpush1.msra.mxu0 0.0
      %5354 = vmatprep.subr.mxu0 0.0
      %5355 = vmatpush1.msra.mxu0 0.0
      %5356 = vmatprep.subr.mxu0 0.0
      %5357 = vmatpush1.msra.mxu0 0.0
      %5358 = vmatprep.subr.mxu0 0.0
      %5359 = vmatpush1.msra.mxu0 0.0
      %5360 = vmatprep.mubr.f32.mxu0 0.0
      %5361 = vmatmul.mubr.f32.gmra.mrb[0].mxu0 %v5285
      %v5362 = vpop.f32.mrb[0].mxu0
      %v5363 = vadd.f32 %v5282, %v5362
      %v5364 = vpop.f32.mrb[0].mxu0
      %5365 = vmatprep.mubr.f32.mxu0 0.0
      %5366 = vmatmul.mubr.f32.gmra.mrb[0].mxu0 %v5288
      %v5367 = vpop.f32.mrb[0].mxu0
      %v5368 = vadd.f32 %v5282, %v5367
      %v5369 = vpop.f32.mrb[0].mxu0
      %5370 = vmatprep.mubr.f32.mxu0 0.0
      %5371 = vmatmul.mubr.f32.gmra.mrb[0].mxu0 %v5291
      %v5372 = vpop.f32.mrb[0].mxu0
      %v5373 = vadd.f32 %v5282, %v5372
      %v5374 = vpop.f32.mrb[0].mxu0
      %5375 = vmatprep.mubr.f32.mxu0 0.0
      %5376 = vmatmul.mubr.f32.gmra.mrb[0].mxu0 %v5294
      %v5377 = vpop.f32.mrb[0].mxu0
      %v5378 = vadd.f32 %v5282, %v5377
      %v5379 = vpop.f32.mrb[0].mxu0
      %5380 = vdwg.mxu0
      %v5381 = vmul.f32 %v5363, 0.70710677
      %v5382 = vmul.f32 %v5368, 0.70710677
      %v5383 = vmul.f32 %v5373, 0.70710677
      %v5384 = vmul.f32 %v5378, 0.70710677
      %vm5385 = vcmp.ge.f32.partialorder %v5381, 0.0
      %vm5386 = vcmp.ge.f32.partialorder %v5382, 0.0
      %vm5387 = vcmp.ge.f32.partialorder %v5383, 0.0
      %vm5388 = vcmp.ge.f32.partialorder %v5384, 0.0
      %v5389 = vsel %vm5385, 1.0, -1.0
      %v5390 = vsel %vm5386, 1.0, -1.0
      %v5391 = vsel %vm5387, 1.0, -1.0
      %v5392 = vsel %vm5388, 1.0, -1.0
      %v5393 = vand.u32 2147483647, %v5381
      %v5394 = vand.u32 2147483647, %v5382
      %v5395 = vand.u32 2147483647, %v5383
      %v5396 = vand.u32 2147483647, %v5384
      %v5397 = vmul.f32 %v5393, 0.3275911
      %v5398 = vmul.f32 %v5394, 0.3275911
      %v5399 = vmul.f32 %v5395, 0.3275911
      %v5400 = vmul.f32 %v5396, 0.3275911
      %v5401 = vadd.f32 %v5397, 1.0
      %v5402 = vadd.f32 %v5398, 1.0
      %v5403 = vadd.f32 %v5399, 1.0
      %v5404 = vadd.f32 %v5400, 1.0
      %v5405 = vrcp.pop %v5401
      %v5406 = vmul.f32 1.0, %v5405
      %v5407 = vrcp.pop %v5402
      %v5408 = vmul.f32 1.0, %v5407
      %v5409 = vrcp.pop %v5403
      %v5410 = vmul.f32 1.0, %v5409
      %v5411 = vrcp.pop %v5404
      %v5412 = vmul.f32 1.0, %v5411
      %v5413 = vmul.f32 %v5406, 1.0614054
      %v5414 = vmul.f32 %v5408, 1.0614054
      %v5415 = vmul.f32 %v5410, 1.0614054
      %v5416 = vmul.f32 %v5412, 1.0614054
      %v5417 = vadd.f32 %v5413, -1.4531521
      %v5418 = vadd.f32 %v5414, -1.4531521
      %v5419 = vadd.f32 %v5415, -1.4531521
      %v5420 = vadd.f32 %v5416, -1.4531521
      %v5421 = vmul.f32 %v5417, %v5406
      %v5422 = vmul.f32 %v5418, %v5408
      %v5423 = vmul.f32 %v5419, %v5410
      %v5424 = vmul.f32 %v5420, %v5412
      %v5425 = vadd.f32 %v5421, 1.4214138
      %v5426 = vadd.f32 %v5422, 1.4214138
      %v5427 = vadd.f32 %v5423, 1.4214138
      %v5428 = vadd.f32 %v5424, 1.4214138
      %v5429 = vmul.f32 %v5425, %v5406
      %v5430 = vmul.f32 %v5426, %v5408
      %v5431 = vmul.f32 %v5427, %v5410
      %v5432 = vmul.f32 %v5428, %v5412
      %v5433 = vadd.f32 %v5429, -0.28449672
      %v5434 = vadd.f32 %v5430, -0.28449672
      %v5435 = vadd.f32 %v5431, -0.28449672
      %v5436 = vadd.f32 %v5432, -0.28449672
      %v5437 = vmul.f32 %v5433, %v5406
      %v5438 = vmul.f32 %v5434, %v5408
      %v5439 = vmul.f32 %v5435, %v5410
      %v5440 = vmul.f32 %v5436, %v5412
      %v5441 = vadd.f32 %v5437, 0.2548296
      %v5442 = vadd.f32 %v5438, 0.2548296
      %v5443 = vadd.f32 %v5439, 0.2548296
      %v5444 = vadd.f32 %v5440, 0.2548296
      %v5445 = vmul.f32 %v5441, %v5406
      %v5446 = vmul.f32 %v5442, %v5408
      %v5447 = vmul.f32 %v5443, %v5410
      %v5448 = vmul.f32 %v5444, %v5412
      %v5449 = vsub.f32 0.0, %v5393
      %v5450 = vsub.f32 0.0, %v5394
      %v5451 = vsub.f32 0.0, %v5395
      %v5452 = vsub.f32 0.0, %v5396
      %v5453 = vmul.f32 %v5449, %v5393
      %v5454 = vmul.f32 %v5450, %v5394
      %v5455 = vmul.f32 %v5451, %v5395
      %v5456 = vmul.f32 %v5452, %v5396
      %v5457 = vmul.f32 %v5453, 1.442695
      %v5458 = vpow.pop %v5457
      %v5459 = vmul.f32 %v5454, 1.442695
      %v5460 = vpow.pop %v5459
      %v5461 = vmul.f32 %v5455, 1.442695
      %v5462 = vpow.pop %v5461
      %v5463 = vmul.f32 %v5456, 1.442695
      %v5464 = vpow.pop %v5463
      %v5465 = vmul.f32 %v5445, %v5458
      %v5466 = vmul.f32 %v5446, %v5460
      %v5467 = vmul.f32 %v5447, %v5462
      %v5468 = vmul.f32 %v5448, %v5464
      %v5469 = vsub.f32 1.0, %v5465
      %v5470 = vsub.f32 1.0, %v5466
      %v5471 = vsub.f32 1.0, %v5467
      %v5472 = vsub.f32 1.0, %v5468
      %v5473 = vmul.f32 %v5389, %v5469
      %v5474 = vmul.f32 %v5390, %v5470
      %v5475 = vmul.f32 %v5391, %v5471
      %v5476 = vmul.f32 %v5392, %v5472
      %v5477 = vmul.f32 %v5363, 0.5
      %v5478 = vmul.f32 %v5368, 0.5
      %v5479 = vmul.f32 %v5373, 0.5
      %v5480 = vmul.f32 %v5378, 0.5
      %v5481 = vadd.f32 %v5473, 1.0
      %v5482 = vadd.f32 %v5474, 1.0
      %v5483 = vadd.f32 %v5475, 1.0
      %v5484 = vadd.f32 %v5476, 1.0
      %v5485 = vmul.f32 %v5477, %v5481
      %v5486 = vmul.f32 %v5478, %v5482
      %v5487 = vmul.f32 %v5479, %v5483
      %v5488 = vmul.f32 %v5480, %v5484
      %v5489 = vld [vmem:[%s49] sm:$0xff]
      %v5490 = vld [vmem:[%s49 + $0x8] sm:$0xff]
      %v5491 = vld [vmem:[%s49 + $0x10] sm:$0xff]
      %v5492 = vld [vmem:[%s49 + $0x18] sm:$0xff]
      %v5493 = vld [vmem:[%s51] sm:$0xff]
      %v5494 = vld [vmem:[%s51 + $0x8] sm:$0xff]
      %v5495 = vld [vmem:[%s51 + $0x10] sm:$0xff]
      %v5496 = vld [vmem:[%s51 + $0x18] sm:$0xff]
      %5498 = vset.pattern.permute.xlu0 0
      %5499 = vperm.xlu0 %5498, %v5493
      %v5500 = vpop.permute.xlu0 %5499
      %5503 = vset.pattern.permute.xlu0 0
      %5504 = vperm.xlu0 %5503, %v5494
      %v5505 = vpop.permute.xlu0 %5504
      %5508 = vset.pattern.permute.xlu0 0
      %5509 = vperm.xlu0 %5508, %v5495
      %v5510 = vpop.permute.xlu0 %5509
      %5513 = vset.pattern.permute.xlu0 0
      %5514 = vperm.xlu0 %5513, %v5496
      %v5515 = vpop.permute.xlu0 %5514
      %v5518 = vsel %vm1324, %v5489, 0
      %v5521 = vsel %vm1324, %v5490, 0
      %v5524 = vsel %vm1324, %v5491, 0
      %v5527 = vsel %vm1324, %v5492, 0
      %v5530 = vsel %vm1324, %v5485, 0
      %v5533 = vsel %vm1324, %v5486, 0
      %v5536 = vsel %vm1324, %v5487, 0
      %v5539 = vsel %vm1324, %v5488, 0
      %5541 = vmatprep.subr.mxu0 0.0
      %5542 = vmatpush1.xpose.msra.mxu0 %v5530
      %5543 = vmatprep.subr.mxu0 0.0
      %5544 = vmatpush1.xpose.msra.mxu0 %v5533
      %5545 = vmatprep.subr.mxu0 0.0
      %5546 = vmatpush1.xpose.msra.mxu0 %v5536
      %5547 = vmatprep.subr.mxu0 0.0
      %5548 = vmatpush1.xpose.msra.mxu0 %v5539
      %5549 = vmatprep.subr.mxu0 0.0
      %5550 = vmatpush1.xpose.msra.mxu0 0.0
      %5551 = vmatprep.subr.mxu0 0.0
      %5552 = vmatpush1.xpose.msra.mxu0 0.0
      %5553 = vmatprep.subr.mxu0 0.0
      %5554 = vmatpush1.xpose.msra.mxu0 0.0
      %5555 = vmatprep.subr.mxu0 0.0
      %5556 = vmatpush1.xpose.msra.mxu0 0.0
      %5557 = vmatprep.subr.mxu0 0.0
      %5558 = vmatpush1.xpose.msra.mxu0 0.0
      %5559 = vmatprep.subr.mxu0 0.0
      %5560 = vmatpush1.xpose.msra.mxu0 0.0
      %5561 = vmatprep.subr.mxu0 0.0
      %5562 = vmatpush1.xpose.msra.mxu0 0.0
      %5563 = vmatprep.subr.mxu0 0.0
      %5564 = vmatpush1.xpose.msra.mxu0 0.0
      %5565 = vmatprep.subr.mxu0 0.0
      %5566 = vmatpush1.xpose.msra.mxu0 0.0
      %5567 = vmatprep.subr.mxu0 0.0
      %5568 = vmatpush1.xpose.msra.mxu0 0.0
      %5569 = vmatprep.subr.mxu0 0.0
      %5570 = vmatpush1.xpose.msra.mxu0 0.0
      %5571 = vmatprep.subr.mxu0 0.0
      %5572 = vmatpush1.xpose.msra.mxu0 0.0
      %5573 = vmatprep.subr.mxu0 0.0
      %5574 = vmatpush1.xpose.msra.mxu0 0.0
      %5575 = vmatprep.subr.mxu0 0.0
      %5576 = vmatpush1.xpose.msra.mxu0 0.0
      %5577 = vmatprep.subr.mxu0 0.0
      %5578 = vmatpush1.xpose.msra.mxu0 0.0
      %5579 = vmatprep.subr.mxu0 0.0
      %5580 = vmatpush1.xpose.msra.mxu0 0.0
      %5581 = vmatprep.subr.mxu0 0.0
      %5582 = vmatpush1.xpose.msra.mxu0 0.0
      %5583 = vmatprep.subr.mxu0 0.0
      %5584 = vmatpush1.xpose.msra.mxu0 0.0
      %5585 = vmatprep.subr.mxu0 0.0
      %5586 = vmatpush1.xpose.msra.mxu0 0.0
      %5587 = vmatprep.subr.mxu0 0.0
      %5588 = vmatpush1.xpose.msra.mxu0 0.0
      %5589 = vmatprep.subr.mxu0 0.0
      %5590 = vmatpush1.xpose.msra.mxu0 0.0
      %5591 = vmatprep.subr.mxu0 0.0
      %5592 = vmatpush1.xpose.msra.mxu0 0.0
      %5593 = vmatprep.subr.mxu0 0.0
      %5594 = vmatpush1.xpose.msra.mxu0 0.0
      %5595 = vmatprep.subr.mxu0 0.0
      %5596 = vmatpush1.xpose.msra.mxu0 0.0
      %5597 = vmatprep.subr.mxu0 0.0
      %5598 = vmatpush1.xpose.msra.mxu0 0.0
      %5599 = vmatprep.subr.mxu0 0.0
      %5600 = vmatpush1.xpose.msra.mxu0 0.0
      %5601 = vmatprep.subr.mxu0 0.0
      %5602 = vmatpush1.xpose.msra.mxu0 0.0
      %5603 = vmatprep.subr.mxu0 0.0
      %5604 = vmatpush1.xpose.msra.mxu0 0.0
      %5605 = vmatprep.mubr.f32.mxu0 0.0
      %5606 = vmatmul.mubr.f32.gmra.mrb[0].mxu0 %v5518
      %v5607 = vpop.f32.mrb[0].mxu0
      %v5608 = vadd.f32 %v5500, %v5607
      %v5609 = vpop.f32.mrb[0].mxu0
      %5610 = vmatprep.mubr.f32.mxu0 0.0
      %5611 = vmatmul.mubr.f32.gmra.mrb[0].mxu0 %v5521
      %v5612 = vpop.f32.mrb[0].mxu0
      %v5613 = vadd.f32 %v5505, %v5612
      %v5614 = vpop.f32.mrb[0].mxu0
      %5615 = vmatprep.mubr.f32.mxu0 0.0
      %5616 = vmatmul.mubr.f32.gmra.mrb[0].mxu0 %v5524
      %v5617 = vpop.f32.mrb[0].mxu0
      %v5618 = vadd.f32 %v5510, %v5617
      %v5619 = vpop.f32.mrb[0].mxu0
      %5620 = vmatprep.mubr.f32.mxu0 0.0
      %5621 = vmatmul.mubr.f32.gmra.mrb[0].mxu0 %v5527
      %v5622 = vpop.f32.mrb[0].mxu0
      %v5623 = vadd.f32 %v5515, %v5622
      %v5624 = vpop.f32.mrb[0].mxu0
      %5625 = vdwg.mxu0
      %v5626 = vadd.f32 %v3255, %v5608
      %v5627 = vadd.f32 %v3256, %v5613
      %v5628 = vadd.f32 %v3257, %v5618
      %v5629 = vadd.f32 %v3258, %v5623
      %s5630 = scalar_lea.vmem %s29, 32
      %v5631 = vld [vmem:[%s5630] sm:$0xff]
      %v5632 = vld [vmem:[%s5630 + $0x8] sm:$0xff]
      %v5633 = vld [vmem:[%s5630 + $0x10] sm:$0xff]
      %v5634 = vld [vmem:[%s5630 + $0x18] sm:$0xff]
      %5635 = vmatprep.subr.mxu0 0.0
      %5636 = vmatpush1.msra.mxu0 %v5631
      %5637 = vmatprep.subr.mxu0 0.0
      %5638 = vmatpush1.msra.mxu0 %v5632
      %5639 = vmatprep.subr.mxu0 0.0
      %5640 = vmatpush1.msra.mxu0 %v5633
      %5641 = vmatprep.subr.mxu0 0.0
      %5642 = vmatpush1.msra.mxu0 %v5634
      %5643 = vmatprep.subr.mxu0 0.0
      %5644 = vmatpush1.msra.mxu0 0.0
      %5645 = vmatprep.subr.mxu0 0.0
      %5646 = vmatpush1.msra.mxu0 0.0
      %5647 = vmatprep.subr.mxu0 0.0
      %5648 = vmatpush1.msra.mxu0 0.0
      %5649 = vmatprep.subr.mxu0 0.0
      %5650 = vmatpush1.msra.mxu0 0.0
      %5651 = vmatprep.subr.mxu0 0.0
      %5652 = vmatpush1.msra.mxu0 0.0
      %5653 = vmatprep.subr.mxu0 0.0
      %5654 = vmatpush1.msra.mxu0 0.0
      %5655 = vmatprep.subr.mxu0 0.0
      %5656 = vmatpush1.msra.mxu0 0.0
      %5657 = vmatprep.subr.mxu0 0.0
      %5658 = vmatpush1.msra.mxu0 0.0
      %5659 = vmatprep.subr.mxu0 0.0
      %5660 = vmatpush1.msra.mxu0 0.0
      %5661 = vmatprep.subr.mxu0 0.0
      %5662 = vmatpush1.msra.mxu0 0.0
      %5663 = vmatprep.subr.mxu0 0.0
      %5664 = vmatpush1.msra.mxu0 0.0
      %5665 = vmatprep.subr.mxu0 0.0
      %5666 = vmatpush1.msra.mxu0 0.0
      %5667 = vmatprep.subr.mxu0 0.0
      %5668 = vmatpush1.msra.mxu0 0.0
      %5669 = vmatprep.subr.mxu0 0.0
      %5670 = vmatpush1.msra.mxu0 0.0
      %5671 = vmatprep.subr.mxu0 0.0
      %5672 = vmatpush1.msra.mxu0 0.0
      %5673 = vmatprep.subr.mxu0 0.0
      %5674 = vmatpush1.msra.mxu0 0.0
      %5675 = vmatprep.subr.mxu0 0.0
      %5676 = vmatpush1.msra.mxu0 0.0
      %5677 = vmatprep.subr.mxu0 0.0
      %5678 = vmatpush1.msra.mxu0 0.0
      %5679 = vmatprep.subr.mxu0 0.0
      %5680 = vmatpush1.msra.mxu0 0.0
      %5681 = vmatprep.subr.mxu0 0.0
      %5682 = vmatpush1.msra.mxu0 0.0
      %5683 = vmatprep.subr.mxu0 0.0
      %5684 = vmatpush1.msra.mxu0 0.0
      %5685 = vmatprep.subr.mxu0 0.0
      %5686 = vmatpush1.msra.mxu0 0.0
      %5687 = vmatprep.subr.mxu0 0.0
      %5688 = vmatpush1.msra.mxu0 0.0
      %5689 = vmatprep.subr.mxu0 0.0
      %5690 = vmatpush1.msra.mxu0 0.0
      %5691 = vmatprep.subr.mxu0 0.0
      %5692 = vmatpush1.msra.mxu0 0.0
      %5693 = vmatprep.subr.mxu0 0.0
      %5694 = vmatpush1.msra.mxu0 0.0
      %5695 = vmatprep.subr.mxu0 0.0
      %5696 = vmatpush1.msra.mxu0 0.0
      %5697 = vmatprep.subr.mxu0 0.0
      %5698 = vmatpush1.msra.mxu0 0.0
      %5699 = vmatprep.mubr.f32.mxu0 0.0
      %5700 = vmatmul.mubr.f32.gmra.mrb[0].mxu0 %v3264
      %v5701 = vpop.f32.mrb[0].mxu0
      %v5702 = vadd.f32 0.0, %v5701
      %v5703 = vpop.f32.mrb[0].mxu0
      %5704 = vmatprep.mubr.f32.mxu0 0.0
      %5705 = vmatmul.mubr.f32.gmra.mrb[0].mxu0 %v3267
      %v5706 = vpop.f32.mrb[0].mxu0
      %v5707 = vadd.f32 0.0, %v5706
      %v5708 = vpop.f32.mrb[0].mxu0
      %5709 = vmatprep.mubr.f32.mxu0 0.0
      %5710 = vmatmul.mubr.f32.gmra.mrb[0].mxu0 %v3270
      %v5711 = vpop.f32.mrb[0].mxu0
      %v5712 = vadd.f32 0.0, %v5711
      %v5713 = vpop.f32.mrb[0].mxu0
      %5714 = vmatprep.mubr.f32.mxu0 0.0
      %5715 = vmatmul.mubr.f32.gmra.mrb[0].mxu0 %v3273
      %v5716 = vpop.f32.mrb[0].mxu0
      %v5717 = vadd.f32 0.0, %v5716
      %v5718 = vpop.f32.mrb[0].mxu0
      %5719 = vdwg.mxu0
      %s5720 = scalar_lea.vmem %s31, 32
      %v5721 = vld [vmem:[%s5720] sm:$0xff]
      %v5722 = vld [vmem:[%s5720 + $0x8] sm:$0xff]
      %v5723 = vld [vmem:[%s5720 + $0x10] sm:$0xff]
      %v5724 = vld [vmem:[%s5720 + $0x18] sm:$0xff]
      %5725 = vmatprep.subr.mxu0 0.0
      %5726 = vmatpush1.msra.mxu0 %v5721
      %5727 = vmatprep.subr.mxu0 0.0
      %5728 = vmatpush1.msra.mxu0 %v5722
      %5729 = vmatprep.subr.mxu0 0.0
      %5730 = vmatpush1.msra.mxu0 %v5723
      %5731 = vmatprep.subr.mxu0 0.0
      %5732 = vmatpush1.msra.mxu0 %v5724
      %5733 = vmatprep.subr.mxu0 0.0
      %5734 = vmatpush1.msra.mxu0 0.0
      %5735 = vmatprep.subr.mxu0 0.0
      %5736 = vmatpush1.msra.mxu0 0.0
      %5737 = vmatprep.subr.mxu0 0.0
      %5738 = vmatpush1.msra.mxu0 0.0
      %5739 = vmatprep.subr.mxu0 0.0
      %5740 = vmatpush1.msra.mxu0 0.0
      %5741 = vmatprep.subr.mxu0 0.0
      %5742 = vmatpush1.msra.mxu0 0.0
      %5743 = vmatprep.subr.mxu0 0.0
      %5744 = vmatpush1.msra.mxu0 0.0
      %5745 = vmatprep.subr.mxu0 0.0
      %5746 = vmatpush1.msra.mxu0 0.0
      %5747 = vmatprep.subr.mxu0 0.0
      %5748 = vmatpush1.msra.mxu0 0.0
      %5749 = vmatprep.subr.mxu0 0.0
      %5750 = vmatpush1.msra.mxu0 0.0
      %5751 = vmatprep.subr.mxu0 0.0
      %5752 = vmatpush1.msra.mxu0 0.0
      %5753 = vmatprep.subr.mxu0 0.0
      %5754 = vmatpush1.msra.mxu0 0.0
      %5755 = vmatprep.subr.mxu0 0.0
      %5756 = vmatpush1.msra.mxu0 0.0
      %5757 = vmatprep.subr.mxu0 0.0
      %5758 = vmatpush1.msra.mxu0 0.0
      %5759 = vmatprep.subr.mxu0 0.0
      %5760 = vmatpush1.msra.mxu0 0.0
      %5761 = vmatprep.subr.mxu0 0.0
      %5762 = vmatpush1.msra.mxu0 0.0
      %5763 = vmatprep.subr.mxu0 0.0
      %5764 = vmatpush1.msra.mxu0 0.0
      %5765 = vmatprep.subr.mxu0 0.0
      %5766 = vmatpush1.msra.mxu0 0.0
      %5767 = vmatprep.subr.mxu0 0.0
      %5768 = vmatpush1.msra.mxu0 0.0
      %5769 = vmatprep.subr.mxu0 0.0
      %5770 = vmatpush1.msra.mxu0 0.0
      %5771 = vmatprep.subr.mxu0 0.0
      %5772 = vmatpush1.msra.mxu0 0.0
      %5773 = vmatprep.subr.mxu0 0.0
      %5774 = vmatpush1.msra.mxu0 0.0
      %5775 = vmatprep.subr.mxu0 0.0
      %5776 = vmatpush1.msra.mxu0 0.0
      %5777 = vmatprep.subr.mxu0 0.0
      %5778 = vmatpush1.msra.mxu0 0.0
      %5779 = vmatprep.subr.mxu0 0.0
      %5780 = vmatpush1.msra.mxu0 0.0
      %5781 = vmatprep.subr.mxu0 0.0
      %5782 = vmatpush1.msra.mxu0 0.0
      %5783 = vmatprep.subr.mxu0 0.0
      %5784 = vmatpush1.msra.mxu0 0.0
      %5785 = vmatprep.subr.mxu0 0.0
      %5786 = vmatpush1.msra.mxu0 0.0
      %5787 = vmatprep.subr.mxu0 0.0
      %5788 = vmatpush1.msra.mxu0 0.0
      %5789 = vmatprep.mubr.f32.mxu0 0.0
      %5790 = vmatmul.mubr.f32.gmra.mrb[0].mxu0 %v3264
      %v5791 = vpop.f32.mrb[0].mxu0
      %v5792 = vadd.f32 0.0, %v5791
      %v5793 = vpop.f32.mrb[0].mxu0
      %5794 = vmatprep.mubr.f32.mxu0 0.0
      %5795 = vmatmul.mubr.f32.gmra.mrb[0].mxu0 %v3267
      %v5796 = vpop.f32.mrb[0].mxu0
      %v5797 = vadd.f32 0.0, %v5796
      %v5798 = vpop.f32.mrb[0].mxu0
      %5799 = vmatprep.mubr.f32.mxu0 0.0
      %5800 = vmatmul.mubr.f32.gmra.mrb[0].mxu0 %v3270
      %v5801 = vpop.f32.mrb[0].mxu0
      %v5802 = vadd.f32 0.0, %v5801
      %v5803 = vpop.f32.mrb[0].mxu0
      %5804 = vmatprep.mubr.f32.mxu0 0.0
      %5805 = vmatmul.mubr.f32.gmra.mrb[0].mxu0 %v3273
      %v5806 = vpop.f32.mrb[0].mxu0
      %v5807 = vadd.f32 0.0, %v5806
      %v5808 = vpop.f32.mrb[0].mxu0
      %5809 = vdwg.mxu0
      %v5811 = vsel %vm1324, %v5626, 0
      %v5814 = vsel %vm1324, %v5627, 0
      %v5817 = vsel %vm1324, %v5628, 0
      %v5820 = vsel %vm1324, %v5629, 0
      %5822 = vmatprep.subr.mxu0 0.0
      %5823 = vmatpush1.msra.mxu0 %v5721
      %5824 = vmatprep.subr.mxu0 0.0
      %5825 = vmatpush1.msra.mxu0 %v5722
      %5826 = vmatprep.subr.mxu0 0.0
      %5827 = vmatpush1.msra.mxu0 %v5723
      %5828 = vmatprep.subr.mxu0 0.0
      %5829 = vmatpush1.msra.mxu0 %v5724
      %5830 = vmatprep.subr.mxu0 0.0
      %5831 = vmatpush1.msra.mxu0 0.0
      %5832 = vmatprep.subr.mxu0 0.0
      %5833 = vmatpush1.msra.mxu0 0.0
      %5834 = vmatprep.subr.mxu0 0.0
      %5835 = vmatpush1.msra.mxu0 0.0
      %5836 = vmatprep.subr.mxu0 0.0
      %5837 = vmatpush1.msra.mxu0 0.0
      %5838 = vmatprep.subr.mxu0 0.0
      %5839 = vmatpush1.msra.mxu0 0.0
      %5840 = vmatprep.subr.mxu0 0.0
      %5841 = vmatpush1.msra.mxu0 0.0
      %5842 = vmatprep.subr.mxu0 0.0
      %5843 = vmatpush1.msra.mxu0 0.0
      %5844 = vmatprep.subr.mxu0 0.0
      %5845 = vmatpush1.msra.mxu0 0.0
      %5846 = vmatprep.subr.mxu0 0.0
      %5847 = vmatpush1.msra.mxu0 0.0
      %5848 = vmatprep.subr.mxu0 0.0
      %5849 = vmatpush1.msra.mxu0 0.0
      %5850 = vmatprep.subr.mxu0 0.0
      %5851 = vmatpush1.msra.mxu0 0.0
      %5852 = vmatprep.subr.mxu0 0.0
      %5853 = vmatpush1.msra.mxu0 0.0
      %5854 = vmatprep.subr.mxu0 0.0
      %5855 = vmatpush1.msra.mxu0 0.0
      %5856 = vmatprep.subr.mxu0 0.0
      %5857 = vmatpush1.msra.mxu0 0.0
      %5858 = vmatprep.subr.mxu0 0.0
      %5859 = vmatpush1.msra.mxu0 0.0
      %5860 = vmatprep.subr.mxu0 0.0
      %5861 = vmatpush1.msra.mxu0 0.0
      %5862 = vmatprep.subr.mxu0 0.0
      %5863 = vmatpush1.msra.mxu0 0.0
      %5864 = vmatprep.subr.mxu0 0.0
      %5865 = vmatpush1.msra.mxu0 0.0
      %5866 = vmatprep.subr.mxu0 0.0
      %5867 = vmatpush1.msra.mxu0 0.0
      %5868 = vmatprep.subr.mxu0 0.0
      %5869 = vmatpush1.msra.mxu0 0.0
      %5870 = vmatprep.subr.mxu0 0.0
      %5871 = vmatpush1.msra.mxu0 0.0
      %5872 = vmatprep.subr.mxu0 0.0
      %5873 = vmatpush1.msra.mxu0 0.0
      %5874 = vmatprep.subr.mxu0 0.0
      %5875 = vmatpush1.msra.mxu0 0.0
      %5876 = vmatprep.subr.mxu0 0.0
      %5877 = vmatpush1.msra.mxu0 0.0
      %5878 = vmatprep.subr.mxu0 0.0
      %5879 = vmatpush1.msra.mxu0 0.0
      %5880 = vmatprep.subr.mxu0 0.0
      %5881 = vmatpush1.msra.mxu0 0.0
      %5882 = vmatprep.subr.mxu0 0.0
      %5883 = vmatpush1.msra.mxu0 0.0
      %5884 = vmatprep.subr.mxu0 0.0
      %5885 = vmatpush1.msra.mxu0 0.0
      %5886 = vmatprep.mubr.f32.mxu0 0.0
      %5887 = vmatmul.mubr.f32.gmra.mrb[0].mxu0 %v5811
      %v5888 = vpop.f32.mrb[0].mxu0
      %v5889 = vadd.f32 0.0, %v5888
      %v5890 = vpop.f32.mrb[0].mxu0
      %5891 = vmatprep.mubr.f32.mxu0 0.0
      %5892 = vmatmul.mubr.f32.gmra.mrb[0].mxu0 %v5814
      %v5893 = vpop.f32.mrb[0].mxu0
      %v5894 = vadd.f32 0.0, %v5893
      %v5895 = vpop.f32.mrb[0].mxu0
      %5896 = vmatprep.mubr.f32.mxu0 0.0
      %5897 = vmatmul.mubr.f32.gmra.mrb[0].mxu0 %v5817
      %v5898 = vpop.f32.mrb[0].mxu0
      %v5899 = vadd.f32 0.0, %v5898
      %v5900 = vpop.f32.mrb[0].mxu0
      %5901 = vmatprep.mubr.f32.mxu0 0.0
      %5902 = vmatmul.mubr.f32.gmra.mrb[0].mxu0 %v5820
      %v5903 = vpop.f32.mrb[0].mxu0
      %v5904 = vadd.f32 0.0, %v5903
      %v5905 = vpop.f32.mrb[0].mxu0
      %5906 = vdwg.mxu0
      %s5907 = scalar_lea.vmem %s33, 128
      %v5908 = vld [vmem:[%s5907] sm:$0xff]
      %v5909 = vld [vmem:[%s5907 + $0x8] sm:$0xff]
      %v5910 = vld [vmem:[%s5907 + $0x10] sm:$0xff]
      %v5911 = vld [vmem:[%s5907 + $0x18] sm:$0xff]
      %v5912 = vld [vmem:[%s5907 + $0x20] sm:$0xff]
      %v5913 = vld [vmem:[%s5907 + $0x28] sm:$0xff]
      %v5914 = vld [vmem:[%s5907 + $0x30] sm:$0xff]
      %v5915 = vld [vmem:[%s5907 + $0x38] sm:$0xff]
      %v5916 = vld [vmem:[%s5907 + $0x40] sm:$0xff]
      %v5917 = vld [vmem:[%s5907 + $0x48] sm:$0xff]
      %v5918 = vld [vmem:[%s5907 + $0x50] sm:$0xff]
      %v5919 = vld [vmem:[%s5907 + $0x58] sm:$0xff]
      %v5920 = vld [vmem:[%s5907 + $0x60] sm:$0xff]
      %v5921 = vld [vmem:[%s5907 + $0x68] sm:$0xff]
      %v5922 = vld [vmem:[%s5907 + $0x70] sm:$0xff]
      %v5923 = vld [vmem:[%s5907 + $0x78] sm:$0xff]
      %5924 = vxpose.xlu0.b32.start [1/16] %v5792, 128
      %5925 = vxpose.xlu0.b32.cont [2/16] %v5797, 128
      %5926 = vxpose.xlu0.b32.cont [3/16] %v5802, 128
      %5927 = vxpose.xlu0.b32.cont [4/16] %v5807, 128
      %5928 = vxpose.xlu0.b32.cont [5/16] 0.0, 128
      %5929 = vxpose.xlu0.b32.cont [6/16] 0.0, 128
      %5930 = vxpose.xlu0.b32.cont [7/16] 0.0, 128
      %5931 = vxpose.xlu0.b32.cont [8/16] 0.0, 128
      %5932 = vxpose.xlu0.b32.cont [9/16] 0.0, 128
      %5933 = vxpose.xlu0.b32.cont [10/16] 0.0, 128
      %5934 = vxpose.xlu0.b32.cont [11/16] 0.0, 128
      %5935 = vxpose.xlu0.b32.cont [12/16] 0.0, 128
      %5936 = vxpose.xlu0.b32.cont [13/16] 0.0, 128
      %5937 = vxpose.xlu0.b32.cont [14/16] 0.0, 128
      %5938 = vxpose.xlu0.b32.cont [15/16] 0.0, 128
      %5939 = vxpose.xlu0.b32.end [16/16] 0.0, 128
      %v5940 = vpop.trf.xlu0
      %v5941 = vpop.trf.xlu0
      %v5942 = vpop.trf.xlu0
      %v5943 = vpop.trf.xlu0
      %v5944 = vpop.trf.xlu0
      %v5945 = vpop.trf.xlu0
      %v5946 = vpop.trf.xlu0
      %v5947 = vpop.trf.xlu0
      %v5948 = vpop.trf.xlu0
      %v5949 = vpop.trf.xlu0
      %v5950 = vpop.trf.xlu0
      %v5951 = vpop.trf.xlu0
      %v5952 = vpop.trf.xlu0
      %v5953 = vpop.trf.xlu0
      %v5954 = vpop.trf.xlu0
      %v5955 = vpop.trf.xlu0
      %v5957 = vsel %vm1324, %v5940, 0
      %v5960 = vsel %vm1324, %v5941, 0
      %v5963 = vsel %vm1324, %v5942, 0
      %v5966 = vsel %vm1324, %v5943, 0
      %5968 = vmatprep.subr.mxu0 0.0
      %5969 = vmatpush1.msra.mxu0 %v5889
      %5970 = vmatprep.subr.mxu0 0.0
      %5971 = vmatpush1.msra.mxu0 %v5894
      %5972 = vmatprep.subr.mxu0 0.0
      %5973 = vmatpush1.msra.mxu0 %v5899
      %5974 = vmatprep.subr.mxu0 0.0
      %5975 = vmatpush1.msra.mxu0 %v5904
      %5976 = vmatprep.subr.mxu0 0.0
      %5977 = vmatpush1.msra.mxu0 0.0
      %5978 = vmatprep.subr.mxu0 0.0
      %5979 = vmatpush1.msra.mxu0 0.0
      %5980 = vmatprep.subr.mxu0 0.0
      %5981 = vmatpush1.msra.mxu0 0.0
      %5982 = vmatprep.subr.mxu0 0.0
      %5983 = vmatpush1.msra.mxu0 0.0
      %5984 = vmatprep.subr.mxu0 0.0
      %5985 = vmatpush1.msra.mxu0 0.0
      %5986 = vmatprep.subr.mxu0 0.0
      %5987 = vmatpush1.msra.mxu0 0.0
      %5988 = vmatprep.subr.mxu0 0.0
      %5989 = vmatpush1.msra.mxu0 0.0
      %5990 = vmatprep.subr.mxu0 0.0
      %5991 = vmatpush1.msra.mxu0 0.0
      %5992 = vmatprep.subr.mxu0 0.0
      %5993 = vmatpush1.msra.mxu0 0.0
      %5994 = vmatprep.subr.mxu0 0.0
      %5995 = vmatpush1.msra.mxu0 0.0
      %5996 = vmatprep.subr.mxu0 0.0
      %5997 = vmatpush1.msra.mxu0 0.0
      %5998 = vmatprep.subr.mxu0 0.0
      %5999 = vmatpush1.msra.mxu0 0.0
      %6000 = vmatprep.subr.mxu0 0.0
      %6001 = vmatpush1.msra.mxu0 0.0
      %6002 = vmatprep.subr.mxu0 0.0
      %6003 = vmatpush1.msra.mxu0 0.0
      %6004 = vmatprep.subr.mxu0 0.0
      %6005 = vmatpush1.msra.mxu0 0.0
      %6006 = vmatprep.subr.mxu0 0.0
      %6007 = vmatpush1.msra.mxu0 0.0
      %6008 = vmatprep.subr.mxu0 0.0
      %6009 = vmatpush1.msra.mxu0 0.0
      %6010 = vmatprep.subr.mxu0 0.0
      %6011 = vmatpush1.msra.mxu0 0.0
      %6012 = vmatprep.subr.mxu0 0.0
      %6013 = vmatpush1.msra.mxu0 0.0
      %6014 = vmatprep.subr.mxu0 0.0
      %6015 = vmatpush1.msra.mxu0 0.0
      %6016 = vmatprep.subr.mxu0 0.0
      %6017 = vmatpush1.msra.mxu0 0.0
      %6018 = vmatprep.subr.mxu0 0.0
      %6019 = vmatpush1.msra.mxu0 0.0
      %6020 = vmatprep.subr.mxu0 0.0
      %6021 = vmatpush1.msra.mxu0 0.0
      %6022 = vmatprep.subr.mxu0 0.0
      %6023 = vmatpush1.msra.mxu0 0.0
      %6024 = vmatprep.subr.mxu0 0.0
      %6025 = vmatpush1.msra.mxu0 0.0
      %6026 = vmatprep.subr.mxu0 0.0
      %6027 = vmatpush1.msra.mxu0 0.0
      %6028 = vmatprep.subr.mxu0 0.0
      %6029 = vmatpush1.msra.mxu0 0.0
      %6030 = vmatprep.subr.mxu0 0.0
      %6031 = vmatpush1.msra.mxu0 0.0
      %6032 = vmatprep.mubr.f32.mxu0 0.0
      %6033 = vmatmul.mubr.f32.gmra.mrb[0].mxu0 %v5957
      %v6034 = vpop.f32.mrb[0].mxu0
      %v6035 = vadd.f32 0.0, %v6034
      %v6036 = vpop.f32.mrb[0].mxu0
      %6037 = vmatprep.mubr.f32.mxu0 0.0
      %6038 = vmatmul.mubr.f32.gmra.mrb[0].mxu0 %v5960
      %v6039 = vpop.f32.mrb[0].mxu0
      %v6040 = vadd.f32 0.0, %v6039
      %v6041 = vpop.f32.mrb[0].mxu0
      %6042 = vmatprep.mubr.f32.mxu0 0.0
      %6043 = vmatmul.mubr.f32.gmra.mrb[0].mxu0 %v5963
      %v6044 = vpop.f32.mrb[0].mxu0
      %v6045 = vadd.f32 0.0, %v6044
      %v6046 = vpop.f32.mrb[0].mxu0
      %6047 = vmatprep.mubr.f32.mxu0 0.0
      %6048 = vmatmul.mubr.f32.gmra.mrb[0].mxu0 %v5966
      %v6049 = vpop.f32.mrb[0].mxu0
      %v6050 = vadd.f32 0.0, %v6049
      %v6051 = vpop.f32.mrb[0].mxu0
      %6052 = vdwg.mxu0
      %v6054 = vsel %vm1324, %v5702, 0
      %v6057 = vsel %vm1324, %v5707, 0
      %v6060 = vsel %vm1324, %v5712, 0
      %v6063 = vsel %vm1324, %v5717, 0
      %6065 = vmatprep.subr.mxu0 0.0
      %6066 = vmatpush1.msra.mxu0 %v6035
      %6067 = vmatprep.subr.mxu0 0.0
      %6068 = vmatpush1.msra.mxu0 %v6040
      %6069 = vmatprep.subr.mxu0 0.0
      %6070 = vmatpush1.msra.mxu0 %v6045
      %6071 = vmatprep.subr.mxu0 0.0
      %6072 = vmatpush1.msra.mxu0 %v6050
      %6073 = vmatprep.subr.mxu0 0.0
      %6074 = vmatpush1.msra.mxu0 0.0
      %6075 = vmatprep.subr.mxu0 0.0
      %6076 = vmatpush1.msra.mxu0 0.0
      %6077 = vmatprep.subr.mxu0 0.0
      %6078 = vmatpush1.msra.mxu0 0.0
      %6079 = vmatprep.subr.mxu0 0.0
      %6080 = vmatpush1.msra.mxu0 0.0
      %6081 = vmatprep.subr.mxu0 0.0
      %6082 = vmatpush1.msra.mxu0 0.0
      %6083 = vmatprep.subr.mxu0 0.0
      %6084 = vmatpush1.msra.mxu0 0.0
      %6085 = vmatprep.subr.mxu0 0.0
      %6086 = vmatpush1.msra.mxu0 0.0
      %6087 = vmatprep.subr.mxu0 0.0
      %6088 = vmatpush1.msra.mxu0 0.0
      %6089 = vmatprep.subr.mxu0 0.0
      %6090 = vmatpush1.msra.mxu0 0.0
      %6091 = vmatprep.subr.mxu0 0.0
      %6092 = vmatpush1.msra.mxu0 0.0
      %6093 = vmatprep.subr.mxu0 0.0
      %6094 = vmatpush1.msra.mxu0 0.0
      %6095 = vmatprep.subr.mxu0 0.0
      %6096 = vmatpush1.msra.mxu0 0.0
      %6097 = vmatprep.subr.mxu0 0.0
      %6098 = vmatpush1.msra.mxu0 0.0
      %6099 = vmatprep.subr.mxu0 0.0
      %6100 = vmatpush1.msra.mxu0 0.0
      %6101 = vmatprep.subr.mxu0 0.0
      %6102 = vmatpush1.msra.mxu0 0.0
      %6103 = vmatprep.subr.mxu0 0.0
      %6104 = vmatpush1.msra.mxu0 0.0
      %6105 = vmatprep.subr.mxu0 0.0
      %6106 = vmatpush1.msra.mxu0 0.0
      %6107 = vmatprep.subr.mxu0 0.0
      %6108 = vmatpush1.msra.mxu0 0.0
      %6109 = vmatprep.subr.mxu0 0.0
      %6110 = vmatpush1.msra.mxu0 0.0
      %6111 = vmatprep.subr.mxu0 0.0
      %6112 = vmatpush1.msra.mxu0 0.0
      %6113 = vmatprep.subr.mxu0 0.0
      %6114 = vmatpush1.msra.mxu0 0.0
      %6115 = vmatprep.subr.mxu0 0.0
      %6116 = vmatpush1.msra.mxu0 0.0
      %6117 = vmatprep.subr.mxu0 0.0
      %6118 = vmatpush1.msra.mxu0 0.0
      %6119 = vmatprep.subr.mxu0 0.0
      %6120 = vmatpush1.msra.mxu0 0.0
      %6121 = vmatprep.subr.mxu0 0.0
      %6122 = vmatpush1.msra.mxu0 0.0
      %6123 = vmatprep.subr.mxu0 0.0
      %6124 = vmatpush1.msra.mxu0 0.0
      %6125 = vmatprep.subr.mxu0 0.0
      %6126 = vmatpush1.msra.mxu0 0.0
      %6127 = vmatprep.subr.mxu0 0.0
      %6128 = vmatpush1.msra.mxu0 0.0
      %6129 = vmatprep.mubr.f32.mxu0 0.0
      %6130 = vmatmul.mubr.f32.gmra.mrb[0].mxu0 %v6054
      %v6131 = vpop.f32.mrb[0].mxu0
      %v6132 = vadd.f32 0.0, %v6131
      %v6133 = vpop.f32.mrb[0].mxu0
      %6134 = vmatprep.mubr.f32.mxu0 0.0
      %6135 = vmatmul.mubr.f32.gmra.mrb[0].mxu0 %v6057
      %v6136 = vpop.f32.mrb[0].mxu0
      %v6137 = vadd.f32 0.0, %v6136
      %v6138 = vpop.f32.mrb[0].mxu0
      %6139 = vmatprep.mubr.f32.mxu0 0.0
      %6140 = vmatmul.mubr.f32.gmra.mrb[0].mxu0 %v6060
      %v6141 = vpop.f32.mrb[0].mxu0
      %v6142 = vadd.f32 0.0, %v6141
      %v6143 = vpop.f32.mrb[0].mxu0
      %6144 = vmatprep.mubr.f32.mxu0 0.0
      %6145 = vmatmul.mubr.f32.gmra.mrb[0].mxu0 %v6063
      %v6146 = vpop.f32.mrb[0].mxu0
      %v6147 = vadd.f32 0.0, %v6146
      %v6148 = vpop.f32.mrb[0].mxu0
      %6149 = vdwg.mxu0
      %6154 = vrot.lane.b32.xlu0 %v5792, 96
      %v6155 = vpop.permute.xlu0 %6154
      %6156 = vrot.lane.b32.xlu0 %v5797, 96
      %v6157 = vpop.permute.xlu0 %6156
      %6158 = vrot.lane.b32.xlu0 %v5802, 96
      %v6159 = vpop.permute.xlu0 %6158
      %6160 = vrot.lane.b32.xlu0 %v5807, 96
      %v6161 = vpop.permute.xlu0 %6160
      %6166 = vxpose.xlu0.b32.start [1/16] %v6155, 128
      %6167 = vxpose.xlu0.b32.cont [2/16] %v6157, 128
      %6168 = vxpose.xlu0.b32.cont [3/16] %v6159, 128
      %6169 = vxpose.xlu0.b32.cont [4/16] %v6161, 128
      %6170 = vxpose.xlu0.b32.cont [5/16] 0.0, 128
      %6171 = vxpose.xlu0.b32.cont [6/16] 0.0, 128
      %6172 = vxpose.xlu0.b32.cont [7/16] 0.0, 128
      %6173 = vxpose.xlu0.b32.cont [8/16] 0.0, 128
      %6174 = vxpose.xlu0.b32.cont [9/16] 0.0, 128
      %6175 = vxpose.xlu0.b32.cont [10/16] 0.0, 128
      %6176 = vxpose.xlu0.b32.cont [11/16] 0.0, 128
      %6177 = vxpose.xlu0.b32.cont [12/16] 0.0, 128
      %6178 = vxpose.xlu0.b32.cont [13/16] 0.0, 128
      %6179 = vxpose.xlu0.b32.cont [14/16] 0.0, 128
      %6180 = vxpose.xlu0.b32.cont [15/16] 0.0, 128
      %6181 = vxpose.xlu0.b32.end [16/16] 0.0, 128
      %v6182 = vpop.trf.xlu0
      %v6183 = vpop.trf.xlu0
      %v6184 = vpop.trf.xlu0
      %v6185 = vpop.trf.xlu0
      %v6186 = vpop.trf.xlu0
      %v6187 = vpop.trf.xlu0
      %v6188 = vpop.trf.xlu0
      %v6189 = vpop.trf.xlu0
      %v6190 = vpop.trf.xlu0
      %v6191 = vpop.trf.xlu0
      %v6192 = vpop.trf.xlu0
      %v6193 = vpop.trf.xlu0
      %v6194 = vpop.trf.xlu0
      %v6195 = vpop.trf.xlu0
      %v6196 = vpop.trf.xlu0
      %v6197 = vpop.trf.xlu0
      %6202 = vrot.lane.b32.xlu0 %v5889, 96
      %v6203 = vpop.permute.xlu0 %6202
      %6204 = vrot.lane.b32.xlu0 %v5894, 96
      %v6205 = vpop.permute.xlu0 %6204
      %6206 = vrot.lane.b32.xlu0 %v5899, 96
      %v6207 = vpop.permute.xlu0 %6206
      %6208 = vrot.lane.b32.xlu0 %v5904, 96
      %v6209 = vpop.permute.xlu0 %6208
      %v6215 = vsel %vm1324, %v6182, 0
      %v6218 = vsel %vm1324, %v6183, 0
      %v6221 = vsel %vm1324, %v6184, 0
      %v6224 = vsel %vm1324, %v6185, 0
      %6226 = vmatprep.subr.mxu0 0.0
      %6227 = vmatpush1.msra.mxu0 %v6203
      %6228 = vmatprep.subr.mxu0 0.0
      %6229 = vmatpush1.msra.mxu0 %v6205
      %6230 = vmatprep.subr.mxu0 0.0
      %6231 = vmatpush1.msra.mxu0 %v6207
      %6232 = vmatprep.subr.mxu0 0.0
      %6233 = vmatpush1.msra.mxu0 %v6209
      %6234 = vmatprep.subr.mxu0 0.0
      %6235 = vmatpush1.msra.mxu0 0.0
      %6236 = vmatprep.subr.mxu0 0.0
      %6237 = vmatpush1.msra.mxu0 0.0
      %6238 = vmatprep.subr.mxu0 0.0
      %6239 = vmatpush1.msra.mxu0 0.0
      %6240 = vmatprep.subr.mxu0 0.0
      %6241 = vmatpush1.msra.mxu0 0.0
      %6242 = vmatprep.subr.mxu0 0.0
      %6243 = vmatpush1.msra.mxu0 0.0
      %6244 = vmatprep.subr.mxu0 0.0
      %6245 = vmatpush1.msra.mxu0 0.0
      %6246 = vmatprep.subr.mxu0 0.0
      %6247 = vmatpush1.msra.mxu0 0.0
      %6248 = vmatprep.subr.mxu0 0.0
      %6249 = vmatpush1.msra.mxu0 0.0
      %6250 = vmatprep.subr.mxu0 0.0
      %6251 = vmatpush1.msra.mxu0 0.0
      %6252 = vmatprep.subr.mxu0 0.0
      %6253 = vmatpush1.msra.mxu0 0.0
      %6254 = vmatprep.subr.mxu0 0.0
      %6255 = vmatpush1.msra.mxu0 0.0
      %6256 = vmatprep.subr.mxu0 0.0
      %6257 = vmatpush1.msra.mxu0 0.0
      %6258 = vmatprep.subr.mxu0 0.0
      %6259 = vmatpush1.msra.mxu0 0.0
      %6260 = vmatprep.subr.mxu0 0.0
      %6261 = vmatpush1.msra.mxu0 0.0
      %6262 = vmatprep.subr.mxu0 0.0
      %6263 = vmatpush1.msra.mxu0 0.0
      %6264 = vmatprep.subr.mxu0 0.0
      %6265 = vmatpush1.msra.mxu0 0.0
      %6266 = vmatprep.subr.mxu0 0.0
      %6267 = vmatpush1.msra.mxu0 0.0
      %6268 = vmatprep.subr.mxu0 0.0
      %6269 = vmatpush1.msra.mxu0 0.0
      %6270 = vmatprep.subr.mxu0 0.0
      %6271 = vmatpush1.msra.mxu0 0.0
      %6272 = vmatprep.subr.mxu0 0.0
      %6273 = vmatpush1.msra.mxu0 0.0
      %6274 = vmatprep.subr.mxu0 0.0
      %6275 = vmatpush1.msra.mxu0 0.0
      %6276 = vmatprep.subr.mxu0 0.0
      %6277 = vmatpush1.msra.mxu0 0.0
      %6278 = vmatprep.subr.mxu0 0.0
      %6279 = vmatpush1.msra.mxu0 0.0
      %6280 = vmatprep.subr.mxu0 0.0
      %6281 = vmatpush1.msra.mxu0 0.0
      %6282 = vmatprep.subr.mxu0 0.0
      %6283 = vmatpush1.msra.mxu0 0.0
      %6284 = vmatprep.subr.mxu0 0.0
      %6285 = vmatpush1.msra.mxu0 0.0
      %6286 = vmatprep.subr.mxu0 0.0
      %6287 = vmatpush1.msra.mxu0 0.0
      %6288 = vmatprep.subr.mxu0 0.0
      %6289 = vmatpush1.msra.mxu0 0.0
      %6290 = vmatprep.mubr.f32.mxu0 0.0
      %6291 = vmatmul.mubr.f32.gmra.mrb[0].mxu0 %v6215
      %v6292 = vpop.f32.mrb[0].mxu0
      %v6293 = vadd.f32 0.0, %v6292
      %v6294 = vpop.f32.mrb[0].mxu0
      %6295 = vmatprep.mubr.f32.mxu0 0.0
      %6296 = vmatmul.mubr.f32.gmra.mrb[0].mxu0 %v6218
      %v6297 = vpop.f32.mrb[0].mxu0
      %v6298 = vadd.f32 0.0, %v6297
      %v6299 = vpop.f32.mrb[0].mxu0
      %6300 = vmatprep.mubr.f32.mxu0 0.0
      %6301 = vmatmul.mubr.f32.gmra.mrb[0].mxu0 %v6221
      %v6302 = vpop.f32.mrb[0].mxu0
      %v6303 = vadd.f32 0.0, %v6302
      %v6304 = vpop.f32.mrb[0].mxu0
      %6305 = vmatprep.mubr.f32.mxu0 0.0
      %6306 = vmatmul.mubr.f32.gmra.mrb[0].mxu0 %v6224
      %v6307 = vpop.f32.mrb[0].mxu0
      %v6308 = vadd.f32 0.0, %v6307
      %v6309 = vpop.f32.mrb[0].mxu0
      %6310 = vdwg.mxu0
      %6311 = vrot.lane.b32.xlu0 %v5702, 96
      %v6312 = vpop.permute.xlu0 %6311
      %6313 = vrot.lane.b32.xlu0 %v5707, 96
      %v6314 = vpop.permute.xlu0 %6313
      %6315 = vrot.lane.b32.xlu0 %v5712, 96
      %v6316 = vpop.permute.xlu0 %6315
      %6317 = vrot.lane.b32.xlu0 %v5717, 96
      %v6318 = vpop.permute.xlu0 %6317
      %v6319 = vsel %vm1324, %v6312, 0
      %v6321 = vsel %vm1324, %v6314, 0
      %v6323 = vsel %vm1324, %v6316, 0
      %v6325 = vsel %vm1324, %v6318, 0
      %6327 = vmatprep.subr.mxu0 0.0
      %6328 = vmatpush1.msra.mxu0 %v6293
      %6329 = vmatprep.subr.mxu0 0.0
      %6330 = vmatpush1.msra.mxu0 %v6298
      %6331 = vmatprep.subr.mxu0 0.0
      %6332 = vmatpush1.msra.mxu0 %v6303
      %6333 = vmatprep.subr.mxu0 0.0
      %6334 = vmatpush1.msra.mxu0 %v6308
      %6335 = vmatprep.subr.mxu0 0.0
      %6336 = vmatpush1.msra.mxu0 0.0
      %6337 = vmatprep.subr.mxu0 0.0
      %6338 = vmatpush1.msra.mxu0 0.0
      %6339 = vmatprep.subr.mxu0 0.0
      %6340 = vmatpush1.msra.mxu0 0.0
      %6341 = vmatprep.subr.mxu0 0.0
      %6342 = vmatpush1.msra.mxu0 0.0
      %6343 = vmatprep.subr.mxu0 0.0
      %6344 = vmatpush1.msra.mxu0 0.0
      %6345 = vmatprep.subr.mxu0 0.0
      %6346 = vmatpush1.msra.mxu0 0.0
      %6347 = vmatprep.subr.mxu0 0.0
      %6348 = vmatpush1.msra.mxu0 0.0
      %6349 = vmatprep.subr.mxu0 0.0
      %6350 = vmatpush1.msra.mxu0 0.0
      %6351 = vmatprep.subr.mxu0 0.0
      %6352 = vmatpush1.msra.mxu0 0.0
      %6353 = vmatprep.subr.mxu0 0.0
      %6354 = vmatpush1.msra.mxu0 0.0
      %6355 = vmatprep.subr.mxu0 0.0
      %6356 = vmatpush1.msra.mxu0 0.0
      %6357 = vmatprep.subr.mxu0 0.0
      %6358 = vmatpush1.msra.mxu0 0.0
      %6359 = vmatprep.subr.mxu0 0.0
      %6360 = vmatpush1.msra.mxu0 0.0
      %6361 = vmatprep.subr.mxu0 0.0
      %6362 = vmatpush1.msra.mxu0 0.0
      %6363 = vmatprep.subr.mxu0 0.0
      %6364 = vmatpush1.msra.mxu0 0.0
      %6365 = vmatprep.subr.mxu0 0.0
      %6366 = vmatpush1.msra.mxu0 0.0
      %6367 = vmatprep.subr.mxu0 0.0
      %6368 = vmatpush1.msra.mxu0 0.0
      %6369 = vmatprep.subr.mxu0 0.0
      %6370 = vmatpush1.msra.mxu0 0.0
      %6371 = vmatprep.subr.mxu0 0.0
      %6372 = vmatpush1.msra.mxu0 0.0
      %6373 = vmatprep.subr.mxu0 0.0
      %6374 = vmatpush1.msra.mxu0 0.0
      %6375 = vmatprep.subr.mxu0 0.0
      %6376 = vmatpush1.msra.mxu0 0.0
      %6377 = vmatprep.subr.mxu0 0.0
      %6378 = vmatpush1.msra.mxu0 0.0
      %6379 = vmatprep.subr.mxu0 0.0
      %6380 = vmatpush1.msra.mxu0 0.0
      %6381 = vmatprep.subr.mxu0 0.0
      %6382 = vmatpush1.msra.mxu0 0.0
      %6383 = vmatprep.subr.mxu0 0.0
      %6384 = vmatpush1.msra.mxu0 0.0
      %6385 = vmatprep.subr.mxu0 0.0
      %6386 = vmatpush1.msra.mxu0 0.0
      %6387 = vmatprep.subr.mxu0 0.0
      %6388 = vmatpush1.msra.mxu0 0.0
      %6389 = vmatprep.subr.mxu0 0.0
      %6390 = vmatpush1.msra.mxu0 0.0
      %6391 = vmatprep.mubr.f32.mxu0 0.0
      %6392 = vmatmul.mubr.f32.gmra.mrb[0].mxu0 %v6319
      %v6393 = vpop.f32.mrb[0].mxu0
      %v6394 = vadd.f32 0.0, %v6393
      %v6395 = vpop.f32.mrb[0].mxu0
      %6396 = vmatprep.mubr.f32.mxu0 0.0
      %6397 = vmatmul.mubr.f32.gmra.mrb[0].mxu0 %v6321
      %v6398 = vpop.f32.mrb[0].mxu0
      %v6399 = vadd.f32 0.0, %v6398
      %v6400 = vpop.f32.mrb[0].mxu0
      %6401 = vmatprep.mubr.f32.mxu0 0.0
      %6402 = vmatmul.mubr.f32.gmra.mrb[0].mxu0 %v6323
      %v6403 = vpop.f32.mrb[0].mxu0
      %v6404 = vadd.f32 0.0, %v6403
      %v6405 = vpop.f32.mrb[0].mxu0
      %6406 = vmatprep.mubr.f32.mxu0 0.0
      %6407 = vmatmul.mubr.f32.gmra.mrb[0].mxu0 %v6325
      %v6408 = vpop.f32.mrb[0].mxu0
      %v6409 = vadd.f32 0.0, %v6408
      %v6410 = vpop.f32.mrb[0].mxu0
      %6411 = vdwg.mxu0
      %v6413 = vsel %vm1324, %v6394, 0
      %v6416 = vsel %vm1324, %v6399, 0
      %v6419 = vsel %vm1324, %v6404, 0
      %v6422 = vsel %vm1324, %v6409, 0
      %6424 = vmatprep.subr.mxu0 0.0
      %6425 = vmatpush1.msra.mxu0 %v5912
      %6426 = vmatprep.subr.mxu0 0.0
      %6427 = vmatpush1.msra.mxu0 %v5913
      %6428 = vmatprep.subr.mxu0 0.0
      %6429 = vmatpush1.msra.mxu0 %v5914
      %6430 = vmatprep.subr.mxu0 0.0
      %6431 = vmatpush1.msra.mxu0 %v5915
      %6432 = vmatprep.subr.mxu0 0.0
      %6433 = vmatpush1.msra.mxu0 0.0
      %6434 = vmatprep.subr.mxu0 0.0
      %6435 = vmatpush1.msra.mxu0 0.0
      %6436 = vmatprep.subr.mxu0 0.0
      %6437 = vmatpush1.msra.mxu0 0.0
      %6438 = vmatprep.subr.mxu0 0.0
      %6439 = vmatpush1.msra.mxu0 0.0
      %6440 = vmatprep.subr.mxu0 0.0
      %6441 = vmatpush1.msra.mxu0 0.0
      %6442 = vmatprep.subr.mxu0 0.0
      %6443 = vmatpush1.msra.mxu0 0.0
      %6444 = vmatprep.subr.mxu0 0.0
      %6445 = vmatpush1.msra.mxu0 0.0
      %6446 = vmatprep.subr.mxu0 0.0
      %6447 = vmatpush1.msra.mxu0 0.0
      %6448 = vmatprep.subr.mxu0 0.0
      %6449 = vmatpush1.msra.mxu0 0.0
      %6450 = vmatprep.subr.mxu0 0.0
      %6451 = vmatpush1.msra.mxu0 0.0
      %6452 = vmatprep.subr.mxu0 0.0
      %6453 = vmatpush1.msra.mxu0 0.0
      %6454 = vmatprep.subr.mxu0 0.0
      %6455 = vmatpush1.msra.mxu0 0.0
      %6456 = vmatprep.subr.mxu0 0.0
      %6457 = vmatpush1.msra.mxu0 0.0
      %6458 = vmatprep.subr.mxu0 0.0
      %6459 = vmatpush1.msra.mxu0 0.0
      %6460 = vmatprep.subr.mxu0 0.0
      %6461 = vmatpush1.msra.mxu0 0.0
      %6462 = vmatprep.subr.mxu0 0.0
      %6463 = vmatpush1.msra.mxu0 0.0
      %6464 = vmatprep.subr.mxu0 0.0
      %6465 = vmatpush1.msra.mxu0 0.0
      %6466 = vmatprep.subr.mxu0 0.0
      %6467 = vmatpush1.msra.mxu0 0.0
      %6468 = vmatprep.subr.mxu0 0.0
      %6469 = vmatpush1.msra.mxu0 0.0
      %6470 = vmatprep.subr.mxu0 0.0
      %6471 = vmatpush1.msra.mxu0 0.0
      %6472 = vmatprep.subr.mxu0 0.0
      %6473 = vmatpush1.msra.mxu0 0.0
      %6474 = vmatprep.subr.mxu0 0.0
      %6475 = vmatpush1.msra.mxu0 0.0
      %6476 = vmatprep.subr.mxu0 0.0
      %6477 = vmatpush1.msra.mxu0 0.0
      %6478 = vmatprep.subr.mxu0 0.0
      %6479 = vmatpush1.msra.mxu0 0.0
      %6480 = vmatprep.subr.mxu0 0.0
      %6481 = vmatpush1.msra.mxu0 0.0
      %6482 = vmatprep.subr.mxu0 0.0
      %6483 = vmatpush1.msra.mxu0 0.0
      %6484 = vmatprep.subr.mxu0 0.0
      %6485 = vmatpush1.msra.mxu0 0.0
      %6486 = vmatprep.subr.mxu0 0.0
      %6487 = vmatpush1.msra.mxu0 0.0
      %6488 = vmatprep.mubr.f32.mxu0 0.0
      %6489 = vmatmul.mubr.f32.gmra.mrb[0].mxu0 %v6413
      %v6490 = vpop.f32.mrb[0].mxu0
      %v6491 = vadd.f32 0.0, %v6490
      %v6492 = vpop.f32.mrb[0].mxu0
      %6493 = vmatprep.mubr.f32.mxu0 0.0
      %6494 = vmatmul.mubr.f32.gmra.mrb[0].mxu0 %v6416
      %v6495 = vpop.f32.mrb[0].mxu0
      %v6496 = vadd.f32 0.0, %v6495
      %v6497 = vpop.f32.mrb[0].mxu0
      %6498 = vmatprep.mubr.f32.mxu0 0.0
      %6499 = vmatmul.mubr.f32.gmra.mrb[0].mxu0 %v6419
      %v6500 = vpop.f32.mrb[0].mxu0
      %v6501 = vadd.f32 0.0, %v6500
      %v6502 = vpop.f32.mrb[0].mxu0
      %6503 = vmatprep.mubr.f32.mxu0 0.0
      %6504 = vmatmul.mubr.f32.gmra.mrb[0].mxu0 %v6422
      %v6505 = vpop.f32.mrb[0].mxu0
      %v6506 = vadd.f32 0.0, %v6505
      %v6507 = vpop.f32.mrb[0].mxu0
      %6508 = vdwg.mxu0
      %v6510 = vsel %vm1324, %v6132, 0
      %v6513 = vsel %vm1324, %v6137, 0
      %v6516 = vsel %vm1324, %v6142, 0
      %v6519 = vsel %vm1324, %v6147, 0
      %6521 = vmatprep.subr.mxu0 0.0
      %6522 = vmatpush1.msra.mxu0 %v5908
      %6523 = vmatprep.subr.mxu0 0.0
      %6524 = vmatpush1.msra.mxu0 %v5909
      %6525 = vmatprep.subr.mxu0 0.0
      %6526 = vmatpush1.msra.mxu0 %v5910
      %6527 = vmatprep.subr.mxu0 0.0
      %6528 = vmatpush1.msra.mxu0 %v5911
      %6529 = vmatprep.subr.mxu0 0.0
      %6530 = vmatpush1.msra.mxu0 0.0
      %6531 = vmatprep.subr.mxu0 0.0
      %6532 = vmatpush1.msra.mxu0 0.0
      %6533 = vmatprep.subr.mxu0 0.0
      %6534 = vmatpush1.msra.mxu0 0.0
      %6535 = vmatprep.subr.mxu0 0.0
      %6536 = vmatpush1.msra.mxu0 0.0
      %6537 = vmatprep.subr.mxu0 0.0
      %6538 = vmatpush1.msra.mxu0 0.0
      %6539 = vmatprep.subr.mxu0 0.0
      %6540 = vmatpush1.msra.mxu0 0.0
      %6541 = vmatprep.subr.mxu0 0.0
      %6542 = vmatpush1.msra.mxu0 0.0
      %6543 = vmatprep.subr.mxu0 0.0
      %6544 = vmatpush1.msra.mxu0 0.0
      %6545 = vmatprep.subr.mxu0 0.0
      %6546 = vmatpush1.msra.mxu0 0.0
      %6547 = vmatprep.subr.mxu0 0.0
      %6548 = vmatpush1.msra.mxu0 0.0
      %6549 = vmatprep.subr.mxu0 0.0
      %6550 = vmatpush1.msra.mxu0 0.0
      %6551 = vmatprep.subr.mxu0 0.0
      %6552 = vmatpush1.msra.mxu0 0.0
      %6553 = vmatprep.subr.mxu0 0.0
      %6554 = vmatpush1.msra.mxu0 0.0
      %6555 = vmatprep.subr.mxu0 0.0
      %6556 = vmatpush1.msra.mxu0 0.0
      %6557 = vmatprep.subr.mxu0 0.0
      %6558 = vmatpush1.msra.mxu0 0.0
      %6559 = vmatprep.subr.mxu0 0.0
      %6560 = vmatpush1.msra.mxu0 0.0
      %6561 = vmatprep.subr.mxu0 0.0
      %6562 = vmatpush1.msra.mxu0 0.0
      %6563 = vmatprep.subr.mxu0 0.0
      %6564 = vmatpush1.msra.mxu0 0.0
      %6565 = vmatprep.subr.mxu0 0.0
      %6566 = vmatpush1.msra.mxu0 0.0
      %6567 = vmatprep.subr.mxu0 0.0
      %6568 = vmatpush1.msra.mxu0 0.0
      %6569 = vmatprep.subr.mxu0 0.0
      %6570 = vmatpush1.msra.mxu0 0.0
      %6571 = vmatprep.subr.mxu0 0.0
      %6572 = vmatpush1.msra.mxu0 0.0
      %6573 = vmatprep.subr.mxu0 0.0
      %6574 = vmatpush1.msra.mxu0 0.0
      %6575 = vmatprep.subr.mxu0 0.0
      %6576 = vmatpush1.msra.mxu0 0.0
      %6577 = vmatprep.subr.mxu0 0.0
      %6578 = vmatpush1.msra.mxu0 0.0
      %6579 = vmatprep.subr.mxu0 0.0
      %6580 = vmatpush1.msra.mxu0 0.0
      %6581 = vmatprep.subr.mxu0 0.0
      %6582 = vmatpush1.msra.mxu0 0.0
      %6583 = vmatprep.subr.mxu0 0.0
      %6584 = vmatpush1.msra.mxu0 0.0
      %6585 = vmatprep.mubr.f32.mxu0 0.0
      %6586 = vmatmul.mubr.f32.gmra.mrb[0].mxu0 %v6510
      %v6587 = vpop.f32.mrb[0].mxu0
      %v6588 = vadd.f32 %v6491, %v6587
      %v6589 = vpop.f32.mrb[0].mxu0
      %6590 = vmatprep.mubr.f32.mxu0 0.0
      %6591 = vmatmul.mubr.f32.gmra.mrb[0].mxu0 %v6513
      %v6592 = vpop.f32.mrb[0].mxu0
      %v6593 = vadd.f32 %v6496, %v6592
      %v6594 = vpop.f32.mrb[0].mxu0
      %6595 = vmatprep.mubr.f32.mxu0 0.0
      %6596 = vmatmul.mubr.f32.gmra.mrb[0].mxu0 %v6516
      %v6597 = vpop.f32.mrb[0].mxu0
      %v6598 = vadd.f32 %v6501, %v6597
      %v6599 = vpop.f32.mrb[0].mxu0
      %6600 = vmatprep.mubr.f32.mxu0 0.0
      %6601 = vmatmul.mubr.f32.gmra.mrb[0].mxu0 %v6519
      %v6602 = vpop.f32.mrb[0].mxu0
      %v6603 = vadd.f32 %v6506, %v6602
      %v6604 = vpop.f32.mrb[0].mxu0
      %6605 = vdwg.mxu0
      %6606 = vrot.lane.b32.xlu0 %v5792, 64
      %v6607 = vpop.permute.xlu0 %6606
      %6608 = vrot.lane.b32.xlu0 %v5797, 64
      %v6609 = vpop.permute.xlu0 %6608
      %6610 = vrot.lane.b32.xlu0 %v5802, 64
      %v6611 = vpop.permute.xlu0 %6610
      %6612 = vrot.lane.b32.xlu0 %v5807, 64
      %v6613 = vpop.permute.xlu0 %6612
      %6618 = vxpose.xlu0.b32.start [1/16] %v6607, 128
      %6619 = vxpose.xlu0.b32.cont [2/16] %v6609, 128
      %6620 = vxpose.xlu0.b32.cont [3/16] %v6611, 128
      %6621 = vxpose.xlu0.b32.cont [4/16] %v6613, 128
      %6622 = vxpose.xlu0.b32.cont [5/16] 0.0, 128
      %6623 = vxpose.xlu0.b32.cont [6/16] 0.0, 128
      %6624 = vxpose.xlu0.b32.cont [7/16] 0.0, 128
      %6625 = vxpose.xlu0.b32.cont [8/16] 0.0, 128
      %6626 = vxpose.xlu0.b32.cont [9/16] 0.0, 128
      %6627 = vxpose.xlu0.b32.cont [10/16] 0.0, 128
      %6628 = vxpose.xlu0.b32.cont [11/16] 0.0, 128
      %6629 = vxpose.xlu0.b32.cont [12/16] 0.0, 128
      %6630 = vxpose.xlu0.b32.cont [13/16] 0.0, 128
      %6631 = vxpose.xlu0.b32.cont [14/16] 0.0, 128
      %6632 = vxpose.xlu0.b32.cont [15/16] 0.0, 128
      %6633 = vxpose.xlu0.b32.end [16/16] 0.0, 128
      %v6634 = vpop.trf.xlu0
      %v6635 = vpop.trf.xlu0
      %v6636 = vpop.trf.xlu0
      %v6637 = vpop.trf.xlu0
      %v6638 = vpop.trf.xlu0
      %v6639 = vpop.trf.xlu0
      %v6640 = vpop.trf.xlu0
      %v6641 = vpop.trf.xlu0
      %v6642 = vpop.trf.xlu0
      %v6643 = vpop.trf.xlu0
      %v6644 = vpop.trf.xlu0
      %v6645 = vpop.trf.xlu0
      %v6646 = vpop.trf.xlu0
      %v6647 = vpop.trf.xlu0
      %v6648 = vpop.trf.xlu0
      %v6649 = vpop.trf.xlu0
      %6650 = vrot.lane.b32.xlu0 %v5889, 64
      %v6651 = vpop.permute.xlu0 %6650
      %6652 = vrot.lane.b32.xlu0 %v5894, 64
      %v6653 = vpop.permute.xlu0 %6652
      %6654 = vrot.lane.b32.xlu0 %v5899, 64
      %v6655 = vpop.permute.xlu0 %6654
      %6656 = vrot.lane.b32.xlu0 %v5904, 64
      %v6657 = vpop.permute.xlu0 %6656
      %v6663 = vsel %vm1324, %v6634, 0
      %v6666 = vsel %vm1324, %v6635, 0
      %v6669 = vsel %vm1324, %v6636, 0
      %v6672 = vsel %vm1324, %v6637, 0
      %6674 = vmatprep.subr.mxu0 0.0
      %6675 = vmatpush1.msra.mxu0 %v6651
      %6676 = vmatprep.subr.mxu0 0.0
      %6677 = vmatpush1.msra.mxu0 %v6653
      %6678 = vmatprep.subr.mxu0 0.0
      %6679 = vmatpush1.msra.mxu0 %v6655
      %6680 = vmatprep.subr.mxu0 0.0
      %6681 = vmatpush1.msra.mxu0 %v6657
      %6682 = vmatprep.subr.mxu0 0.0
      %6683 = vmatpush1.msra.mxu0 0.0
      %6684 = vmatprep.subr.mxu0 0.0
      %6685 = vmatpush1.msra.mxu0 0.0
      %6686 = vmatprep.subr.mxu0 0.0
      %6687 = vmatpush1.msra.mxu0 0.0
      %6688 = vmatprep.subr.mxu0 0.0
      %6689 = vmatpush1.msra.mxu0 0.0
      %6690 = vmatprep.subr.mxu0 0.0
      %6691 = vmatpush1.msra.mxu0 0.0
      %6692 = vmatprep.subr.mxu0 0.0
      %6693 = vmatpush1.msra.mxu0 0.0
      %6694 = vmatprep.subr.mxu0 0.0
      %6695 = vmatpush1.msra.mxu0 0.0
      %6696 = vmatprep.subr.mxu0 0.0
      %6697 = vmatpush1.msra.mxu0 0.0
      %6698 = vmatprep.subr.mxu0 0.0
      %6699 = vmatpush1.msra.mxu0 0.0
      %6700 = vmatprep.subr.mxu0 0.0
      %6701 = vmatpush1.msra.mxu0 0.0
      %6702 = vmatprep.subr.mxu0 0.0
      %6703 = vmatpush1.msra.mxu0 0.0
      %6704 = vmatprep.subr.mxu0 0.0
      %6705 = vmatpush1.msra.mxu0 0.0
      %6706 = vmatprep.subr.mxu0 0.0
      %6707 = vmatpush1.msra.mxu0 0.0
      %6708 = vmatprep.subr.mxu0 0.0
      %6709 = vmatpush1.msra.mxu0 0.0
      %6710 = vmatprep.subr.mxu0 0.0
      %6711 = vmatpush1.msra.mxu0 0.0
      %6712 = vmatprep.subr.mxu0 0.0
      %6713 = vmatpush1.msra.mxu0 0.0
      %6714 = vmatprep.subr.mxu0 0.0
      %6715 = vmatpush1.msra.mxu0 0.0
      %6716 = vmatprep.subr.mxu0 0.0
      %6717 = vmatpush1.msra.mxu0 0.0
      %6718 = vmatprep.subr.mxu0 0.0
      %6719 = vmatpush1.msra.mxu0 0.0
      %6720 = vmatprep.subr.mxu0 0.0
      %6721 = vmatpush1.msra.mxu0 0.0
      %6722 = vmatprep.subr.mxu0 0.0
      %6723 = vmatpush1.msra.mxu0 0.0
      %6724 = vmatprep.subr.mxu0 0.0
      %6725 = vmatpush1.msra.mxu0 0.0
      %6726 = vmatprep.subr.mxu0 0.0
      %6727 = vmatpush1.msra.mxu0 0.0
      %6728 = vmatprep.subr.mxu0 0.0
      %6729 = vmatpush1.msra.mxu0 0.0
      %6730 = vmatprep.subr.mxu0 0.0
      %6731 = vmatpush1.msra.mxu0 0.0
      %6732 = vmatprep.subr.mxu0 0.0
      %6733 = vmatpush1.msra.mxu0 0.0
      %6734 = vmatprep.subr.mxu0 0.0
      %6735 = vmatpush1.msra.mxu0 0.0
      %6736 = vmatprep.subr.mxu0 0.0
      %6737 = vmatpush1.msra.mxu0 0.0
      %6738 = vmatprep.mubr.f32.mxu0 0.0
      %6739 = vmatmul.mubr.f32.gmra.mrb[0].mxu0 %v6663
      %v6740 = vpop.f32.mrb[0].mxu0
      %v6741 = vadd.f32 0.0, %v6740
      %v6742 = vpop.f32.mrb[0].mxu0
      %6743 = vmatprep.mubr.f32.mxu0 0.0
      %6744 = vmatmul.mubr.f32.gmra.mrb[0].mxu0 %v6666
      %v6745 = vpop.f32.mrb[0].mxu0
      %v6746 = vadd.f32 0.0, %v6745
      %v6747 = vpop.f32.mrb[0].mxu0
      %6748 = vmatprep.mubr.f32.mxu0 0.0
      %6749 = vmatmul.mubr.f32.gmra.mrb[0].mxu0 %v6669
      %v6750 = vpop.f32.mrb[0].mxu0
      %v6751 = vadd.f32 0.0, %v6750
      %v6752 = vpop.f32.mrb[0].mxu0
      %6753 = vmatprep.mubr.f32.mxu0 0.0
      %6754 = vmatmul.mubr.f32.gmra.mrb[0].mxu0 %v6672
      %v6755 = vpop.f32.mrb[0].mxu0
      %v6756 = vadd.f32 0.0, %v6755
      %v6757 = vpop.f32.mrb[0].mxu0
      %6758 = vdwg.mxu0
      %6759 = vrot.lane.b32.xlu0 %v5702, 64
      %v6760 = vpop.permute.xlu0 %6759
      %6761 = vrot.lane.b32.xlu0 %v5707, 64
      %v6762 = vpop.permute.xlu0 %6761
      %6763 = vrot.lane.b32.xlu0 %v5712, 64
      %v6764 = vpop.permute.xlu0 %6763
      %6765 = vrot.lane.b32.xlu0 %v5717, 64
      %v6766 = vpop.permute.xlu0 %6765
      %v6767 = vsel %vm1324, %v6760, 0
      %v6769 = vsel %vm1324, %v6762, 0
      %v6771 = vsel %vm1324, %v6764, 0
      %v6773 = vsel %vm1324, %v6766, 0
      %6775 = vmatprep.subr.mxu0 0.0
      %6776 = vmatpush1.msra.mxu0 %v6741
      %6777 = vmatprep.subr.mxu0 0.0
      %6778 = vmatpush1.msra.mxu0 %v6746
      %6779 = vmatprep.subr.mxu0 0.0
      %6780 = vmatpush1.msra.mxu0 %v6751
      %6781 = vmatprep.subr.mxu0 0.0
      %6782 = vmatpush1.msra.mxu0 %v6756
      %6783 = vmatprep.subr.mxu0 0.0
      %6784 = vmatpush1.msra.mxu0 0.0
      %6785 = vmatprep.subr.mxu0 0.0
      %6786 = vmatpush1.msra.mxu0 0.0
      %6787 = vmatprep.subr.mxu0 0.0
      %6788 = vmatpush1.msra.mxu0 0.0
      %6789 = vmatprep.subr.mxu0 0.0
      %6790 = vmatpush1.msra.mxu0 0.0
      %6791 = vmatprep.subr.mxu0 0.0
      %6792 = vmatpush1.msra.mxu0 0.0
      %6793 = vmatprep.subr.mxu0 0.0
      %6794 = vmatpush1.msra.mxu0 0.0
      %6795 = vmatprep.subr.mxu0 0.0
      %6796 = vmatpush1.msra.mxu0 0.0
      %6797 = vmatprep.subr.mxu0 0.0
      %6798 = vmatpush1.msra.mxu0 0.0
      %6799 = vmatprep.subr.mxu0 0.0
      %6800 = vmatpush1.msra.mxu0 0.0
      %6801 = vmatprep.subr.mxu0 0.0
      %6802 = vmatpush1.msra.mxu0 0.0
      %6803 = vmatprep.subr.mxu0 0.0
      %6804 = vmatpush1.msra.mxu0 0.0
      %6805 = vmatprep.subr.mxu0 0.0
      %6806 = vmatpush1.msra.mxu0 0.0
      %6807 = vmatprep.subr.mxu0 0.0
      %6808 = vmatpush1.msra.mxu0 0.0
      %6809 = vmatprep.subr.mxu0 0.0
      %6810 = vmatpush1.msra.mxu0 0.0
      %6811 = vmatprep.subr.mxu0 0.0
      %6812 = vmatpush1.msra.mxu0 0.0
      %6813 = vmatprep.subr.mxu0 0.0
      %6814 = vmatpush1.msra.mxu0 0.0
      %6815 = vmatprep.subr.mxu0 0.0
      %6816 = vmatpush1.msra.mxu0 0.0
      %6817 = vmatprep.subr.mxu0 0.0
      %6818 = vmatpush1.msra.mxu0 0.0
      %6819 = vmatprep.subr.mxu0 0.0
      %6820 = vmatpush1.msra.mxu0 0.0
      %6821 = vmatprep.subr.mxu0 0.0
      %6822 = vmatpush1.msra.mxu0 0.0
      %6823 = vmatprep.subr.mxu0 0.0
      %6824 = vmatpush1.msra.mxu0 0.0
      %6825 = vmatprep.subr.mxu0 0.0
      %6826 = vmatpush1.msra.mxu0 0.0
      %6827 = vmatprep.subr.mxu0 0.0
      %6828 = vmatpush1.msra.mxu0 0.0
      %6829 = vmatprep.subr.mxu0 0.0
      %6830 = vmatpush1.msra.mxu0 0.0
      %6831 = vmatprep.subr.mxu0 0.0
      %6832 = vmatpush1.msra.mxu0 0.0
      %6833 = vmatprep.subr.mxu0 0.0
      %6834 = vmatpush1.msra.mxu0 0.0
      %6835 = vmatprep.subr.mxu0 0.0
      %6836 = vmatpush1.msra.mxu0 0.0
      %6837 = vmatprep.subr.mxu0 0.0
      %6838 = vmatpush1.msra.mxu0 0.0
      %6839 = vmatprep.mubr.f32.mxu0 0.0
      %6840 = vmatmul.mubr.f32.gmra.mrb[0].mxu0 %v6767
      %v6841 = vpop.f32.mrb[0].mxu0
      %v6842 = vadd.f32 0.0, %v6841
      %v6843 = vpop.f32.mrb[0].mxu0
      %6844 = vmatprep.mubr.f32.mxu0 0.0
      %6845 = vmatmul.mubr.f32.gmra.mrb[0].mxu0 %v6769
      %v6846 = vpop.f32.mrb[0].mxu0
      %v6847 = vadd.f32 0.0, %v6846
      %v6848 = vpop.f32.mrb[0].mxu0
      %6849 = vmatprep.mubr.f32.mxu0 0.0
      %6850 = vmatmul.mubr.f32.gmra.mrb[0].mxu0 %v6771
      %v6851 = vpop.f32.mrb[0].mxu0
      %v6852 = vadd.f32 0.0, %v6851
      %v6853 = vpop.f32.mrb[0].mxu0
      %6854 = vmatprep.mubr.f32.mxu0 0.0
      %6855 = vmatmul.mubr.f32.gmra.mrb[0].mxu0 %v6773
      %v6856 = vpop.f32.mrb[0].mxu0
      %v6857 = vadd.f32 0.0, %v6856
      %v6858 = vpop.f32.mrb[0].mxu0
      %6859 = vdwg.mxu0
      %v6861 = vsel %vm1324, %v6842, 0
      %v6864 = vsel %vm1324, %v6847, 0
      %v6867 = vsel %vm1324, %v6852, 0
      %v6870 = vsel %vm1324, %v6857, 0
      %6872 = vmatprep.subr.mxu0 0.0
      %6873 = vmatpush1.msra.mxu0 %v5916
      %6874 = vmatprep.subr.mxu0 0.0
      %6875 = vmatpush1.msra.mxu0 %v5917
      %6876 = vmatprep.subr.mxu0 0.0
      %6877 = vmatpush1.msra.mxu0 %v5918
      %6878 = vmatprep.subr.mxu0 0.0
      %6879 = vmatpush1.msra.mxu0 %v5919
      %6880 = vmatprep.subr.mxu0 0.0
      %6881 = vmatpush1.msra.mxu0 0.0
      %6882 = vmatprep.subr.mxu0 0.0
      %6883 = vmatpush1.msra.mxu0 0.0
      %6884 = vmatprep.subr.mxu0 0.0
      %6885 = vmatpush1.msra.mxu0 0.0
      %6886 = vmatprep.subr.mxu0 0.0
      %6887 = vmatpush1.msra.mxu0 0.0
      %6888 = vmatprep.subr.mxu0 0.0
      %6889 = vmatpush1.msra.mxu0 0.0
      %6890 = vmatprep.subr.mxu0 0.0
      %6891 = vmatpush1.msra.mxu0 0.0
      %6892 = vmatprep.subr.mxu0 0.0
      %6893 = vmatpush1.msra.mxu0 0.0
      %6894 = vmatprep.subr.mxu0 0.0
      %6895 = vmatpush1.msra.mxu0 0.0
      %6896 = vmatprep.subr.mxu0 0.0
      %6897 = vmatpush1.msra.mxu0 0.0
      %6898 = vmatprep.subr.mxu0 0.0
      %6899 = vmatpush1.msra.mxu0 0.0
      %6900 = vmatprep.subr.mxu0 0.0
      %6901 = vmatpush1.msra.mxu0 0.0
      %6902 = vmatprep.subr.mxu0 0.0
      %6903 = vmatpush1.msra.mxu0 0.0
      %6904 = vmatprep.subr.mxu0 0.0
      %6905 = vmatpush1.msra.mxu0 0.0
      %6906 = vmatprep.subr.mxu0 0.0
      %6907 = vmatpush1.msra.mxu0 0.0
      %6908 = vmatprep.subr.mxu0 0.0
      %6909 = vmatpush1.msra.mxu0 0.0
      %6910 = vmatprep.subr.mxu0 0.0
      %6911 = vmatpush1.msra.mxu0 0.0
      %6912 = vmatprep.subr.mxu0 0.0
      %6913 = vmatpush1.msra.mxu0 0.0
      %6914 = vmatprep.subr.mxu0 0.0
      %6915 = vmatpush1.msra.mxu0 0.0
      %6916 = vmatprep.subr.mxu0 0.0
      %6917 = vmatpush1.msra.mxu0 0.0
      %6918 = vmatprep.subr.mxu0 0.0
      %6919 = vmatpush1.msra.mxu0 0.0
      %6920 = vmatprep.subr.mxu0 0.0
      %6921 = vmatpush1.msra.mxu0 0.0
      %6922 = vmatprep.subr.mxu0 0.0
      %6923 = vmatpush1.msra.mxu0 0.0
      %6924 = vmatprep.subr.mxu0 0.0
      %6925 = vmatpush1.msra.mxu0 0.0
      %6926 = vmatprep.subr.mxu0 0.0
      %6927 = vmatpush1.msra.mxu0 0.0
      %6928 = vmatprep.subr.mxu0 0.0
      %6929 = vmatpush1.msra.mxu0 0.0
      %6930 = vmatprep.subr.mxu0 0.0
      %6931 = vmatpush1.msra.mxu0 0.0
      %6932 = vmatprep.subr.mxu0 0.0
      %6933 = vmatpush1.msra.mxu0 0.0
      %6934 = vmatprep.subr.mxu0 0.0
      %6935 = vmatpush1.msra.mxu0 0.0
      %6936 = vmatprep.mubr.f32.mxu0 0.0
      %6937 = vmatmul.mubr.f32.gmra.mrb[0].mxu0 %v6861
      %v6938 = vpop.f32.mrb[0].mxu0
      %v6939 = vadd.f32 0.0, %v6938
      %v6940 = vpop.f32.mrb[0].mxu0
      %6941 = vmatprep.mubr.f32.mxu0 0.0
      %6942 = vmatmul.mubr.f32.gmra.mrb[0].mxu0 %v6864
      %v6943 = vpop.f32.mrb[0].mxu0
      %v6944 = vadd.f32 0.0, %v6943
      %v6945 = vpop.f32.mrb[0].mxu0
      %6946 = vmatprep.mubr.f32.mxu0 0.0
      %6947 = vmatmul.mubr.f32.gmra.mrb[0].mxu0 %v6867
      %v6948 = vpop.f32.mrb[0].mxu0
      %v6949 = vadd.f32 0.0, %v6948
      %v6950 = vpop.f32.mrb[0].mxu0
      %6951 = vmatprep.mubr.f32.mxu0 0.0
      %6952 = vmatmul.mubr.f32.gmra.mrb[0].mxu0 %v6870
      %v6953 = vpop.f32.mrb[0].mxu0
      %v6954 = vadd.f32 0.0, %v6953
      %v6955 = vpop.f32.mrb[0].mxu0
      %6956 = vdwg.mxu0
      %v6957 = vadd.f32 %v6588, %v6939
      %v6958 = vadd.f32 %v6593, %v6944
      %v6959 = vadd.f32 %v6598, %v6949
      %v6960 = vadd.f32 %v6603, %v6954
      %6961 = vrot.lane.b32.xlu0 %v5792, 32
      %v6962 = vpop.permute.xlu0 %6961
      %6963 = vrot.lane.b32.xlu0 %v5797, 32
      %v6964 = vpop.permute.xlu0 %6963
      %6965 = vrot.lane.b32.xlu0 %v5802, 32
      %v6966 = vpop.permute.xlu0 %6965
      %6967 = vrot.lane.b32.xlu0 %v5807, 32
      %v6968 = vpop.permute.xlu0 %6967
      %6973 = vxpose.xlu0.b32.start [1/16] %v6962, 128
      %6974 = vxpose.xlu0.b32.cont [2/16] %v6964, 128
      %6975 = vxpose.xlu0.b32.cont [3/16] %v6966, 128
      %6976 = vxpose.xlu0.b32.cont [4/16] %v6968, 128
      %6977 = vxpose.xlu0.b32.cont [5/16] 0.0, 128
      %6978 = vxpose.xlu0.b32.cont [6/16] 0.0, 128
      %6979 = vxpose.xlu0.b32.cont [7/16] 0.0, 128
      %6980 = vxpose.xlu0.b32.cont [8/16] 0.0, 128
      %6981 = vxpose.xlu0.b32.cont [9/16] 0.0, 128
      %6982 = vxpose.xlu0.b32.cont [10/16] 0.0, 128
      %6983 = vxpose.xlu0.b32.cont [11/16] 0.0, 128
      %6984 = vxpose.xlu0.b32.cont [12/16] 0.0, 128
      %6985 = vxpose.xlu0.b32.cont [13/16] 0.0, 128
      %6986 = vxpose.xlu0.b32.cont [14/16] 0.0, 128
      %6987 = vxpose.xlu0.b32.cont [15/16] 0.0, 128
      %6988 = vxpose.xlu0.b32.end [16/16] 0.0, 128
      %v6989 = vpop.trf.xlu0
      %v6990 = vpop.trf.xlu0
      %v6991 = vpop.trf.xlu0
      %v6992 = vpop.trf.xlu0
      %v6993 = vpop.trf.xlu0
      %v6994 = vpop.trf.xlu0
      %v6995 = vpop.trf.xlu0
      %v6996 = vpop.trf.xlu0
      %v6997 = vpop.trf.xlu0
      %v6998 = vpop.trf.xlu0
      %v6999 = vpop.trf.xlu0
      %v7000 = vpop.trf.xlu0
      %v7001 = vpop.trf.xlu0
      %v7002 = vpop.trf.xlu0
      %v7003 = vpop.trf.xlu0
      %v7004 = vpop.trf.xlu0
      %7005 = vrot.lane.b32.xlu0 %v5889, 32
      %v7006 = vpop.permute.xlu0 %7005
      %7007 = vrot.lane.b32.xlu0 %v5894, 32
      %v7008 = vpop.permute.xlu0 %7007
      %7009 = vrot.lane.b32.xlu0 %v5899, 32
      %v7010 = vpop.permute.xlu0 %7009
      %7011 = vrot.lane.b32.xlu0 %v5904, 32
      %v7012 = vpop.permute.xlu0 %7011
      %v7018 = vsel %vm1324, %v6989, 0
      %v7021 = vsel %vm1324, %v6990, 0
      %v7024 = vsel %vm1324, %v6991, 0
      %v7027 = vsel %vm1324, %v6992, 0
      %7029 = vmatprep.subr.mxu0 0.0
      %7030 = vmatpush1.msra.mxu0 %v7006
      %7031 = vmatprep.subr.mxu0 0.0
      %7032 = vmatpush1.msra.mxu0 %v7008
      %7033 = vmatprep.subr.mxu0 0.0
      %7034 = vmatpush1.msra.mxu0 %v7010
      %7035 = vmatprep.subr.mxu0 0.0
      %7036 = vmatpush1.msra.mxu0 %v7012
      %7037 = vmatprep.subr.mxu0 0.0
      %7038 = vmatpush1.msra.mxu0 0.0
      %7039 = vmatprep.subr.mxu0 0.0
      %7040 = vmatpush1.msra.mxu0 0.0
      %7041 = vmatprep.subr.mxu0 0.0
      %7042 = vmatpush1.msra.mxu0 0.0
      %7043 = vmatprep.subr.mxu0 0.0
      %7044 = vmatpush1.msra.mxu0 0.0
      %7045 = vmatprep.subr.mxu0 0.0
      %7046 = vmatpush1.msra.mxu0 0.0
      %7047 = vmatprep.subr.mxu0 0.0
      %7048 = vmatpush1.msra.mxu0 0.0
      %7049 = vmatprep.subr.mxu0 0.0
      %7050 = vmatpush1.msra.mxu0 0.0
      %7051 = vmatprep.subr.mxu0 0.0
      %7052 = vmatpush1.msra.mxu0 0.0
      %7053 = vmatprep.subr.mxu0 0.0
      %7054 = vmatpush1.msra.mxu0 0.0
      %7055 = vmatprep.subr.mxu0 0.0
      %7056 = vmatpush1.msra.mxu0 0.0
      %7057 = vmatprep.subr.mxu0 0.0
      %7058 = vmatpush1.msra.mxu0 0.0
      %7059 = vmatprep.subr.mxu0 0.0
      %7060 = vmatpush1.msra.mxu0 0.0
      %7061 = vmatprep.subr.mxu0 0.0
      %7062 = vmatpush1.msra.mxu0 0.0
      %7063 = vmatprep.subr.mxu0 0.0
      %7064 = vmatpush1.msra.mxu0 0.0
      %7065 = vmatprep.subr.mxu0 0.0
      %7066 = vmatpush1.msra.mxu0 0.0
      %7067 = vmatprep.subr.mxu0 0.0
      %7068 = vmatpush1.msra.mxu0 0.0
      %7069 = vmatprep.subr.mxu0 0.0
      %7070 = vmatpush1.msra.mxu0 0.0
      %7071 = vmatprep.subr.mxu0 0.0
      %7072 = vmatpush1.msra.mxu0 0.0
      %7073 = vmatprep.subr.mxu0 0.0
      %7074 = vmatpush1.msra.mxu0 0.0
      %7075 = vmatprep.subr.mxu0 0.0
      %7076 = vmatpush1.msra.mxu0 0.0
      %7077 = vmatprep.subr.mxu0 0.0
      %7078 = vmatpush1.msra.mxu0 0.0
      %7079 = vmatprep.subr.mxu0 0.0
      %7080 = vmatpush1.msra.mxu0 0.0
      %7081 = vmatprep.subr.mxu0 0.0
      %7082 = vmatpush1.msra.mxu0 0.0
      %7083 = vmatprep.subr.mxu0 0.0
      %7084 = vmatpush1.msra.mxu0 0.0
      %7085 = vmatprep.subr.mxu0 0.0
      %7086 = vmatpush1.msra.mxu0 0.0
      %7087 = vmatprep.subr.mxu0 0.0
      %7088 = vmatpush1.msra.mxu0 0.0
      %7089 = vmatprep.subr.mxu0 0.0
      %7090 = vmatpush1.msra.mxu0 0.0
      %7091 = vmatprep.subr.mxu0 0.0
      %7092 = vmatpush1.msra.mxu0 0.0
      %7093 = vmatprep.mubr.f32.mxu0 0.0
      %7094 = vmatmul.mubr.f32.gmra.mrb[0].mxu0 %v7018
      %v7095 = vpop.f32.mrb[0].mxu0
      %v7096 = vadd.f32 0.0, %v7095
      %v7097 = vpop.f32.mrb[0].mxu0
      %7098 = vmatprep.mubr.f32.mxu0 0.0
      %7099 = vmatmul.mubr.f32.gmra.mrb[0].mxu0 %v7021
      %v7100 = vpop.f32.mrb[0].mxu0
      %v7101 = vadd.f32 0.0, %v7100
      %v7102 = vpop.f32.mrb[0].mxu0
      %7103 = vmatprep.mubr.f32.mxu0 0.0
      %7104 = vmatmul.mubr.f32.gmra.mrb[0].mxu0 %v7024
      %v7105 = vpop.f32.mrb[0].mxu0
      %v7106 = vadd.f32 0.0, %v7105
      %v7107 = vpop.f32.mrb[0].mxu0
      %7108 = vmatprep.mubr.f32.mxu0 0.0
      %7109 = vmatmul.mubr.f32.gmra.mrb[0].mxu0 %v7027
      %v7110 = vpop.f32.mrb[0].mxu0
      %v7111 = vadd.f32 0.0, %v7110
      %v7112 = vpop.f32.mrb[0].mxu0
      %7113 = vdwg.mxu0
      %7114 = vrot.lane.b32.xlu0 %v5702, 32
      %v7115 = vpop.permute.xlu0 %7114
      %7116 = vrot.lane.b32.xlu0 %v5707, 32
      %v7117 = vpop.permute.xlu0 %7116
      %7118 = vrot.lane.b32.xlu0 %v5712, 32
      %v7119 = vpop.permute.xlu0 %7118
      %7120 = vrot.lane.b32.xlu0 %v5717, 32
      %v7121 = vpop.permute.xlu0 %7120
      %v7122 = vsel %vm1324, %v7115, 0
      %v7124 = vsel %vm1324, %v7117, 0
      %v7126 = vsel %vm1324, %v7119, 0
      %v7128 = vsel %vm1324, %v7121, 0
      %7130 = vmatprep.subr.mxu0 0.0
      %7131 = vmatpush1.msra.mxu0 %v7096
      %7132 = vmatprep.subr.mxu0 0.0
      %7133 = vmatpush1.msra.mxu0 %v7101
      %7134 = vmatprep.subr.mxu0 0.0
      %7135 = vmatpush1.msra.mxu0 %v7106
      %7136 = vmatprep.subr.mxu0 0.0
      %7137 = vmatpush1.msra.mxu0 %v7111
      %7138 = vmatprep.subr.mxu0 0.0
      %7139 = vmatpush1.msra.mxu0 0.0
      %7140 = vmatprep.subr.mxu0 0.0
      %7141 = vmatpush1.msra.mxu0 0.0
      %7142 = vmatprep.subr.mxu0 0.0
      %7143 = vmatpush1.msra.mxu0 0.0
      %7144 = vmatprep.subr.mxu0 0.0
      %7145 = vmatpush1.msra.mxu0 0.0
      %7146 = vmatprep.subr.mxu0 0.0
      %7147 = vmatpush1.msra.mxu0 0.0
      %7148 = vmatprep.subr.mxu0 0.0
      %7149 = vmatpush1.msra.mxu0 0.0
      %7150 = vmatprep.subr.mxu0 0.0
      %7151 = vmatpush1.msra.mxu0 0.0
      %7152 = vmatprep.subr.mxu0 0.0
      %7153 = vmatpush1.msra.mxu0 0.0
      %7154 = vmatprep.subr.mxu0 0.0
      %7155 = vmatpush1.msra.mxu0 0.0
      %7156 = vmatprep.subr.mxu0 0.0
      %7157 = vmatpush1.msra.mxu0 0.0
      %7158 = vmatprep.subr.mxu0 0.0
      %7159 = vmatpush1.msra.mxu0 0.0
      %7160 = vmatprep.subr.mxu0 0.0
      %7161 = vmatpush1.msra.mxu0 0.0
      %7162 = vmatprep.subr.mxu0 0.0
      %7163 = vmatpush1.msra.mxu0 0.0
      %7164 = vmatprep.subr.mxu0 0.0
      %7165 = vmatpush1.msra.mxu0 0.0
      %7166 = vmatprep.subr.mxu0 0.0
      %7167 = vmatpush1.msra.mxu0 0.0
      %7168 = vmatprep.subr.mxu0 0.0
      %7169 = vmatpush1.msra.mxu0 0.0
      %7170 = vmatprep.subr.mxu0 0.0
      %7171 = vmatpush1.msra.mxu0 0.0
      %7172 = vmatprep.subr.mxu0 0.0
      %7173 = vmatpush1.msra.mxu0 0.0
      %7174 = vmatprep.subr.mxu0 0.0
      %7175 = vmatpush1.msra.mxu0 0.0
      %7176 = vmatprep.subr.mxu0 0.0
      %7177 = vmatpush1.msra.mxu0 0.0
      %7178 = vmatprep.subr.mxu0 0.0
      %7179 = vmatpush1.msra.mxu0 0.0
      %7180 = vmatprep.subr.mxu0 0.0
      %7181 = vmatpush1.msra.mxu0 0.0
      %7182 = vmatprep.subr.mxu0 0.0
      %7183 = vmatpush1.msra.mxu0 0.0
      %7184 = vmatprep.subr.mxu0 0.0
      %7185 = vmatpush1.msra.mxu0 0.0
      %7186 = vmatprep.subr.mxu0 0.0
      %7187 = vmatpush1.msra.mxu0 0.0
      %7188 = vmatprep.subr.mxu0 0.0
      %7189 = vmatpush1.msra.mxu0 0.0
      %7190 = vmatprep.subr.mxu0 0.0
      %7191 = vmatpush1.msra.mxu0 0.0
      %7192 = vmatprep.subr.mxu0 0.0
      %7193 = vmatpush1.msra.mxu0 0.0
      %7194 = vmatprep.mubr.f32.mxu0 0.0
      %7195 = vmatmul.mubr.f32.gmra.mrb[0].mxu0 %v7122
      %v7196 = vpop.f32.mrb[0].mxu0
      %v7197 = vadd.f32 0.0, %v7196
      %v7198 = vpop.f32.mrb[0].mxu0
      %7199 = vmatprep.mubr.f32.mxu0 0.0
      %7200 = vmatmul.mubr.f32.gmra.mrb[0].mxu0 %v7124
      %v7201 = vpop.f32.mrb[0].mxu0
      %v7202 = vadd.f32 0.0, %v7201
      %v7203 = vpop.f32.mrb[0].mxu0
      %7204 = vmatprep.mubr.f32.mxu0 0.0
      %7205 = vmatmul.mubr.f32.gmra.mrb[0].mxu0 %v7126
      %v7206 = vpop.f32.mrb[0].mxu0
      %v7207 = vadd.f32 0.0, %v7206
      %v7208 = vpop.f32.mrb[0].mxu0
      %7209 = vmatprep.mubr.f32.mxu0 0.0
      %7210 = vmatmul.mubr.f32.gmra.mrb[0].mxu0 %v7128
      %v7211 = vpop.f32.mrb[0].mxu0
      %v7212 = vadd.f32 0.0, %v7211
      %v7213 = vpop.f32.mrb[0].mxu0
      %7214 = vdwg.mxu0
      %v7216 = vsel %vm1324, %v7197, 0
      %v7219 = vsel %vm1324, %v7202, 0
      %v7222 = vsel %vm1324, %v7207, 0
      %v7225 = vsel %vm1324, %v7212, 0
      %7227 = vmatprep.subr.mxu0 0.0
      %7228 = vmatpush1.msra.mxu0 %v5920
      %7229 = vmatprep.subr.mxu0 0.0
      %7230 = vmatpush1.msra.mxu0 %v5921
      %7231 = vmatprep.subr.mxu0 0.0
      %7232 = vmatpush1.msra.mxu0 %v5922
      %7233 = vmatprep.subr.mxu0 0.0
      %7234 = vmatpush1.msra.mxu0 %v5923
      %7235 = vmatprep.subr.mxu0 0.0
      %7236 = vmatpush1.msra.mxu0 0.0
      %7237 = vmatprep.subr.mxu0 0.0
      %7238 = vmatpush1.msra.mxu0 0.0
      %7239 = vmatprep.subr.mxu0 0.0
      %7240 = vmatpush1.msra.mxu0 0.0
      %7241 = vmatprep.subr.mxu0 0.0
      %7242 = vmatpush1.msra.mxu0 0.0
      %7243 = vmatprep.subr.mxu0 0.0
      %7244 = vmatpush1.msra.mxu0 0.0
      %7245 = vmatprep.subr.mxu0 0.0
      %7246 = vmatpush1.msra.mxu0 0.0
      %7247 = vmatprep.subr.mxu0 0.0
      %7248 = vmatpush1.msra.mxu0 0.0
      %7249 = vmatprep.subr.mxu0 0.0
      %7250 = vmatpush1.msra.mxu0 0.0
      %7251 = vmatprep.subr.mxu0 0.0
      %7252 = vmatpush1.msra.mxu0 0.0
      %7253 = vmatprep.subr.mxu0 0.0
      %7254 = vmatpush1.msra.mxu0 0.0
      %7255 = vmatprep.subr.mxu0 0.0
      %7256 = vmatpush1.msra.mxu0 0.0
      %7257 = vmatprep.subr.mxu0 0.0
      %7258 = vmatpush1.msra.mxu0 0.0
      %7259 = vmatprep.subr.mxu0 0.0
      %7260 = vmatpush1.msra.mxu0 0.0
      %7261 = vmatprep.subr.mxu0 0.0
      %7262 = vmatpush1.msra.mxu0 0.0
      %7263 = vmatprep.subr.mxu0 0.0
      %7264 = vmatpush1.msra.mxu0 0.0
      %7265 = vmatprep.subr.mxu0 0.0
      %7266 = vmatpush1.msra.mxu0 0.0
      %7267 = vmatprep.subr.mxu0 0.0
      %7268 = vmatpush1.msra.mxu0 0.0
      %7269 = vmatprep.subr.mxu0 0.0
      %7270 = vmatpush1.msra.mxu0 0.0
      %7271 = vmatprep.subr.mxu0 0.0
      %7272 = vmatpush1.msra.mxu0 0.0
      %7273 = vmatprep.subr.mxu0 0.0
      %7274 = vmatpush1.msra.mxu0 0.0
      %7275 = vmatprep.subr.mxu0 0.0
      %7276 = vmatpush1.msra.mxu0 0.0
      %7277 = vmatprep.subr.mxu0 0.0
      %7278 = vmatpush1.msra.mxu0 0.0
      %7279 = vmatprep.subr.mxu0 0.0
      %7280 = vmatpush1.msra.mxu0 0.0
      %7281 = vmatprep.subr.mxu0 0.0
      %7282 = vmatpush1.msra.mxu0 0.0
      %7283 = vmatprep.subr.mxu0 0.0
      %7284 = vmatpush1.msra.mxu0 0.0
      %7285 = vmatprep.subr.mxu0 0.0
      %7286 = vmatpush1.msra.mxu0 0.0
      %7287 = vmatprep.subr.mxu0 0.0
      %7288 = vmatpush1.msra.mxu0 0.0
      %7289 = vmatprep.subr.mxu0 0.0
      %7290 = vmatpush1.msra.mxu0 0.0
      %7291 = vmatprep.mubr.f32.mxu0 0.0
      %7292 = vmatmul.mubr.f32.gmra.mrb[0].mxu0 %v7216
      %v7293 = vpop.f32.mrb[0].mxu0
      %v7294 = vadd.f32 0.0, %v7293
      %v7295 = vpop.f32.mrb[0].mxu0
      %7296 = vmatprep.mubr.f32.mxu0 0.0
      %7297 = vmatmul.mubr.f32.gmra.mrb[0].mxu0 %v7219
      %v7298 = vpop.f32.mrb[0].mxu0
      %v7299 = vadd.f32 0.0, %v7298
      %v7300 = vpop.f32.mrb[0].mxu0
      %7301 = vmatprep.mubr.f32.mxu0 0.0
      %7302 = vmatmul.mubr.f32.gmra.mrb[0].mxu0 %v7222
      %v7303 = vpop.f32.mrb[0].mxu0
      %v7304 = vadd.f32 0.0, %v7303
      %v7305 = vpop.f32.mrb[0].mxu0
      %7306 = vmatprep.mubr.f32.mxu0 0.0
      %7307 = vmatmul.mubr.f32.gmra.mrb[0].mxu0 %v7225
      %v7308 = vpop.f32.mrb[0].mxu0
      %v7309 = vadd.f32 0.0, %v7308
      %v7310 = vpop.f32.mrb[0].mxu0
      %7311 = vdwg.mxu0
      %v7312 = vadd.f32 %v6957, %v7294
      %v7313 = vadd.f32 %v6958, %v7299
      %v7314 = vadd.f32 %v6959, %v7304
      %v7315 = vadd.f32 %v6960, %v7309
      %v7316 = vmul.f32 %v7312, 0.03125
      %v7317 = vmul.f32 %v7313, 0.03125
      %v7318 = vmul.f32 %v7314, 0.03125
      %v7319 = vmul.f32 %v7315, 0.03125
      %s7320 = scalar_lea.vmem %s35, 1
      %v7321 = vld [vmem:[%s7320] sm:$0x1]
      %v7323 = vlaneseq
      %v7324 = vshrl.u32 %v7323, 7
      %v7325 = vsub.s32 0, %v7324
      %v7326 = vrot.slane %v7321, %v7325
      %v7328 = vadd.f32 %v7316, %v7326
      %v7329 = vadd.f32 %v7317, %v7326
      %v7330 = vadd.f32 %v7318, %v7326
      %v7331 = vadd.f32 %v7319, %v7326
      %s7332 = scalar_lea.vmem %s37, 32
      %v7333 = vld [vmem:[%s7332] sm:$0xff]
      %v7334 = vld [vmem:[%s7332 + $0x8] sm:$0xff]
      %v7335 = vld [vmem:[%s7332 + $0x10] sm:$0xff]
      %v7336 = vld [vmem:[%s7332 + $0x18] sm:$0xff]
      %v7338 = vlaneseq
      %v7339 = vshrl.u32 %v7338, 7
      %v7340 = vsub.s32 0, %v7339
      %v7341 = vrot.slane %v1055, %v7340
      %v7343 = vmul.f32 %v7341, %v7333
      %v7344 = vmul.f32 %v7341, %v7334
      %v7345 = vmul.f32 %v7341, %v7335
      %v7346 = vmul.f32 %v7341, %v7336
      %s7347 = scalar_lea.vmem %s39, 32
      %v7348 = vld [vmem:[%s7347] sm:$0xff]
      %v7349 = vld [vmem:[%s7347 + $0x8] sm:$0xff]
      %v7350 = vld [vmem:[%s7347 + $0x10] sm:$0xff]
      %v7351 = vld [vmem:[%s7347 + $0x18] sm:$0xff]
      %v7352 = vadd.f32 %v7343, %v7348
      %v7353 = vadd.f32 %v7344, %v7349
      %v7354 = vadd.f32 %v7345, %v7350
      %v7355 = vadd.f32 %v7346, %v7351
      %s7356 = scalar_lea.vmem %s41, 40
      %v7357 = vld [vmem:[%s7356] sm:$0xff]
      %v7358 = vld [vmem:[%s7356 + $0x8] sm:$0xff]
      %v7359 = vld [vmem:[%s7356 + $0x10] sm:$0xff]
      %v7360 = vld [vmem:[%s7356 + $0x18] sm:$0xff]
      %v7361 = vld [vmem:[%s7356 + $0x20] sm:$0x1]
      %7363 = vset.pattern.permute.xlu0 0
      %7364 = vperm.xlu0 %7363, %v7352
      %v7365 = vpop.permute.xlu0 %7364
      %7368 = vset.pattern.permute.xlu0 0
      %7369 = vperm.xlu0 %7368, %v7353
      %v7370 = vpop.permute.xlu0 %7369
      %7373 = vset.pattern.permute.xlu0 0
      %7374 = vperm.xlu0 %7373, %v7354
      %v7375 = vpop.permute.xlu0 %7374
      %7378 = vset.pattern.permute.xlu0 0
      %7379 = vperm.xlu0 %7378, %v7355
      %v7380 = vpop.permute.xlu0 %7379
      %v7382 = vlaneseq
      %v7383 = vshrl.u32 %v7382, 7
      %v7384 = vsub.s32 0, %v7383
      %v7385 = vrot.slane %v7361, %v7384
      %v7386 = vmul.f32 %v7365, %v7385
      %v7387 = vmul.f32 %v7370, %v7385
      %v7388 = vmul.f32 %v7375, %v7385
      %v7389 = vmul.f32 %v7380, %v7385
      %7390 = vxpose.xlu0.b32.start [1/16] %v7328, 128
      %7391 = vxpose.xlu0.b32.cont [2/16] %v7329, 128
      %7392 = vxpose.xlu0.b32.cont [3/16] %v7330, 128
      %7393 = vxpose.xlu0.b32.cont [4/16] %v7331, 128
      %7394 = vxpose.xlu0.b32.cont [5/16] 0.0, 128
      %7395 = vxpose.xlu0.b32.cont [6/16] 0.0, 128
      %7396 = vxpose.xlu0.b32.cont [7/16] 0.0, 128
      %7397 = vxpose.xlu0.b32.cont [8/16] 0.0, 128
      %7398 = vxpose.xlu0.b32.cont [9/16] 0.0, 128
      %7399 = vxpose.xlu0.b32.cont [10/16] 0.0, 128
      %7400 = vxpose.xlu0.b32.cont [11/16] 0.0, 128
      %7401 = vxpose.xlu0.b32.cont [12/16] 0.0, 128
      %7402 = vxpose.xlu0.b32.cont [13/16] 0.0, 128
      %7403 = vxpose.xlu0.b32.cont [14/16] 0.0, 128
      %7404 = vxpose.xlu0.b32.cont [15/16] 0.0, 128
      %7405 = vxpose.xlu0.b32.end [16/16] 0.0, 128
      %v7406 = vpop.trf.xlu0
      %v7407 = vpop.trf.xlu0
      %v7408 = vpop.trf.xlu0
      %v7409 = vpop.trf.xlu0
      %v7410 = vpop.trf.xlu0
      %v7411 = vpop.trf.xlu0
      %v7412 = vpop.trf.xlu0
      %v7413 = vpop.trf.xlu0
      %v7414 = vpop.trf.xlu0
      %v7415 = vpop.trf.xlu0
      %v7416 = vpop.trf.xlu0
      %v7417 = vpop.trf.xlu0
      %v7418 = vpop.trf.xlu0
      %v7419 = vpop.trf.xlu0
      %v7420 = vpop.trf.xlu0
      %v7421 = vpop.trf.xlu0
      %v7423 = vsel %vm1324, %v7406, 0
      %v7426 = vsel %vm1324, %v7407, 0
      %v7429 = vsel %vm1324, %v7408, 0
      %v7432 = vsel %vm1324, %v7409, 0
      %7434 = vmatprep.subr.mxu0 0.0
      %7435 = vmatpush1.msra.mxu0 %v7357
      %7436 = vmatprep.subr.mxu0 0.0
      %7437 = vmatpush1.msra.mxu0 %v7358
      %7438 = vmatprep.subr.mxu0 0.0
      %7439 = vmatpush1.msra.mxu0 %v7359
      %7440 = vmatprep.subr.mxu0 0.0
      %7441 = vmatpush1.msra.mxu0 %v7360
      %7442 = vmatprep.subr.mxu0 0.0
      %7443 = vmatpush1.msra.mxu0 0.0
      %7444 = vmatprep.subr.mxu0 0.0
      %7445 = vmatpush1.msra.mxu0 0.0
      %7446 = vmatprep.subr.mxu0 0.0
      %7447 = vmatpush1.msra.mxu0 0.0
      %7448 = vmatprep.subr.mxu0 0.0
      %7449 = vmatpush1.msra.mxu0 0.0
      %7450 = vmatprep.subr.mxu0 0.0
      %7451 = vmatpush1.msra.mxu0 0.0
      %7452 = vmatprep.subr.mxu0 0.0
      %7453 = vmatpush1.msra.mxu0 0.0
      %7454 = vmatprep.subr.mxu0 0.0
      %7455 = vmatpush1.msra.mxu0 0.0
      %7456 = vmatprep.subr.mxu0 0.0
      %7457 = vmatpush1.msra.mxu0 0.0
      %7458 = vmatprep.subr.mxu0 0.0
      %7459 = vmatpush1.msra.mxu0 0.0
      %7460 = vmatprep.subr.mxu0 0.0
      %7461 = vmatpush1.msra.mxu0 0.0
      %7462 = vmatprep.subr.mxu0 0.0
      %7463 = vmatpush1.msra.mxu0 0.0
      %7464 = vmatprep.subr.mxu0 0.0
      %7465 = vmatpush1.msra.mxu0 0.0
      %7466 = vmatprep.subr.mxu0 0.0
      %7467 = vmatpush1.msra.mxu0 0.0
      %7468 = vmatprep.subr.mxu0 0.0
      %7469 = vmatpush1.msra.mxu0 0.0
      %7470 = vmatprep.subr.mxu0 0.0
      %7471 = vmatpush1.msra.mxu0 0.0
      %7472 = vmatprep.subr.mxu0 0.0
      %7473 = vmatpush1.msra.mxu0 0.0
      %7474 = vmatprep.subr.mxu0 0.0
      %7475 = vmatpush1.msra.mxu0 0.0
      %7476 = vmatprep.subr.mxu0 0.0
      %7477 = vmatpush1.msra.mxu0 0.0
      %7478 = vmatprep.subr.mxu0 0.0
      %7479 = vmatpush1.msra.mxu0 0.0
      %7480 = vmatprep.subr.mxu0 0.0
      %7481 = vmatpush1.msra.mxu0 0.0
      %7482 = vmatprep.subr.mxu0 0.0
      %7483 = vmatpush1.msra.mxu0 0.0
      %7484 = vmatprep.subr.mxu0 0.0
      %7485 = vmatpush1.msra.mxu0 0.0
      %7486 = vmatprep.subr.mxu0 0.0
      %7487 = vmatpush1.msra.mxu0 0.0
      %7488 = vmatprep.subr.mxu0 0.0
      %7489 = vmatpush1.msra.mxu0 0.0
      %7490 = vmatprep.subr.mxu0 0.0
      %7491 = vmatpush1.msra.mxu0 0.0
      %7492 = vmatprep.subr.mxu0 0.0
      %7493 = vmatpush1.msra.mxu0 0.0
      %7494 = vmatprep.subr.mxu0 0.0
      %7495 = vmatpush1.msra.mxu0 0.0
      %7496 = vmatprep.subr.mxu0 0.0
      %7497 = vmatpush1.msra.mxu0 0.0
      %7498 = vmatprep.mubr.f32.mxu0 0.0
      %7499 = vmatmul.mubr.f32.gmra.mrb[0].mxu0 %v7423
      %v7500 = vpop.f32.mrb[0].mxu0
      %v7501 = vadd.f32 %v7386, %v7500
      %v7502 = vpop.f32.mrb[0].mxu0
      %7503 = vmatprep.mubr.f32.mxu0 0.0
      %7504 = vmatmul.mubr.f32.gmra.mrb[0].mxu0 %v7426
      %v7505 = vpop.f32.mrb[0].mxu0
      %v7506 = vadd.f32 %v7387, %v7505
      %v7507 = vpop.f32.mrb[0].mxu0
      %7508 = vmatprep.mubr.f32.mxu0 0.0
      %7509 = vmatmul.mubr.f32.gmra.mrb[0].mxu0 %v7429
      %v7510 = vpop.f32.mrb[0].mxu0
      %v7511 = vadd.f32 %v7388, %v7510
      %v7512 = vpop.f32.mrb[0].mxu0
      %7513 = vmatprep.mubr.f32.mxu0 0.0
      %7514 = vmatmul.mubr.f32.gmra.mrb[0].mxu0 %v7432
      %v7515 = vpop.f32.mrb[0].mxu0
      %v7516 = vadd.f32 %v7389, %v7515
      %v7517 = vpop.f32.mrb[0].mxu0
      %7518 = vdwg.mxu0
      %s7519 = scalar_lea.vmem %s43, 1
      %v7520 = vld [vmem:[%s7519] sm:$0x1]
      %v7522 = vlaneseq
      %v7523 = vshrl.u32 %v7522, 7
      %v7524 = vsub.s32 0, %v7523
      %v7525 = vrot.slane %v7520, %v7524
      %v7527 = vadd.f32 %v7501, %v7525
      %v7528 = vadd.f32 %v7506, %v7525
      %v7529 = vadd.f32 %v7511, %v7525
      %v7530 = vadd.f32 %v7516, %v7525
      %v7531 = vmul.f32 %v7527, 0.70710677
      %v7532 = vmul.f32 %v7528, 0.70710677
      %v7533 = vmul.f32 %v7529, 0.70710677
      %v7534 = vmul.f32 %v7530, 0.70710677
      %vm7535 = vcmp.ge.f32.partialorder %v7531, 0.0
      %vm7536 = vcmp.ge.f32.partialorder %v7532, 0.0
      %vm7537 = vcmp.ge.f32.partialorder %v7533, 0.0
      %vm7538 = vcmp.ge.f32.partialorder %v7534, 0.0
      %v7539 = vsel %vm7535, 1.0, -1.0
      %v7540 = vsel %vm7536, 1.0, -1.0
      %v7541 = vsel %vm7537, 1.0, -1.0
      %v7542 = vsel %vm7538, 1.0, -1.0
      %v7543 = vand.u32 2147483647, %v7531
      %v7544 = vand.u32 2147483647, %v7532
      %v7545 = vand.u32 2147483647, %v7533
      %v7546 = vand.u32 2147483647, %v7534
      %v7547 = vmul.f32 %v7543, 0.3275911
      %v7548 = vmul.f32 %v7544, 0.3275911
      %v7549 = vmul.f32 %v7545, 0.3275911
      %v7550 = vmul.f32 %v7546, 0.3275911
      %v7551 = vadd.f32 %v7547, 1.0
      %v7552 = vadd.f32 %v7548, 1.0
      %v7553 = vadd.f32 %v7549, 1.0
      %v7554 = vadd.f32 %v7550, 1.0
      %v7555 = vrcp.pop %v7551
      %v7556 = vmul.f32 1.0, %v7555
      %v7557 = vrcp.pop %v7552
      %v7558 = vmul.f32 1.0, %v7557
      %v7559 = vrcp.pop %v7553
      %v7560 = vmul.f32 1.0, %v7559
      %v7561 = vrcp.pop %v7554
      %v7562 = vmul.f32 1.0, %v7561
      %v7563 = vmul.f32 %v7556, 1.0614054
      %v7564 = vmul.f32 %v7558, 1.0614054
      %v7565 = vmul.f32 %v7560, 1.0614054
      %v7566 = vmul.f32 %v7562, 1.0614054
      %v7567 = vadd.f32 %v7563, -1.4531521
      %v7568 = vadd.f32 %v7564, -1.4531521
      %v7569 = vadd.f32 %v7565, -1.4531521
      %v7570 = vadd.f32 %v7566, -1.4531521
      %v7571 = vmul.f32 %v7567, %v7556
      %v7572 = vmul.f32 %v7568, %v7558
      %v7573 = vmul.f32 %v7569, %v7560
      %v7574 = vmul.f32 %v7570, %v7562
      %v7575 = vadd.f32 %v7571, 1.4214138
      %v7576 = vadd.f32 %v7572, 1.4214138
      %v7577 = vadd.f32 %v7573, 1.4214138
      %v7578 = vadd.f32 %v7574, 1.4214138
      %v7579 = vmul.f32 %v7575, %v7556
      %v7580 = vmul.f32 %v7576, %v7558
      %v7581 = vmul.f32 %v7577, %v7560
      %v7582 = vmul.f32 %v7578, %v7562
      %v7583 = vadd.f32 %v7579, -0.28449672
      %v7584 = vadd.f32 %v7580, -0.28449672
      %v7585 = vadd.f32 %v7581, -0.28449672
      %v7586 = vadd.f32 %v7582, -0.28449672
      %v7587 = vmul.f32 %v7583, %v7556
      %v7588 = vmul.f32 %v7584, %v7558
      %v7589 = vmul.f32 %v7585, %v7560
      %v7590 = vmul.f32 %v7586, %v7562
      %v7591 = vadd.f32 %v7587, 0.2548296
      %v7592 = vadd.f32 %v7588, 0.2548296
      %v7593 = vadd.f32 %v7589, 0.2548296
      %v7594 = vadd.f32 %v7590, 0.2548296
      %v7595 = vmul.f32 %v7591, %v7556
      %v7596 = vmul.f32 %v7592, %v7558
      %v7597 = vmul.f32 %v7593, %v7560
      %v7598 = vmul.f32 %v7594, %v7562
      %v7599 = vsub.f32 0.0, %v7543
      %v7600 = vsub.f32 0.0, %v7544
      %v7601 = vsub.f32 0.0, %v7545
      %v7602 = vsub.f32 0.0, %v7546
      %v7603 = vmul.f32 %v7599, %v7543
      %v7604 = vmul.f32 %v7600, %v7544
      %v7605 = vmul.f32 %v7601, %v7545
      %v7606 = vmul.f32 %v7602, %v7546
      %v7607 = vmul.f32 %v7603, 1.442695
      %v7608 = vpow.pop %v7607
      %v7609 = vmul.f32 %v7604, 1.442695
      %v7610 = vpow.pop %v7609
      %v7611 = vmul.f32 %v7605, 1.442695
      %v7612 = vpow.pop %v7611
      %v7613 = vmul.f32 %v7606, 1.442695
      %v7614 = vpow.pop %v7613
      %v7615 = vmul.f32 %v7595, %v7608
      %v7616 = vmul.f32 %v7596, %v7610
      %v7617 = vmul.f32 %v7597, %v7612
      %v7618 = vmul.f32 %v7598, %v7614
      %v7619 = vsub.f32 1.0, %v7615
      %v7620 = vsub.f32 1.0, %v7616
      %v7621 = vsub.f32 1.0, %v7617
      %v7622 = vsub.f32 1.0, %v7618
      %v7623 = vmul.f32 %v7539, %v7619
      %v7624 = vmul.f32 %v7540, %v7620
      %v7625 = vmul.f32 %v7541, %v7621
      %v7626 = vmul.f32 %v7542, %v7622
      %v7627 = vmul.f32 %v7527, 0.5
      %v7628 = vmul.f32 %v7528, 0.5
      %v7629 = vmul.f32 %v7529, 0.5
      %v7630 = vmul.f32 %v7530, 0.5
      %v7631 = vadd.f32 %v7623, 1.0
      %v7632 = vadd.f32 %v7624, 1.0
      %v7633 = vadd.f32 %v7625, 1.0
      %v7634 = vadd.f32 %v7626, 1.0
      %v7635 = vmul.f32 %v7627, %v7631
      %v7636 = vmul.f32 %v7628, %v7632
      %v7637 = vmul.f32 %v7629, %v7633
      %v7638 = vmul.f32 %v7630, %v7634
      %s7639 = scalar_lea.vmem %s45, 32
      %v7640 = vld [vmem:[%s7639] sm:$0xff]
      %v7641 = vld [vmem:[%s7639 + $0x8] sm:$0xff]
      %v7642 = vld [vmem:[%s7639 + $0x10] sm:$0xff]
      %v7643 = vld [vmem:[%s7639 + $0x18] sm:$0xff]
      %s7644 = scalar_lea.vmem %s47, 1
      %v7645 = vld [vmem:[%s7644] sm:$0x1]
      %v7647 = vlaneseq
      %v7648 = vshrl.u32 %v7647, 7
      %v7649 = vsub.s32 0, %v7648
      %v7650 = vrot.slane %v7645, %v7649
      %v7653 = vsel %vm1324, %v7635, 0
      %v7656 = vsel %vm1324, %v7636, 0
      %v7659 = vsel %vm1324, %v7637, 0
      %v7662 = vsel %vm1324, %v7638, 0
      %7664 = vmatprep.subr.mxu0 0.0
      %7665 = vmatpush1.msra.mxu0 %v7640
      %7666 = vmatprep.subr.mxu0 0.0
      %7667 = vmatpush1.msra.mxu0 %v7641
      %7668 = vmatprep.subr.mxu0 0.0
      %7669 = vmatpush1.msra.mxu0 %v7642
      %7670 = vmatprep.subr.mxu0 0.0
      %7671 = vmatpush1.msra.mxu0 %v7643
      %7672 = vmatprep.subr.mxu0 0.0
      %7673 = vmatpush1.msra.mxu0 0.0
      %7674 = vmatprep.subr.mxu0 0.0
      %7675 = vmatpush1.msra.mxu0 0.0
      %7676 = vmatprep.subr.mxu0 0.0
      %7677 = vmatpush1.msra.mxu0 0.0
      %7678 = vmatprep.subr.mxu0 0.0
      %7679 = vmatpush1.msra.mxu0 0.0
      %7680 = vmatprep.subr.mxu0 0.0
      %7681 = vmatpush1.msra.mxu0 0.0
      %7682 = vmatprep.subr.mxu0 0.0
      %7683 = vmatpush1.msra.mxu0 0.0
      %7684 = vmatprep.subr.mxu0 0.0
      %7685 = vmatpush1.msra.mxu0 0.0
      %7686 = vmatprep.subr.mxu0 0.0
      %7687 = vmatpush1.msra.mxu0 0.0
      %7688 = vmatprep.subr.mxu0 0.0
      %7689 = vmatpush1.msra.mxu0 0.0
      %7690 = vmatprep.subr.mxu0 0.0
      %7691 = vmatpush1.msra.mxu0 0.0
      %7692 = vmatprep.subr.mxu0 0.0
      %7693 = vmatpush1.msra.mxu0 0.0
      %7694 = vmatprep.subr.mxu0 0.0
      %7695 = vmatpush1.msra.mxu0 0.0
      %7696 = vmatprep.subr.mxu0 0.0
      %7697 = vmatpush1.msra.mxu0 0.0
      %7698 = vmatprep.subr.mxu0 0.0
      %7699 = vmatpush1.msra.mxu0 0.0
      %7700 = vmatprep.subr.mxu0 0.0
      %7701 = vmatpush1.msra.mxu0 0.0
      %7702 = vmatprep.subr.mxu0 0.0
      %7703 = vmatpush1.msra.mxu0 0.0
      %7704 = vmatprep.subr.mxu0 0.0
      %7705 = vmatpush1.msra.mxu0 0.0
      %7706 = vmatprep.subr.mxu0 0.0
      %7707 = vmatpush1.msra.mxu0 0.0
      %7708 = vmatprep.subr.mxu0 0.0
      %7709 = vmatpush1.msra.mxu0 0.0
      %7710 = vmatprep.subr.mxu0 0.0
      %7711 = vmatpush1.msra.mxu0 0.0
      %7712 = vmatprep.subr.mxu0 0.0
      %7713 = vmatpush1.msra.mxu0 0.0
      %7714 = vmatprep.subr.mxu0 0.0
      %7715 = vmatpush1.msra.mxu0 0.0
      %7716 = vmatprep.subr.mxu0 0.0
      %7717 = vmatpush1.msra.mxu0 0.0
      %7718 = vmatprep.subr.mxu0 0.0
      %7719 = vmatpush1.msra.mxu0 0.0
      %7720 = vmatprep.subr.mxu0 0.0
      %7721 = vmatpush1.msra.mxu0 0.0
      %7722 = vmatprep.subr.mxu0 0.0
      %7723 = vmatpush1.msra.mxu0 0.0
      %7724 = vmatprep.subr.mxu0 0.0
      %7725 = vmatpush1.msra.mxu0 0.0
      %7726 = vmatprep.subr.mxu0 0.0
      %7727 = vmatpush1.msra.mxu0 0.0
      %7728 = vmatprep.mubr.f32.mxu0 0.0
      %7729 = vmatmul.mubr.f32.gmra.mrb[0].mxu0 %v7653
      %v7730 = vpop.f32.mrb[0].mxu0
      %v7731 = vadd.f32 %v7650, %v7730
      %v7732 = vpop.f32.mrb[0].mxu0
      %7733 = vmatprep.mubr.f32.mxu0 0.0
      %7734 = vmatmul.mubr.f32.gmra.mrb[0].mxu0 %v7656
      %v7735 = vpop.f32.mrb[0].mxu0
      %v7736 = vadd.f32 %v7650, %v7735
      %v7737 = vpop.f32.mrb[0].mxu0
      %7738 = vmatprep.mubr.f32.mxu0 0.0
      %7739 = vmatmul.mubr.f32.gmra.mrb[0].mxu0 %v7659
      %v7740 = vpop.f32.mrb[0].mxu0
      %v7741 = vadd.f32 %v7650, %v7740
      %v7742 = vpop.f32.mrb[0].mxu0
      %7743 = vmatprep.mubr.f32.mxu0 0.0
      %7744 = vmatmul.mubr.f32.gmra.mrb[0].mxu0 %v7662
      %v7745 = vpop.f32.mrb[0].mxu0
      %v7746 = vadd.f32 %v7650, %v7745
      %v7747 = vpop.f32.mrb[0].mxu0
      %7748 = vdwg.mxu0
      %v7749 = vmul.f32 %v7731, 0.70710677
      %v7750 = vmul.f32 %v7736, 0.70710677
      %v7751 = vmul.f32 %v7741, 0.70710677
      %v7752 = vmul.f32 %v7746, 0.70710677
      %vm7753 = vcmp.ge.f32.partialorder %v7749, 0.0
      %vm7754 = vcmp.ge.f32.partialorder %v7750, 0.0
      %vm7755 = vcmp.ge.f32.partialorder %v7751, 0.0
      %vm7756 = vcmp.ge.f32.partialorder %v7752, 0.0
      %v7757 = vsel %vm7753, 1.0, -1.0
      %v7758 = vsel %vm7754, 1.0, -1.0
      %v7759 = vsel %vm7755, 1.0, -1.0
      %v7760 = vsel %vm7756, 1.0, -1.0
      %v7761 = vand.u32 2147483647, %v7749
      %v7762 = vand.u32 2147483647, %v7750
      %v7763 = vand.u32 2147483647, %v7751
      %v7764 = vand.u32 2147483647, %v7752
      %v7765 = vmul.f32 %v7761, 0.3275911
      %v7766 = vmul.f32 %v7762, 0.3275911
      %v7767 = vmul.f32 %v7763, 0.3275911
      %v7768 = vmul.f32 %v7764, 0.3275911
      %v7769 = vadd.f32 %v7765, 1.0
      %v7770 = vadd.f32 %v7766, 1.0
      %v7771 = vadd.f32 %v7767, 1.0
      %v7772 = vadd.f32 %v7768, 1.0
      %v7773 = vrcp.pop %v7769
      %v7774 = vmul.f32 1.0, %v7773
      %v7775 = vrcp.pop %v7770
      %v7776 = vmul.f32 1.0, %v7775
      %v7777 = vrcp.pop %v7771
      %v7778 = vmul.f32 1.0, %v7777
      %v7779 = vrcp.pop %v7772
      %v7780 = vmul.f32 1.0, %v7779
      %v7781 = vmul.f32 %v7774, 1.0614054
      %v7782 = vmul.f32 %v7776, 1.0614054
      %v7783 = vmul.f32 %v7778, 1.0614054
      %v7784 = vmul.f32 %v7780, 1.0614054
      %v7785 = vadd.f32 %v7781, -1.4531521
      %v7786 = vadd.f32 %v7782, -1.4531521
      %v7787 = vadd.f32 %v7783, -1.4531521
      %v7788 = vadd.f32 %v7784, -1.4531521
      %v7789 = vmul.f32 %v7785, %v7774
      %v7790 = vmul.f32 %v7786, %v7776
      %v7791 = vmul.f32 %v7787, %v7778
      %v7792 = vmul.f32 %v7788, %v7780
      %v7793 = vadd.f32 %v7789, 1.4214138
      %v7794 = vadd.f32 %v7790, 1.4214138
      %v7795 = vadd.f32 %v7791, 1.4214138
      %v7796 = vadd.f32 %v7792, 1.4214138
      %v7797 = vmul.f32 %v7793, %v7774
      %v7798 = vmul.f32 %v7794, %v7776
      %v7799 = vmul.f32 %v7795, %v7778
      %v7800 = vmul.f32 %v7796, %v7780
      %v7801 = vadd.f32 %v7797, -0.28449672
      %v7802 = vadd.f32 %v7798, -0.28449672
      %v7803 = vadd.f32 %v7799, -0.28449672
      %v7804 = vadd.f32 %v7800, -0.28449672
      %v7805 = vmul.f32 %v7801, %v7774
      %v7806 = vmul.f32 %v7802, %v7776
      %v7807 = vmul.f32 %v7803, %v7778
      %v7808 = vmul.f32 %v7804, %v7780
      %v7809 = vadd.f32 %v7805, 0.2548296
      %v7810 = vadd.f32 %v7806, 0.2548296
      %v7811 = vadd.f32 %v7807, 0.2548296
      %v7812 = vadd.f32 %v7808, 0.2548296
      %v7813 = vmul.f32 %v7809, %v7774
      %v7814 = vmul.f32 %v7810, %v7776
      %v7815 = vmul.f32 %v7811, %v7778
      %v7816 = vmul.f32 %v7812, %v7780
      %v7817 = vsub.f32 0.0, %v7761
      %v7818 = vsub.f32 0.0, %v7762
      %v7819 = vsub.f32 0.0, %v7763
      %v7820 = vsub.f32 0.0, %v7764
      %v7821 = vmul.f32 %v7817, %v7761
      %v7822 = vmul.f32 %v7818, %v7762
      %v7823 = vmul.f32 %v7819, %v7763
      %v7824 = vmul.f32 %v7820, %v7764
      %v7825 = vmul.f32 %v7821, 1.442695
      %v7826 = vpow.pop %v7825
      %v7827 = vmul.f32 %v7822, 1.442695
      %v7828 = vpow.pop %v7827
      %v7829 = vmul.f32 %v7823, 1.442695
      %v7830 = vpow.pop %v7829
      %v7831 = vmul.f32 %v7824, 1.442695
      %v7832 = vpow.pop %v7831
      %v7833 = vmul.f32 %v7813, %v7826
      %v7834 = vmul.f32 %v7814, %v7828
      %v7835 = vmul.f32 %v7815, %v7830
      %v7836 = vmul.f32 %v7816, %v7832
      %v7837 = vsub.f32 1.0, %v7833
      %v7838 = vsub.f32 1.0, %v7834
      %v7839 = vsub.f32 1.0, %v7835
      %v7840 = vsub.f32 1.0, %v7836
      %v7841 = vmul.f32 %v7757, %v7837
      %v7842 = vmul.f32 %v7758, %v7838
      %v7843 = vmul.f32 %v7759, %v7839
      %v7844 = vmul.f32 %v7760, %v7840
      %v7845 = vmul.f32 %v7731, 0.5
      %v7846 = vmul.f32 %v7736, 0.5
      %v7847 = vmul.f32 %v7741, 0.5
      %v7848 = vmul.f32 %v7746, 0.5
      %v7849 = vadd.f32 %v7841, 1.0
      %v7850 = vadd.f32 %v7842, 1.0
      %v7851 = vadd.f32 %v7843, 1.0
      %v7852 = vadd.f32 %v7844, 1.0
      %v7853 = vmul.f32 %v7845, %v7849
      %v7854 = vmul.f32 %v7846, %v7850
      %v7855 = vmul.f32 %v7847, %v7851
      %v7856 = vmul.f32 %v7848, %v7852
      %s7857 = scalar_lea.vmem %s49, 32
      %v7858 = vld [vmem:[%s7857] sm:$0xff]
      %v7859 = vld [vmem:[%s7857 + $0x8] sm:$0xff]
      %v7860 = vld [vmem:[%s7857 + $0x10] sm:$0xff]
      %v7861 = vld [vmem:[%s7857 + $0x18] sm:$0xff]
      %s7862 = scalar_lea.vmem %s51, 32
      %v7863 = vld [vmem:[%s7862] sm:$0xff]
      %v7864 = vld [vmem:[%s7862 + $0x8] sm:$0xff]
      %v7865 = vld [vmem:[%s7862 + $0x10] sm:$0xff]
      %v7866 = vld [vmem:[%s7862 + $0x18] sm:$0xff]
      %7868 = vset.pattern.permute.xlu0 0
      %7869 = vperm.xlu0 %7868, %v7863
      %v7870 = vpop.permute.xlu0 %7869
      %7873 = vset.pattern.permute.xlu0 0
      %7874 = vperm.xlu0 %7873, %v7864
      %v7875 = vpop.permute.xlu0 %7874
      %7878 = vset.pattern.permute.xlu0 0
      %7879 = vperm.xlu0 %7878, %v7865
      %v7880 = vpop.permute.xlu0 %7879
      %7883 = vset.pattern.permute.xlu0 0
      %7884 = vperm.xlu0 %7883, %v7866
      %v7885 = vpop.permute.xlu0 %7884
      %v7888 = vsel %vm1324, %v7858, 0
      %v7891 = vsel %vm1324, %v7859, 0
      %v7894 = vsel %vm1324, %v7860, 0
      %v7897 = vsel %vm1324, %v7861, 0
      %v7900 = vsel %vm1324, %v7853, 0
      %v7903 = vsel %vm1324, %v7854, 0
      %v7906 = vsel %vm1324, %v7855, 0
      %v7909 = vsel %vm1324, %v7856, 0
      %7911 = vmatprep.subr.mxu0 0.0
      %7912 = vmatpush1.xpose.msra.mxu0 %v7900
      %7913 = vmatprep.subr.mxu0 0.0
      %7914 = vmatpush1.xpose.msra.mxu0 %v7903
      %7915 = vmatprep.subr.mxu0 0.0
      %7916 = vmatpush1.xpose.msra.mxu0 %v7906
      %7917 = vmatprep.subr.mxu0 0.0
      %7918 = vmatpush1.xpose.msra.mxu0 %v7909
      %7919 = vmatprep.subr.mxu0 0.0
      %7920 = vmatpush1.xpose.msra.mxu0 0.0
      %7921 = vmatprep.subr.mxu0 0.0
      %7922 = vmatpush1.xpose.msra.mxu0 0.0
      %7923 = vmatprep.subr.mxu0 0.0
      %7924 = vmatpush1.xpose.msra.mxu0 0.0
      %7925 = vmatprep.subr.mxu0 0.0
      %7926 = vmatpush1.xpose.msra.mxu0 0.0
      %7927 = vmatprep.subr.mxu0 0.0
      %7928 = vmatpush1.xpose.msra.mxu0 0.0
      %7929 = vmatprep.subr.mxu0 0.0
      %7930 = vmatpush1.xpose.msra.mxu0 0.0
      %7931 = vmatprep.subr.mxu0 0.0
      %7932 = vmatpush1.xpose.msra.mxu0 0.0
      %7933 = vmatprep.subr.mxu0 0.0
      %7934 = vmatpush1.xpose.msra.mxu0 0.0
      %7935 = vmatprep.subr.mxu0 0.0
      %7936 = vmatpush1.xpose.msra.mxu0 0.0
      %7937 = vmatprep.subr.mxu0 0.0
      %7938 = vmatpush1.xpose.msra.mxu0 0.0
      %7939 = vmatprep.subr.mxu0 0.0
      %7940 = vmatpush1.xpose.msra.mxu0 0.0
      %7941 = vmatprep.subr.mxu0 0.0
      %7942 = vmatpush1.xpose.msra.mxu0 0.0
      %7943 = vmatprep.subr.mxu0 0.0
      %7944 = vmatpush1.xpose.msra.mxu0 0.0
      %7945 = vmatprep.subr.mxu0 0.0
      %7946 = vmatpush1.xpose.msra.mxu0 0.0
      %7947 = vmatprep.subr.mxu0 0.0
      %7948 = vmatpush1.xpose.msra.mxu0 0.0
      %7949 = vmatprep.subr.mxu0 0.0
      %7950 = vmatpush1.xpose.msra.mxu0 0.0
      %7951 = vmatprep.subr.mxu0 0.0
      %7952 = vmatpush1.xpose.msra.mxu0 0.0
      %7953 = vmatprep.subr.mxu0 0.0
      %7954 = vmatpush1.xpose.msra.mxu0 0.0
      %7955 = vmatprep.subr.mxu0 0.0
      %7956 = vmatpush1.xpose.msra.mxu0 0.0
      %7957 = vmatprep.subr.mxu0 0.0
      %7958 = vmatpush1.xpose.msra.mxu0 0.0
      %7959 = vmatprep.subr.mxu0 0.0
      %7960 = vmatpush1.xpose.msra.mxu0 0.0
      %7961 = vmatprep.subr.mxu0 0.0
      %7962 = vmatpush1.xpose.msra.mxu0 0.0
      %7963 = vmatprep.subr.mxu0 0.0
      %7964 = vmatpush1.xpose.msra.mxu0 0.0
      %7965 = vmatprep.subr.mxu0 0.0
      %7966 = vmatpush1.xpose.msra.mxu0 0.0
      %7967 = vmatprep.subr.mxu0 0.0
      %7968 = vmatpush1.xpose.msra.mxu0 0.0
      %7969 = vmatprep.subr.mxu0 0.0
      %7970 = vmatpush1.xpose.msra.mxu0 0.0
      %7971 = vmatprep.subr.mxu0 0.0
      %7972 = vmatpush1.xpose.msra.mxu0 0.0
      %7973 = vmatprep.subr.mxu0 0.0
      %7974 = vmatpush1.xpose.msra.mxu0 0.0
      %7975 = vmatprep.mubr.f32.mxu0 0.0
      %7976 = vmatmul.mubr.f32.gmra.mrb[0].mxu0 %v7888
      %v7977 = vpop.f32.mrb[0].mxu0
      %v7978 = vadd.f32 %v7870, %v7977
      %v7979 = vpop.f32.mrb[0].mxu0
      %7980 = vmatprep.mubr.f32.mxu0 0.0
      %7981 = vmatmul.mubr.f32.gmra.mrb[0].mxu0 %v7891
      %v7982 = vpop.f32.mrb[0].mxu0
      %v7983 = vadd.f32 %v7875, %v7982
      %v7984 = vpop.f32.mrb[0].mxu0
      %7985 = vmatprep.mubr.f32.mxu0 0.0
      %7986 = vmatmul.mubr.f32.gmra.mrb[0].mxu0 %v7894
      %v7987 = vpop.f32.mrb[0].mxu0
      %v7988 = vadd.f32 %v7880, %v7987
      %v7989 = vpop.f32.mrb[0].mxu0
      %7990 = vmatprep.mubr.f32.mxu0 0.0
      %7991 = vmatmul.mubr.f32.gmra.mrb[0].mxu0 %v7897
      %v7992 = vpop.f32.mrb[0].mxu0
      %v7993 = vadd.f32 %v7885, %v7992
      %v7994 = vpop.f32.mrb[0].mxu0
      %7995 = vdwg.mxu0
      %v7996 = vadd.f32 %v5626, %v7978
      %v7997 = vadd.f32 %v5627, %v7983
      %v7998 = vadd.f32 %v5628, %v7988
      %v7999 = vadd.f32 %v5629, %v7993
      %v8000 = vld [vmem:[%s53] sm:$0xff]
      %v8001 = vld [vmem:[%s53 + $0x8] sm:$0xff]
      %v8002 = vld [vmem:[%s53 + $0x10] sm:$0xff]
      %v8003 = vld [vmem:[%s53 + $0x18] sm:$0xff]
      %v8004 = vld [vmem:[%s53 + $0x20] sm:$0xff]
      %v8005 = vld [vmem:[%s53 + $0x28] sm:$0xff]
      %v8006 = vld [vmem:[%s53 + $0x30] sm:$0xff]
      %v8007 = vld [vmem:[%s53 + $0x38] sm:$0xff]
      %v8009 = vsel %vm1324, %v8000, 0
      %v8012 = vsel %vm1324, %v8001, 0
      %v8015 = vsel %vm1324, %v8002, 0
      %v8018 = vsel %vm1324, %v8003, 0
      %v8021 = vsel %vm1324, %v8004, 0
      %v8024 = vsel %vm1324, %v8005, 0
      %v8027 = vsel %vm1324, %v8006, 0
      %v8030 = vsel %vm1324, %v8007, 0
      %8032 = vmatprep.subr.mxu0 0.0
      %8033 = vmatpush1.msra.mxu0 %v7996
      %8034 = vmatprep.subr.mxu0 0.0
      %8035 = vmatpush1.msra.mxu0 %v7997
      %8036 = vmatprep.subr.mxu0 0.0
      %8037 = vmatpush1.msra.mxu0 %v7998
      %8038 = vmatprep.subr.mxu0 0.0
      %8039 = vmatpush1.msra.mxu0 %v7999
      %8040 = vmatprep.subr.mxu0 0.0
      %8041 = vmatpush1.msra.mxu0 0.0
      %8042 = vmatprep.subr.mxu0 0.0
      %8043 = vmatpush1.msra.mxu0 0.0
      %8044 = vmatprep.subr.mxu0 0.0
      %8045 = vmatpush1.msra.mxu0 0.0
      %8046 = vmatprep.subr.mxu0 0.0
      %8047 = vmatpush1.msra.mxu0 0.0
      %8048 = vmatprep.subr.mxu0 0.0
      %8049 = vmatpush1.msra.mxu0 0.0
      %8050 = vmatprep.subr.mxu0 0.0
      %8051 = vmatpush1.msra.mxu0 0.0
      %8052 = vmatprep.subr.mxu0 0.0
      %8053 = vmatpush1.msra.mxu0 0.0
      %8054 = vmatprep.subr.mxu0 0.0
      %8055 = vmatpush1.msra.mxu0 0.0
      %8056 = vmatprep.subr.mxu0 0.0
      %8057 = vmatpush1.msra.mxu0 0.0
      %8058 = vmatprep.subr.mxu0 0.0
      %8059 = vmatpush1.msra.mxu0 0.0
      %8060 = vmatprep.subr.mxu0 0.0
      %8061 = vmatpush1.msra.mxu0 0.0
      %8062 = vmatprep.subr.mxu0 0.0
      %8063 = vmatpush1.msra.mxu0 0.0
      %8064 = vmatprep.subr.mxu0 0.0
      %8065 = vmatpush1.msra.mxu0 0.0
      %8066 = vmatprep.subr.mxu0 0.0
      %8067 = vmatpush1.msra.mxu0 0.0
      %8068 = vmatprep.subr.mxu0 0.0
      %8069 = vmatpush1.msra.mxu0 0.0
      %8070 = vmatprep.subr.mxu0 0.0
      %8071 = vmatpush1.msra.mxu0 0.0
      %8072 = vmatprep.subr.mxu0 0.0
      %8073 = vmatpush1.msra.mxu0 0.0
      %8074 = vmatprep.subr.mxu0 0.0
      %8075 = vmatpush1.msra.mxu0 0.0
      %8076 = vmatprep.subr.mxu0 0.0
      %8077 = vmatpush1.msra.mxu0 0.0
      %8078 = vmatprep.subr.mxu0 0.0
      %8079 = vmatpush1.msra.mxu0 0.0
      %8080 = vmatprep.subr.mxu0 0.0
      %8081 = vmatpush1.msra.mxu0 0.0
      %8082 = vmatprep.subr.mxu0 0.0
      %8083 = vmatpush1.msra.mxu0 0.0
      %8084 = vmatprep.subr.mxu0 0.0
      %8085 = vmatpush1.msra.mxu0 0.0
      %8086 = vmatprep.subr.mxu0 0.0
      %8087 = vmatpush1.msra.mxu0 0.0
      %8088 = vmatprep.subr.mxu0 0.0
      %8089 = vmatpush1.msra.mxu0 0.0
      %8090 = vmatprep.subr.mxu0 0.0
      %8091 = vmatpush1.msra.mxu0 0.0
      %8092 = vmatprep.subr.mxu0 0.0
      %8093 = vmatpush1.msra.mxu0 0.0
      %8094 = vmatprep.subr.mxu0 0.0
      %8095 = vmatpush1.msra.mxu0 0.0
      %8096 = vmatprep.mubr.f32.mxu0 0.0
      %8097 = vmatmul.mubr.f32.gmra.mrb[0].mxu0 %v8009
      %v8098 = vpop.f32.mrb[0].mxu0
      %v8099 = vadd.f32 0.0, %v8098
      %v8100 = vpop.f32.mrb[0].mxu0
      %8101 = vmatprep.mubr.f32.mxu0 0.0
      %8102 = vmatmul.mubr.f32.gmra.mrb[0].mxu0 %v8012
      %v8103 = vpop.f32.mrb[0].mxu0
      %v8104 = vadd.f32 0.0, %v8103
      %v8105 = vpop.f32.mrb[0].mxu0
      %8106 = vmatprep.mubr.f32.mxu0 0.0
      %8107 = vmatmul.mubr.f32.gmra.mrb[0].mxu0 %v8015
      %v8108 = vpop.f32.mrb[0].mxu0
      %v8109 = vadd.f32 0.0, %v8108
      %v8110 = vpop.f32.mrb[0].mxu0
      %8111 = vmatprep.mubr.f32.mxu0 0.0
      %8112 = vmatmul.mubr.f32.gmra.mrb[0].mxu0 %v8018
      %v8113 = vpop.f32.mrb[0].mxu0
      %v8114 = vadd.f32 0.0, %v8113
      %v8115 = vpop.f32.mrb[0].mxu0
      %8116 = vmatprep.mubr.f32.mxu0 0.0
      %8117 = vmatmul.mubr.f32.gmra.mrb[0].mxu0 %v8021
      %v8118 = vpop.f32.mrb[0].mxu0
      %v8119 = vadd.f32 0.0, %v8118
      %v8120 = vpop.f32.mrb[0].mxu0
      %8121 = vmatprep.mubr.f32.mxu0 0.0
      %8122 = vmatmul.mubr.f32.gmra.mrb[0].mxu0 %v8024
      %v8123 = vpop.f32.mrb[0].mxu0
      %v8124 = vadd.f32 0.0, %v8123
      %v8125 = vpop.f32.mrb[0].mxu0
      %8126 = vmatprep.mubr.f32.mxu0 0.0
      %8127 = vmatmul.mubr.f32.gmra.mrb[0].mxu0 %v8027
      %v8128 = vpop.f32.mrb[0].mxu0
      %v8129 = vadd.f32 0.0, %v8128
      %v8130 = vpop.f32.mrb[0].mxu0
      %8131 = vmatprep.mubr.f32.mxu0 0.0
      %8132 = vmatmul.mubr.f32.gmra.mrb[0].mxu0 %v8030
      %v8133 = vpop.f32.mrb[0].mxu0
      %v8134 = vadd.f32 0.0, %v8133
      %v8135 = vpop.f32.mrb[0].mxu0
      %8136 = vdwg.mxu0
      %v8137 = vld [vmem:[%s55] sm:$0xff]
      %v8138 = vld [vmem:[%s55 + $0x8] sm:$0xff]
      %v8139 = vld [vmem:[%s55 + $0x10] sm:$0xff]
      %v8140 = vld [vmem:[%s55 + $0x18] sm:$0xff]
      %v8141 = vld [vmem:[%s57] sm:$0x1]
      %v8143 = vlaneseq
      %v8144 = vshrl.u32 %v8143, 7
      %v8145 = vsub.s32 0, %v8144
      %v8146 = vrot.slane %v8141, %v8145
      %v8149 = vsel %vm1324, %v8099, 0
      %v8152 = vsel %vm1324, %v8104, 0
      %v8155 = vsel %vm1324, %v8109, 0
      %v8158 = vsel %vm1324, %v8114, 0
      %v8161 = vsel %vm1324, %v8119, 0
      %v8164 = vsel %vm1324, %v8124, 0
      %v8167 = vsel %vm1324, %v8129, 0
      %v8170 = vsel %vm1324, %v8134, 0
      %8172 = vmatprep.subr.mxu0 0.0
      %8173 = vmatpush1.msra.mxu0 %v8137
      %8174 = vmatprep.subr.mxu0 0.0
      %8175 = vmatpush1.msra.mxu0 %v8138
      %8176 = vmatprep.subr.mxu0 0.0
      %8177 = vmatpush1.msra.mxu0 %v8139
      %8178 = vmatprep.subr.mxu0 0.0
      %8179 = vmatpush1.msra.mxu0 %v8140
      %8180 = vmatprep.subr.mxu0 0.0
      %8181 = vmatpush1.msra.mxu0 0.0
      %8182 = vmatprep.subr.mxu0 0.0
      %8183 = vmatpush1.msra.mxu0 0.0
      %8184 = vmatprep.subr.mxu0 0.0
      %8185 = vmatpush1.msra.mxu0 0.0
      %8186 = vmatprep.subr.mxu0 0.0
      %8187 = vmatpush1.msra.mxu0 0.0
      %8188 = vmatprep.subr.mxu0 0.0
      %8189 = vmatpush1.msra.mxu0 0.0
      %8190 = vmatprep.subr.mxu0 0.0
      %8191 = vmatpush1.msra.mxu0 0.0
      %8192 = vmatprep.subr.mxu0 0.0
      %8193 = vmatpush1.msra.mxu0 0.0
      %8194 = vmatprep.subr.mxu0 0.0
      %8195 = vmatpush1.msra.mxu0 0.0
      %8196 = vmatprep.subr.mxu0 0.0
      %8197 = vmatpush1.msra.mxu0 0.0
      %8198 = vmatprep.subr.mxu0 0.0
      %8199 = vmatpush1.msra.mxu0 0.0
      %8200 = vmatprep.subr.mxu0 0.0
      %8201 = vmatpush1.msra.mxu0 0.0
      %8202 = vmatprep.subr.mxu0 0.0
      %8203 = vmatpush1.msra.mxu0 0.0
      %8204 = vmatprep.subr.mxu0 0.0
      %8205 = vmatpush1.msra.mxu0 0.0
      %8206 = vmatprep.subr.mxu0 0.0
      %8207 = vmatpush1.msra.mxu0 0.0
      %8208 = vmatprep.subr.mxu0 0.0
      %8209 = vmatpush1.msra.mxu0 0.0
      %8210 = vmatprep.subr.mxu0 0.0
      %8211 = vmatpush1.msra.mxu0 0.0
      %8212 = vmatprep.subr.mxu0 0.0
      %8213 = vmatpush1.msra.mxu0 0.0
      %8214 = vmatprep.subr.mxu0 0.0
      %8215 = vmatpush1.msra.mxu0 0.0
      %8216 = vmatprep.subr.mxu0 0.0
      %8217 = vmatpush1.msra.mxu0 0.0
      %8218 = vmatprep.subr.mxu0 0.0
      %8219 = vmatpush1.msra.mxu0 0.0
      %8220 = vmatprep.subr.mxu0 0.0
      %8221 = vmatpush1.msra.mxu0 0.0
      %8222 = vmatprep.subr.mxu0 0.0
      %8223 = vmatpush1.msra.mxu0 0.0
      %8224 = vmatprep.subr.mxu0 0.0
      %8225 = vmatpush1.msra.mxu0 0.0
      %8226 = vmatprep.subr.mxu0 0.0
      %8227 = vmatpush1.msra.mxu0 0.0
      %8228 = vmatprep.subr.mxu0 0.0
      %8229 = vmatpush1.msra.mxu0 0.0
      %8230 = vmatprep.subr.mxu0 0.0
      %8231 = vmatpush1.msra.mxu0 0.0
      %8232 = vmatprep.subr.mxu0 0.0
      %8233 = vmatpush1.msra.mxu0 0.0
      %8234 = vmatprep.subr.mxu0 0.0
      %8235 = vmatpush1.msra.mxu0 0.0
      %8236 = vmatprep.mubr.f32.mxu0 0.0
      %8237 = vmatmul.mubr.f32.gmra.mrb[0].mxu0 %v8149
      %v8238 = vpop.f32.mrb[0].mxu0
      %v8239 = vadd.f32 %v8146, %v8238
      %v8240 = vpop.f32.mrb[0].mxu0
      %8241 = vmatprep.mubr.f32.mxu0 0.0
      %8242 = vmatmul.mubr.f32.gmra.mrb[0].mxu0 %v8152
      %v8243 = vpop.f32.mrb[0].mxu0
      %v8244 = vadd.f32 %v8146, %v8243
      %v8245 = vpop.f32.mrb[0].mxu0
      %8246 = vmatprep.mubr.f32.mxu0 0.0
      %8247 = vmatmul.mubr.f32.gmra.mrb[0].mxu0 %v8155
      %v8248 = vpop.f32.mrb[0].mxu0
      %v8249 = vadd.f32 %v8146, %v8248
      %v8250 = vpop.f32.mrb[0].mxu0
      %8251 = vmatprep.mubr.f32.mxu0 0.0
      %8252 = vmatmul.mubr.f32.gmra.mrb[0].mxu0 %v8158
      %v8253 = vpop.f32.mrb[0].mxu0
      %v8254 = vadd.f32 %v8146, %v8253
      %v8255 = vpop.f32.mrb[0].mxu0
      %8256 = vmatprep.mubr.f32.mxu0 0.0
      %8257 = vmatmul.mubr.f32.gmra.mrb[0].mxu0 %v8161
      %v8258 = vpop.f32.mrb[0].mxu0
      %v8259 = vadd.f32 %v8146, %v8258
      %v8260 = vpop.f32.mrb[0].mxu0
      %8261 = vmatprep.mubr.f32.mxu0 0.0
      %8262 = vmatmul.mubr.f32.gmra.mrb[0].mxu0 %v8164
      %v8263 = vpop.f32.mrb[0].mxu0
      %v8264 = vadd.f32 %v8146, %v8263
      %v8265 = vpop.f32.mrb[0].mxu0
      %8266 = vmatprep.mubr.f32.mxu0 0.0
      %8267 = vmatmul.mubr.f32.gmra.mrb[0].mxu0 %v8167
      %v8268 = vpop.f32.mrb[0].mxu0
      %v8269 = vadd.f32 %v8146, %v8268
      %v8270 = vpop.f32.mrb[0].mxu0
      %8271 = vmatprep.mubr.f32.mxu0 0.0
      %8272 = vmatmul.mubr.f32.gmra.mrb[0].mxu0 %v8170
      %v8273 = vpop.f32.mrb[0].mxu0
      %v8274 = vadd.f32 %v8146, %v8273
      %v8275 = vpop.f32.mrb[0].mxu0
      %8276 = vdwg.mxu0
      %v8277 = vmul.f32 %v8239, 0.70710677
      %v8278 = vmul.f32 %v8244, 0.70710677
      %v8279 = vmul.f32 %v8249, 0.70710677
      %v8280 = vmul.f32 %v8254, 0.70710677
      %v8281 = vmul.f32 %v8259, 0.70710677
      %v8282 = vmul.f32 %v8264, 0.70710677
      %v8283 = vmul.f32 %v8269, 0.70710677
      %v8284 = vmul.f32 %v8274, 0.70710677
      %vm8285 = vcmp.ge.f32.partialorder %v8277, 0.0
      %vm8286 = vcmp.ge.f32.partialorder %v8278, 0.0
      %vm8287 = vcmp.ge.f32.partialorder %v8279, 0.0
      %vm8288 = vcmp.ge.f32.partialorder %v8280, 0.0
      %vm8289 = vcmp.ge.f32.partialorder %v8281, 0.0
      %vm8290 = vcmp.ge.f32.partialorder %v8282, 0.0
      %vm8291 = vcmp.ge.f32.partialorder %v8283, 0.0
      %vm8292 = vcmp.ge.f32.partialorder %v8284, 0.0
      %v8293 = vsel %vm8285, 1.0, -1.0
      %v8294 = vsel %vm8286, 1.0, -1.0
      %v8295 = vsel %vm8287, 1.0, -1.0
      %v8296 = vsel %vm8288, 1.0, -1.0
      %v8297 = vsel %vm8289, 1.0, -1.0
      %v8298 = vsel %vm8290, 1.0, -1.0
      %v8299 = vsel %vm8291, 1.0, -1.0
      %v8300 = vsel %vm8292, 1.0, -1.0
      %v8301 = vand.u32 2147483647, %v8277
      %v8302 = vand.u32 2147483647, %v8278
      %v8303 = vand.u32 2147483647, %v8279
      %v8304 = vand.u32 2147483647, %v8280
      %v8305 = vand.u32 2147483647, %v8281
      %v8306 = vand.u32 2147483647, %v8282
      %v8307 = vand.u32 2147483647, %v8283
      %v8308 = vand.u32 2147483647, %v8284
      %v8309 = vmul.f32 %v8301, 0.3275911
      %v8310 = vmul.f32 %v8302, 0.3275911
      %v8311 = vmul.f32 %v8303, 0.3275911
      %v8312 = vmul.f32 %v8304, 0.3275911
      %v8313 = vmul.f32 %v8305, 0.3275911
      %v8314 = vmul.f32 %v8306, 0.3275911
      %v8315 = vmul.f32 %v8307, 0.3275911
      %v8316 = vmul.f32 %v8308, 0.3275911
      %v8317 = vadd.f32 %v8309, 1.0
      %v8318 = vadd.f32 %v8310, 1.0
      %v8319 = vadd.f32 %v8311, 1.0
      %v8320 = vadd.f32 %v8312, 1.0
      %v8321 = vadd.f32 %v8313, 1.0
      %v8322 = vadd.f32 %v8314, 1.0
      %v8323 = vadd.f32 %v8315, 1.0
      %v8324 = vadd.f32 %v8316, 1.0
      %v8325 = vrcp.pop %v8317
      %v8326 = vmul.f32 1.0, %v8325
      %v8327 = vrcp.pop %v8318
      %v8328 = vmul.f32 1.0, %v8327
      %v8329 = vrcp.pop %v8319
      %v8330 = vmul.f32 1.0, %v8329
      %v8331 = vrcp.pop %v8320
      %v8332 = vmul.f32 1.0, %v8331
      %v8333 = vrcp.pop %v8321
      %v8334 = vmul.f32 1.0, %v8333
      %v8335 = vrcp.pop %v8322
      %v8336 = vmul.f32 1.0, %v8335
      %v8337 = vrcp.pop %v8323
      %v8338 = vmul.f32 1.0, %v8337
      %v8339 = vrcp.pop %v8324
      %v8340 = vmul.f32 1.0, %v8339
      %v8341 = vmul.f32 %v8326, 1.0614054
      %v8342 = vmul.f32 %v8328, 1.0614054
      %v8343 = vmul.f32 %v8330, 1.0614054
      %v8344 = vmul.f32 %v8332, 1.0614054
      %v8345 = vmul.f32 %v8334, 1.0614054
      %v8346 = vmul.f32 %v8336, 1.0614054
      %v8347 = vmul.f32 %v8338, 1.0614054
      %v8348 = vmul.f32 %v8340, 1.0614054
      %v8349 = vadd.f32 %v8341, -1.4531521
      %v8350 = vadd.f32 %v8342, -1.4531521
      %v8351 = vadd.f32 %v8343, -1.4531521
      %v8352 = vadd.f32 %v8344, -1.4531521
      %v8353 = vadd.f32 %v8345, -1.4531521
      %v8354 = vadd.f32 %v8346, -1.4531521
      %v8355 = vadd.f32 %v8347, -1.4531521
      %v8356 = vadd.f32 %v8348, -1.4531521
      %v8357 = vmul.f32 %v8349, %v8326
      %v8358 = vmul.f32 %v8350, %v8328
      %v8359 = vmul.f32 %v8351, %v8330
      %v8360 = vmul.f32 %v8352, %v8332
      %v8361 = vmul.f32 %v8353, %v8334
      %v8362 = vmul.f32 %v8354, %v8336
      %v8363 = vmul.f32 %v8355, %v8338
      %v8364 = vmul.f32 %v8356, %v8340
      %v8365 = vadd.f32 %v8357, 1.4214138
      %v8366 = vadd.f32 %v8358, 1.4214138
      %v8367 = vadd.f32 %v8359, 1.4214138
      %v8368 = vadd.f32 %v8360, 1.4214138
      %v8369 = vadd.f32 %v8361, 1.4214138
      %v8370 = vadd.f32 %v8362, 1.4214138
      %v8371 = vadd.f32 %v8363, 1.4214138
      %v8372 = vadd.f32 %v8364, 1.4214138
      %v8373 = vmul.f32 %v8365, %v8326
      %v8374 = vmul.f32 %v8366, %v8328
      %v8375 = vmul.f32 %v8367, %v8330
      %v8376 = vmul.f32 %v8368, %v8332
      %v8377 = vmul.f32 %v8369, %v8334
      %v8378 = vmul.f32 %v8370, %v8336
      %v8379 = vmul.f32 %v8371, %v8338
      %v8380 = vmul.f32 %v8372, %v8340
      %v8381 = vadd.f32 %v8373, -0.28449672
      %v8382 = vadd.f32 %v8374, -0.28449672
      %v8383 = vadd.f32 %v8375, -0.28449672
      %v8384 = vadd.f32 %v8376, -0.28449672
      %v8385 = vadd.f32 %v8377, -0.28449672
      %v8386 = vadd.f32 %v8378, -0.28449672
      %v8387 = vadd.f32 %v8379, -0.28449672
      %v8388 = vadd.f32 %v8380, -0.28449672
      %v8389 = vmul.f32 %v8381, %v8326
      %v8390 = vmul.f32 %v8382, %v8328
      %v8391 = vmul.f32 %v8383, %v8330
      %v8392 = vmul.f32 %v8384, %v8332
      %v8393 = vmul.f32 %v8385, %v8334
      %v8394 = vmul.f32 %v8386, %v8336
      %v8395 = vmul.f32 %v8387, %v8338
      %v8396 = vmul.f32 %v8388, %v8340
      %v8397 = vadd.f32 %v8389, 0.2548296
      %v8398 = vadd.f32 %v8390, 0.2548296
      %v8399 = vadd.f32 %v8391, 0.2548296
      %v8400 = vadd.f32 %v8392, 0.2548296
      %v8401 = vadd.f32 %v8393, 0.2548296
      %v8402 = vadd.f32 %v8394, 0.2548296
      %v8403 = vadd.f32 %v8395, 0.2548296
      %v8404 = vadd.f32 %v8396, 0.2548296
      %v8405 = vmul.f32 %v8397, %v8326
      %v8406 = vmul.f32 %v8398, %v8328
      %v8407 = vmul.f32 %v8399, %v8330
      %v8408 = vmul.f32 %v8400, %v8332
      %v8409 = vmul.f32 %v8401, %v8334
      %v8410 = vmul.f32 %v8402, %v8336
      %v8411 = vmul.f32 %v8403, %v8338
      %v8412 = vmul.f32 %v8404, %v8340
      %v8413 = vsub.f32 0.0, %v8301
      %v8414 = vsub.f32 0.0, %v8302
      %v8415 = vsub.f32 0.0, %v8303
      %v8416 = vsub.f32 0.0, %v8304
      %v8417 = vsub.f32 0.0, %v8305
      %v8418 = vsub.f32 0.0, %v8306
      %v8419 = vsub.f32 0.0, %v8307
      %v8420 = vsub.f32 0.0, %v8308
      %v8421 = vmul.f32 %v8413, %v8301
      %v8422 = vmul.f32 %v8414, %v8302
      %v8423 = vmul.f32 %v8415, %v8303
      %v8424 = vmul.f32 %v8416, %v8304
      %v8425 = vmul.f32 %v8417, %v8305
      %v8426 = vmul.f32 %v8418, %v8306
      %v8427 = vmul.f32 %v8419, %v8307
      %v8428 = vmul.f32 %v8420, %v8308
      %v8429 = vmul.f32 %v8421, 1.442695
      %v8430 = vpow.pop %v8429
      %v8431 = vmul.f32 %v8422, 1.442695
      %v8432 = vpow.pop %v8431
      %v8433 = vmul.f32 %v8423, 1.442695
      %v8434 = vpow.pop %v8433
      %v8435 = vmul.f32 %v8424, 1.442695
      %v8436 = vpow.pop %v8435
      %v8437 = vmul.f32 %v8425, 1.442695
      %v8438 = vpow.pop %v8437
      %v8439 = vmul.f32 %v8426, 1.442695
      %v8440 = vpow.pop %v8439
      %v8441 = vmul.f32 %v8427, 1.442695
      %v8442 = vpow.pop %v8441
      %v8443 = vmul.f32 %v8428, 1.442695
      %v8444 = vpow.pop %v8443
      %v8445 = vmul.f32 %v8405, %v8430
      %v8446 = vmul.f32 %v8406, %v8432
      %v8447 = vmul.f32 %v8407, %v8434
      %v8448 = vmul.f32 %v8408, %v8436
      %v8449 = vmul.f32 %v8409, %v8438
      %v8450 = vmul.f32 %v8410, %v8440
      %v8451 = vmul.f32 %v8411, %v8442
      %v8452 = vmul.f32 %v8412, %v8444
      %v8453 = vsub.f32 1.0, %v8445
      %v8454 = vsub.f32 1.0, %v8446
      %v8455 = vsub.f32 1.0, %v8447
      %v8456 = vsub.f32 1.0, %v8448
      %v8457 = vsub.f32 1.0, %v8449
      %v8458 = vsub.f32 1.0, %v8450
      %v8459 = vsub.f32 1.0, %v8451
      %v8460 = vsub.f32 1.0, %v8452
      %v8461 = vmul.f32 %v8293, %v8453
      %v8462 = vmul.f32 %v8294, %v8454
      %v8463 = vmul.f32 %v8295, %v8455
      %v8464 = vmul.f32 %v8296, %v8456
      %v8465 = vmul.f32 %v8297, %v8457
      %v8466 = vmul.f32 %v8298, %v8458
      %v8467 = vmul.f32 %v8299, %v8459
      %v8468 = vmul.f32 %v8300, %v8460
      %v8469 = vmul.f32 %v8239, 0.5
      %v8470 = vmul.f32 %v8244, 0.5
      %v8471 = vmul.f32 %v8249, 0.5
      %v8472 = vmul.f32 %v8254, 0.5
      %v8473 = vmul.f32 %v8259, 0.5
      %v8474 = vmul.f32 %v8264, 0.5
      %v8475 = vmul.f32 %v8269, 0.5
      %v8476 = vmul.f32 %v8274, 0.5
      %v8477 = vadd.f32 %v8461, 1.0
      %v8478 = vadd.f32 %v8462, 1.0
      %v8479 = vadd.f32 %v8463, 1.0
      %v8480 = vadd.f32 %v8464, 1.0
      %v8481 = vadd.f32 %v8465, 1.0
      %v8482 = vadd.f32 %v8466, 1.0
      %v8483 = vadd.f32 %v8467, 1.0
      %v8484 = vadd.f32 %v8468, 1.0
      %v8485 = vmul.f32 %v8469, %v8477
      %v8486 = vmul.f32 %v8470, %v8478
      %v8487 = vmul.f32 %v8471, %v8479
      %v8488 = vmul.f32 %v8472, %v8480
      %v8489 = vmul.f32 %v8473, %v8481
      %v8490 = vmul.f32 %v8474, %v8482
      %v8491 = vmul.f32 %v8475, %v8483
      %v8492 = vmul.f32 %v8476, %v8484
      %v8493 = vld [vmem:[%s59] sm:$0xff]
      %v8494 = vld [vmem:[%s59 + $0x8] sm:$0xff]
      %v8495 = vld [vmem:[%s59 + $0x10] sm:$0xff]
      %v8496 = vld [vmem:[%s59 + $0x18] sm:$0xff]
      %v8497 = vld [vmem:[%s61] sm:$0x1]
      %v8499 = vlaneseq
      %v8500 = vshrl.u32 %v8499, 7
      %v8501 = vsub.s32 0, %v8500
      %v8502 = vrot.slane %v8497, %v8501
      %v8505 = vsel %vm1324, %v8485, 0
      %v8508 = vsel %vm1324, %v8486, 0
      %v8511 = vsel %vm1324, %v8487, 0
      %v8514 = vsel %vm1324, %v8488, 0
      %v8517 = vsel %vm1324, %v8489, 0
      %v8520 = vsel %vm1324, %v8490, 0
      %v8523 = vsel %vm1324, %v8491, 0
      %v8526 = vsel %vm1324, %v8492, 0
      %8528 = vmatprep.subr.mxu0 0.0
      %8529 = vmatpush1.msra.mxu0 %v8493
      %8530 = vmatprep.subr.mxu0 0.0
      %8531 = vmatpush1.msra.mxu0 %v8494
      %8532 = vmatprep.subr.mxu0 0.0
      %8533 = vmatpush1.msra.mxu0 %v8495
      %8534 = vmatprep.subr.mxu0 0.0
      %8535 = vmatpush1.msra.mxu0 %v8496
      %8536 = vmatprep.subr.mxu0 0.0
      %8537 = vmatpush1.msra.mxu0 0.0
      %8538 = vmatprep.subr.mxu0 0.0
      %8539 = vmatpush1.msra.mxu0 0.0
      %8540 = vmatprep.subr.mxu0 0.0
      %8541 = vmatpush1.msra.mxu0 0.0
      %8542 = vmatprep.subr.mxu0 0.0
      %8543 = vmatpush1.msra.mxu0 0.0
      %8544 = vmatprep.subr.mxu0 0.0
      %8545 = vmatpush1.msra.mxu0 0.0
      %8546 = vmatprep.subr.mxu0 0.0
      %8547 = vmatpush1.msra.mxu0 0.0
      %8548 = vmatprep.subr.mxu0 0.0
      %8549 = vmatpush1.msra.mxu0 0.0
      %8550 = vmatprep.subr.mxu0 0.0
      %8551 = vmatpush1.msra.mxu0 0.0
      %8552 = vmatprep.subr.mxu0 0.0
      %8553 = vmatpush1.msra.mxu0 0.0
      %8554 = vmatprep.subr.mxu0 0.0
      %8555 = vmatpush1.msra.mxu0 0.0
      %8556 = vmatprep.subr.mxu0 0.0
      %8557 = vmatpush1.msra.mxu0 0.0
      %8558 = vmatprep.subr.mxu0 0.0
      %8559 = vmatpush1.msra.mxu0 0.0
      %8560 = vmatprep.subr.mxu0 0.0
      %8561 = vmatpush1.msra.mxu0 0.0
      %8562 = vmatprep.subr.mxu0 0.0
      %8563 = vmatpush1.msra.mxu0 0.0
      %8564 = vmatprep.subr.mxu0 0.0
      %8565 = vmatpush1.msra.mxu0 0.0
      %8566 = vmatprep.subr.mxu0 0.0
      %8567 = vmatpush1.msra.mxu0 0.0
      %8568 = vmatprep.subr.mxu0 0.0
      %8569 = vmatpush1.msra.mxu0 0.0
      %8570 = vmatprep.subr.mxu0 0.0
      %8571 = vmatpush1.msra.mxu0 0.0
      %8572 = vmatprep.subr.mxu0 0.0
      %8573 = vmatpush1.msra.mxu0 0.0
      %8574 = vmatprep.subr.mxu0 0.0
      %8575 = vmatpush1.msra.mxu0 0.0
      %8576 = vmatprep.subr.mxu0 0.0
      %8577 = vmatpush1.msra.mxu0 0.0
      %8578 = vmatprep.subr.mxu0 0.0
      %8579 = vmatpush1.msra.mxu0 0.0
      %8580 = vmatprep.subr.mxu0 0.0
      %8581 = vmatpush1.msra.mxu0 0.0
      %8582 = vmatprep.subr.mxu0 0.0
      %8583 = vmatpush1.msra.mxu0 0.0
      %8584 = vmatprep.subr.mxu0 0.0
      %8585 = vmatpush1.msra.mxu0 0.0
      %8586 = vmatprep.subr.mxu0 0.0
      %8587 = vmatpush1.msra.mxu0 0.0
      %8588 = vmatprep.subr.mxu0 0.0
      %8589 = vmatpush1.msra.mxu0 0.0
      %8590 = vmatprep.subr.mxu0 0.0
      %8591 = vmatpush1.msra.mxu0 0.0
      %8592 = vmatprep.mubr.f32.mxu0 0.0
      %8593 = vmatmul.mubr.f32.gmra.mrb[0].mxu0 %v8505
      %v8594 = vpop.f32.mrb[0].mxu0
      %v8595 = vadd.f32 %v8502, %v8594
      %v8596 = vpop.f32.mrb[0].mxu0
      %8597 = vmatprep.mubr.f32.mxu0 0.0
      %8598 = vmatmul.mubr.f32.gmra.mrb[0].mxu0 %v8508
      %v8599 = vpop.f32.mrb[0].mxu0
      %v8600 = vadd.f32 %v8502, %v8599
      %v8601 = vpop.f32.mrb[0].mxu0
      %8602 = vmatprep.mubr.f32.mxu0 0.0
      %8603 = vmatmul.mubr.f32.gmra.mrb[0].mxu0 %v8511
      %v8604 = vpop.f32.mrb[0].mxu0
      %v8605 = vadd.f32 %v8502, %v8604
      %v8606 = vpop.f32.mrb[0].mxu0
      %8607 = vmatprep.mubr.f32.mxu0 0.0
      %8608 = vmatmul.mubr.f32.gmra.mrb[0].mxu0 %v8514
      %v8609 = vpop.f32.mrb[0].mxu0
      %v8610 = vadd.f32 %v8502, %v8609
      %v8611 = vpop.f32.mrb[0].mxu0
      %8612 = vmatprep.mubr.f32.mxu0 0.0
      %8613 = vmatmul.mubr.f32.gmra.mrb[0].mxu0 %v8517
      %v8614 = vpop.f32.mrb[0].mxu0
      %v8615 = vadd.f32 %v8502, %v8614
      %v8616 = vpop.f32.mrb[0].mxu0
      %8617 = vmatprep.mubr.f32.mxu0 0.0
      %8618 = vmatmul.mubr.f32.gmra.mrb[0].mxu0 %v8520
      %v8619 = vpop.f32.mrb[0].mxu0
      %v8620 = vadd.f32 %v8502, %v8619
      %v8621 = vpop.f32.mrb[0].mxu0
      %8622 = vmatprep.mubr.f32.mxu0 0.0
      %8623 = vmatmul.mubr.f32.gmra.mrb[0].mxu0 %v8523
      %v8624 = vpop.f32.mrb[0].mxu0
      %v8625 = vadd.f32 %v8502, %v8624
      %v8626 = vpop.f32.mrb[0].mxu0
      %8627 = vmatprep.mubr.f32.mxu0 0.0
      %8628 = vmatmul.mubr.f32.gmra.mrb[0].mxu0 %v8526
      %v8629 = vpop.f32.mrb[0].mxu0
      %v8630 = vadd.f32 %v8502, %v8629
      %v8631 = vpop.f32.mrb[0].mxu0
      %8632 = vdwg.mxu0
      %v8633 = vmul.f32 %v8595, 0.70710677
      %v8634 = vmul.f32 %v8600, 0.70710677
      %v8635 = vmul.f32 %v8605, 0.70710677
      %v8636 = vmul.f32 %v8610, 0.70710677
      %v8637 = vmul.f32 %v8615, 0.70710677
      %v8638 = vmul.f32 %v8620, 0.70710677
      %v8639 = vmul.f32 %v8625, 0.70710677
      %v8640 = vmul.f32 %v8630, 0.70710677
      %vm8641 = vcmp.ge.f32.partialorder %v8633, 0.0
      %vm8642 = vcmp.ge.f32.partialorder %v8634, 0.0
      %vm8643 = vcmp.ge.f32.partialorder %v8635, 0.0
      %vm8644 = vcmp.ge.f32.partialorder %v8636, 0.0
      %vm8645 = vcmp.ge.f32.partialorder %v8637, 0.0
      %vm8646 = vcmp.ge.f32.partialorder %v8638, 0.0
      %vm8647 = vcmp.ge.f32.partialorder %v8639, 0.0
      %vm8648 = vcmp.ge.f32.partialorder %v8640, 0.0
      %v8649 = vsel %vm8641, 1.0, -1.0
      %v8650 = vsel %vm8642, 1.0, -1.0
      %v8651 = vsel %vm8643, 1.0, -1.0
      %v8652 = vsel %vm8644, 1.0, -1.0
      %v8653 = vsel %vm8645, 1.0, -1.0
      %v8654 = vsel %vm8646, 1.0, -1.0
      %v8655 = vsel %vm8647, 1.0, -1.0
      %v8656 = vsel %vm8648, 1.0, -1.0
      %v8657 = vand.u32 2147483647, %v8633
      %v8658 = vand.u32 2147483647, %v8634
      %v8659 = vand.u32 2147483647, %v8635
      %v8660 = vand.u32 2147483647, %v8636
      %v8661 = vand.u32 2147483647, %v8637
      %v8662 = vand.u32 2147483647, %v8638
      %v8663 = vand.u32 2147483647, %v8639
      %v8664 = vand.u32 2147483647, %v8640
      %v8665 = vmul.f32 %v8657, 0.3275911
      %v8666 = vmul.f32 %v8658, 0.3275911
      %v8667 = vmul.f32 %v8659, 0.3275911
      %v8668 = vmul.f32 %v8660, 0.3275911
      %v8669 = vmul.f32 %v8661, 0.3275911
      %v8670 = vmul.f32 %v8662, 0.3275911
      %v8671 = vmul.f32 %v8663, 0.3275911
      %v8672 = vmul.f32 %v8664, 0.3275911
      %v8673 = vadd.f32 %v8665, 1.0
      %v8674 = vadd.f32 %v8666, 1.0
      %v8675 = vadd.f32 %v8667, 1.0
      %v8676 = vadd.f32 %v8668, 1.0
      %v8677 = vadd.f32 %v8669, 1.0
      %v8678 = vadd.f32 %v8670, 1.0
      %v8679 = vadd.f32 %v8671, 1.0
      %v8680 = vadd.f32 %v8672, 1.0
      %v8681 = vrcp.pop %v8673
      %v8682 = vmul.f32 1.0, %v8681
      %v8683 = vrcp.pop %v8674
      %v8684 = vmul.f32 1.0, %v8683
      %v8685 = vrcp.pop %v8675
      %v8686 = vmul.f32 1.0, %v8685
      %v8687 = vrcp.pop %v8676
      %v8688 = vmul.f32 1.0, %v8687
      %v8689 = vrcp.pop %v8677
      %v8690 = vmul.f32 1.0, %v8689
      %v8691 = vrcp.pop %v8678
      %v8692 = vmul.f32 1.0, %v8691
      %v8693 = vrcp.pop %v8679
      %v8694 = vmul.f32 1.0, %v8693
      %v8695 = vrcp.pop %v8680
      %v8696 = vmul.f32 1.0, %v8695
      %v8697 = vmul.f32 %v8682, 1.0614054
      %v8698 = vmul.f32 %v8684, 1.0614054
      %v8699 = vmul.f32 %v8686, 1.0614054
      %v8700 = vmul.f32 %v8688, 1.0614054
      %v8701 = vmul.f32 %v8690, 1.0614054
      %v8702 = vmul.f32 %v8692, 1.0614054
      %v8703 = vmul.f32 %v8694, 1.0614054
      %v8704 = vmul.f32 %v8696, 1.0614054
      %v8705 = vadd.f32 %v8697, -1.4531521
      %v8706 = vadd.f32 %v8698, -1.4531521
      %v8707 = vadd.f32 %v8699, -1.4531521
      %v8708 = vadd.f32 %v8700, -1.4531521
      %v8709 = vadd.f32 %v8701, -1.4531521
      %v8710 = vadd.f32 %v8702, -1.4531521
      %v8711 = vadd.f32 %v8703, -1.4531521
      %v8712 = vadd.f32 %v8704, -1.4531521
      %v8713 = vmul.f32 %v8705, %v8682
      %v8714 = vmul.f32 %v8706, %v8684
      %v8715 = vmul.f32 %v8707, %v8686
      %v8716 = vmul.f32 %v8708, %v8688
      %v8717 = vmul.f32 %v8709, %v8690
      %v8718 = vmul.f32 %v8710, %v8692
      %v8719 = vmul.f32 %v8711, %v8694
      %v8720 = vmul.f32 %v8712, %v8696
      %v8721 = vadd.f32 %v8713, 1.4214138
      %v8722 = vadd.f32 %v8714, 1.4214138
      %v8723 = vadd.f32 %v8715, 1.4214138
      %v8724 = vadd.f32 %v8716, 1.4214138
      %v8725 = vadd.f32 %v8717, 1.4214138
      %v8726 = vadd.f32 %v8718, 1.4214138
      %v8727 = vadd.f32 %v8719, 1.4214138
      %v8728 = vadd.f32 %v8720, 1.4214138
      %v8729 = vmul.f32 %v8721, %v8682
      %v8730 = vmul.f32 %v8722, %v8684
      %v8731 = vmul.f32 %v8723, %v8686
      %v8732 = vmul.f32 %v8724, %v8688
      %v8733 = vmul.f32 %v8725, %v8690
      %v8734 = vmul.f32 %v8726, %v8692
      %v8735 = vmul.f32 %v8727, %v8694
      %v8736 = vmul.f32 %v8728, %v8696
      %v8737 = vadd.f32 %v8729, -0.28449672
      %v8738 = vadd.f32 %v8730, -0.28449672
      %v8739 = vadd.f32 %v8731, -0.28449672
      %v8740 = vadd.f32 %v8732, -0.28449672
      %v8741 = vadd.f32 %v8733, -0.28449672
      %v8742 = vadd.f32 %v8734, -0.28449672
      %v8743 = vadd.f32 %v8735, -0.28449672
      %v8744 = vadd.f32 %v8736, -0.28449672
      %v8745 = vmul.f32 %v8737, %v8682
      %v8746 = vmul.f32 %v8738, %v8684
      %v8747 = vmul.f32 %v8739, %v8686
      %v8748 = vmul.f32 %v8740, %v8688
      %v8749 = vmul.f32 %v8741, %v8690
      %v8750 = vmul.f32 %v8742, %v8692
      %v8751 = vmul.f32 %v8743, %v8694
      %v8752 = vmul.f32 %v8744, %v8696
      %v8753 = vadd.f32 %v8745, 0.2548296
      %v8754 = vadd.f32 %v8746, 0.2548296
      %v8755 = vadd.f32 %v8747, 0.2548296
      %v8756 = vadd.f32 %v8748, 0.2548296
      %v8757 = vadd.f32 %v8749, 0.2548296
      %v8758 = vadd.f32 %v8750, 0.2548296
      %v8759 = vadd.f32 %v8751, 0.2548296
      %v8760 = vadd.f32 %v8752, 0.2548296
      %v8761 = vmul.f32 %v8753, %v8682
      %v8762 = vmul.f32 %v8754, %v8684
      %v8763 = vmul.f32 %v8755, %v8686
      %v8764 = vmul.f32 %v8756, %v8688
      %v8765 = vmul.f32 %v8757, %v8690
      %v8766 = vmul.f32 %v8758, %v8692
      %v8767 = vmul.f32 %v8759, %v8694
      %v8768 = vmul.f32 %v8760, %v8696
      %v8769 = vsub.f32 0.0, %v8657
      %v8770 = vsub.f32 0.0, %v8658
      %v8771 = vsub.f32 0.0, %v8659
      %v8772 = vsub.f32 0.0, %v8660
      %v8773 = vsub.f32 0.0, %v8661
      %v8774 = vsub.f32 0.0, %v8662
      %v8775 = vsub.f32 0.0, %v8663
      %v8776 = vsub.f32 0.0, %v8664
      %v8777 = vmul.f32 %v8769, %v8657
      %v8778 = vmul.f32 %v8770, %v8658
      %v8779 = vmul.f32 %v8771, %v8659
      %v8780 = vmul.f32 %v8772, %v8660
      %v8781 = vmul.f32 %v8773, %v8661
      %v8782 = vmul.f32 %v8774, %v8662
      %v8783 = vmul.f32 %v8775, %v8663
      %v8784 = vmul.f32 %v8776, %v8664
      %v8785 = vmul.f32 %v8777, 1.442695
      %v8786 = vpow.pop %v8785
      %v8787 = vmul.f32 %v8778, 1.442695
      %v8788 = vpow.pop %v8787
      %v8789 = vmul.f32 %v8779, 1.442695
      %v8790 = vpow.pop %v8789
      %v8791 = vmul.f32 %v8780, 1.442695
      %v8792 = vpow.pop %v8791
      %v8793 = vmul.f32 %v8781, 1.442695
      %v8794 = vpow.pop %v8793
      %v8795 = vmul.f32 %v8782, 1.442695
      %v8796 = vpow.pop %v8795
      %v8797 = vmul.f32 %v8783, 1.442695
      %v8798 = vpow.pop %v8797
      %v8799 = vmul.f32 %v8784, 1.442695
      %v8800 = vpow.pop %v8799
      %v8801 = vmul.f32 %v8761, %v8786
      %v8802 = vmul.f32 %v8762, %v8788
      %v8803 = vmul.f32 %v8763, %v8790
      %v8804 = vmul.f32 %v8764, %v8792
      %v8805 = vmul.f32 %v8765, %v8794
      %v8806 = vmul.f32 %v8766, %v8796
      %v8807 = vmul.f32 %v8767, %v8798
      %v8808 = vmul.f32 %v8768, %v8800
      %v8809 = vsub.f32 1.0, %v8801
      %v8810 = vsub.f32 1.0, %v8802
      %v8811 = vsub.f32 1.0, %v8803
      %v8812 = vsub.f32 1.0, %v8804
      %v8813 = vsub.f32 1.0, %v8805
      %v8814 = vsub.f32 1.0, %v8806
      %v8815 = vsub.f32 1.0, %v8807
      %v8816 = vsub.f32 1.0, %v8808
      %v8817 = vmul.f32 %v8649, %v8809
      %v8818 = vmul.f32 %v8650, %v8810
      %v8819 = vmul.f32 %v8651, %v8811
      %v8820 = vmul.f32 %v8652, %v8812
      %v8821 = vmul.f32 %v8653, %v8813
      %v8822 = vmul.f32 %v8654, %v8814
      %v8823 = vmul.f32 %v8655, %v8815
      %v8824 = vmul.f32 %v8656, %v8816
      %v8825 = vmul.f32 %v8595, 0.5
      %v8826 = vmul.f32 %v8600, 0.5
      %v8827 = vmul.f32 %v8605, 0.5
      %v8828 = vmul.f32 %v8610, 0.5
      %v8829 = vmul.f32 %v8615, 0.5
      %v8830 = vmul.f32 %v8620, 0.5
      %v8831 = vmul.f32 %v8625, 0.5
      %v8832 = vmul.f32 %v8630, 0.5
      %v8833 = vadd.f32 %v8817, 1.0
      %v8834 = vadd.f32 %v8818, 1.0
      %v8835 = vadd.f32 %v8819, 1.0
      %v8836 = vadd.f32 %v8820, 1.0
      %v8837 = vadd.f32 %v8821, 1.0
      %v8838 = vadd.f32 %v8822, 1.0
      %v8839 = vadd.f32 %v8823, 1.0
      %v8840 = vadd.f32 %v8824, 1.0
      %v8841 = vmul.f32 %v8825, %v8833
      %v8842 = vmul.f32 %v8826, %v8834
      %v8843 = vmul.f32 %v8827, %v8835
      %v8844 = vmul.f32 %v8828, %v8836
      %v8845 = vmul.f32 %v8829, %v8837
      %v8846 = vmul.f32 %v8830, %v8838
      %v8847 = vmul.f32 %v8831, %v8839
      %v8848 = vmul.f32 %v8832, %v8840
      %v8849 = vld [vmem:[%s63] sm:$0x1]
      %v8850 = vld [vmem:[#allocation2] sm:$0x1]
      %8852 = vset.pattern.permute.xlu0 0
      %8853 = vperm.xlu0 %8852, %v8850
      %v8854 = vpop.permute.xlu0 %8853
      %v8856 = vlaneseq
      %v8857 = vshrl.u32 %v8856, 7
      %v8858 = vsub.s32 0, %v8857
      %v8859 = vrot.slane %v8854, %v8858
      %v8861 = vsel %vm1324, %v8849, 0
      %v8864 = vsel %vm1324, %v8841, 0
      %v8867 = vsel %vm1324, %v8842, 0
      %v8870 = vsel %vm1324, %v8843, 0
      %v8873 = vsel %vm1324, %v8844, 0
      %v8876 = vsel %vm1324, %v8845, 0
      %v8879 = vsel %vm1324, %v8846, 0
      %v8882 = vsel %vm1324, %v8847, 0
      %v8885 = vsel %vm1324, %v8848, 0
      %8887 = vmatprep.subr.mxu0 0.0
      %8888 = vmatpush1.xpose.msra.mxu0 %v8864
      %8889 = vmatprep.subr.mxu0 0.0
      %8890 = vmatpush1.xpose.msra.mxu0 %v8867
      %8891 = vmatprep.subr.mxu0 0.0
      %8892 = vmatpush1.xpose.msra.mxu0 %v8870
      %8893 = vmatprep.subr.mxu0 0.0
      %8894 = vmatpush1.xpose.msra.mxu0 %v8873
      %8895 = vmatprep.subr.mxu0 0.0
      %8896 = vmatpush1.xpose.msra.mxu0 %v8876
      %8897 = vmatprep.subr.mxu0 0.0
      %8898 = vmatpush1.xpose.msra.mxu0 %v8879
      %8899 = vmatprep.subr.mxu0 0.0
      %8900 = vmatpush1.xpose.msra.mxu0 %v8882
      %8901 = vmatprep.subr.mxu0 0.0
      %8902 = vmatpush1.xpose.msra.mxu0 %v8885
      %8903 = vmatprep.subr.mxu0 0.0
      %8904 = vmatpush1.xpose.msra.mxu0 0.0
      %8905 = vmatprep.subr.mxu0 0.0
      %8906 = vmatpush1.xpose.msra.mxu0 0.0
      %8907 = vmatprep.subr.mxu0 0.0
      %8908 = vmatpush1.xpose.msra.mxu0 0.0
      %8909 = vmatprep.subr.mxu0 0.0
      %8910 = vmatpush1.xpose.msra.mxu0 0.0
      %8911 = vmatprep.subr.mxu0 0.0
      %8912 = vmatpush1.xpose.msra.mxu0 0.0
      %8913 = vmatprep.subr.mxu0 0.0
      %8914 = vmatpush1.xpose.msra.mxu0 0.0
      %8915 = vmatprep.subr.mxu0 0.0
      %8916 = vmatpush1.xpose.msra.mxu0 0.0
      %8917 = vmatprep.subr.mxu0 0.0
      %8918 = vmatpush1.xpose.msra.mxu0 0.0
      %8919 = vmatprep.subr.mxu0 0.0
      %8920 = vmatpush1.xpose.msra.mxu0 0.0
      %8921 = vmatprep.subr.mxu0 0.0
      %8922 = vmatpush1.xpose.msra.mxu0 0.0
      %8923 = vmatprep.subr.mxu0 0.0
      %8924 = vmatpush1.xpose.msra.mxu0 0.0
      %8925 = vmatprep.subr.mxu0 0.0
      %8926 = vmatpush1.xpose.msra.mxu0 0.0
      %8927 = vmatprep.subr.mxu0 0.0
      %8928 = vmatpush1.xpose.msra.mxu0 0.0
      %8929 = vmatprep.subr.mxu0 0.0
      %8930 = vmatpush1.xpose.msra.mxu0 0.0
      %8931 = vmatprep.subr.mxu0 0.0
      %8932 = vmatpush1.xpose.msra.mxu0 0.0
      %8933 = vmatprep.subr.mxu0 0.0
      %8934 = vmatpush1.xpose.msra.mxu0 0.0
      %8935 = vmatprep.subr.mxu0 0.0
      %8936 = vmatpush1.xpose.msra.mxu0 0.0
      %8937 = vmatprep.subr.mxu0 0.0
      %8938 = vmatpush1.xpose.msra.mxu0 0.0
      %8939 = vmatprep.subr.mxu0 0.0
      %8940 = vmatpush1.xpose.msra.mxu0 0.0
      %8941 = vmatprep.subr.mxu0 0.0
      %8942 = vmatpush1.xpose.msra.mxu0 0.0
      %8943 = vmatprep.subr.mxu0 0.0
      %8944 = vmatpush1.xpose.msra.mxu0 0.0
      %8945 = vmatprep.subr.mxu0 0.0
      %8946 = vmatpush1.xpose.msra.mxu0 0.0
      %8947 = vmatprep.subr.mxu0 0.0
      %8948 = vmatpush1.xpose.msra.mxu0 0.0
      %8949 = vmatprep.subr.mxu0 0.0
      %8950 = vmatpush1.xpose.msra.mxu0 0.0
      %8951 = vmatprep.mubr.f32.mxu0 0.0
      %8952 = vmatmul.mubr.f32.gmra.mrb[0].mxu0 %v8861
      %v8953 = vpop.f32.mrb[0].mxu0
      %v8954 = vadd.f32 %v8859, %v8953
      %v8955 = vpop.f32.mrb[0].mxu0
      %8956 = vdwg.mxu0
      %v8957 = vadd.f32 %v1257, %v8954
      %vm8958 = vcmask 516096
      %8959 = vst.msk [vmem:[%s1051] sm:$0x1] %vm8958, %v8957
      %p8960 = scmp.lt.s32.totalorder %s80, 1
      %s8961 = scalar_select %p8960, %s80, 1
      %s8962 = scalar_lea.vmem %s67, %s8961
      // Predicated region
      $region153: #{pitt2d_forward.1} parent=151 // pred_check
        %p8963 = pneg %p811
      $region154: #{pitt2d_forward.1} parent=151 // pred_check_branch
        %8965 = sbr.rel (%p8963) target = $region156
      $region155: #{pitt2d_forward.1} parent=151 // pred_region
        _
      $region156: #{pitt2d_forward.1} parent=151 // pred_fallthru
        _
    $region152: #{pitt2d_forward.1} parent=5 // pred_fallthru
      _
    %p8966 = scmp.le.s32.totalorder 2, %s75
    // Predicated region
    $region157: #{pitt2d_forward.1} parent=5 // pred_check
      %p8967 = pneg %p8966
    $region158: #{pitt2d_forward.1} parent=5 // pred_check_branch
      %8969 = sbr.rel (%p8967) target = $region160
    $region159: #{pitt2d_forward.1} parent=5 // pred_region
      %s8970 = ssub.s32 %s75, 2
      // Predicated region
      $region161: #{pitt2d_forward.1} parent=159 // pred_check
        %p8971 = pneg %p817
      $region162: #{pitt2d_forward.1} parent=159 // pred_check_branch
        %8973 = sbr.rel (%p8971) target = $region164
      $region163: #{pitt2d_forward.1} parent=159 // pred_region
        %p8974 = scmp.lt.s32.totalorder %s81, 1
        %s8975 = scalar_select %p8974, %s81, 1
        %s8976 = scalar_lea.vmem %s67, %s8975
      $region164: #{pitt2d_forward.1} parent=159 // pred_fallthru
        _
    $region160: #{pitt2d_forward.1} parent=5 // pred_fallthru
      _
  $region6: #{pitt2d_forward.1} parent=0 // loop_footer
    %s79 = sadd.s32 1, %s75
  $region7: #{pitt2d_forward.1} parent=0 // loop_footer_branch
    %74 = sbr.rel target = $region3
  $region8: #{pitt2d_forward.1} parent=0 // loop_exit
    _

</llo_original>
